<compile_context>
chip_gen: v5e
topology: v5e:2x2
jax: 0.10.0
libtpu: 0.0.40
codegen_flags: <defaults>
</compile_context>

<pallas_src>
import functools
import math

import jax
import jax.numpy as jnp
from jax.experimental import pallas as pl
from jax.experimental.pallas import tpu as pltpu


# ----------------------------- Pallas kernel ------------------------------ #

def _decoder_layer_kernel(
    # ---- inputs ----
    x_ref,                    # [Bt, L, D]
    cross_ref,                # [Bt, S, D]
    wqkv_s_ref, bqkv_s_ref,   # fused self-attn Q|K|V: [D, 3D], [1, 3D] (scale folded into Q)
    wo_s_ref, bo_s_ref,       # [D, D], [1, D]
    g1_ref, be1_ref,          # LayerNorm1 gamma/beta [1, D]
    wq_c_ref, bq_c_ref,       # cross-attn Q: [D, D], [1, D]   (scale folded)
    wkv_c_ref, bkv_c_ref,     # fused cross-attn K|V: [D, 2D], [1, 2D]
    wo_c_ref, bo_c_ref,       # [D, D], [1, D]
    g2_ref, be2_ref,          # LayerNorm2 gamma/beta [1, D]
    w1_ref, b1_ref,           # conv1 (1x1): [D, d_ff], [1, d_ff]
    w2_ref, b2_ref,           # conv2 (1x1): [d_ff, D], [1, D]
    g3_ref, be3_ref,          # LayerNorm3 gamma/beta [1, D]
    # ---- outputs ----
    out_ref,                  # [Bt, L, D]
    *, n_heads: int, eps: float, concat_heads: bool,
):
    cd = wqkv_s_ref.dtype                 # matmul compute dtype (bf16 or f32)
    Bt, L, D = x_ref.shape
    S = cross_ref.shape[1]
    dk = D // n_heads
    N = Bt * L

    # Residual stream in f32, flattened to [Bt*L, D] so the MXU M-dim is Bt*L.
    x = x_ref[...].astype(jnp.float32).reshape(N, D)
    cr = cross_ref[...].astype(cd).reshape(Bt * S, D)

    def layer_norm(z, g, b):
        mu = jnp.mean(z, axis=-1, keepdims=True)
        var = jnp.mean(jnp.square(z - mu), axis=-1, keepdims=True)
        return (z - mu) * jax.lax.rsqrt(var + eps) * g + b

    def mha(q_flat, k_flat, v_flat, Lk, wo, bo):
        # q_flat: [Bt*L, D] (cd), k_flat/v_flat: [Bt*Lk, D] (cd).
        # Heads are split by lane-slicing the fused projection output; everything
        # stays in vregs (no VMEM scratch round trips, no masked per-head stores).
        ctx_heads = []
        for h in range(n_heads):
            lo = h * dk
            qh = q_flat[:, lo:lo + dk].reshape(Bt, L, dk)
            kh = k_flat[:, lo:lo + dk].reshape(Bt, Lk, dk)
            vh = v_flat[:, lo:lo + dk].reshape(Bt, Lk, dk)
            s = jnp.einsum("bqd,bkd->bqk", qh, kh,
                           preferred_element_type=jnp.float32)        # [Bt, L, Lk]
            s = s - jnp.max(s, axis=-1, keepdims=True)
            e = jnp.exp(s)
            a = e * pl.reciprocal(jnp.sum(e, axis=-1, keepdims=True), approx=True)
            ctx_heads.append(
                jnp.einsum("bqk,bkd->bqd", a.astype(cd), vh,
                           preferred_element_type=jnp.float32))        # [Bt, L, dk]
        if concat_heads:
            # Lane-dense merge -> one dense [N, D] x [D, D] output projection.
            ctx = jnp.concatenate(ctx_heads, axis=-1).reshape(N, D).astype(cd)
            o = jnp.dot(ctx, wo, preferred_element_type=jnp.float32)
        else:
            # Fallback (older Mosaic: no minor-dim concat): accumulate per-head
            # output projections.  Same FLOPs, lower MXU K-fill.
            o = jnp.zeros((N, D), jnp.float32)
            for h, c in enumerate(ctx_heads):
                o = o + jnp.dot(c.reshape(N, dk).astype(cd),
                                wo[h * dk:(h + 1) * dk, :],
                                preferred_element_type=jnp.float32)
        return o + bo

    # ------------------- self-attention + residual + norm1 ------------------ #
    qkv = (jnp.dot(x.astype(cd), wqkv_s_ref[...],
                   preferred_element_type=jnp.float32) + bqkv_s_ref[...])   # [N, 3D]
    qkv_c = qkv.astype(cd)                                                  # single cast
    x1 = layer_norm(
        x + mha(qkv_c[:, :D], qkv_c[:, D:2 * D], qkv_c[:, 2 * D:], L,
                wo_s_ref[...], bo_s_ref[...]),
        g1_ref[...], be1_ref[...])

    # ------------------ cross-attention + residual + norm2 ------------------ #
    qc = (jnp.dot(x1.astype(cd), wq_c_ref[...],
                  preferred_element_type=jnp.float32) + bq_c_ref[...]).astype(cd)
    kv = (jnp.dot(cr, wkv_c_ref[...],
                  preferred_element_type=jnp.float32) + bkv_c_ref[...]).astype(cd)
    x2 = layer_norm(
        x1 + mha(qc, kv[:, :D], kv[:, D:], S, wo_c_ref[...], bo_c_ref[...]),
        g2_ref[...], be2_ref[...])

    # ---------------- FFN (1x1 convs) + residual + norm3 -------------------- #
    y = jnp.dot(x2.astype(cd), w1_ref[...],
                preferred_element_type=jnp.float32) + b1_ref[...]
    y = jnp.maximum(y, 0.0)                                   # activation='relu'
    y = jnp.dot(y.astype(cd), w2_ref[...],
                preferred_element_type=jnp.float32) + b2_ref[...]

    out = layer_norm(x2 + y, g3_ref[...], be3_ref[...])
    out_ref[...] = out.reshape(Bt, L, D).astype(out_ref.dtype)


# ------------------------------ helpers ------------------------------------ #

def _pick_batch_tile(batch, seq_len, target_rows=256, max_rows=2048):
    """Largest divisor of `batch` such that Bt*L stays VMEM-friendly, stopping
    once the MXU M-dim target (256 rows on v6e/v7x) is reached."""
    best = 1
    for bt in range(1, batch + 1):
        if batch % bt:
            continue
        if bt * seq_len <= max_rows:
            best = bt
        if bt * seq_len >= target_rows:
            break
    return best


def _vmem_limit_bytes():
    """Generation-aware scoped-VMEM cap: ~75% of physical VMEM
    (v5e/v6e 128 MiB -> 96 MiB; v7x 64 MiB -> 48 MiB). Safe fallback otherwise."""
    try:
        cap = int(getattr(pltpu.get_tpu_info(), "vmem_capacity_bytes", 64 << 20))
    except Exception:
        cap = 64 << 20
    return max(32 << 20, min(cap * 3 // 4, 100 << 20))


# ------------------------------ wrapper ------------------------------------ #

def decoder_layer(x, cross, params, *, n_heads, eps=1e-5,
                  compute_dtype=jnp.bfloat16, batch_tile=None):
    """x: [B, L, D], cross: [B, S, D] (f32). Returns [B, L, D] f32."""
    B, L, D = x.shape
    S = cross.shape[1]
    assert D % n_heads == 0
    dk = D // n_heads
    d_ff = params["w1"].shape[1]
    scale = 1.0 / math.sqrt(dk)
    cd = compute_dtype
    f32 = jnp.float32

    Bt = batch_tile or _pick_batch_tile(B, L)
    assert B % Bt == 0

    # One-time host-side weight prep: fuse projections, fold the 1/sqrt(dk)
    # attention scale into the Q projections, cast matmul weights to `cd`.
    wqkv_s = jnp.concatenate(
        [params["wq_s"] * scale, params["wk_s"], params["wv_s"]], axis=1).astype(cd)
    bqkv_s = jnp.concatenate(
        [params["bq_s"] * scale, params["bk_s"], params["bv_s"]], axis=1).astype(f32)
    wkv_c = jnp.concatenate([params["wk_c"], params["wv_c"]], axis=1).astype(cd)
    bkv_c = jnp.concatenate([params["bk_c"], params["bv_c"]], axis=1).astype(f32)

    inputs = (
        x, cross,
        wqkv_s, bqkv_s,
        params["wo_s"].astype(cd), params["bo_s"].astype(f32),
        params["g1"].astype(f32), params["be1"].astype(f32),
        (params["wq_c"] * scale).astype(cd), (params["bq_c"] * scale).astype(f32),
        wkv_c, bkv_c,
        params["wo_c"].astype(cd), params["bo_c"].astype(f32),
        params["g2"].astype(f32), params["be2"].astype(f32),
        params["w1"].astype(cd), params["b1"].astype(f32),
        params["w2"].astype(cd), params["b2"].astype(f32),
        params["g3"].astype(f32), params["be3"].astype(f32),
    )

    # Advisory cost estimate for XLA's scheduler.
    N, Ns = B * L, B * S
    flops = int(2 * N * D * 3 * D          # fused self QKV
                + 2 * N * D * D * 3        # self out, cross Q, cross out
                + 2 * Ns * D * 2 * D       # fused cross KV
                + 4 * N * D * d_ff         # FFN
                + 4 * N * D * (L + S))     # attention scores + context
    transcendentals = int(B * n_heads * L * (L + S) + 6 * N)
    bytes_accessed = int(sum(a.size * a.dtype.itemsize for a in inputs)
                         + N * D * 4)

    def build(single_buffer_weights, concat_heads):
        wkw = {}
        if single_buffer_weights and hasattr(pl, "Buffered"):
            # Weights have a constant index_map (never re-fetched): single buffer.
            wkw["pipeline_mode"] = pl.Buffered(1)

        def wspec(shape):
            zeros = (0,) * len(shape)
            return pl.BlockSpec(shape, lambda b, _z=zeros: _z, **wkw)

        in_specs = [
            pl.BlockSpec((Bt, L, D), lambda b: (b, 0, 0)),      # x
            pl.BlockSpec((Bt, S, D), lambda b: (b, 0, 0)),      # cross
            wspec((D, 3 * D)), wspec((1, 3 * D)),
            wspec((D, D)), wspec((1, D)),
            wspec((1, D)), wspec((1, D)),
            wspec((D, D)), wspec((1, D)),
            wspec((D, 2 * D)), wspec((1, 2 * D)),
            wspec((D, D)), wspec((1, D)),
            wspec((1, D)), wspec((1, D)),
            wspec((D, d_ff)), wspec((1, d_ff)),
            wspec((d_ff, D)), wspec((1, D)),
            wspec((1, D)), wspec((1, D)),
        ]
        kernel = functools.partial(_decoder_layer_kernel, n_heads=n_heads,
                                   eps=eps, concat_heads=concat_heads)
        return pl.pallas_call(
            kernel,
            out_shape=jax.ShapeDtypeStruct((B, L, D), jnp.float32),
            grid=(B // Bt,),
            in_specs=in_specs,
            out_specs=pl.BlockSpec((Bt, L, D), lambda b: (b, 0, 0)),
            compiler_params=pltpu.CompilerParams(
                dimension_semantics=("parallel",),
                vmem_limit_bytes=_vmem_limit_bytes(),
            ),
            cost_estimate=pl.CostEstimate(
                flops=flops, transcendentals=transcendentals,
                bytes_accessed=bytes_accessed),
        )

    # Prefer (single-buffered weights, dense head-merge); degrade gracefully on
    # JAX/Mosaic builds that reject either feature so the kernel always runs.
    last_err = None
    for sb in (True, False):
        for cc in (True, False):
            try:
                return build(sb, cc)(*inputs)
            except Exception as e:  # lowering/compile rejection -> try next config
                last_err = e
    raise last_err


# ------------------------- pure-JAX reference ------------------------------ #

def decoder_layer_ref(x, cross, params, *, n_heads, eps=1e-5):
    def mha(q_in, kv_in, p):
        B, Lq, D = q_in.shape
        S = kv_in.shape[1]
        dk = D // n_heads
        q = q_in @ p["wq"] + p["bq"]
        k = kv_in @ p["wk"] + p["bk"]
        v = kv_in @ p["wv"] + p["bv"]
        qh = q.reshape(B, Lq, n_heads, dk).transpose(0, 2, 1, 3)
        kh = k.reshape(B, S, n_heads, dk).transpose(0, 2, 1, 3)
        vh = v.reshape(B, S, n_heads, dk).transpose(0, 2, 1, 3)
        s = jnp.einsum("bhqd,bhkd->bhqk", qh, kh) / math.sqrt(dk)
        a = jax.nn.softmax(s, axis=-1)
        ctx = jnp.einsum("bhqk,bhkd->bhqd", a, vh).transpose(0, 2, 1, 3).reshape(B, Lq, D)
        return ctx @ p["wo"] + p["bo"]

    def ln(z, g, b):
        mu = jnp.mean(z, axis=-1, keepdims=True)
        var = jnp.mean(jnp.square(z - mu), axis=-1, keepdims=True)
        return (z - mu) * jax.lax.rsqrt(var + eps) * g + b

    sp = {k: params[k + "_s"] for k in ("wq", "wk", "wv", "wo", "bq", "bk", "bv", "bo")}
    cp = {k: params[k + "_c"] for k in ("wq", "wk", "wv", "wo", "bq", "bk", "bv", "bo")}

    x1 = ln(x + mha(x, x, sp), params["g1"], params["be1"])
    x2 = ln(x1 + mha(x1, cross, cp), params["g2"], params["be2"])
    y = jnp.maximum(x2 @ params["w1"] + params["b1"], 0.0) @ params["w2"] + params["b2"]
    return ln(x2 + y, params["g3"], params["be3"])


# --------------------------------- main ------------------------------------ #

if __name__ == "__main__":
    B, L, S, D, H = 2, 8, 16, 32, 4
    d_ff = 4 * D
    f32 = jnp.float32

    names_shapes = [
        ("wq_s", (D, D)), ("wk_s", (D, D)), ("wv_s", (D, D)), ("wo_s", (D, D)),
        ("bq_s", (1, D)), ("bk_s", (1, D)), ("bv_s", (1, D)), ("bo_s", (1, D)),
        ("wq_c", (D, D)), ("wk_c", (D, D)), ("wv_c", (D, D)), ("wo_c", (D, D)),
        ("bq_c", (1, D)), ("bk_c", (1, D)), ("bv_c", (1, D)), ("bo_c", (1, D)),
        ("w1", (D, d_ff)), ("b1", (1, d_ff)),
        ("w2", (d_ff, D)), ("b2", (1, D)),
    ]
    keys = jax.random.split(jax.random.PRNGKey(0), len(names_shapes) + 2)
    params = {}
    for (name, shape), k in zip(names_shapes, keys[:len(names_shapes)]):
        std = 0.05 if name.startswith("w") else 0.01
        params[name] = jax.random.normal(k, shape, f32) * std
    for n in ("g1", "g2", "g3"):
        params[n] = jnp.ones((1, D), f32)
    for n in ("be1", "be2", "be3"):
        params[n] = jnp.zeros((1, D), f32)

    x = jax.random.normal(keys[-2], (B, L, D), f32)
    cross = jax.random.normal(keys[-1], (B, S, D), f32)

    ref = decoder_layer_ref(x, cross, params, n_heads=H)

    # f32 compute path — near-exact vs. reference (tolerance covers approx recip).
    out_f32 = jax.block_until_ready(
        decoder_layer(x, cross, params, n_heads=H, compute_dtype=jnp.float32))
    assert jnp.allclose(out_f32, ref, atol=2e-3, rtol=2e-3), "f32 output mismatch"

    # bf16 matmul path (MXU-native on v5e/v6e/v7x), f32 accumulation — looser tol.
    out_bf16 = jax.block_until_ready(
        decoder_layer(x, cross, params, n_heads=H, compute_dtype=jnp.bfloat16))
    assert jnp.allclose(out_bf16, ref, atol=5e-2, rtol=5e-2), "bf16 output mismatch"

    print("KERNEL_OK")
</pallas_src>

<mosaic_0001>
module attributes {stable_mosaic.version = 11 : i64} {
  func.func @_decoder_layer_kernel(%arg0: i32, %arg1: memref<2x8x32xf32, #tpu.memory_space<vmem>>, %arg2: memref<2x16x32xf32, #tpu.memory_space<vmem>>, %arg3: memref<32x96xf32, #tpu.memory_space<vmem>>, %arg4: memref<1x96xf32, #tpu.memory_space<vmem>>, %arg5: memref<32x32xf32, #tpu.memory_space<vmem>>, %arg6: memref<1x32xf32, #tpu.memory_space<vmem>>, %arg7: memref<1x32xf32, #tpu.memory_space<vmem>>, %arg8: memref<1x32xf32, #tpu.memory_space<vmem>>, %arg9: memref<32x32xf32, #tpu.memory_space<vmem>>, %arg10: memref<1x32xf32, #tpu.memory_space<vmem>>, %arg11: memref<32x64xf32, #tpu.memory_space<vmem>>, %arg12: memref<1x64xf32, #tpu.memory_space<vmem>>, %arg13: memref<32x32xf32, #tpu.memory_space<vmem>>, %arg14: memref<1x32xf32, #tpu.memory_space<vmem>>, %arg15: memref<1x32xf32, #tpu.memory_space<vmem>>, %arg16: memref<1x32xf32, #tpu.memory_space<vmem>>, %arg17: memref<32x128xf32, #tpu.memory_space<vmem>>, %arg18: memref<1x128xf32, #tpu.memory_space<vmem>>, %arg19: memref<128x32xf32, #tpu.memory_space<vmem>>, %arg20: memref<1x32xf32, #tpu.memory_space<vmem>>, %arg21: memref<1x32xf32, #tpu.memory_space<vmem>>, %arg22: memref<1x32xf32, #tpu.memory_space<vmem>>, %arg23: memref<2x8x32xf32, #tpu.memory_space<vmem>>) attributes {dimension_semantics = [#tpu.dimension_semantics<parallel>], iteration_bounds = array<i64: 1>, scalar_prefetch = 0 : i64, scratch_operands = 0 : i64, tpu.core_type = #tpu.core_type<tc>, window_params = [{transform_indices = @transform_0, window_bounds = array<i64: 2, 8, 32>}, {transform_indices = @transform_1, window_bounds = array<i64: 2, 16, 32>}, {pipeline_mode = #tpu.pipeline_mode<synchronous>, transform_indices = @transform_2, window_bounds = array<i64: 32, 96>}, {pipeline_mode = #tpu.pipeline_mode<synchronous>, transform_indices = @transform_3, window_bounds = array<i64: 1, 96>}, {pipeline_mode = #tpu.pipeline_mode<synchronous>, transform_indices = @transform_4, window_bounds = array<i64: 32, 32>}, {pipeline_mode = #tpu.pipeline_mode<synchronous>, transform_indices = @transform_5, window_bounds = array<i64: 1, 32>}, {pipeline_mode = #tpu.pipeline_mode<synchronous>, transform_indices = @transform_6, window_bounds = array<i64: 1, 32>}, {pipeline_mode = #tpu.pipeline_mode<synchronous>, transform_indices = @transform_7, window_bounds = array<i64: 1, 32>}, {pipeline_mode = #tpu.pipeline_mode<synchronous>, transform_indices = @transform_8, window_bounds = array<i64: 32, 32>}, {pipeline_mode = #tpu.pipeline_mode<synchronous>, transform_indices = @transform_9, window_bounds = array<i64: 1, 32>}, {pipeline_mode = #tpu.pipeline_mode<synchronous>, transform_indices = @transform_10, window_bounds = array<i64: 32, 64>}, {pipeline_mode = #tpu.pipeline_mode<synchronous>, transform_indices = @transform_11, window_bounds = array<i64: 1, 64>}, {pipeline_mode = #tpu.pipeline_mode<synchronous>, transform_indices = @transform_12, window_bounds = array<i64: 32, 32>}, {pipeline_mode = #tpu.pipeline_mode<synchronous>, transform_indices = @transform_13, window_bounds = array<i64: 1, 32>}, {pipeline_mode = #tpu.pipeline_mode<synchronous>, transform_indices = @transform_14, window_bounds = array<i64: 1, 32>}, {pipeline_mode = #tpu.pipeline_mode<synchronous>, transform_indices = @transform_15, window_bounds = array<i64: 1, 32>}, {pipeline_mode = #tpu.pipeline_mode<synchronous>, transform_indices = @transform_16, window_bounds = array<i64: 32, 128>}, {pipeline_mode = #tpu.pipeline_mode<synchronous>, transform_indices = @transform_17, window_bounds = array<i64: 1, 128>}, {pipeline_mode = #tpu.pipeline_mode<synchronous>, transform_indices = @transform_18, window_bounds = array<i64: 128, 32>}, {pipeline_mode = #tpu.pipeline_mode<synchronous>, transform_indices = @transform_19, window_bounds = array<i64: 1, 32>}, {pipeline_mode = #tpu.pipeline_mode<synchronous>, transform_indices = @transform_20, window_bounds = array<i64: 1, 32>}, {pipeline_mode = #tpu.pipeline_mode<synchronous>, transform_indices = @transform_21, window_bounds = array<i64: 1, 32>}, {transform_indices = @transform_22, window_bounds = array<i64: 2, 8, 32>}]} {
    %c0 = arith.constant 0 : index
    %c0_0 = arith.constant 0 : index
    %c0_1 = arith.constant 0 : index
    %0 = vector.load %arg1[%c0, %c0_0, %c0_1] : memref<2x8x32xf32, #tpu.memory_space<vmem>>, vector<2x8x32xf32>
    %1 = vector.shape_cast %0 : vector<2x8x32xf32> to vector<16x32xf32>
    %c0_2 = arith.constant 0 : index
    %c0_3 = arith.constant 0 : index
    %c0_4 = arith.constant 0 : index
    %2 = vector.load %arg2[%c0_2, %c0_3, %c0_4] : memref<2x16x32xf32, #tpu.memory_space<vmem>>, vector<2x16x32xf32>
    %3 = vector.shape_cast %2 : vector<2x16x32xf32> to vector<32x32xf32>
    %c0_5 = arith.constant 0 : index
    %c0_6 = arith.constant 0 : index
    %4 = vector.load %arg3[%c0_5, %c0_6] : memref<32x96xf32, #tpu.memory_space<vmem>>, vector<32x96xf32>
    %cst = arith.constant dense<0.000000e+00> : vector<16x96xf32>
    %5 = tpu.matmul %1, %4, %cst {dimension_numbers = #tpu.dot_dimension_numbers<[1], [0], [0], [1], [0, 0, 1, 1], [], []>} : vector<16x32xf32>, vector<32x96xf32>, vector<16x96xf32> -> vector<16x96xf32>
    %c0_7 = arith.constant 0 : index
    %c0_8 = arith.constant 0 : index
    %6 = vector.load %arg4[%c0_7, %c0_8] : memref<1x96xf32, #tpu.memory_space<vmem>>, vector<1x96xf32>
    %7 = vector.broadcast %6 : vector<1x96xf32> to vector<16x96xf32>
    %8 = arith.addf %5, %7 : vector<16x96xf32>
    %9 = vector.extract_strided_slice %8 {offsets = [0, 0], sizes = [16, 32], strides = [1, 1]} : vector<16x96xf32> to vector<16x32xf32>
    %10 = vector.extract_strided_slice %8 {offsets = [0, 32], sizes = [16, 32], strides = [1, 1]} : vector<16x96xf32> to vector<16x32xf32>
    %11 = vector.extract_strided_slice %8 {offsets = [0, 64], sizes = [16, 32], strides = [1, 1]} : vector<16x96xf32> to vector<16x32xf32>
    %c0_9 = arith.constant 0 : index
    %c0_10 = arith.constant 0 : index
    %12 = vector.load %arg5[%c0_9, %c0_10] : memref<32x32xf32, #tpu.memory_space<vmem>>, vector<32x32xf32>
    %c0_11 = arith.constant 0 : index
    %c0_12 = arith.constant 0 : index
    %13 = vector.load %arg6[%c0_11, %c0_12] : memref<1x32xf32, #tpu.memory_space<vmem>>, vector<1x32xf32>
    %14 = vector.extract_strided_slice %9 {offsets = [0, 0], sizes = [16, 8], strides = [1, 1]} : vector<16x32xf32> to vector<16x8xf32>
    %15 = vector.shape_cast %14 : vector<16x8xf32> to vector<2x8x8xf32>
    %16 = vector.extract_strided_slice %10 {offsets = [0, 0], sizes = [16, 8], strides = [1, 1]} : vector<16x32xf32> to vector<16x8xf32>
    %17 = vector.shape_cast %16 : vector<16x8xf32> to vector<2x8x8xf32>
    %18 = vector.extract_strided_slice %11 {offsets = [0, 0], sizes = [16, 8], strides = [1, 1]} : vector<16x32xf32> to vector<16x8xf32>
    %19 = vector.shape_cast %18 : vector<16x8xf32> to vector<2x8x8xf32>
    "tpu.trace_start"() <{level = 10 : i32, message = "bqd,bkd->bqk"}> : () -> ()
    %cst_13 = arith.constant dense<0.000000e+00> : vector<2x8x8xf32>
    %20 = tpu.matmul %15, %17, %cst_13 {dimension_numbers = #tpu.dot_dimension_numbers<[2], [2], [1], [1], [0, 0, 0, 1, 1, 1], [0], [0]>} : vector<2x8x8xf32>, vector<2x8x8xf32>, vector<2x8x8xf32> -> vector<2x8x8xf32>
    "tpu.trace_stop"() : () -> ()
    %cst_14 = arith.constant dense<0xFF800000> : vector<2x8xf32>
    %21 = vector.multi_reduction <maximumf>, %20, %cst_14 [2] : vector<2x8x8xf32> to vector<2x8xf32>
    %22 = vector.shape_cast %21 : vector<2x8xf32> to vector<2x8x1xf32>
    %23 = vector.broadcast %22 : vector<2x8x1xf32> to vector<2x8x8xf32>
    %24 = arith.subf %20, %23 : vector<2x8x8xf32>
    %25 = math.exp %24 : vector<2x8x8xf32>
    %cst_15 = arith.constant dense<0.000000e+00> : vector<2x8xf32>
    %26 = vector.multi_reduction <add>, %25, %cst_15 [2] : vector<2x8x8xf32> to vector<2x8xf32>
    %27 = vector.shape_cast %26 : vector<2x8xf32> to vector<2x8x1xf32>
    %28 = tpu.reciprocal %27 {approx = true} : vector<2x8x1xf32> -> vector<2x8x1xf32>
    %29 = vector.broadcast %28 : vector<2x8x1xf32> to vector<2x8x8xf32>
    %30 = arith.mulf %25, %29 : vector<2x8x8xf32>
    "tpu.trace_start"() <{level = 10 : i32, message = "bqk,bkd->bqd"}> : () -> ()
    %cst_16 = arith.constant dense<0.000000e+00> : vector<2x8x8xf32>
    %31 = tpu.matmul %30, %19, %cst_16 {dimension_numbers = #tpu.dot_dimension_numbers<[2], [1], [1], [2], [0, 0, 0, 1, 1, 2], [0], [0]>} : vector<2x8x8xf32>, vector<2x8x8xf32>, vector<2x8x8xf32> -> vector<2x8x8xf32>
    "tpu.trace_stop"() : () -> ()
    %32 = vector.extract_strided_slice %9 {offsets = [0, 8], sizes = [16, 8], strides = [1, 1]} : vector<16x32xf32> to vector<16x8xf32>
    %33 = vector.shape_cast %32 : vector<16x8xf32> to vector<2x8x8xf32>
    %34 = vector.extract_strided_slice %10 {offsets = [0, 8], sizes = [16, 8], strides = [1, 1]} : vector<16x32xf32> to vector<16x8xf32>
    %35 = vector.shape_cast %34 : vector<16x8xf32> to vector<2x8x8xf32>
    %36 = vector.extract_strided_slice %11 {offsets = [0, 8], sizes = [16, 8], strides = [1, 1]} : vector<16x32xf32> to vector<16x8xf32>
    %37 = vector.shape_cast %36 : vector<16x8xf32> to vector<2x8x8xf32>
    "tpu.trace_start"() <{level = 10 : i32, message = "bqd,bkd->bqk"}> : () -> ()
    %cst_17 = arith.constant dense<0.000000e+00> : vector<2x8x8xf32>
    %38 = tpu.matmul %33, %35, %cst_17 {dimension_numbers = #tpu.dot_dimension_numbers<[2], [2], [1], [1], [0, 0, 0, 1, 1, 1], [0], [0]>} : vector<2x8x8xf32>, vector<2x8x8xf32>, vector<2x8x8xf32> -> vector<2x8x8xf32>
    "tpu.trace_stop"() : () -> ()
    %cst_18 = arith.constant dense<0xFF800000> : vector<2x8xf32>
    %39 = vector.multi_reduction <maximumf>, %38, %cst_18 [2] : vector<2x8x8xf32> to vector<2x8xf32>
    %40 = vector.shape_cast %39 : vector<2x8xf32> to vector<2x8x1xf32>
    %41 = vector.broadcast %40 : vector<2x8x1xf32> to vector<2x8x8xf32>
    %42 = arith.subf %38, %41 : vector<2x8x8xf32>
    %43 = math.exp %42 : vector<2x8x8xf32>
    %cst_19 = arith.constant dense<0.000000e+00> : vector<2x8xf32>
    %44 = vector.multi_reduction <add>, %43, %cst_19 [2] : vector<2x8x8xf32> to vector<2x8xf32>
    %45 = vector.shape_cast %44 : vector<2x8xf32> to vector<2x8x1xf32>
    %46 = tpu.reciprocal %45 {approx = true} : vector<2x8x1xf32> -> vector<2x8x1xf32>
    %47 = vector.broadcast %46 : vector<2x8x1xf32> to vector<2x8x8xf32>
    %48 = arith.mulf %43, %47 : vector<2x8x8xf32>
    "tpu.trace_start"() <{level = 10 : i32, message = "bqk,bkd->bqd"}> : () -> ()
    %cst_20 = arith.constant dense<0.000000e+00> : vector<2x8x8xf32>
    %49 = tpu.matmul %48, %37, %cst_20 {dimension_numbers = #tpu.dot_dimension_numbers<[2], [1], [1], [2], [0, 0, 0, 1, 1, 2], [0], [0]>} : vector<2x8x8xf32>, vector<2x8x8xf32>, vector<2x8x8xf32> -> vector<2x8x8xf32>
    "tpu.trace_stop"() : () -> ()
    %50 = vector.extract_strided_slice %9 {offsets = [0, 16], sizes = [16, 8], strides = [1, 1]} : vector<16x32xf32> to vector<16x8xf32>
    %51 = vector.shape_cast %50 : vector<16x8xf32> to vector<2x8x8xf32>
    %52 = vector.extract_strided_slice %10 {offsets = [0, 16], sizes = [16, 8], strides = [1, 1]} : vector<16x32xf32> to vector<16x8xf32>
    %53 = vector.shape_cast %52 : vector<16x8xf32> to vector<2x8x8xf32>
    %54 = vector.extract_strided_slice %11 {offsets = [0, 16], sizes = [16, 8], strides = [1, 1]} : vector<16x32xf32> to vector<16x8xf32>
    %55 = vector.shape_cast %54 : vector<16x8xf32> to vector<2x8x8xf32>
    "tpu.trace_start"() <{level = 10 : i32, message = "bqd,bkd->bqk"}> : () -> ()
    %cst_21 = arith.constant dense<0.000000e+00> : vector<2x8x8xf32>
    %56 = tpu.matmul %51, %53, %cst_21 {dimension_numbers = #tpu.dot_dimension_numbers<[2], [2], [1], [1], [0, 0, 0, 1, 1, 1], [0], [0]>} : vector<2x8x8xf32>, vector<2x8x8xf32>, vector<2x8x8xf32> -> vector<2x8x8xf32>
    "tpu.trace_stop"() : () -> ()
    %cst_22 = arith.constant dense<0xFF800000> : vector<2x8xf32>
    %57 = vector.multi_reduction <maximumf>, %56, %cst_22 [2] : vector<2x8x8xf32> to vector<2x8xf32>
    %58 = vector.shape_cast %57 : vector<2x8xf32> to vector<2x8x1xf32>
    %59 = vector.broadcast %58 : vector<2x8x1xf32> to vector<2x8x8xf32>
    %60 = arith.subf %56, %59 : vector<2x8x8xf32>
    %61 = math.exp %60 : vector<2x8x8xf32>
    %cst_23 = arith.constant dense<0.000000e+00> : vector<2x8xf32>
    %62 = vector.multi_reduction <add>, %61, %cst_23 [2] : vector<2x8x8xf32> to vector<2x8xf32>
    %63 = vector.shape_cast %62 : vector<2x8xf32> to vector<2x8x1xf32>
    %64 = tpu.reciprocal %63 {approx = true} : vector<2x8x1xf32> -> vector<2x8x1xf32>
    %65 = vector.broadcast %64 : vector<2x8x1xf32> to vector<2x8x8xf32>
    %66 = arith.mulf %61, %65 : vector<2x8x8xf32>
    "tpu.trace_start"() <{level = 10 : i32, message = "bqk,bkd->bqd"}> : () -> ()
    %cst_24 = arith.constant dense<0.000000e+00> : vector<2x8x8xf32>
    %67 = tpu.matmul %66, %55, %cst_24 {dimension_numbers = #tpu.dot_dimension_numbers<[2], [1], [1], [2], [0, 0, 0, 1, 1, 2], [0], [0]>} : vector<2x8x8xf32>, vector<2x8x8xf32>, vector<2x8x8xf32> -> vector<2x8x8xf32>
    "tpu.trace_stop"() : () -> ()
    %68 = vector.extract_strided_slice %9 {offsets = [0, 24], sizes = [16, 8], strides = [1, 1]} : vector<16x32xf32> to vector<16x8xf32>
    %69 = vector.shape_cast %68 : vector<16x8xf32> to vector<2x8x8xf32>
    %70 = vector.extract_strided_slice %10 {offsets = [0, 24], sizes = [16, 8], strides = [1, 1]} : vector<16x32xf32> to vector<16x8xf32>
    %71 = vector.shape_cast %70 : vector<16x8xf32> to vector<2x8x8xf32>
    %72 = vector.extract_strided_slice %11 {offsets = [0, 24], sizes = [16, 8], strides = [1, 1]} : vector<16x32xf32> to vector<16x8xf32>
    %73 = vector.shape_cast %72 : vector<16x8xf32> to vector<2x8x8xf32>
    "tpu.trace_start"() <{level = 10 : i32, message = "bqd,bkd->bqk"}> : () -> ()
    %cst_25 = arith.constant dense<0.000000e+00> : vector<2x8x8xf32>
    %74 = tpu.matmul %69, %71, %cst_25 {dimension_numbers = #tpu.dot_dimension_numbers<[2], [2], [1], [1], [0, 0, 0, 1, 1, 1], [0], [0]>} : vector<2x8x8xf32>, vector<2x8x8xf32>, vector<2x8x8xf32> -> vector<2x8x8xf32>
    "tpu.trace_stop"() : () -> ()
    %cst_26 = arith.constant dense<0xFF800000> : vector<2x8xf32>
    %75 = vector.multi_reduction <maximumf>, %74, %cst_26 [2] : vector<2x8x8xf32> to vector<2x8xf32>
    %76 = vector.shape_cast %75 : vector<2x8xf32> to vector<2x8x1xf32>
    %77 = vector.broadcast %76 : vector<2x8x1xf32> to vector<2x8x8xf32>
    %78 = arith.subf %74, %77 : vector<2x8x8xf32>
    %79 = math.exp %78 : vector<2x8x8xf32>
    %cst_27 = arith.constant dense<0.000000e+00> : vector<2x8xf32>
    %80 = vector.multi_reduction <add>, %79, %cst_27 [2] : vector<2x8x8xf32> to vector<2x8xf32>
    %81 = vector.shape_cast %80 : vector<2x8xf32> to vector<2x8x1xf32>
    %82 = tpu.reciprocal %81 {approx = true} : vector<2x8x1xf32> -> vector<2x8x1xf32>
    %83 = vector.broadcast %82 : vector<2x8x1xf32> to vector<2x8x8xf32>
    %84 = arith.mulf %79, %83 : vector<2x8x8xf32>
    "tpu.trace_start"() <{level = 10 : i32, message = "bqk,bkd->bqd"}> : () -> ()
    %cst_28 = arith.constant dense<0.000000e+00> : vector<2x8x8xf32>
    %85 = tpu.matmul %84, %73, %cst_28 {dimension_numbers = #tpu.dot_dimension_numbers<[2], [1], [1], [2], [0, 0, 0, 1, 1, 2], [0], [0]>} : vector<2x8x8xf32>, vector<2x8x8xf32>, vector<2x8x8xf32> -> vector<2x8x8xf32>
    "tpu.trace_stop"() : () -> ()
    %86 = tpu.concatenate %31, %49, %67, %85 in 2 : vector<2x8x8xf32>, vector<2x8x8xf32>, vector<2x8x8xf32>, vector<2x8x8xf32> -> vector<2x8x32xf32>
    %87 = vector.shape_cast %86 : vector<2x8x32xf32> to vector<16x32xf32>
    %cst_29 = arith.constant dense<0.000000e+00> : vector<16x32xf32>
    %88 = tpu.matmul %87, %12, %cst_29 {dimension_numbers = #tpu.dot_dimension_numbers<[1], [0], [0], [1], [0, 0, 1, 1], [], []>} : vector<16x32xf32>, vector<32x32xf32>, vector<16x32xf32> -> vector<16x32xf32>
    %89 = vector.broadcast %13 : vector<1x32xf32> to vector<16x32xf32>
    %90 = arith.addf %88, %89 : vector<16x32xf32>
    %91 = arith.addf %1, %90 : vector<16x32xf32>
    %c0_30 = arith.constant 0 : index
    %c0_31 = arith.constant 0 : index
    %92 = vector.load %arg7[%c0_30, %c0_31] : memref<1x32xf32, #tpu.memory_space<vmem>>, vector<1x32xf32>
    %c0_32 = arith.constant 0 : index
    %c0_33 = arith.constant 0 : index
    %93 = vector.load %arg8[%c0_32, %c0_33] : memref<1x32xf32, #tpu.memory_space<vmem>>, vector<1x32xf32>
    %cst_34 = arith.constant dense<0.000000e+00> : vector<16xf32>
    %94 = vector.multi_reduction <add>, %91, %cst_34 [1] : vector<16x32xf32> to vector<16xf32>
    %95 = vector.shape_cast %94 : vector<16xf32> to vector<16x1xf32>
    %cst_35 = arith.constant 3.200000e+01 : f32
    %96 = vector.broadcast %cst_35 : f32 to vector<16x1xf32>
    %97 = arith.divf %95, %96 : vector<16x1xf32>
    %98 = vector.broadcast %97 : vector<16x1xf32> to vector<16x32xf32>
    %99 = arith.subf %91, %98 : vector<16x32xf32>
    %100 = arith.mulf %99, %99 : vector<16x32xf32>
    %cst_36 = arith.constant dense<0.000000e+00> : vector<16xf32>
    %101 = vector.multi_reduction <add>, %100, %cst_36 [1] : vector<16x32xf32> to vector<16xf32>
    %102 = vector.shape_cast %101 : vector<16xf32> to vector<16x1xf32>
    %cst_37 = arith.constant 3.200000e+01 : f32
    %103 = vector.broadcast %cst_37 : f32 to vector<16x1xf32>
    %104 = arith.divf %102, %103 : vector<16x1xf32>
    %105 = vector.broadcast %97 : vector<16x1xf32> to vector<16x32xf32>
    %106 = arith.subf %91, %105 : vector<16x32xf32>
    %cst_38 = arith.constant 9.99999974E-6 : f32
    %107 = vector.broadcast %cst_38 : f32 to vector<16x1xf32>
    %108 = arith.addf %104, %107 : vector<16x1xf32>
    %109 = math.rsqrt %108 : vector<16x1xf32>
    %110 = vector.broadcast %109 : vector<16x1xf32> to vector<16x32xf32>
    %111 = arith.mulf %106, %110 : vector<16x32xf32>
    %112 = vector.broadcast %92 : vector<1x32xf32> to vector<16x32xf32>
    %113 = arith.mulf %111, %112 : vector<16x32xf32>
    %114 = vector.broadcast %93 : vector<1x32xf32> to vector<16x32xf32>
    %115 = arith.addf %113, %114 : vector<16x32xf32>
    %c0_39 = arith.constant 0 : index
    %c0_40 = arith.constant 0 : index
    %116 = vector.load %arg9[%c0_39, %c0_40] : memref<32x32xf32, #tpu.memory_space<vmem>>, vector<32x32xf32>
    %cst_41 = arith.constant dense<0.000000e+00> : vector<16x32xf32>
    %117 = tpu.matmul %115, %116, %cst_41 {dimension_numbers = #tpu.dot_dimension_numbers<[1], [0], [0], [1], [0, 0, 1, 1], [], []>} : vector<16x32xf32>, vector<32x32xf32>, vector<16x32xf32> -> vector<16x32xf32>
    %c0_42 = arith.constant 0 : index
    %c0_43 = arith.constant 0 : index
    %118 = vector.load %arg10[%c0_42, %c0_43] : memref<1x32xf32, #tpu.memory_space<vmem>>, vector<1x32xf32>
    %119 = vector.broadcast %118 : vector<1x32xf32> to vector<16x32xf32>
    %120 = arith.addf %117, %119 : vector<16x32xf32>
    %c0_44 = arith.constant 0 : index
    %c0_45 = arith.constant 0 : index
    %121 = vector.load %arg11[%c0_44, %c0_45] : memref<32x64xf32, #tpu.memory_space<vmem>>, vector<32x64xf32>
    %cst_46 = arith.constant dense<0.000000e+00> : vector<32x64xf32>
    %122 = tpu.matmul %3, %121, %cst_46 {dimension_numbers = #tpu.dot_dimension_numbers<[1], [0], [0], [1], [0, 0, 1, 1], [], []>} : vector<32x32xf32>, vector<32x64xf32>, vector<32x64xf32> -> vector<32x64xf32>
    %c0_47 = arith.constant 0 : index
    %c0_48 = arith.constant 0 : index
    %123 = vector.load %arg12[%c0_47, %c0_48] : memref<1x64xf32, #tpu.memory_space<vmem>>, vector<1x64xf32>
    %124 = vector.broadcast %123 : vector<1x64xf32> to vector<32x64xf32>
    %125 = arith.addf %122, %124 : vector<32x64xf32>
    %126 = vector.extract_strided_slice %125 {offsets = [0, 0], sizes = [32, 32], strides = [1, 1]} : vector<32x64xf32> to vector<32x32xf32>
    %127 = vector.extract_strided_slice %125 {offsets = [0, 32], sizes = [32, 32], strides = [1, 1]} : vector<32x64xf32> to vector<32x32xf32>
    %c0_49 = arith.constant 0 : index
    %c0_50 = arith.constant 0 : index
    %128 = vector.load %arg13[%c0_49, %c0_50] : memref<32x32xf32, #tpu.memory_space<vmem>>, vector<32x32xf32>
    %c0_51 = arith.constant 0 : index
    %c0_52 = arith.constant 0 : index
    %129 = vector.load %arg14[%c0_51, %c0_52] : memref<1x32xf32, #tpu.memory_space<vmem>>, vector<1x32xf32>
    %130 = vector.extract_strided_slice %120 {offsets = [0, 0], sizes = [16, 8], strides = [1, 1]} : vector<16x32xf32> to vector<16x8xf32>
    %131 = vector.shape_cast %130 : vector<16x8xf32> to vector<2x8x8xf32>
    %132 = vector.extract_strided_slice %126 {offsets = [0, 0], sizes = [32, 8], strides = [1, 1]} : vector<32x32xf32> to vector<32x8xf32>
    %133 = vector.shape_cast %132 : vector<32x8xf32> to vector<2x16x8xf32>
    %134 = vector.extract_strided_slice %127 {offsets = [0, 0], sizes = [32, 8], strides = [1, 1]} : vector<32x32xf32> to vector<32x8xf32>
    %135 = vector.shape_cast %134 : vector<32x8xf32> to vector<2x16x8xf32>
    "tpu.trace_start"() <{level = 10 : i32, message = "bqd,bkd->bqk"}> : () -> ()
    %cst_53 = arith.constant dense<0.000000e+00> : vector<2x8x16xf32>
    %136 = tpu.matmul %131, %133, %cst_53 {dimension_numbers = #tpu.dot_dimension_numbers<[2], [2], [1], [1], [0, 0, 0, 1, 1, 1], [0], [0]>} : vector<2x8x8xf32>, vector<2x16x8xf32>, vector<2x8x16xf32> -> vector<2x8x16xf32>
    "tpu.trace_stop"() : () -> ()
    %cst_54 = arith.constant dense<0xFF800000> : vector<2x8xf32>
    %137 = vector.multi_reduction <maximumf>, %136, %cst_54 [2] : vector<2x8x16xf32> to vector<2x8xf32>
    %138 = vector.shape_cast %137 : vector<2x8xf32> to vector<2x8x1xf32>
    %139 = vector.broadcast %138 : vector<2x8x1xf32> to vector<2x8x16xf32>
    %140 = arith.subf %136, %139 : vector<2x8x16xf32>
    %141 = math.exp %140 : vector<2x8x16xf32>
    %cst_55 = arith.constant dense<0.000000e+00> : vector<2x8xf32>
    %142 = vector.multi_reduction <add>, %141, %cst_55 [2] : vector<2x8x16xf32> to vector<2x8xf32>
    %143 = vector.shape_cast %142 : vector<2x8xf32> to vector<2x8x1xf32>
    %144 = tpu.reciprocal %143 {approx = true} : vector<2x8x1xf32> -> vector<2x8x1xf32>
    %145 = vector.broadcast %144 : vector<2x8x1xf32> to vector<2x8x16xf32>
    %146 = arith.mulf %141, %145 : vector<2x8x16xf32>
    "tpu.trace_start"() <{level = 10 : i32, message = "bqk,bkd->bqd"}> : () -> ()
    %cst_56 = arith.constant dense<0.000000e+00> : vector<2x8x8xf32>
    %147 = tpu.matmul %146, %135, %cst_56 {dimension_numbers = #tpu.dot_dimension_numbers<[2], [1], [1], [2], [0, 0, 0, 1, 1, 2], [0], [0]>} : vector<2x8x16xf32>, vector<2x16x8xf32>, vector<2x8x8xf32> -> vector<2x8x8xf32>
    "tpu.trace_stop"() : () -> ()
    %148 = vector.extract_strided_slice %120 {offsets = [0, 8], sizes = [16, 8], strides = [1, 1]} : vector<16x32xf32> to vector<16x8xf32>
    %149 = vector.shape_cast %148 : vector<16x8xf32> to vector<2x8x8xf32>
    %150 = vector.extract_strided_slice %126 {offsets = [0, 8], sizes = [32, 8], strides = [1, 1]} : vector<32x32xf32> to vector<32x8xf32>
    %151 = vector.shape_cast %150 : vector<32x8xf32> to vector<2x16x8xf32>
    %152 = vector.extract_strided_slice %127 {offsets = [0, 8], sizes = [32, 8], strides = [1, 1]} : vector<32x32xf32> to vector<32x8xf32>
    %153 = vector.shape_cast %152 : vector<32x8xf32> to vector<2x16x8xf32>
    "tpu.trace_start"() <{level = 10 : i32, message = "bqd,bkd->bqk"}> : () -> ()
    %cst_57 = arith.constant dense<0.000000e+00> : vector<2x8x16xf32>
    %154 = tpu.matmul %149, %151, %cst_57 {dimension_numbers = #tpu.dot_dimension_numbers<[2], [2], [1], [1], [0, 0, 0, 1, 1, 1], [0], [0]>} : vector<2x8x8xf32>, vector<2x16x8xf32>, vector<2x8x16xf32> -> vector<2x8x16xf32>
    "tpu.trace_stop"() : () -> ()
    %cst_58 = arith.constant dense<0xFF800000> : vector<2x8xf32>
    %155 = vector.multi_reduction <maximumf>, %154, %cst_58 [2] : vector<2x8x16xf32> to vector<2x8xf32>
    %156 = vector.shape_cast %155 : vector<2x8xf32> to vector<2x8x1xf32>
    %157 = vector.broadcast %156 : vector<2x8x1xf32> to vector<2x8x16xf32>
    %158 = arith.subf %154, %157 : vector<2x8x16xf32>
    %159 = math.exp %158 : vector<2x8x16xf32>
    %cst_59 = arith.constant dense<0.000000e+00> : vector<2x8xf32>
    %160 = vector.multi_reduction <add>, %159, %cst_59 [2] : vector<2x8x16xf32> to vector<2x8xf32>
    %161 = vector.shape_cast %160 : vector<2x8xf32> to vector<2x8x1xf32>
    %162 = tpu.reciprocal %161 {approx = true} : vector<2x8x1xf32> -> vector<2x8x1xf32>
    %163 = vector.broadcast %162 : vector<2x8x1xf32> to vector<2x8x16xf32>
    %164 = arith.mulf %159, %163 : vector<2x8x16xf32>
    "tpu.trace_start"() <{level = 10 : i32, message = "bqk,bkd->bqd"}> : () -> ()
    %cst_60 = arith.constant dense<0.000000e+00> : vector<2x8x8xf32>
    %165 = tpu.matmul %164, %153, %cst_60 {dimension_numbers = #tpu.dot_dimension_numbers<[2], [1], [1], [2], [0, 0, 0, 1, 1, 2], [0], [0]>} : vector<2x8x16xf32>, vector<2x16x8xf32>, vector<2x8x8xf32> -> vector<2x8x8xf32>
    "tpu.trace_stop"() : () -> ()
    %166 = vector.extract_strided_slice %120 {offsets = [0, 16], sizes = [16, 8], strides = [1, 1]} : vector<16x32xf32> to vector<16x8xf32>
    %167 = vector.shape_cast %166 : vector<16x8xf32> to vector<2x8x8xf32>
    %168 = vector.extract_strided_slice %126 {offsets = [0, 16], sizes = [32, 8], strides = [1, 1]} : vector<32x32xf32> to vector<32x8xf32>
    %169 = vector.shape_cast %168 : vector<32x8xf32> to vector<2x16x8xf32>
    %170 = vector.extract_strided_slice %127 {offsets = [0, 16], sizes = [32, 8], strides = [1, 1]} : vector<32x32xf32> to vector<32x8xf32>
    %171 = vector.shape_cast %170 : vector<32x8xf32> to vector<2x16x8xf32>
    "tpu.trace_start"() <{level = 10 : i32, message = "bqd,bkd->bqk"}> : () -> ()
    %cst_61 = arith.constant dense<0.000000e+00> : vector<2x8x16xf32>
    %172 = tpu.matmul %167, %169, %cst_61 {dimension_numbers = #tpu.dot_dimension_numbers<[2], [2], [1], [1], [0, 0, 0, 1, 1, 1], [0], [0]>} : vector<2x8x8xf32>, vector<2x16x8xf32>, vector<2x8x16xf32> -> vector<2x8x16xf32>
    "tpu.trace_stop"() : () -> ()
    %cst_62 = arith.constant dense<0xFF800000> : vector<2x8xf32>
    %173 = vector.multi_reduction <maximumf>, %172, %cst_62 [2] : vector<2x8x16xf32> to vector<2x8xf32>
    %174 = vector.shape_cast %173 : vector<2x8xf32> to vector<2x8x1xf32>
    %175 = vector.broadcast %174 : vector<2x8x1xf32> to vector<2x8x16xf32>
    %176 = arith.subf %172, %175 : vector<2x8x16xf32>
    %177 = math.exp %176 : vector<2x8x16xf32>
    %cst_63 = arith.constant dense<0.000000e+00> : vector<2x8xf32>
    %178 = vector.multi_reduction <add>, %177, %cst_63 [2] : vector<2x8x16xf32> to vector<2x8xf32>
    %179 = vector.shape_cast %178 : vector<2x8xf32> to vector<2x8x1xf32>
    %180 = tpu.reciprocal %179 {approx = true} : vector<2x8x1xf32> -> vector<2x8x1xf32>
    %181 = vector.broadcast %180 : vector<2x8x1xf32> to vector<2x8x16xf32>
    %182 = arith.mulf %177, %181 : vector<2x8x16xf32>
    "tpu.trace_start"() <{level = 10 : i32, message = "bqk,bkd->bqd"}> : () -> ()
    %cst_64 = arith.constant dense<0.000000e+00> : vector<2x8x8xf32>
    %183 = tpu.matmul %182, %171, %cst_64 {dimension_numbers = #tpu.dot_dimension_numbers<[2], [1], [1], [2], [0, 0, 0, 1, 1, 2], [0], [0]>} : vector<2x8x16xf32>, vector<2x16x8xf32>, vector<2x8x8xf32> -> vector<2x8x8xf32>
    "tpu.trace_stop"() : () -> ()
    %184 = vector.extract_strided_slice %120 {offsets = [0, 24], sizes = [16, 8], strides = [1, 1]} : vector<16x32xf32> to vector<16x8xf32>
    %185 = vector.shape_cast %184 : vector<16x8xf32> to vector<2x8x8xf32>
    %186 = vector.extract_strided_slice %126 {offsets = [0, 24], sizes = [32, 8], strides = [1, 1]} : vector<32x32xf32> to vector<32x8xf32>
    %187 = vector.shape_cast %186 : vector<32x8xf32> to vector<2x16x8xf32>
    %188 = vector.extract_strided_slice %127 {offsets = [0, 24], sizes = [32, 8], strides = [1, 1]} : vector<32x32xf32> to vector<32x8xf32>
    %189 = vector.shape_cast %188 : vector<32x8xf32> to vector<2x16x8xf32>
    "tpu.trace_start"() <{level = 10 : i32, message = "bqd,bkd->bqk"}> : () -> ()
    %cst_65 = arith.constant dense<0.000000e+00> : vector<2x8x16xf32>
    %190 = tpu.matmul %185, %187, %cst_65 {dimension_numbers = #tpu.dot_dimension_numbers<[2], [2], [1], [1], [0, 0, 0, 1, 1, 1], [0], [0]>} : vector<2x8x8xf32>, vector<2x16x8xf32>, vector<2x8x16xf32> -> vector<2x8x16xf32>
    "tpu.trace_stop"() : () -> ()
    %cst_66 = arith.constant dense<0xFF800000> : vector<2x8xf32>
    %191 = vector.multi_reduction <maximumf>, %190, %cst_66 [2] : vector<2x8x16xf32> to vector<2x8xf32>
    %192 = vector.shape_cast %191 : vector<2x8xf32> to vector<2x8x1xf32>
    %193 = vector.broadcast %192 : vector<2x8x1xf32> to vector<2x8x16xf32>
    %194 = arith.subf %190, %193 : vector<2x8x16xf32>
    %195 = math.exp %194 : vector<2x8x16xf32>
    %cst_67 = arith.constant dense<0.000000e+00> : vector<2x8xf32>
    %196 = vector.multi_reduction <add>, %195, %cst_67 [2] : vector<2x8x16xf32> to vector<2x8xf32>
    %197 = vector.shape_cast %196 : vector<2x8xf32> to vector<2x8x1xf32>
    %198 = tpu.reciprocal %197 {approx = true} : vector<2x8x1xf32> -> vector<2x8x1xf32>
    %199 = vector.broadcast %198 : vector<2x8x1xf32> to vector<2x8x16xf32>
    %200 = arith.mulf %195, %199 : vector<2x8x16xf32>
    "tpu.trace_start"() <{level = 10 : i32, message = "bqk,bkd->bqd"}> : () -> ()
    %cst_68 = arith.constant dense<0.000000e+00> : vector<2x8x8xf32>
    %201 = tpu.matmul %200, %189, %cst_68 {dimension_numbers = #tpu.dot_dimension_numbers<[2], [1], [1], [2], [0, 0, 0, 1, 1, 2], [0], [0]>} : vector<2x8x16xf32>, vector<2x16x8xf32>, vector<2x8x8xf32> -> vector<2x8x8xf32>
    "tpu.trace_stop"() : () -> ()
    %202 = tpu.concatenate %147, %165, %183, %201 in 2 : vector<2x8x8xf32>, vector<2x8x8xf32>, vector<2x8x8xf32>, vector<2x8x8xf32> -> vector<2x8x32xf32>
    %203 = vector.shape_cast %202 : vector<2x8x32xf32> to vector<16x32xf32>
    %cst_69 = arith.constant dense<0.000000e+00> : vector<16x32xf32>
    %204 = tpu.matmul %203, %128, %cst_69 {dimension_numbers = #tpu.dot_dimension_numbers<[1], [0], [0], [1], [0, 0, 1, 1], [], []>} : vector<16x32xf32>, vector<32x32xf32>, vector<16x32xf32> -> vector<16x32xf32>
    %205 = vector.broadcast %129 : vector<1x32xf32> to vector<16x32xf32>
    %206 = arith.addf %204, %205 : vector<16x32xf32>
    %207 = arith.addf %115, %206 : vector<16x32xf32>
    %c0_70 = arith.constant 0 : index
    %c0_71 = arith.constant 0 : index
    %208 = vector.load %arg15[%c0_70, %c0_71] : memref<1x32xf32, #tpu.memory_space<vmem>>, vector<1x32xf32>
    %c0_72 = arith.constant 0 : index
    %c0_73 = arith.constant 0 : index
    %209 = vector.load %arg16[%c0_72, %c0_73] : memref<1x32xf32, #tpu.memory_space<vmem>>, vector<1x32xf32>
    %cst_74 = arith.constant dense<0.000000e+00> : vector<16xf32>
    %210 = vector.multi_reduction <add>, %207, %cst_74 [1] : vector<16x32xf32> to vector<16xf32>
    %211 = vector.shape_cast %210 : vector<16xf32> to vector<16x1xf32>
    %cst_75 = arith.constant 3.200000e+01 : f32
    %212 = vector.broadcast %cst_75 : f32 to vector<16x1xf32>
    %213 = arith.divf %211, %212 : vector<16x1xf32>
    %214 = vector.broadcast %213 : vector<16x1xf32> to vector<16x32xf32>
    %215 = arith.subf %207, %214 : vector<16x32xf32>
    %216 = arith.mulf %215, %215 : vector<16x32xf32>
    %cst_76 = arith.constant dense<0.000000e+00> : vector<16xf32>
    %217 = vector.multi_reduction <add>, %216, %cst_76 [1] : vector<16x32xf32> to vector<16xf32>
    %218 = vector.shape_cast %217 : vector<16xf32> to vector<16x1xf32>
    %cst_77 = arith.constant 3.200000e+01 : f32
    %219 = vector.broadcast %cst_77 : f32 to vector<16x1xf32>
    %220 = arith.divf %218, %219 : vector<16x1xf32>
    %221 = vector.broadcast %213 : vector<16x1xf32> to vector<16x32xf32>
    %222 = arith.subf %207, %221 : vector<16x32xf32>
    %cst_78 = arith.constant 9.99999974E-6 : f32
    %223 = vector.broadcast %cst_78 : f32 to vector<16x1xf32>
    %224 = arith.addf %220, %223 : vector<16x1xf32>
    %225 = math.rsqrt %224 : vector<16x1xf32>
    %226 = vector.broadcast %225 : vector<16x1xf32> to vector<16x32xf32>
    %227 = arith.mulf %222, %226 : vector<16x32xf32>
    %228 = vector.broadcast %208 : vector<1x32xf32> to vector<16x32xf32>
    %229 = arith.mulf %227, %228 : vector<16x32xf32>
    %230 = vector.broadcast %209 : vector<1x32xf32> to vector<16x32xf32>
    %231 = arith.addf %229, %230 : vector<16x32xf32>
    %c0_79 = arith.constant 0 : index
    %c0_80 = arith.constant 0 : index
    %232 = vector.load %arg17[%c0_79, %c0_80] : memref<32x128xf32, #tpu.memory_space<vmem>>, vector<32x128xf32>
    %cst_81 = arith.constant dense<0.000000e+00> : vector<16x128xf32>
    %233 = tpu.matmul %231, %232, %cst_81 {dimension_numbers = #tpu.dot_dimension_numbers<[1], [0], [0], [1], [0, 0, 1, 1], [], []>} : vector<16x32xf32>, vector<32x128xf32>, vector<16x128xf32> -> vector<16x128xf32>
    %c0_82 = arith.constant 0 : index
    %c0_83 = arith.constant 0 : index
    %234 = vector.load %arg18[%c0_82, %c0_83] : memref<1x128xf32, #tpu.memory_space<vmem>>, vector<1x128xf32>
    %235 = vector.broadcast %234 : vector<1x128xf32> to vector<16x128xf32>
    %236 = arith.addf %233, %235 : vector<16x128xf32>
    %cst_84 = arith.constant 0.000000e+00 : f32
    %237 = vector.broadcast %cst_84 : f32 to vector<16x128xf32>
    %238 = arith.maximumf %236, %237 : vector<16x128xf32>
    %c0_85 = arith.constant 0 : index
    %c0_86 = arith.constant 0 : index
    %239 = vector.load %arg19[%c0_85, %c0_86] : memref<128x32xf32, #tpu.memory_space<vmem>>, vector<128x32xf32>
    %cst_87 = arith.constant dense<0.000000e+00> : vector<16x32xf32>
    %240 = tpu.matmul %238, %239, %cst_87 {dimension_numbers = #tpu.dot_dimension_numbers<[1], [0], [0], [1], [0, 0, 1, 1], [], []>} : vector<16x128xf32>, vector<128x32xf32>, vector<16x32xf32> -> vector<16x32xf32>
    %c0_88 = arith.constant 0 : index
    %c0_89 = arith.constant 0 : index
    %241 = vector.load %arg20[%c0_88, %c0_89] : memref<1x32xf32, #tpu.memory_space<vmem>>, vector<1x32xf32>
    %242 = vector.broadcast %241 : vector<1x32xf32> to vector<16x32xf32>
    %243 = arith.addf %240, %242 : vector<16x32xf32>
    %244 = arith.addf %231, %243 : vector<16x32xf32>
    %c0_90 = arith.constant 0 : index
    %c0_91 = arith.constant 0 : index
    %245 = vector.load %arg21[%c0_90, %c0_91] : memref<1x32xf32, #tpu.memory_space<vmem>>, vector<1x32xf32>
    %c0_92 = arith.constant 0 : index
    %c0_93 = arith.constant 0 : index
    %246 = vector.load %arg22[%c0_92, %c0_93] : memref<1x32xf32, #tpu.memory_space<vmem>>, vector<1x32xf32>
    %cst_94 = arith.constant dense<0.000000e+00> : vector<16xf32>
    %247 = vector.multi_reduction <add>, %244, %cst_94 [1] : vector<16x32xf32> to vector<16xf32>
    %248 = vector.shape_cast %247 : vector<16xf32> to vector<16x1xf32>
    %cst_95 = arith.constant 3.200000e+01 : f32
    %249 = vector.broadcast %cst_95 : f32 to vector<16x1xf32>
    %250 = arith.divf %248, %249 : vector<16x1xf32>
    %251 = vector.broadcast %250 : vector<16x1xf32> to vector<16x32xf32>
    %252 = arith.subf %244, %251 : vector<16x32xf32>
    %253 = arith.mulf %252, %252 : vector<16x32xf32>
    %cst_96 = arith.constant dense<0.000000e+00> : vector<16xf32>
    %254 = vector.multi_reduction <add>, %253, %cst_96 [1] : vector<16x32xf32> to vector<16xf32>
    %255 = vector.shape_cast %254 : vector<16xf32> to vector<16x1xf32>
    %cst_97 = arith.constant 3.200000e+01 : f32
    %256 = vector.broadcast %cst_97 : f32 to vector<16x1xf32>
    %257 = arith.divf %255, %256 : vector<16x1xf32>
    %258 = vector.broadcast %250 : vector<16x1xf32> to vector<16x32xf32>
    %259 = arith.subf %244, %258 : vector<16x32xf32>
    %cst_98 = arith.constant 9.99999974E-6 : f32
    %260 = vector.broadcast %cst_98 : f32 to vector<16x1xf32>
    %261 = arith.addf %257, %260 : vector<16x1xf32>
    %262 = math.rsqrt %261 : vector<16x1xf32>
    %263 = vector.broadcast %262 : vector<16x1xf32> to vector<16x32xf32>
    %264 = arith.mulf %259, %263 : vector<16x32xf32>
    %265 = vector.broadcast %245 : vector<1x32xf32> to vector<16x32xf32>
    %266 = arith.mulf %264, %265 : vector<16x32xf32>
    %267 = vector.broadcast %246 : vector<1x32xf32> to vector<16x32xf32>
    %268 = arith.addf %266, %267 : vector<16x32xf32>
    %269 = vector.shape_cast %268 : vector<16x32xf32> to vector<2x8x32xf32>
    %c0_99 = arith.constant 0 : index
    %c0_100 = arith.constant 0 : index
    %c0_101 = arith.constant 0 : index
    %270 = vector.load %arg23[%c0_99, %c0_100, %c0_101] : memref<2x8x32xf32, #tpu.memory_space<vmem>>, vector<2x8x32xf32>
    tpu.vector_store %arg23[%c0_99, %c0_100, %c0_101], %269 {strides = array<i32>} : memref<2x8x32xf32, #tpu.memory_space<vmem>>, vector<2x8x32xf32>,
    return
  }
  func.func @transform_0(%arg0: i32) -> (i32, i32, i32) {
    %c0_i32 = arith.constant 0 : i32
    %c0_i32_0 = arith.constant 0 : i32
    %c0_i32_1 = arith.constant 0 : i32
    return %arg0, %c0_i32, %c0_i32_0 : i32, i32, i32
  }
  func.func @transform_1(%arg0: i32) -> (i32, i32, i32) {
    %c0_i32 = arith.constant 0 : i32
    %c0_i32_0 = arith.constant 0 : i32
    %c0_i32_1 = arith.constant 0 : i32
    return %arg0, %c0_i32, %c0_i32_0 : i32, i32, i32
  }
  func.func @transform_2(%arg0: i32) -> (i32, i32) {
    %c0_i32 = arith.constant 0 : i32
    %c0_i32_0 = arith.constant 0 : i32
    %c0_i32_1 = arith.constant 0 : i32
    return %c0_i32, %c0_i32_0 : i32, i32
  }
  func.func @transform_3(%arg0: i32) -> (i32, i32) {
    %c0_i32 = arith.constant 0 : i32
    %c0_i32_0 = arith.constant 0 : i32
    %c0_i32_1 = arith.constant 0 : i32
    return %c0_i32, %c0_i32_0 : i32, i32
  }
  func.func @transform_4(%arg0: i32) -> (i32, i32) {
    %c0_i32 = arith.constant 0 : i32
    %c0_i32_0 = arith.constant 0 : i32
    %c0_i32_1 = arith.constant 0 : i32
    return %c0_i32, %c0_i32_0 : i32, i32
  }
  func.func @transform_5(%arg0: i32) -> (i32, i32) {
    %c0_i32 = arith.constant 0 : i32
    %c0_i32_0 = arith.constant 0 : i32
    %c0_i32_1 = arith.constant 0 : i32
    return %c0_i32, %c0_i32_0 : i32, i32
  }
  func.func @transform_6(%arg0: i32) -> (i32, i32) {
    %c0_i32 = arith.constant 0 : i32
    %c0_i32_0 = arith.constant 0 : i32
    %c0_i32_1 = arith.constant 0 : i32
    return %c0_i32, %c0_i32_0 : i32, i32
  }
  func.func @transform_7(%arg0: i32) -> (i32, i32) {
    %c0_i32 = arith.constant 0 : i32
    %c0_i32_0 = arith.constant 0 : i32
    %c0_i32_1 = arith.constant 0 : i32
    return %c0_i32, %c0_i32_0 : i32, i32
  }
  func.func @transform_8(%arg0: i32) -> (i32, i32) {
    %c0_i32 = arith.constant 0 : i32
    %c0_i32_0 = arith.constant 0 : i32
    %c0_i32_1 = arith.constant 0 : i32
    return %c0_i32, %c0_i32_0 : i32, i32
  }
  func.func @transform_9(%arg0: i32) -> (i32, i32) {
    %c0_i32 = arith.constant 0 : i32
    %c0_i32_0 = arith.constant 0 : i32
    %c0_i32_1 = arith.constant 0 : i32
    return %c0_i32, %c0_i32_0 : i32, i32
  }
  func.func @transform_10(%arg0: i32) -> (i32, i32) {
    %c0_i32 = arith.constant 0 : i32
    %c0_i32_0 = arith.constant 0 : i32
    %c0_i32_1 = arith.constant 0 : i32
    return %c0_i32, %c0_i32_0 : i32, i32
  }
  func.func @transform_11(%arg0: i32) -> (i32, i32) {
    %c0_i32 = arith.constant 0 : i32
    %c0_i32_0 = arith.constant 0 : i32
    %c0_i32_1 = arith.constant 0 : i32
    return %c0_i32, %c0_i32_0 : i32, i32
  }
  func.func @transform_12(%arg0: i32) -> (i32, i32) {
    %c0_i32 = arith.constant 0 : i32
    %c0_i32_0 = arith.constant 0 : i32
    %c0_i32_1 = arith.constant 0 : i32
    return %c0_i32, %c0_i32_0 : i32, i32
  }
  func.func @transform_13(%arg0: i32) -> (i32, i32) {
    %c0_i32 = arith.constant 0 : i32
    %c0_i32_0 = arith.constant 0 : i32
    %c0_i32_1 = arith.constant 0 : i32
    return %c0_i32, %c0_i32_0 : i32, i32
  }
  func.func @transform_14(%arg0: i32) -> (i32, i32) {
    %c0_i32 = arith.constant 0 : i32
    %c0_i32_0 = arith.constant 0 : i32
    %c0_i32_1 = arith.constant 0 : i32
    return %c0_i32, %c0_i32_0 : i32, i32
  }
  func.func @transform_15(%arg0: i32) -> (i32, i32) {
    %c0_i32 = arith.constant 0 : i32
    %c0_i32_0 = arith.constant 0 : i32
    %c0_i32_1 = arith.constant 0 : i32
    return %c0_i32, %c0_i32_0 : i32, i32
  }
  func.func @transform_16(%arg0: i32) -> (i32, i32) {
    %c0_i32 = arith.constant 0 : i32
    %c0_i32_0 = arith.constant 0 : i32
    %c0_i32_1 = arith.constant 0 : i32
    return %c0_i32, %c0_i32_0 : i32, i32
  }
  func.func @transform_17(%arg0: i32) -> (i32, i32) {
    %c0_i32 = arith.constant 0 : i32
    %c0_i32_0 = arith.constant 0 : i32
    %c0_i32_1 = arith.constant 0 : i32
    return %c0_i32, %c0_i32_0 : i32, i32
  }
  func.func @transform_18(%arg0: i32) -> (i32, i32) {
    %c0_i32 = arith.constant 0 : i32
    %c0_i32_0 = arith.constant 0 : i32
    %c0_i32_1 = arith.constant 0 : i32
    return %c0_i32, %c0_i32_0 : i32, i32
  }
  func.func @transform_19(%arg0: i32) -> (i32, i32) {
    %c0_i32 = arith.constant 0 : i32
    %c0_i32_0 = arith.constant 0 : i32
    %c0_i32_1 = arith.constant 0 : i32
    return %c0_i32, %c0_i32_0 : i32, i32
  }
  func.func @transform_20(%arg0: i32) -> (i32, i32) {
    %c0_i32 = arith.constant 0 : i32
    %c0_i32_0 = arith.constant 0 : i32
    %c0_i32_1 = arith.constant 0 : i32
    return %c0_i32, %c0_i32_0 : i32, i32
  }
  func.func @transform_21(%arg0: i32) -> (i32, i32) {
    %c0_i32 = arith.constant 0 : i32
    %c0_i32_0 = arith.constant 0 : i32
    %c0_i32_1 = arith.constant 0 : i32
    return %c0_i32, %c0_i32_0 : i32, i32
  }
  func.func @transform_22(%arg0: i32) -> (i32, i32, i32) {
    %c0_i32 = arith.constant 0 : i32
    %c0_i32_0 = arith.constant 0 : i32
    %c0_i32_1 = arith.constant 0 : i32
    return %arg0, %c0_i32, %c0_i32_0 : i32, i32, i32
  }
}

module attributes {stable_mosaic.version = 11 : i64} {
  func.func @_decoder_layer_kernel(%arg0: i32, %arg1: memref<2x8x32xf32, #tpu.memory_space<vmem>>, %arg2: memref<2x16x32xf32, #tpu.memory_space<vmem>>, %arg3: memref<32x96xf32, #tpu.memory_space<vmem>>, %arg4: memref<1x96xf32, #tpu.memory_space<vmem>>, %arg5: memref<32x32xf32, #tpu.memory_space<vmem>>, %arg6: memref<1x32xf32, #tpu.memory_space<vmem>>, %arg7: memref<1x32xf32, #tpu.memory_space<vmem>>, %arg8: memref<1x32xf32, #tpu.memory_space<vmem>>, %arg9: memref<32x32xf32, #tpu.memory_space<vmem>>, %arg10: memref<1x32xf32, #tpu.memory_space<vmem>>, %arg11: memref<32x64xf32, #tpu.memory_space<vmem>>, %arg12: memref<1x64xf32, #tpu.memory_space<vmem>>, %arg13: memref<32x32xf32, #tpu.memory_space<vmem>>, %arg14: memref<1x32xf32, #tpu.memory_space<vmem>>, %arg15: memref<1x32xf32, #tpu.memory_space<vmem>>, %arg16: memref<1x32xf32, #tpu.memory_space<vmem>>, %arg17: memref<32x128xf32, #tpu.memory_space<vmem>>, %arg18: memref<1x128xf32, #tpu.memory_space<vmem>>, %arg19: memref<128x32xf32, #tpu.memory_space<vmem>>, %arg20: memref<1x32xf32, #tpu.memory_space<vmem>>, %arg21: memref<1x32xf32, #tpu.memory_space<vmem>>, %arg22: memref<1x32xf32, #tpu.memory_space<vmem>>, %arg23: memref<2x8x32xf32, #tpu.memory_space<vmem>>) attributes {dimension_semantics = [#tpu.dimension_semantics<parallel>], iteration_bounds = array<i64: 1>, scalar_prefetch = 0 : i64, scratch_operands = 0 : i64, tpu.core_type = #tpu.core_type<tc>, window_params = [{transform_indices = @transform_0, window_bounds = array<i64: 2, 8, 32>}, {transform_indices = @transform_1, window_bounds = array<i64: 2, 16, 32>}, {pipeline_mode = #tpu.pipeline_mode<synchronous>, transform_indices = @transform_2, window_bounds = array<i64: 32, 96>}, {pipeline_mode = #tpu.pipeline_mode<synchronous>, transform_indices = @transform_3, window_bounds = array<i64: 1, 96>}, {pipeline_mode = #tpu.pipeline_mode<synchronous>, transform_indices = @transform_4, window_bounds = array<i64: 32, 32>}, {pipeline_mode = #tpu.pipeline_mode<synchronous>, transform_indices = @transform_5, window_bounds = array<i64: 1, 32>}, {pipeline_mode = #tpu.pipeline_mode<synchronous>, transform_indices = @transform_6, window_bounds = array<i64: 1, 32>}, {pipeline_mode = #tpu.pipeline_mode<synchronous>, transform_indices = @transform_7, window_bounds = array<i64: 1, 32>}, {pipeline_mode = #tpu.pipeline_mode<synchronous>, transform_indices = @transform_8, window_bounds = array<i64: 32, 32>}, {pipeline_mode = #tpu.pipeline_mode<synchronous>, transform_indices = @transform_9, window_bounds = array<i64: 1, 32>}, {pipeline_mode = #tpu.pipeline_mode<synchronous>, transform_indices = @transform_10, window_bounds = array<i64: 32, 64>}, {pipeline_mode = #tpu.pipeline_mode<synchronous>, transform_indices = @transform_11, window_bounds = array<i64: 1, 64>}, {pipeline_mode = #tpu.pipeline_mode<synchronous>, transform_indices = @transform_12, window_bounds = array<i64: 32, 32>}, {pipeline_mode = #tpu.pipeline_mode<synchronous>, transform_indices = @transform_13, window_bounds = array<i64: 1, 32>}, {pipeline_mode = #tpu.pipeline_mode<synchronous>, transform_indices = @transform_14, window_bounds = array<i64: 1, 32>}, {pipeline_mode = #tpu.pipeline_mode<synchronous>, transform_indices = @transform_15, window_bounds = array<i64: 1, 32>}, {pipeline_mode = #tpu.pipeline_mode<synchronous>, transform_indices = @transform_16, window_bounds = array<i64: 32, 128>}, {pipeline_mode = #tpu.pipeline_mode<synchronous>, transform_indices = @transform_17, window_bounds = array<i64: 1, 128>}, {pipeline_mode = #tpu.pipeline_mode<synchronous>, transform_indices = @transform_18, window_bounds = array<i64: 128, 32>}, {pipeline_mode = #tpu.pipeline_mode<synchronous>, transform_indices = @transform_19, window_bounds = array<i64: 1, 32>}, {pipeline_mode = #tpu.pipeline_mode<synchronous>, transform_indices = @transform_20, window_bounds = array<i64: 1, 32>}, {pipeline_mode = #tpu.pipeline_mode<synchronous>, transform_indices = @transform_21, window_bounds = array<i64: 1, 32>}, {transform_indices = @transform_22, window_bounds = array<i64: 2, 8, 32>}]} {
    %c0 = arith.constant 0 : index
    %c0_0 = arith.constant 0 : index
    %c0_1 = arith.constant 0 : index
    %0 = vector.load %arg1[%c0, %c0_0, %c0_1] : memref<2x8x32xf32, #tpu.memory_space<vmem>>, vector<2x8x32xf32>
    %1 = vector.shape_cast %0 : vector<2x8x32xf32> to vector<16x32xf32>
    %c0_2 = arith.constant 0 : index
    %c0_3 = arith.constant 0 : index
    %c0_4 = arith.constant 0 : index
    %2 = vector.load %arg2[%c0_2, %c0_3, %c0_4] : memref<2x16x32xf32, #tpu.memory_space<vmem>>, vector<2x16x32xf32>
    %3 = vector.shape_cast %2 : vector<2x16x32xf32> to vector<32x32xf32>
    %c0_5 = arith.constant 0 : index
    %c0_6 = arith.constant 0 : index
    %4 = vector.load %arg3[%c0_5, %c0_6] : memref<32x96xf32, #tpu.memory_space<vmem>>, vector<32x96xf32>
    %cst = arith.constant dense<0.000000e+00> : vector<16x96xf32>
    %5 = tpu.matmul %1, %4, %cst {dimension_numbers = #tpu.dot_dimension_numbers<[1], [0], [0], [1], [0, 0, 1, 1], [], []>} : vector<16x32xf32>, vector<32x96xf32>, vector<16x96xf32> -> vector<16x96xf32>
    %c0_7 = arith.constant 0 : index
    %c0_8 = arith.constant 0 : index
    %6 = vector.load %arg4[%c0_7, %c0_8] : memref<1x96xf32, #tpu.memory_space<vmem>>, vector<1x96xf32>
    %7 = vector.broadcast %6 : vector<1x96xf32> to vector<16x96xf32>
    %8 = arith.addf %5, %7 : vector<16x96xf32>
    %9 = vector.extract_strided_slice %8 {offsets = [0, 0], sizes = [16, 32], strides = [1, 1]} : vector<16x96xf32> to vector<16x32xf32>
    %10 = vector.extract_strided_slice %8 {offsets = [0, 32], sizes = [16, 32], strides = [1, 1]} : vector<16x96xf32> to vector<16x32xf32>
    %11 = vector.extract_strided_slice %8 {offsets = [0, 64], sizes = [16, 32], strides = [1, 1]} : vector<16x96xf32> to vector<16x32xf32>
    %c0_9 = arith.constant 0 : index
    %c0_10 = arith.constant 0 : index
    %12 = vector.load %arg5[%c0_9, %c0_10] : memref<32x32xf32, #tpu.memory_space<vmem>>, vector<32x32xf32>
    %c0_11 = arith.constant 0 : index
    %c0_12 = arith.constant 0 : index
    %13 = vector.load %arg6[%c0_11, %c0_12] : memref<1x32xf32, #tpu.memory_space<vmem>>, vector<1x32xf32>
    %14 = vector.extract_strided_slice %9 {offsets = [0, 0], sizes = [16, 8], strides = [1, 1]} : vector<16x32xf32> to vector<16x8xf32>
    %15 = vector.shape_cast %14 : vector<16x8xf32> to vector<2x8x8xf32>
    %16 = vector.extract_strided_slice %10 {offsets = [0, 0], sizes = [16, 8], strides = [1, 1]} : vector<16x32xf32> to vector<16x8xf32>
    %17 = vector.shape_cast %16 : vector<16x8xf32> to vector<2x8x8xf32>
    %18 = vector.extract_strided_slice %11 {offsets = [0, 0], sizes = [16, 8], strides = [1, 1]} : vector<16x32xf32> to vector<16x8xf32>
    %19 = vector.shape_cast %18 : vector<16x8xf32> to vector<2x8x8xf32>
    "tpu.trace_start"() <{level = 10 : i32, message = "bqd,bkd->bqk"}> : () -> ()
    %cst_13 = arith.constant dense<0.000000e+00> : vector<2x8x8xf32>
    %20 = tpu.matmul %15, %17, %cst_13 {dimension_numbers = #tpu.dot_dimension_numbers<[2], [2], [1], [1], [0, 0, 0, 1, 1, 1], [0], [0]>} : vector<2x8x8xf32>, vector<2x8x8xf32>, vector<2x8x8xf32> -> vector<2x8x8xf32>
    "tpu.trace_stop"() : () -> ()
    %cst_14 = arith.constant dense<0xFF800000> : vector<2x8xf32>
    %21 = vector.multi_reduction <maximumf>, %20, %cst_14 [2] : vector<2x8x8xf32> to vector<2x8xf32>
    %22 = vector.shape_cast %21 : vector<2x8xf32> to vector<2x8x1xf32>
    %23 = vector.broadcast %22 : vector<2x8x1xf32> to vector<2x8x8xf32>
    %24 = arith.subf %20, %23 : vector<2x8x8xf32>
    %25 = math.exp %24 : vector<2x8x8xf32>
    %cst_15 = arith.constant dense<0.000000e+00> : vector<2x8xf32>
    %26 = vector.multi_reduction <add>, %25, %cst_15 [2] : vector<2x8x8xf32> to vector<2x8xf32>
    %27 = vector.shape_cast %26 : vector<2x8xf32> to vector<2x8x1xf32>
    %28 = tpu.reciprocal %27 {approx = true} : vector<2x8x1xf32> -> vector<2x8x1xf32>
    %29 = vector.broadcast %28 : vector<2x8x1xf32> to vector<2x8x8xf32>
    %30 = arith.mulf %25, %29 : vector<2x8x8xf32>
    "tpu.trace_start"() <{level = 10 : i32, message = "bqk,bkd->bqd"}> : () -> ()
    %cst_16 = arith.constant dense<0.000000e+00> : vector<2x8x8xf32>
    %31 = tpu.matmul %30, %19, %cst_16 {dimension_numbers = #tpu.dot_dimension_numbers<[2], [1], [1], [2], [0, 0, 0, 1, 1, 2], [0], [0]>} : vector<2x8x8xf32>, vector<2x8x8xf32>, vector<2x8x8xf32> -> vector<2x8x8xf32>
    "tpu.trace_stop"() : () -> ()
    %32 = vector.extract_strided_slice %9 {offsets = [0, 8], sizes = [16, 8], strides = [1, 1]} : vector<16x32xf32> to vector<16x8xf32>
    %33 = vector.shape_cast %32 : vector<16x8xf32> to vector<2x8x8xf32>
    %34 = vector.extract_strided_slice %10 {offsets = [0, 8], sizes = [16, 8], strides = [1, 1]} : vector<16x32xf32> to vector<16x8xf32>
    %35 = vector.shape_cast %34 : vector<16x8xf32> to vector<2x8x8xf32>
    %36 = vector.extract_strided_slice %11 {offsets = [0, 8], sizes = [16, 8], strides = [1, 1]} : vector<16x32xf32> to vector<16x8xf32>
    %37 = vector.shape_cast %36 : vector<16x8xf32> to vector<2x8x8xf32>
    "tpu.trace_start"() <{level = 10 : i32, message = "bqd,bkd->bqk"}> : () -> ()
    %cst_17 = arith.constant dense<0.000000e+00> : vector<2x8x8xf32>
    %38 = tpu.matmul %33, %35, %cst_17 {dimension_numbers = #tpu.dot_dimension_numbers<[2], [2], [1], [1], [0, 0, 0, 1, 1, 1], [0], [0]>} : vector<2x8x8xf32>, vector<2x8x8xf32>, vector<2x8x8xf32> -> vector<2x8x8xf32>
    "tpu.trace_stop"() : () -> ()
    %cst_18 = arith.constant dense<0xFF800000> : vector<2x8xf32>
    %39 = vector.multi_reduction <maximumf>, %38, %cst_18 [2] : vector<2x8x8xf32> to vector<2x8xf32>
    %40 = vector.shape_cast %39 : vector<2x8xf32> to vector<2x8x1xf32>
    %41 = vector.broadcast %40 : vector<2x8x1xf32> to vector<2x8x8xf32>
    %42 = arith.subf %38, %41 : vector<2x8x8xf32>
    %43 = math.exp %42 : vector<2x8x8xf32>
    %cst_19 = arith.constant dense<0.000000e+00> : vector<2x8xf32>
    %44 = vector.multi_reduction <add>, %43, %cst_19 [2] : vector<2x8x8xf32> to vector<2x8xf32>
    %45 = vector.shape_cast %44 : vector<2x8xf32> to vector<2x8x1xf32>
    %46 = tpu.reciprocal %45 {approx = true} : vector<2x8x1xf32> -> vector<2x8x1xf32>
    %47 = vector.broadcast %46 : vector<2x8x1xf32> to vector<2x8x8xf32>
    %48 = arith.mulf %43, %47 : vector<2x8x8xf32>
    "tpu.trace_start"() <{level = 10 : i32, message = "bqk,bkd->bqd"}> : () -> ()
    %cst_20 = arith.constant dense<0.000000e+00> : vector<2x8x8xf32>
    %49 = tpu.matmul %48, %37, %cst_20 {dimension_numbers = #tpu.dot_dimension_numbers<[2], [1], [1], [2], [0, 0, 0, 1, 1, 2], [0], [0]>} : vector<2x8x8xf32>, vector<2x8x8xf32>, vector<2x8x8xf32> -> vector<2x8x8xf32>
    "tpu.trace_stop"() : () -> ()
    %50 = vector.extract_strided_slice %9 {offsets = [0, 16], sizes = [16, 8], strides = [1, 1]} : vector<16x32xf32> to vector<16x8xf32>
    %51 = vector.shape_cast %50 : vector<16x8xf32> to vector<2x8x8xf32>
    %52 = vector.extract_strided_slice %10 {offsets = [0, 16], sizes = [16, 8], strides = [1, 1]} : vector<16x32xf32> to vector<16x8xf32>
    %53 = vector.shape_cast %52 : vector<16x8xf32> to vector<2x8x8xf32>
    %54 = vector.extract_strided_slice %11 {offsets = [0, 16], sizes = [16, 8], strides = [1, 1]} : vector<16x32xf32> to vector<16x8xf32>
    %55 = vector.shape_cast %54 : vector<16x8xf32> to vector<2x8x8xf32>
    "tpu.trace_start"() <{level = 10 : i32, message = "bqd,bkd->bqk"}> : () -> ()
    %cst_21 = arith.constant dense<0.000000e+00> : vector<2x8x8xf32>
    %56 = tpu.matmul %51, %53, %cst_21 {dimension_numbers = #tpu.dot_dimension_numbers<[2], [2], [1], [1], [0, 0, 0, 1, 1, 1], [0], [0]>} : vector<2x8x8xf32>, vector<2x8x8xf32>, vector<2x8x8xf32> -> vector<2x8x8xf32>
    "tpu.trace_stop"() : () -> ()
    %cst_22 = arith.constant dense<0xFF800000> : vector<2x8xf32>
    %57 = vector.multi_reduction <maximumf>, %56, %cst_22 [2] : vector<2x8x8xf32> to vector<2x8xf32>
    %58 = vector.shape_cast %57 : vector<2x8xf32> to vector<2x8x1xf32>
    %59 = vector.broadcast %58 : vector<2x8x1xf32> to vector<2x8x8xf32>
    %60 = arith.subf %56, %59 : vector<2x8x8xf32>
    %61 = math.exp %60 : vector<2x8x8xf32>
    %cst_23 = arith.constant dense<0.000000e+00> : vector<2x8xf32>
    %62 = vector.multi_reduction <add>, %61, %cst_23 [2] : vector<2x8x8xf32> to vector<2x8xf32>
    %63 = vector.shape_cast %62 : vector<2x8xf32> to vector<2x8x1xf32>
    %64 = tpu.reciprocal %63 {approx = true} : vector<2x8x1xf32> -> vector<2x8x1xf32>
    %65 = vector.broadcast %64 : vector<2x8x1xf32> to vector<2x8x8xf32>
    %66 = arith.mulf %61, %65 : vector<2x8x8xf32>
    "tpu.trace_start"() <{level = 10 : i32, message = "bqk,bkd->bqd"}> : () -> ()
    %cst_24 = arith.constant dense<0.000000e+00> : vector<2x8x8xf32>
    %67 = tpu.matmul %66, %55, %cst_24 {dimension_numbers = #tpu.dot_dimension_numbers<[2], [1], [1], [2], [0, 0, 0, 1, 1, 2], [0], [0]>} : vector<2x8x8xf32>, vector<2x8x8xf32>, vector<2x8x8xf32> -> vector<2x8x8xf32>
    "tpu.trace_stop"() : () -> ()
    %68 = vector.extract_strided_slice %9 {offsets = [0, 24], sizes = [16, 8], strides = [1, 1]} : vector<16x32xf32> to vector<16x8xf32>
    %69 = vector.shape_cast %68 : vector<16x8xf32> to vector<2x8x8xf32>
    %70 = vector.extract_strided_slice %10 {offsets = [0, 24], sizes = [16, 8], strides = [1, 1]} : vector<16x32xf32> to vector<16x8xf32>
    %71 = vector.shape_cast %70 : vector<16x8xf32> to vector<2x8x8xf32>
    %72 = vector.extract_strided_slice %11 {offsets = [0, 24], sizes = [16, 8], strides = [1, 1]} : vector<16x32xf32> to vector<16x8xf32>
    %73 = vector.shape_cast %72 : vector<16x8xf32> to vector<2x8x8xf32>
    "tpu.trace_start"() <{level = 10 : i32, message = "bqd,bkd->bqk"}> : () -> ()
    %cst_25 = arith.constant dense<0.000000e+00> : vector<2x8x8xf32>
    %74 = tpu.matmul %69, %71, %cst_25 {dimension_numbers = #tpu.dot_dimension_numbers<[2], [2], [1], [1], [0, 0, 0, 1, 1, 1], [0], [0]>} : vector<2x8x8xf32>, vector<2x8x8xf32>, vector<2x8x8xf32> -> vector<2x8x8xf32>
    "tpu.trace_stop"() : () -> ()
    %cst_26 = arith.constant dense<0xFF800000> : vector<2x8xf32>
    %75 = vector.multi_reduction <maximumf>, %74, %cst_26 [2] : vector<2x8x8xf32> to vector<2x8xf32>
    %76 = vector.shape_cast %75 : vector<2x8xf32> to vector<2x8x1xf32>
    %77 = vector.broadcast %76 : vector<2x8x1xf32> to vector<2x8x8xf32>
    %78 = arith.subf %74, %77 : vector<2x8x8xf32>
    %79 = math.exp %78 : vector<2x8x8xf32>
    %cst_27 = arith.constant dense<0.000000e+00> : vector<2x8xf32>
    %80 = vector.multi_reduction <add>, %79, %cst_27 [2] : vector<2x8x8xf32> to vector<2x8xf32>
    %81 = vector.shape_cast %80 : vector<2x8xf32> to vector<2x8x1xf32>
    %82 = tpu.reciprocal %81 {approx = true} : vector<2x8x1xf32> -> vector<2x8x1xf32>
    %83 = vector.broadcast %82 : vector<2x8x1xf32> to vector<2x8x8xf32>
    %84 = arith.mulf %79, %83 : vector<2x8x8xf32>
    "tpu.trace_start"() <{level = 10 : i32, message = "bqk,bkd->bqd"}> : () -> ()
    %cst_28 = arith.constant dense<0.000000e+00> : vector<2x8x8xf32>
    %85 = tpu.matmul %84, %73, %cst_28 {dimension_numbers = #tpu.dot_dimension_numbers<[2], [1], [1], [2], [0, 0, 0, 1, 1, 2], [0], [0]>} : vector<2x8x8xf32>, vector<2x8x8xf32>, vector<2x8x8xf32> -> vector<2x8x8xf32>
    %cst_29 = arith.constant 0.000000e+00 : f32
    "tpu.trace_stop"() : () -> ()
    %86 = vector.broadcast %cst_29 : f32 to vector<16x32xf32>
    %87 = vector.shape_cast %31 : vector<2x8x8xf32> to vector<16x8xf32>
    %88 = vector.extract_strided_slice %12 {offsets = [0, 0], sizes = [8, 32], strides = [1, 1]} : vector<32x32xf32> to vector<8x32xf32>
    %cst_30 = arith.constant dense<0.000000e+00> : vector<16x32xf32>
    %89 = tpu.matmul %87, %88, %cst_30 {dimension_numbers = #tpu.dot_dimension_numbers<[1], [0], [0], [1], [0, 0, 1, 1], [], []>} : vector<16x8xf32>, vector<8x32xf32>, vector<16x32xf32> -> vector<16x32xf32>
    %90 = arith.addf %86, %89 : vector<16x32xf32>
    %91 = vector.shape_cast %49 : vector<2x8x8xf32> to vector<16x8xf32>
    %92 = vector.extract_strided_slice %12 {offsets = [8, 0], sizes = [8, 32], strides = [1, 1]} : vector<32x32xf32> to vector<8x32xf32>
    %cst_31 = arith.constant dense<0.000000e+00> : vector<16x32xf32>
    %93 = tpu.matmul %91, %92, %cst_31 {dimension_numbers = #tpu.dot_dimension_numbers<[1], [0], [0], [1], [0, 0, 1, 1], [], []>} : vector<16x8xf32>, vector<8x32xf32>, vector<16x32xf32> -> vector<16x32xf32>
    %94 = arith.addf %90, %93 : vector<16x32xf32>
    %95 = vector.shape_cast %67 : vector<2x8x8xf32> to vector<16x8xf32>
    %96 = vector.extract_strided_slice %12 {offsets = [16, 0], sizes = [8, 32], strides = [1, 1]} : vector<32x32xf32> to vector<8x32xf32>
    %cst_32 = arith.constant dense<0.000000e+00> : vector<16x32xf32>
    %97 = tpu.matmul %95, %96, %cst_32 {dimension_numbers = #tpu.dot_dimension_numbers<[1], [0], [0], [1], [0, 0, 1, 1], [], []>} : vector<16x8xf32>, vector<8x32xf32>, vector<16x32xf32> -> vector<16x32xf32>
    %98 = arith.addf %94, %97 : vector<16x32xf32>
    %99 = vector.shape_cast %85 : vector<2x8x8xf32> to vector<16x8xf32>
    %100 = vector.extract_strided_slice %12 {offsets = [24, 0], sizes = [8, 32], strides = [1, 1]} : vector<32x32xf32> to vector<8x32xf32>
    %cst_33 = arith.constant dense<0.000000e+00> : vector<16x32xf32>
    %101 = tpu.matmul %99, %100, %cst_33 {dimension_numbers = #tpu.dot_dimension_numbers<[1], [0], [0], [1], [0, 0, 1, 1], [], []>} : vector<16x8xf32>, vector<8x32xf32>, vector<16x32xf32> -> vector<16x32xf32>
    %102 = arith.addf %98, %101 : vector<16x32xf32>
    %103 = vector.broadcast %13 : vector<1x32xf32> to vector<16x32xf32>
    %104 = arith.addf %102, %103 : vector<16x32xf32>
    %105 = arith.addf %1, %104 : vector<16x32xf32>
    %c0_34 = arith.constant 0 : index
    %c0_35 = arith.constant 0 : index
    %106 = vector.load %arg7[%c0_34, %c0_35] : memref<1x32xf32, #tpu.memory_space<vmem>>, vector<1x32xf32>
    %c0_36 = arith.constant 0 : index
    %c0_37 = arith.constant 0 : index
    %107 = vector.load %arg8[%c0_36, %c0_37] : memref<1x32xf32, #tpu.memory_space<vmem>>, vector<1x32xf32>
    %cst_38 = arith.constant dense<0.000000e+00> : vector<16xf32>
    %108 = vector.multi_reduction <add>, %105, %cst_38 [1] : vector<16x32xf32> to vector<16xf32>
    %109 = vector.shape_cast %108 : vector<16xf32> to vector<16x1xf32>
    %cst_39 = arith.constant 3.200000e+01 : f32
    %110 = vector.broadcast %cst_39 : f32 to vector<16x1xf32>
    %111 = arith.divf %109, %110 : vector<16x1xf32>
    %112 = vector.broadcast %111 : vector<16x1xf32> to vector<16x32xf32>
    %113 = arith.subf %105, %112 : vector<16x32xf32>
    %114 = arith.mulf %113, %113 : vector<16x32xf32>
    %cst_40 = arith.constant dense<0.000000e+00> : vector<16xf32>
    %115 = vector.multi_reduction <add>, %114, %cst_40 [1] : vector<16x32xf32> to vector<16xf32>
    %116 = vector.shape_cast %115 : vector<16xf32> to vector<16x1xf32>
    %cst_41 = arith.constant 3.200000e+01 : f32
    %117 = vector.broadcast %cst_41 : f32 to vector<16x1xf32>
    %118 = arith.divf %116, %117 : vector<16x1xf32>
    %119 = vector.broadcast %111 : vector<16x1xf32> to vector<16x32xf32>
    %120 = arith.subf %105, %119 : vector<16x32xf32>
    %cst_42 = arith.constant 9.99999974E-6 : f32
    %121 = vector.broadcast %cst_42 : f32 to vector<16x1xf32>
    %122 = arith.addf %118, %121 : vector<16x1xf32>
    %123 = math.rsqrt %122 : vector<16x1xf32>
    %124 = vector.broadcast %123 : vector<16x1xf32> to vector<16x32xf32>
    %125 = arith.mulf %120, %124 : vector<16x32xf32>
    %126 = vector.broadcast %106 : vector<1x32xf32> to vector<16x32xf32>
    %127 = arith.mulf %125, %126 : vector<16x32xf32>
    %128 = vector.broadcast %107 : vector<1x32xf32> to vector<16x32xf32>
    %129 = arith.addf %127, %128 : vector<16x32xf32>
    %c0_43 = arith.constant 0 : index
    %c0_44 = arith.constant 0 : index
    %130 = vector.load %arg9[%c0_43, %c0_44] : memref<32x32xf32, #tpu.memory_space<vmem>>, vector<32x32xf32>
    %cst_45 = arith.constant dense<0.000000e+00> : vector<16x32xf32>
    %131 = tpu.matmul %129, %130, %cst_45 {dimension_numbers = #tpu.dot_dimension_numbers<[1], [0], [0], [1], [0, 0, 1, 1], [], []>} : vector<16x32xf32>, vector<32x32xf32>, vector<16x32xf32> -> vector<16x32xf32>
    %c0_46 = arith.constant 0 : index
    %c0_47 = arith.constant 0 : index
    %132 = vector.load %arg10[%c0_46, %c0_47] : memref<1x32xf32, #tpu.memory_space<vmem>>, vector<1x32xf32>
    %133 = vector.broadcast %132 : vector<1x32xf32> to vector<16x32xf32>
    %134 = arith.addf %131, %133 : vector<16x32xf32>
    %c0_48 = arith.constant 0 : index
    %c0_49 = arith.constant 0 : index
    %135 = vector.load %arg11[%c0_48, %c0_49] : memref<32x64xf32, #tpu.memory_space<vmem>>, vector<32x64xf32>
    %cst_50 = arith.constant dense<0.000000e+00> : vector<32x64xf32>
    %136 = tpu.matmul %3, %135, %cst_50 {dimension_numbers = #tpu.dot_dimension_numbers<[1], [0], [0], [1], [0, 0, 1, 1], [], []>} : vector<32x32xf32>, vector<32x64xf32>, vector<32x64xf32> -> vector<32x64xf32>
    %c0_51 = arith.constant 0 : index
    %c0_52 = arith.constant 0 : index
    %137 = vector.load %arg12[%c0_51, %c0_52] : memref<1x64xf32, #tpu.memory_space<vmem>>, vector<1x64xf32>
    %138 = vector.broadcast %137 : vector<1x64xf32> to vector<32x64xf32>
    %139 = arith.addf %136, %138 : vector<32x64xf32>
    %140 = vector.extract_strided_slice %139 {offsets = [0, 0], sizes = [32, 32], strides = [1, 1]} : vector<32x64xf32> to vector<32x32xf32>
    %141 = vector.extract_strided_slice %139 {offsets = [0, 32], sizes = [32, 32], strides = [1, 1]} : vector<32x64xf32> to vector<32x32xf32>
    %c0_53 = arith.constant 0 : index
    %c0_54 = arith.constant 0 : index
    %142 = vector.load %arg13[%c0_53, %c0_54] : memref<32x32xf32, #tpu.memory_space<vmem>>, vector<32x32xf32>
    %c0_55 = arith.constant 0 : index
    %c0_56 = arith.constant 0 : index
    %143 = vector.load %arg14[%c0_55, %c0_56] : memref<1x32xf32, #tpu.memory_space<vmem>>, vector<1x32xf32>
    %144 = vector.extract_strided_slice %134 {offsets = [0, 0], sizes = [16, 8], strides = [1, 1]} : vector<16x32xf32> to vector<16x8xf32>
    %145 = vector.shape_cast %144 : vector<16x8xf32> to vector<2x8x8xf32>
    %146 = vector.extract_strided_slice %140 {offsets = [0, 0], sizes = [32, 8], strides = [1, 1]} : vector<32x32xf32> to vector<32x8xf32>
    %147 = vector.shape_cast %146 : vector<32x8xf32> to vector<2x16x8xf32>
    %148 = vector.extract_strided_slice %141 {offsets = [0, 0], sizes = [32, 8], strides = [1, 1]} : vector<32x32xf32> to vector<32x8xf32>
    %149 = vector.shape_cast %148 : vector<32x8xf32> to vector<2x16x8xf32>
    "tpu.trace_start"() <{level = 10 : i32, message = "bqd,bkd->bqk"}> : () -> ()
    %cst_57 = arith.constant dense<0.000000e+00> : vector<2x8x16xf32>
    %150 = tpu.matmul %145, %147, %cst_57 {dimension_numbers = #tpu.dot_dimension_numbers<[2], [2], [1], [1], [0, 0, 0, 1, 1, 1], [0], [0]>} : vector<2x8x8xf32>, vector<2x16x8xf32>, vector<2x8x16xf32> -> vector<2x8x16xf32>
    "tpu.trace_stop"() : () -> ()
    %cst_58 = arith.constant dense<0xFF800000> : vector<2x8xf32>
    %151 = vector.multi_reduction <maximumf>, %150, %cst_58 [2] : vector<2x8x16xf32> to vector<2x8xf32>
    %152 = vector.shape_cast %151 : vector<2x8xf32> to vector<2x8x1xf32>
    %153 = vector.broadcast %152 : vector<2x8x1xf32> to vector<2x8x16xf32>
    %154 = arith.subf %150, %153 : vector<2x8x16xf32>
    %155 = math.exp %154 : vector<2x8x16xf32>
    %cst_59 = arith.constant dense<0.000000e+00> : vector<2x8xf32>
    %156 = vector.multi_reduction <add>, %155, %cst_59 [2] : vector<2x8x16xf32> to vector<2x8xf32>
    %157 = vector.shape_cast %156 : vector<2x8xf32> to vector<2x8x1xf32>
    %158 = tpu.reciprocal %157 {approx = true} : vector<2x8x1xf32> -> vector<2x8x1xf32>
    %159 = vector.broadcast %158 : vector<2x8x1xf32> to vector<2x8x16xf32>
    %160 = arith.mulf %155, %159 : vector<2x8x16xf32>
    "tpu.trace_start"() <{level = 10 : i32, message = "bqk,bkd->bqd"}> : () -> ()
    %cst_60 = arith.constant dense<0.000000e+00> : vector<2x8x8xf32>
    %161 = tpu.matmul %160, %149, %cst_60 {dimension_numbers = #tpu.dot_dimension_numbers<[2], [1], [1], [2], [0, 0, 0, 1, 1, 2], [0], [0]>} : vector<2x8x16xf32>, vector<2x16x8xf32>, vector<2x8x8xf32> -> vector<2x8x8xf32>
    "tpu.trace_stop"() : () -> ()
    %162 = vector.extract_strided_slice %134 {offsets = [0, 8], sizes = [16, 8], strides = [1, 1]} : vector<16x32xf32> to vector<16x8xf32>
    %163 = vector.shape_cast %162 : vector<16x8xf32> to vector<2x8x8xf32>
    %164 = vector.extract_strided_slice %140 {offsets = [0, 8], sizes = [32, 8], strides = [1, 1]} : vector<32x32xf32> to vector<32x8xf32>
    %165 = vector.shape_cast %164 : vector<32x8xf32> to vector<2x16x8xf32>
    %166 = vector.extract_strided_slice %141 {offsets = [0, 8], sizes = [32, 8], strides = [1, 1]} : vector<32x32xf32> to vector<32x8xf32>
    %167 = vector.shape_cast %166 : vector<32x8xf32> to vector<2x16x8xf32>
    "tpu.trace_start"() <{level = 10 : i32, message = "bqd,bkd->bqk"}> : () -> ()
    %cst_61 = arith.constant dense<0.000000e+00> : vector<2x8x16xf32>
    %168 = tpu.matmul %163, %165, %cst_61 {dimension_numbers = #tpu.dot_dimension_numbers<[2], [2], [1], [1], [0, 0, 0, 1, 1, 1], [0], [0]>} : vector<2x8x8xf32>, vector<2x16x8xf32>, vector<2x8x16xf32> -> vector<2x8x16xf32>
    "tpu.trace_stop"() : () -> ()
    %cst_62 = arith.constant dense<0xFF800000> : vector<2x8xf32>
    %169 = vector.multi_reduction <maximumf>, %168, %cst_62 [2] : vector<2x8x16xf32> to vector<2x8xf32>
    %170 = vector.shape_cast %169 : vector<2x8xf32> to vector<2x8x1xf32>
    %171 = vector.broadcast %170 : vector<2x8x1xf32> to vector<2x8x16xf32>
    %172 = arith.subf %168, %171 : vector<2x8x16xf32>
    %173 = math.exp %172 : vector<2x8x16xf32>
    %cst_63 = arith.constant dense<0.000000e+00> : vector<2x8xf32>
    %174 = vector.multi_reduction <add>, %173, %cst_63 [2] : vector<2x8x16xf32> to vector<2x8xf32>
    %175 = vector.shape_cast %174 : vector<2x8xf32> to vector<2x8x1xf32>
    %176 = tpu.reciprocal %175 {approx = true} : vector<2x8x1xf32> -> vector<2x8x1xf32>
    %177 = vector.broadcast %176 : vector<2x8x1xf32> to vector<2x8x16xf32>
    %178 = arith.mulf %173, %177 : vector<2x8x16xf32>
    "tpu.trace_start"() <{level = 10 : i32, message = "bqk,bkd->bqd"}> : () -> ()
    %cst_64 = arith.constant dense<0.000000e+00> : vector<2x8x8xf32>
    %179 = tpu.matmul %178, %167, %cst_64 {dimension_numbers = #tpu.dot_dimension_numbers<[2], [1], [1], [2], [0, 0, 0, 1, 1, 2], [0], [0]>} : vector<2x8x16xf32>, vector<2x16x8xf32>, vector<2x8x8xf32> -> vector<2x8x8xf32>
    "tpu.trace_stop"() : () -> ()
    %180 = vector.extract_strided_slice %134 {offsets = [0, 16], sizes = [16, 8], strides = [1, 1]} : vector<16x32xf32> to vector<16x8xf32>
    %181 = vector.shape_cast %180 : vector<16x8xf32> to vector<2x8x8xf32>
    %182 = vector.extract_strided_slice %140 {offsets = [0, 16], sizes = [32, 8], strides = [1, 1]} : vector<32x32xf32> to vector<32x8xf32>
    %183 = vector.shape_cast %182 : vector<32x8xf32> to vector<2x16x8xf32>
    %184 = vector.extract_strided_slice %141 {offsets = [0, 16], sizes = [32, 8], strides = [1, 1]} : vector<32x32xf32> to vector<32x8xf32>
    %185 = vector.shape_cast %184 : vector<32x8xf32> to vector<2x16x8xf32>
    "tpu.trace_start"() <{level = 10 : i32, message = "bqd,bkd->bqk"}> : () -> ()
    %cst_65 = arith.constant dense<0.000000e+00> : vector<2x8x16xf32>
    %186 = tpu.matmul %181, %183, %cst_65 {dimension_numbers = #tpu.dot_dimension_numbers<[2], [2], [1], [1], [0, 0, 0, 1, 1, 1], [0], [0]>} : vector<2x8x8xf32>, vector<2x16x8xf32>, vector<2x8x16xf32> -> vector<2x8x16xf32>
    "tpu.trace_stop"() : () -> ()
    %cst_66 = arith.constant dense<0xFF800000> : vector<2x8xf32>
    %187 = vector.multi_reduction <maximumf>, %186, %cst_66 [2] : vector<2x8x16xf32> to vector<2x8xf32>
    %188 = vector.shape_cast %187 : vector<2x8xf32> to vector<2x8x1xf32>
    %189 = vector.broadcast %188 : vector<2x8x1xf32> to vector<2x8x16xf32>
    %190 = arith.subf %186, %189 : vector<2x8x16xf32>
    %191 = math.exp %190 : vector<2x8x16xf32>
    %cst_67 = arith.constant dense<0.000000e+00> : vector<2x8xf32>
    %192 = vector.multi_reduction <add>, %191, %cst_67 [2] : vector<2x8x16xf32> to vector<2x8xf32>
    %193 = vector.shape_cast %192 : vector<2x8xf32> to vector<2x8x1xf32>
    %194 = tpu.reciprocal %193 {approx = true} : vector<2x8x1xf32> -> vector<2x8x1xf32>
    %195 = vector.broadcast %194 : vector<2x8x1xf32> to vector<2x8x16xf32>
    %196 = arith.mulf %191, %195 : vector<2x8x16xf32>
    "tpu.trace_start"() <{level = 10 : i32, message = "bqk,bkd->bqd"}> : () -> ()
    %cst_68 = arith.constant dense<0.000000e+00> : vector<2x8x8xf32>
    %197 = tpu.matmul %196, %185, %cst_68 {dimension_numbers = #tpu.dot_dimension_numbers<[2], [1], [1], [2], [0, 0, 0, 1, 1, 2], [0], [0]>} : vector<2x8x16xf32>, vector<2x16x8xf32>, vector<2x8x8xf32> -> vector<2x8x8xf32>
    "tpu.trace_stop"() : () -> ()
    %198 = vector.extract_strided_slice %134 {offsets = [0, 24], sizes = [16, 8], strides = [1, 1]} : vector<16x32xf32> to vector<16x8xf32>
    %199 = vector.shape_cast %198 : vector<16x8xf32> to vector<2x8x8xf32>
    %200 = vector.extract_strided_slice %140 {offsets = [0, 24], sizes = [32, 8], strides = [1, 1]} : vector<32x32xf32> to vector<32x8xf32>
    %201 = vector.shape_cast %200 : vector<32x8xf32> to vector<2x16x8xf32>
    %202 = vector.extract_strided_slice %141 {offsets = [0, 24], sizes = [32, 8], strides = [1, 1]} : vector<32x32xf32> to vector<32x8xf32>
    %203 = vector.shape_cast %202 : vector<32x8xf32> to vector<2x16x8xf32>
    "tpu.trace_start"() <{level = 10 : i32, message = "bqd,bkd->bqk"}> : () -> ()
    %cst_69 = arith.constant dense<0.000000e+00> : vector<2x8x16xf32>
    %204 = tpu.matmul %199, %201, %cst_69 {dimension_numbers = #tpu.dot_dimension_numbers<[2], [2], [1], [1], [0, 0, 0, 1, 1, 1], [0], [0]>} : vector<2x8x8xf32>, vector<2x16x8xf32>, vector<2x8x16xf32> -> vector<2x8x16xf32>
    "tpu.trace_stop"() : () -> ()
    %cst_70 = arith.constant dense<0xFF800000> : vector<2x8xf32>
    %205 = vector.multi_reduction <maximumf>, %204, %cst_70 [2] : vector<2x8x16xf32> to vector<2x8xf32>
    %206 = vector.shape_cast %205 : vector<2x8xf32> to vector<2x8x1xf32>
    %207 = vector.broadcast %206 : vector<2x8x1xf32> to vector<2x8x16xf32>
    %208 = arith.subf %204, %207 : vector<2x8x16xf32>
    %209 = math.exp %208 : vector<2x8x16xf32>
    %cst_71 = arith.constant dense<0.000000e+00> : vector<2x8xf32>
    %210 = vector.multi_reduction <add>, %209, %cst_71 [2] : vector<2x8x16xf32> to vector<2x8xf32>
    %211 = vector.shape_cast %210 : vector<2x8xf32> to vector<2x8x1xf32>
    %212 = tpu.reciprocal %211 {approx = true} : vector<2x8x1xf32> -> vector<2x8x1xf32>
    %213 = vector.broadcast %212 : vector<2x8x1xf32> to vector<2x8x16xf32>
    %214 = arith.mulf %209, %213 : vector<2x8x16xf32>
    "tpu.trace_start"() <{level = 10 : i32, message = "bqk,bkd->bqd"}> : () -> ()
    %cst_72 = arith.constant dense<0.000000e+00> : vector<2x8x8xf32>
    %215 = tpu.matmul %214, %203, %cst_72 {dimension_numbers = #tpu.dot_dimension_numbers<[2], [1], [1], [2], [0, 0, 0, 1, 1, 2], [0], [0]>} : vector<2x8x16xf32>, vector<2x16x8xf32>, vector<2x8x8xf32> -> vector<2x8x8xf32>
    %cst_73 = arith.constant 0.000000e+00 : f32
    "tpu.trace_stop"() : () -> ()
    %216 = vector.broadcast %cst_73 : f32 to vector<16x32xf32>
    %217 = vector.shape_cast %161 : vector<2x8x8xf32> to vector<16x8xf32>
    %218 = vector.extract_strided_slice %142 {offsets = [0, 0], sizes = [8, 32], strides = [1, 1]} : vector<32x32xf32> to vector<8x32xf32>
    %cst_74 = arith.constant dense<0.000000e+00> : vector<16x32xf32>
    %219 = tpu.matmul %217, %218, %cst_74 {dimension_numbers = #tpu.dot_dimension_numbers<[1], [0], [0], [1], [0, 0, 1, 1], [], []>} : vector<16x8xf32>, vector<8x32xf32>, vector<16x32xf32> -> vector<16x32xf32>
    %220 = arith.addf %216, %219 : vector<16x32xf32>
    %221 = vector.shape_cast %179 : vector<2x8x8xf32> to vector<16x8xf32>
    %222 = vector.extract_strided_slice %142 {offsets = [8, 0], sizes = [8, 32], strides = [1, 1]} : vector<32x32xf32> to vector<8x32xf32>
    %cst_75 = arith.constant dense<0.000000e+00> : vector<16x32xf32>
    %223 = tpu.matmul %221, %222, %cst_75 {dimension_numbers = #tpu.dot_dimension_numbers<[1], [0], [0], [1], [0, 0, 1, 1], [], []>} : vector<16x8xf32>, vector<8x32xf32>, vector<16x32xf32> -> vector<16x32xf32>
    %224 = arith.addf %220, %223 : vector<16x32xf32>
    %225 = vector.shape_cast %197 : vector<2x8x8xf32> to vector<16x8xf32>
    %226 = vector.extract_strided_slice %142 {offsets = [16, 0], sizes = [8, 32], strides = [1, 1]} : vector<32x32xf32> to vector<8x32xf32>
    %cst_76 = arith.constant dense<0.000000e+00> : vector<16x32xf32>
    %227 = tpu.matmul %225, %226, %cst_76 {dimension_numbers = #tpu.dot_dimension_numbers<[1], [0], [0], [1], [0, 0, 1, 1], [], []>} : vector<16x8xf32>, vector<8x32xf32>, vector<16x32xf32> -> vector<16x32xf32>
    %228 = arith.addf %224, %227 : vector<16x32xf32>
    %229 = vector.shape_cast %215 : vector<2x8x8xf32> to vector<16x8xf32>
    %230 = vector.extract_strided_slice %142 {offsets = [24, 0], sizes = [8, 32], strides = [1, 1]} : vector<32x32xf32> to vector<8x32xf32>
    %cst_77 = arith.constant dense<0.000000e+00> : vector<16x32xf32>
    %231 = tpu.matmul %229, %230, %cst_77 {dimension_numbers = #tpu.dot_dimension_numbers<[1], [0], [0], [1], [0, 0, 1, 1], [], []>} : vector<16x8xf32>, vector<8x32xf32>, vector<16x32xf32> -> vector<16x32xf32>
    %232 = arith.addf %228, %231 : vector<16x32xf32>
    %233 = vector.broadcast %143 : vector<1x32xf32> to vector<16x32xf32>
    %234 = arith.addf %232, %233 : vector<16x32xf32>
    %235 = arith.addf %129, %234 : vector<16x32xf32>
    %c0_78 = arith.constant 0 : index
    %c0_79 = arith.constant 0 : index
    %236 = vector.load %arg15[%c0_78, %c0_79] : memref<1x32xf32, #tpu.memory_space<vmem>>, vector<1x32xf32>
    %c0_80 = arith.constant 0 : index
    %c0_81 = arith.constant 0 : index
    %237 = vector.load %arg16[%c0_80, %c0_81] : memref<1x32xf32, #tpu.memory_space<vmem>>, vector<1x32xf32>
    %cst_82 = arith.constant dense<0.000000e+00> : vector<16xf32>
    %238 = vector.multi_reduction <add>, %235, %cst_82 [1] : vector<16x32xf32> to vector<16xf32>
    %239 = vector.shape_cast %238 : vector<16xf32> to vector<16x1xf32>
    %cst_83 = arith.constant 3.200000e+01 : f32
    %240 = vector.broadcast %cst_83 : f32 to vector<16x1xf32>
    %241 = arith.divf %239, %240 : vector<16x1xf32>
    %242 = vector.broadcast %241 : vector<16x1xf32> to vector<16x32xf32>
    %243 = arith.subf %235, %242 : vector<16x32xf32>
    %244 = arith.mulf %243, %243 : vector<16x32xf32>
    %cst_84 = arith.constant dense<0.000000e+00> : vector<16xf32>
    %245 = vector.multi_reduction <add>, %244, %cst_84 [1] : vector<16x32xf32> to vector<16xf32>
    %246 = vector.shape_cast %245 : vector<16xf32> to vector<16x1xf32>
    %cst_85 = arith.constant 3.200000e+01 : f32
    %247 = vector.broadcast %cst_85 : f32 to vector<16x1xf32>
    %248 = arith.divf %246, %247 : vector<16x1xf32>
    %249 = vector.broadcast %241 : vector<16x1xf32> to vector<16x32xf32>
    %250 = arith.subf %235, %249 : vector<16x32xf32>
    %cst_86 = arith.constant 9.99999974E-6 : f32
    %251 = vector.broadcast %cst_86 : f32 to vector<16x1xf32>
    %252 = arith.addf %248, %251 : vector<16x1xf32>
    %253 = math.rsqrt %252 : vector<16x1xf32>
    %254 = vector.broadcast %253 : vector<16x1xf32> to vector<16x32xf32>
    %255 = arith.mulf %250, %254 : vector<16x32xf32>
    %256 = vector.broadcast %236 : vector<1x32xf32> to vector<16x32xf32>
    %257 = arith.mulf %255, %256 : vector<16x32xf32>
    %258 = vector.broadcast %237 : vector<1x32xf32> to vector<16x32xf32>
    %259 = arith.addf %257, %258 : vector<16x32xf32>
    %c0_87 = arith.constant 0 : index
    %c0_88 = arith.constant 0 : index
    %260 = vector.load %arg17[%c0_87, %c0_88] : memref<32x128xf32, #tpu.memory_space<vmem>>, vector<32x128xf32>
    %cst_89 = arith.constant dense<0.000000e+00> : vector<16x128xf32>
    %261 = tpu.matmul %259, %260, %cst_89 {dimension_numbers = #tpu.dot_dimension_numbers<[1], [0], [0], [1], [0, 0, 1, 1], [], []>} : vector<16x32xf32>, vector<32x128xf32>, vector<16x128xf32> -> vector<16x128xf32>
    %c0_90 = arith.constant 0 : index
    %c0_91 = arith.constant 0 : index
    %262 = vector.load %arg18[%c0_90, %c0_91] : memref<1x128xf32, #tpu.memory_space<vmem>>, vector<1x128xf32>
    %263 = vector.broadcast %262 : vector<1x128xf32> to vector<16x128xf32>
    %264 = arith.addf %261, %263 : vector<16x128xf32>
    %cst_92 = arith.constant 0.000000e+00 : f32
    %265 = vector.broadcast %cst_92 : f32 to vector<16x128xf32>
    %266 = arith.maximumf %264, %265 : vector<16x128xf32>
    %c0_93 = arith.constant 0 : index
    %c0_94 = arith.constant 0 : index
    %267 = vector.load %arg19[%c0_93, %c0_94] : memref<128x32xf32, #tpu.memory_space<vmem>>, vector<128x32xf32>
    %cst_95 = arith.constant dense<0.000000e+00> : vector<16x32xf32>
    %268 = tpu.matmul %266, %267, %cst_95 {dimension_numbers = #tpu.dot_dimension_numbers<[1], [0], [0], [1], [0, 0, 1, 1], [], []>} : vector<16x128xf32>, vector<128x32xf32>, vector<16x32xf32> -> vector<16x32xf32>
    %c0_96 = arith.constant 0 : index
    %c0_97 = arith.constant 0 : index
    %269 = vector.load %arg20[%c0_96, %c0_97] : memref<1x32xf32, #tpu.memory_space<vmem>>, vector<1x32xf32>
    %270 = vector.broadcast %269 : vector<1x32xf32> to vector<16x32xf32>
    %271 = arith.addf %268, %270 : vector<16x32xf32>
    %272 = arith.addf %259, %271 : vector<16x32xf32>
    %c0_98 = arith.constant 0 : index
    %c0_99 = arith.constant 0 : index
    %273 = vector.load %arg21[%c0_98, %c0_99] : memref<1x32xf32, #tpu.memory_space<vmem>>, vector<1x32xf32>
    %c0_100 = arith.constant 0 : index
    %c0_101 = arith.constant 0 : index
    %274 = vector.load %arg22[%c0_100, %c0_101] : memref<1x32xf32, #tpu.memory_space<vmem>>, vector<1x32xf32>
    %cst_102 = arith.constant dense<0.000000e+00> : vector<16xf32>
    %275 = vector.multi_reduction <add>, %272, %cst_102 [1] : vector<16x32xf32> to vector<16xf32>
    %276 = vector.shape_cast %275 : vector<16xf32> to vector<16x1xf32>
    %cst_103 = arith.constant 3.200000e+01 : f32
    %277 = vector.broadcast %cst_103 : f32 to vector<16x1xf32>
    %278 = arith.divf %276, %277 : vector<16x1xf32>
    %279 = vector.broadcast %278 : vector<16x1xf32> to vector<16x32xf32>
    %280 = arith.subf %272, %279 : vector<16x32xf32>
    %281 = arith.mulf %280, %280 : vector<16x32xf32>
    %cst_104 = arith.constant dense<0.000000e+00> : vector<16xf32>
    %282 = vector.multi_reduction <add>, %281, %cst_104 [1] : vector<16x32xf32> to vector<16xf32>
    %283 = vector.shape_cast %282 : vector<16xf32> to vector<16x1xf32>
    %cst_105 = arith.constant 3.200000e+01 : f32
    %284 = vector.broadcast %cst_105 : f32 to vector<16x1xf32>
    %285 = arith.divf %283, %284 : vector<16x1xf32>
    %286 = vector.broadcast %278 : vector<16x1xf32> to vector<16x32xf32>
    %287 = arith.subf %272, %286 : vector<16x32xf32>
    %cst_106 = arith.constant 9.99999974E-6 : f32
    %288 = vector.broadcast %cst_106 : f32 to vector<16x1xf32>
    %289 = arith.addf %285, %288 : vector<16x1xf32>
    %290 = math.rsqrt %289 : vector<16x1xf32>
    %291 = vector.broadcast %290 : vector<16x1xf32> to vector<16x32xf32>
    %292 = arith.mulf %287, %291 : vector<16x32xf32>
    %293 = vector.broadcast %273 : vector<1x32xf32> to vector<16x32xf32>
    %294 = arith.mulf %292, %293 : vector<16x32xf32>
    %295 = vector.broadcast %274 : vector<1x32xf32> to vector<16x32xf32>
    %296 = arith.addf %294, %295 : vector<16x32xf32>
    %297 = vector.shape_cast %296 : vector<16x32xf32> to vector<2x8x32xf32>
    %c0_107 = arith.constant 0 : index
    %c0_108 = arith.constant 0 : index
    %c0_109 = arith.constant 0 : index
    %298 = vector.load %arg23[%c0_107, %c0_108, %c0_109] : memref<2x8x32xf32, #tpu.memory_space<vmem>>, vector<2x8x32xf32>
    tpu.vector_store %arg23[%c0_107, %c0_108, %c0_109], %297 {strides = array<i32>} : memref<2x8x32xf32, #tpu.memory_space<vmem>>, vector<2x8x32xf32>,
    return
  }
  func.func @transform_0(%arg0: i32) -> (i32, i32, i32) {
    %c0_i32 = arith.constant 0 : i32
    %c0_i32_0 = arith.constant 0 : i32
    %c0_i32_1 = arith.constant 0 : i32
    return %arg0, %c0_i32, %c0_i32_0 : i32, i32, i32
  }
  func.func @transform_1(%arg0: i32) -> (i32, i32, i32) {
    %c0_i32 = arith.constant 0 : i32
    %c0_i32_0 = arith.constant 0 : i32
    %c0_i32_1 = arith.constant 0 : i32
    return %arg0, %c0_i32, %c0_i32_0 : i32, i32, i32
  }
  func.func @transform_2(%arg0: i32) -> (i32, i32) {
    %c0_i32 = arith.constant 0 : i32
    %c0_i32_0 = arith.constant 0 : i32
    %c0_i32_1 = arith.constant 0 : i32
    return %c0_i32, %c0_i32_0 : i32, i32
  }
  func.func @transform_3(%arg0: i32) -> (i32, i32) {
    %c0_i32 = arith.constant 0 : i32
    %c0_i32_0 = arith.constant 0 : i32
    %c0_i32_1 = arith.constant 0 : i32
    return %c0_i32, %c0_i32_0 : i32, i32
  }
  func.func @transform_4(%arg0: i32) -> (i32, i32) {
    %c0_i32 = arith.constant 0 : i32
    %c0_i32_0 = arith.constant 0 : i32
    %c0_i32_1 = arith.constant 0 : i32
    return %c0_i32, %c0_i32_0 : i32, i32
  }
  func.func @transform_5(%arg0: i32) -> (i32, i32) {
    %c0_i32 = arith.constant 0 : i32
    %c0_i32_0 = arith.constant 0 : i32
    %c0_i32_1 = arith.constant 0 : i32
    return %c0_i32, %c0_i32_0 : i32, i32
  }
  func.func @transform_6(%arg0: i32) -> (i32, i32) {
    %c0_i32 = arith.constant 0 : i32
    %c0_i32_0 = arith.constant 0 : i32
    %c0_i32_1 = arith.constant 0 : i32
    return %c0_i32, %c0_i32_0 : i32, i32
  }
  func.func @transform_7(%arg0: i32) -> (i32, i32) {
    %c0_i32 = arith.constant 0 : i32
    %c0_i32_0 = arith.constant 0 : i32
    %c0_i32_1 = arith.constant 0 : i32
    return %c0_i32, %c0_i32_0 : i32, i32
  }
  func.func @transform_8(%arg0: i32) -> (i32, i32) {
    %c0_i32 = arith.constant 0 : i32
    %c0_i32_0 = arith.constant 0 : i32
    %c0_i32_1 = arith.constant 0 : i32
    return %c0_i32, %c0_i32_0 : i32, i32
  }
  func.func @transform_9(%arg0: i32) -> (i32, i32) {
    %c0_i32 = arith.constant 0 : i32
    %c0_i32_0 = arith.constant 0 : i32
    %c0_i32_1 = arith.constant 0 : i32
    return %c0_i32, %c0_i32_0 : i32, i32
  }
  func.func @transform_10(%arg0: i32) -> (i32, i32) {
    %c0_i32 = arith.constant 0 : i32
    %c0_i32_0 = arith.constant 0 : i32
    %c0_i32_1 = arith.constant 0 : i32
    return %c0_i32, %c0_i32_0 : i32, i32
  }
  func.func @transform_11(%arg0: i32) -> (i32, i32) {
    %c0_i32 = arith.constant 0 : i32
    %c0_i32_0 = arith.constant 0 : i32
    %c0_i32_1 = arith.constant 0 : i32
    return %c0_i32, %c0_i32_0 : i32, i32
  }
  func.func @transform_12(%arg0: i32) -> (i32, i32) {
    %c0_i32 = arith.constant 0 : i32
    %c0_i32_0 = arith.constant 0 : i32
    %c0_i32_1 = arith.constant 0 : i32
    return %c0_i32, %c0_i32_0 : i32, i32
  }
  func.func @transform_13(%arg0: i32) -> (i32, i32) {
    %c0_i32 = arith.constant 0 : i32
    %c0_i32_0 = arith.constant 0 : i32
    %c0_i32_1 = arith.constant 0 : i32
    return %c0_i32, %c0_i32_0 : i32, i32
  }
  func.func @transform_14(%arg0: i32) -> (i32, i32) {
    %c0_i32 = arith.constant 0 : i32
    %c0_i32_0 = arith.constant 0 : i32
    %c0_i32_1 = arith.constant 0 : i32
    return %c0_i32, %c0_i32_0 : i32, i32
  }
  func.func @transform_15(%arg0: i32) -> (i32, i32) {
    %c0_i32 = arith.constant 0 : i32
    %c0_i32_0 = arith.constant 0 : i32
    %c0_i32_1 = arith.constant 0 : i32
    return %c0_i32, %c0_i32_0 : i32, i32
  }
  func.func @transform_16(%arg0: i32) -> (i32, i32) {
    %c0_i32 = arith.constant 0 : i32
    %c0_i32_0 = arith.constant 0 : i32
    %c0_i32_1 = arith.constant 0 : i32
    return %c0_i32, %c0_i32_0 : i32, i32
  }
  func.func @transform_17(%arg0: i32) -> (i32, i32) {
    %c0_i32 = arith.constant 0 : i32
    %c0_i32_0 = arith.constant 0 : i32
    %c0_i32_1 = arith.constant 0 : i32
    return %c0_i32, %c0_i32_0 : i32, i32
  }
  func.func @transform_18(%arg0: i32) -> (i32, i32) {
    %c0_i32 = arith.constant 0 : i32
    %c0_i32_0 = arith.constant 0 : i32
    %c0_i32_1 = arith.constant 0 : i32
    return %c0_i32, %c0_i32_0 : i32, i32
  }
  func.func @transform_19(%arg0: i32) -> (i32, i32) {
    %c0_i32 = arith.constant 0 : i32
    %c0_i32_0 = arith.constant 0 : i32
    %c0_i32_1 = arith.constant 0 : i32
    return %c0_i32, %c0_i32_0 : i32, i32
  }
  func.func @transform_20(%arg0: i32) -> (i32, i32) {
    %c0_i32 = arith.constant 0 : i32
    %c0_i32_0 = arith.constant 0 : i32
    %c0_i32_1 = arith.constant 0 : i32
    return %c0_i32, %c0_i32_0 : i32, i32
  }
  func.func @transform_21(%arg0: i32) -> (i32, i32) {
    %c0_i32 = arith.constant 0 : i32
    %c0_i32_0 = arith.constant 0 : i32
    %c0_i32_1 = arith.constant 0 : i32
    return %c0_i32, %c0_i32_0 : i32, i32
  }
  func.func @transform_22(%arg0: i32) -> (i32, i32, i32) {
    %c0_i32 = arith.constant 0 : i32
    %c0_i32_0 = arith.constant 0 : i32
    %c0_i32_1 = arith.constant 0 : i32
    return %arg0, %c0_i32, %c0_i32_0 : i32, i32, i32
  }
}

module attributes {stable_mosaic.version = 11 : i64} {
  func.func @_decoder_layer_kernel(%arg0: i32, %arg1: memref<2x8x32xf32, #tpu.memory_space<vmem>>, %arg2: memref<2x16x32xf32, #tpu.memory_space<vmem>>, %arg3: memref<32x96xf32, #tpu.memory_space<vmem>>, %arg4: memref<1x96xf32, #tpu.memory_space<vmem>>, %arg5: memref<32x32xf32, #tpu.memory_space<vmem>>, %arg6: memref<1x32xf32, #tpu.memory_space<vmem>>, %arg7: memref<1x32xf32, #tpu.memory_space<vmem>>, %arg8: memref<1x32xf32, #tpu.memory_space<vmem>>, %arg9: memref<32x32xf32, #tpu.memory_space<vmem>>, %arg10: memref<1x32xf32, #tpu.memory_space<vmem>>, %arg11: memref<32x64xf32, #tpu.memory_space<vmem>>, %arg12: memref<1x64xf32, #tpu.memory_space<vmem>>, %arg13: memref<32x32xf32, #tpu.memory_space<vmem>>, %arg14: memref<1x32xf32, #tpu.memory_space<vmem>>, %arg15: memref<1x32xf32, #tpu.memory_space<vmem>>, %arg16: memref<1x32xf32, #tpu.memory_space<vmem>>, %arg17: memref<32x128xf32, #tpu.memory_space<vmem>>, %arg18: memref<1x128xf32, #tpu.memory_space<vmem>>, %arg19: memref<128x32xf32, #tpu.memory_space<vmem>>, %arg20: memref<1x32xf32, #tpu.memory_space<vmem>>, %arg21: memref<1x32xf32, #tpu.memory_space<vmem>>, %arg22: memref<1x32xf32, #tpu.memory_space<vmem>>, %arg23: memref<2x8x32xf32, #tpu.memory_space<vmem>>) attributes {dimension_semantics = [#tpu.dimension_semantics<parallel>], iteration_bounds = array<i64: 1>, scalar_prefetch = 0 : i64, scratch_operands = 0 : i64, tpu.core_type = #tpu.core_type<tc>, window_params = [{transform_indices = @transform_0, window_bounds = array<i64: 2, 8, 32>}, {transform_indices = @transform_1, window_bounds = array<i64: 2, 16, 32>}, {pipeline_mode = #tpu.pipeline_mode<synchronous>, transform_indices = @transform_2, window_bounds = array<i64: 32, 96>}, {pipeline_mode = #tpu.pipeline_mode<synchronous>, transform_indices = @transform_3, window_bounds = array<i64: 1, 96>}, {pipeline_mode = #tpu.pipeline_mode<synchronous>, transform_indices = @transform_4, window_bounds = array<i64: 32, 32>}, {pipeline_mode = #tpu.pipeline_mode<synchronous>, transform_indices = @transform_5, window_bounds = array<i64: 1, 32>}, {pipeline_mode = #tpu.pipeline_mode<synchronous>, transform_indices = @transform_6, window_bounds = array<i64: 1, 32>}, {pipeline_mode = #tpu.pipeline_mode<synchronous>, transform_indices = @transform_7, window_bounds = array<i64: 1, 32>}, {pipeline_mode = #tpu.pipeline_mode<synchronous>, transform_indices = @transform_8, window_bounds = array<i64: 32, 32>}, {pipeline_mode = #tpu.pipeline_mode<synchronous>, transform_indices = @transform_9, window_bounds = array<i64: 1, 32>}, {pipeline_mode = #tpu.pipeline_mode<synchronous>, transform_indices = @transform_10, window_bounds = array<i64: 32, 64>}, {pipeline_mode = #tpu.pipeline_mode<synchronous>, transform_indices = @transform_11, window_bounds = array<i64: 1, 64>}, {pipeline_mode = #tpu.pipeline_mode<synchronous>, transform_indices = @transform_12, window_bounds = array<i64: 32, 32>}, {pipeline_mode = #tpu.pipeline_mode<synchronous>, transform_indices = @transform_13, window_bounds = array<i64: 1, 32>}, {pipeline_mode = #tpu.pipeline_mode<synchronous>, transform_indices = @transform_14, window_bounds = array<i64: 1, 32>}, {pipeline_mode = #tpu.pipeline_mode<synchronous>, transform_indices = @transform_15, window_bounds = array<i64: 1, 32>}, {pipeline_mode = #tpu.pipeline_mode<synchronous>, transform_indices = @transform_16, window_bounds = array<i64: 32, 128>}, {pipeline_mode = #tpu.pipeline_mode<synchronous>, transform_indices = @transform_17, window_bounds = array<i64: 1, 128>}, {pipeline_mode = #tpu.pipeline_mode<synchronous>, transform_indices = @transform_18, window_bounds = array<i64: 128, 32>}, {pipeline_mode = #tpu.pipeline_mode<synchronous>, transform_indices = @transform_19, window_bounds = array<i64: 1, 32>}, {pipeline_mode = #tpu.pipeline_mode<synchronous>, transform_indices = @transform_20, window_bounds = array<i64: 1, 32>}, {pipeline_mode = #tpu.pipeline_mode<synchronous>, transform_indices = @transform_21, window_bounds = array<i64: 1, 32>}, {transform_indices = @transform_22, window_bounds = array<i64: 2, 8, 32>}]} {
    %c0 = arith.constant 0 : index
    %c0_0 = arith.constant 0 : index
    %c0_1 = arith.constant 0 : index
    %0 = vector.load %arg1[%c0, %c0_0, %c0_1] : memref<2x8x32xf32, #tpu.memory_space<vmem>>, vector<2x8x32xf32>
    %1 = vector.shape_cast %0 : vector<2x8x32xf32> to vector<16x32xf32>
    %c0_2 = arith.constant 0 : index
    %c0_3 = arith.constant 0 : index
    %c0_4 = arith.constant 0 : index
    %2 = vector.load %arg2[%c0_2, %c0_3, %c0_4] : memref<2x16x32xf32, #tpu.memory_space<vmem>>, vector<2x16x32xf32>
    %3 = vector.shape_cast %2 : vector<2x16x32xf32> to vector<32x32xf32>
    %c0_5 = arith.constant 0 : index
    %c0_6 = arith.constant 0 : index
    %4 = vector.load %arg3[%c0_5, %c0_6] : memref<32x96xf32, #tpu.memory_space<vmem>>, vector<32x96xf32>
    %cst = arith.constant dense<0.000000e+00> : vector<16x96xf32>
    %5 = tpu.matmul %1, %4, %cst {dimension_numbers = #tpu.dot_dimension_numbers<[1], [0], [0], [1], [0, 0, 1, 1], [], []>} : vector<16x32xf32>, vector<32x96xf32>, vector<16x96xf32> -> vector<16x96xf32>
    %c0_7 = arith.constant 0 : index
    %c0_8 = arith.constant 0 : index
    %6 = vector.load %arg4[%c0_7, %c0_8] : memref<1x96xf32, #tpu.memory_space<vmem>>, vector<1x96xf32>
    %7 = vector.broadcast %6 : vector<1x96xf32> to vector<16x96xf32>
    %8 = arith.addf %5, %7 : vector<16x96xf32>
    %9 = vector.extract_strided_slice %8 {offsets = [0, 0], sizes = [16, 32], strides = [1, 1]} : vector<16x96xf32> to vector<16x32xf32>
    %10 = vector.extract_strided_slice %8 {offsets = [0, 32], sizes = [16, 32], strides = [1, 1]} : vector<16x96xf32> to vector<16x32xf32>
    %11 = vector.extract_strided_slice %8 {offsets = [0, 64], sizes = [16, 32], strides = [1, 1]} : vector<16x96xf32> to vector<16x32xf32>
    %c0_9 = arith.constant 0 : index
    %c0_10 = arith.constant 0 : index
    %12 = vector.load %arg5[%c0_9, %c0_10] : memref<32x32xf32, #tpu.memory_space<vmem>>, vector<32x32xf32>
    %c0_11 = arith.constant 0 : index
    %c0_12 = arith.constant 0 : index
    %13 = vector.load %arg6[%c0_11, %c0_12] : memref<1x32xf32, #tpu.memory_space<vmem>>, vector<1x32xf32>
    %14 = vector.extract_strided_slice %9 {offsets = [0, 0], sizes = [16, 8], strides = [1, 1]} : vector<16x32xf32> to vector<16x8xf32>
    %15 = vector.shape_cast %14 : vector<16x8xf32> to vector<2x8x8xf32>
    %16 = vector.extract_strided_slice %10 {offsets = [0, 0], sizes = [16, 8], strides = [1, 1]} : vector<16x32xf32> to vector<16x8xf32>
    %17 = vector.shape_cast %16 : vector<16x8xf32> to vector<2x8x8xf32>
    %18 = vector.extract_strided_slice %11 {offsets = [0, 0], sizes = [16, 8], strides = [1, 1]} : vector<16x32xf32> to vector<16x8xf32>
    %19 = vector.shape_cast %18 : vector<16x8xf32> to vector<2x8x8xf32>
    "tpu.trace_start"() <{level = 10 : i32, message = "bqd,bkd->bqk"}> : () -> ()
    %cst_13 = arith.constant dense<0.000000e+00> : vector<2x8x8xf32>
    %20 = tpu.matmul %15, %17, %cst_13 {dimension_numbers = #tpu.dot_dimension_numbers<[2], [2], [1], [1], [0, 0, 0, 1, 1, 1], [0], [0]>} : vector<2x8x8xf32>, vector<2x8x8xf32>, vector<2x8x8xf32> -> vector<2x8x8xf32>
    "tpu.trace_stop"() : () -> ()
    %cst_14 = arith.constant dense<0xFF800000> : vector<2x8xf32>
    %21 = vector.multi_reduction <maximumf>, %20, %cst_14 [2] : vector<2x8x8xf32> to vector<2x8xf32>
    %22 = vector.shape_cast %21 : vector<2x8xf32> to vector<2x8x1xf32>
    %23 = vector.broadcast %22 : vector<2x8x1xf32> to vector<2x8x8xf32>
    %24 = arith.subf %20, %23 : vector<2x8x8xf32>
    %25 = math.exp %24 : vector<2x8x8xf32>
    %cst_15 = arith.constant dense<0.000000e+00> : vector<2x8xf32>
    %26 = vector.multi_reduction <add>, %25, %cst_15 [2] : vector<2x8x8xf32> to vector<2x8xf32>
    %27 = vector.shape_cast %26 : vector<2x8xf32> to vector<2x8x1xf32>
    %28 = tpu.reciprocal %27 {approx = true} : vector<2x8x1xf32> -> vector<2x8x1xf32>
    %29 = vector.broadcast %28 : vector<2x8x1xf32> to vector<2x8x8xf32>
    %30 = arith.mulf %25, %29 : vector<2x8x8xf32>
    "tpu.trace_start"() <{level = 10 : i32, message = "bqk,bkd->bqd"}> : () -> ()
    %cst_16 = arith.constant dense<0.000000e+00> : vector<2x8x8xf32>
    %31 = tpu.matmul %30, %19, %cst_16 {dimension_numbers = #tpu.dot_dimension_numbers<[2], [1], [1], [2], [0, 0, 0, 1, 1, 2], [0], [0]>} : vector<2x8x8xf32>, vector<2x8x8xf32>, vector<2x8x8xf32> -> vector<2x8x8xf32>
    "tpu.trace_stop"() : () -> ()
    %32 = vector.extract_strided_slice %9 {offsets = [0, 8], sizes = [16, 8], strides = [1, 1]} : vector<16x32xf32> to vector<16x8xf32>
    %33 = vector.shape_cast %32 : vector<16x8xf32> to vector<2x8x8xf32>
    %34 = vector.extract_strided_slice %10 {offsets = [0, 8], sizes = [16, 8], strides = [1, 1]} : vector<16x32xf32> to vector<16x8xf32>
    %35 = vector.shape_cast %34 : vector<16x8xf32> to vector<2x8x8xf32>
    %36 = vector.extract_strided_slice %11 {offsets = [0, 8], sizes = [16, 8], strides = [1, 1]} : vector<16x32xf32> to vector<16x8xf32>
    %37 = vector.shape_cast %36 : vector<16x8xf32> to vector<2x8x8xf32>
    "tpu.trace_start"() <{level = 10 : i32, message = "bqd,bkd->bqk"}> : () -> ()
    %cst_17 = arith.constant dense<0.000000e+00> : vector<2x8x8xf32>
    %38 = tpu.matmul %33, %35, %cst_17 {dimension_numbers = #tpu.dot_dimension_numbers<[2], [2], [1], [1], [0, 0, 0, 1, 1, 1], [0], [0]>} : vector<2x8x8xf32>, vector<2x8x8xf32>, vector<2x8x8xf32> -> vector<2x8x8xf32>
    "tpu.trace_stop"() : () -> ()
    %cst_18 = arith.constant dense<0xFF800000> : vector<2x8xf32>
    %39 = vector.multi_reduction <maximumf>, %38, %cst_18 [2] : vector<2x8x8xf32> to vector<2x8xf32>
    %40 = vector.shape_cast %39 : vector<2x8xf32> to vector<2x8x1xf32>
    %41 = vector.broadcast %40 : vector<2x8x1xf32> to vector<2x8x8xf32>
    %42 = arith.subf %38, %41 : vector<2x8x8xf32>
    %43 = math.exp %42 : vector<2x8x8xf32>
    %cst_19 = arith.constant dense<0.000000e+00> : vector<2x8xf32>
    %44 = vector.multi_reduction <add>, %43, %cst_19 [2] : vector<2x8x8xf32> to vector<2x8xf32>
    %45 = vector.shape_cast %44 : vector<2x8xf32> to vector<2x8x1xf32>
    %46 = tpu.reciprocal %45 {approx = true} : vector<2x8x1xf32> -> vector<2x8x1xf32>
    %47 = vector.broadcast %46 : vector<2x8x1xf32> to vector<2x8x8xf32>
    %48 = arith.mulf %43, %47 : vector<2x8x8xf32>
    "tpu.trace_start"() <{level = 10 : i32, message = "bqk,bkd->bqd"}> : () -> ()
    %cst_20 = arith.constant dense<0.000000e+00> : vector<2x8x8xf32>
    %49 = tpu.matmul %48, %37, %cst_20 {dimension_numbers = #tpu.dot_dimension_numbers<[2], [1], [1], [2], [0, 0, 0, 1, 1, 2], [0], [0]>} : vector<2x8x8xf32>, vector<2x8x8xf32>, vector<2x8x8xf32> -> vector<2x8x8xf32>
    "tpu.trace_stop"() : () -> ()
    %50 = vector.extract_strided_slice %9 {offsets = [0, 16], sizes = [16, 8], strides = [1, 1]} : vector<16x32xf32> to vector<16x8xf32>
    %51 = vector.shape_cast %50 : vector<16x8xf32> to vector<2x8x8xf32>
    %52 = vector.extract_strided_slice %10 {offsets = [0, 16], sizes = [16, 8], strides = [1, 1]} : vector<16x32xf32> to vector<16x8xf32>
    %53 = vector.shape_cast %52 : vector<16x8xf32> to vector<2x8x8xf32>
    %54 = vector.extract_strided_slice %11 {offsets = [0, 16], sizes = [16, 8], strides = [1, 1]} : vector<16x32xf32> to vector<16x8xf32>
    %55 = vector.shape_cast %54 : vector<16x8xf32> to vector<2x8x8xf32>
    "tpu.trace_start"() <{level = 10 : i32, message = "bqd,bkd->bqk"}> : () -> ()
    %cst_21 = arith.constant dense<0.000000e+00> : vector<2x8x8xf32>
    %56 = tpu.matmul %51, %53, %cst_21 {dimension_numbers = #tpu.dot_dimension_numbers<[2], [2], [1], [1], [0, 0, 0, 1, 1, 1], [0], [0]>} : vector<2x8x8xf32>, vector<2x8x8xf32>, vector<2x8x8xf32> -> vector<2x8x8xf32>
    "tpu.trace_stop"() : () -> ()
    %cst_22 = arith.constant dense<0xFF800000> : vector<2x8xf32>
    %57 = vector.multi_reduction <maximumf>, %56, %cst_22 [2] : vector<2x8x8xf32> to vector<2x8xf32>
    %58 = vector.shape_cast %57 : vector<2x8xf32> to vector<2x8x1xf32>
    %59 = vector.broadcast %58 : vector<2x8x1xf32> to vector<2x8x8xf32>
    %60 = arith.subf %56, %59 : vector<2x8x8xf32>
    %61 = math.exp %60 : vector<2x8x8xf32>
    %cst_23 = arith.constant dense<0.000000e+00> : vector<2x8xf32>
    %62 = vector.multi_reduction <add>, %61, %cst_23 [2] : vector<2x8x8xf32> to vector<2x8xf32>
    %63 = vector.shape_cast %62 : vector<2x8xf32> to vector<2x8x1xf32>
    %64 = tpu.reciprocal %63 {approx = true} : vector<2x8x1xf32> -> vector<2x8x1xf32>
    %65 = vector.broadcast %64 : vector<2x8x1xf32> to vector<2x8x8xf32>
    %66 = arith.mulf %61, %65 : vector<2x8x8xf32>
    "tpu.trace_start"() <{level = 10 : i32, message = "bqk,bkd->bqd"}> : () -> ()
    %cst_24 = arith.constant dense<0.000000e+00> : vector<2x8x8xf32>
    %67 = tpu.matmul %66, %55, %cst_24 {dimension_numbers = #tpu.dot_dimension_numbers<[2], [1], [1], [2], [0, 0, 0, 1, 1, 2], [0], [0]>} : vector<2x8x8xf32>, vector<2x8x8xf32>, vector<2x8x8xf32> -> vector<2x8x8xf32>
    "tpu.trace_stop"() : () -> ()
    %68 = vector.extract_strided_slice %9 {offsets = [0, 24], sizes = [16, 8], strides = [1, 1]} : vector<16x32xf32> to vector<16x8xf32>
    %69 = vector.shape_cast %68 : vector<16x8xf32> to vector<2x8x8xf32>
    %70 = vector.extract_strided_slice %10 {offsets = [0, 24], sizes = [16, 8], strides = [1, 1]} : vector<16x32xf32> to vector<16x8xf32>
    %71 = vector.shape_cast %70 : vector<16x8xf32> to vector<2x8x8xf32>
    %72 = vector.extract_strided_slice %11 {offsets = [0, 24], sizes = [16, 8], strides = [1, 1]} : vector<16x32xf32> to vector<16x8xf32>
    %73 = vector.shape_cast %72 : vector<16x8xf32> to vector<2x8x8xf32>
    "tpu.trace_start"() <{level = 10 : i32, message = "bqd,bkd->bqk"}> : () -> ()
    %cst_25 = arith.constant dense<0.000000e+00> : vector<2x8x8xf32>
    %74 = tpu.matmul %69, %71, %cst_25 {dimension_numbers = #tpu.dot_dimension_numbers<[2], [2], [1], [1], [0, 0, 0, 1, 1, 1], [0], [0]>} : vector<2x8x8xf32>, vector<2x8x8xf32>, vector<2x8x8xf32> -> vector<2x8x8xf32>
    "tpu.trace_stop"() : () -> ()
    %cst_26 = arith.constant dense<0xFF800000> : vector<2x8xf32>
    %75 = vector.multi_reduction <maximumf>, %74, %cst_26 [2] : vector<2x8x8xf32> to vector<2x8xf32>
    %76 = vector.shape_cast %75 : vector<2x8xf32> to vector<2x8x1xf32>
    %77 = vector.broadcast %76 : vector<2x8x1xf32> to vector<2x8x8xf32>
    %78 = arith.subf %74, %77 : vector<2x8x8xf32>
    %79 = math.exp %78 : vector<2x8x8xf32>
    %cst_27 = arith.constant dense<0.000000e+00> : vector<2x8xf32>
    %80 = vector.multi_reduction <add>, %79, %cst_27 [2] : vector<2x8x8xf32> to vector<2x8xf32>
    %81 = vector.shape_cast %80 : vector<2x8xf32> to vector<2x8x1xf32>
    %82 = tpu.reciprocal %81 {approx = true} : vector<2x8x1xf32> -> vector<2x8x1xf32>
    %83 = vector.broadcast %82 : vector<2x8x1xf32> to vector<2x8x8xf32>
    %84 = arith.mulf %79, %83 : vector<2x8x8xf32>
    "tpu.trace_start"() <{level = 10 : i32, message = "bqk,bkd->bqd"}> : () -> ()
    %cst_28 = arith.constant dense<0.000000e+00> : vector<2x8x8xf32>
    %85 = tpu.matmul %84, %73, %cst_28 {dimension_numbers = #tpu.dot_dimension_numbers<[2], [1], [1], [2], [0, 0, 0, 1, 1, 2], [0], [0]>} : vector<2x8x8xf32>, vector<2x8x8xf32>, vector<2x8x8xf32> -> vector<2x8x8xf32>
    "tpu.trace_stop"() : () -> ()
    %86 = tpu.concatenate %31, %49, %67, %85 in 2 : vector<2x8x8xf32>, vector<2x8x8xf32>, vector<2x8x8xf32>, vector<2x8x8xf32> -> vector<2x8x32xf32>
    %87 = vector.shape_cast %86 : vector<2x8x32xf32> to vector<16x32xf32>
    %cst_29 = arith.constant dense<0.000000e+00> : vector<16x32xf32>
    %88 = tpu.matmul %87, %12, %cst_29 {dimension_numbers = #tpu.dot_dimension_numbers<[1], [0], [0], [1], [0, 0, 1, 1], [], []>} : vector<16x32xf32>, vector<32x32xf32>, vector<16x32xf32> -> vector<16x32xf32>
    %89 = vector.broadcast %13 : vector<1x32xf32> to vector<16x32xf32>
    %90 = arith.addf %88, %89 : vector<16x32xf32>
    %91 = arith.addf %1, %90 : vector<16x32xf32>
    %c0_30 = arith.constant 0 : index
    %c0_31 = arith.constant 0 : index
    %92 = vector.load %arg7[%c0_30, %c0_31] : memref<1x32xf32, #tpu.memory_space<vmem>>, vector<1x32xf32>
    %c0_32 = arith.constant 0 : index
    %c0_33 = arith.constant 0 : index
    %93 = vector.load %arg8[%c0_32, %c0_33] : memref<1x32xf32, #tpu.memory_space<vmem>>, vector<1x32xf32>
    %cst_34 = arith.constant dense<0.000000e+00> : vector<16xf32>
    %94 = vector.multi_reduction <add>, %91, %cst_34 [1] : vector<16x32xf32> to vector<16xf32>
    %95 = vector.shape_cast %94 : vector<16xf32> to vector<16x1xf32>
    %cst_35 = arith.constant 3.200000e+01 : f32
    %96 = vector.broadcast %cst_35 : f32 to vector<16x1xf32>
    %97 = arith.divf %95, %96 : vector<16x1xf32>
    %98 = vector.broadcast %97 : vector<16x1xf32> to vector<16x32xf32>
    %99 = arith.subf %91, %98 : vector<16x32xf32>
    %100 = arith.mulf %99, %99 : vector<16x32xf32>
    %cst_36 = arith.constant dense<0.000000e+00> : vector<16xf32>
    %101 = vector.multi_reduction <add>, %100, %cst_36 [1] : vector<16x32xf32> to vector<16xf32>
    %102 = vector.shape_cast %101 : vector<16xf32> to vector<16x1xf32>
    %cst_37 = arith.constant 3.200000e+01 : f32
    %103 = vector.broadcast %cst_37 : f32 to vector<16x1xf32>
    %104 = arith.divf %102, %103 : vector<16x1xf32>
    %105 = vector.broadcast %97 : vector<16x1xf32> to vector<16x32xf32>
    %106 = arith.subf %91, %105 : vector<16x32xf32>
    %cst_38 = arith.constant 9.99999974E-6 : f32
    %107 = vector.broadcast %cst_38 : f32 to vector<16x1xf32>
    %108 = arith.addf %104, %107 : vector<16x1xf32>
    %109 = math.rsqrt %108 : vector<16x1xf32>
    %110 = vector.broadcast %109 : vector<16x1xf32> to vector<16x32xf32>
    %111 = arith.mulf %106, %110 : vector<16x32xf32>
    %112 = vector.broadcast %92 : vector<1x32xf32> to vector<16x32xf32>
    %113 = arith.mulf %111, %112 : vector<16x32xf32>
    %114 = vector.broadcast %93 : vector<1x32xf32> to vector<16x32xf32>
    %115 = arith.addf %113, %114 : vector<16x32xf32>
    %c0_39 = arith.constant 0 : index
    %c0_40 = arith.constant 0 : index
    %116 = vector.load %arg9[%c0_39, %c0_40] : memref<32x32xf32, #tpu.memory_space<vmem>>, vector<32x32xf32>
    %cst_41 = arith.constant dense<0.000000e+00> : vector<16x32xf32>
    %117 = tpu.matmul %115, %116, %cst_41 {dimension_numbers = #tpu.dot_dimension_numbers<[1], [0], [0], [1], [0, 0, 1, 1], [], []>} : vector<16x32xf32>, vector<32x32xf32>, vector<16x32xf32> -> vector<16x32xf32>
    %c0_42 = arith.constant 0 : index
    %c0_43 = arith.constant 0 : index
    %118 = vector.load %arg10[%c0_42, %c0_43] : memref<1x32xf32, #tpu.memory_space<vmem>>, vector<1x32xf32>
    %119 = vector.broadcast %118 : vector<1x32xf32> to vector<16x32xf32>
    %120 = arith.addf %117, %119 : vector<16x32xf32>
    %c0_44 = arith.constant 0 : index
    %c0_45 = arith.constant 0 : index
    %121 = vector.load %arg11[%c0_44, %c0_45] : memref<32x64xf32, #tpu.memory_space<vmem>>, vector<32x64xf32>
    %cst_46 = arith.constant dense<0.000000e+00> : vector<32x64xf32>
    %122 = tpu.matmul %3, %121, %cst_46 {dimension_numbers = #tpu.dot_dimension_numbers<[1], [0], [0], [1], [0, 0, 1, 1], [], []>} : vector<32x32xf32>, vector<32x64xf32>, vector<32x64xf32> -> vector<32x64xf32>
    %c0_47 = arith.constant 0 : index
    %c0_48 = arith.constant 0 : index
    %123 = vector.load %arg12[%c0_47, %c0_48] : memref<1x64xf32, #tpu.memory_space<vmem>>, vector<1x64xf32>
    %124 = vector.broadcast %123 : vector<1x64xf32> to vector<32x64xf32>
    %125 = arith.addf %122, %124 : vector<32x64xf32>
    %126 = vector.extract_strided_slice %125 {offsets = [0, 0], sizes = [32, 32], strides = [1, 1]} : vector<32x64xf32> to vector<32x32xf32>
    %127 = vector.extract_strided_slice %125 {offsets = [0, 32], sizes = [32, 32], strides = [1, 1]} : vector<32x64xf32> to vector<32x32xf32>
    %c0_49 = arith.constant 0 : index
    %c0_50 = arith.constant 0 : index
    %128 = vector.load %arg13[%c0_49, %c0_50] : memref<32x32xf32, #tpu.memory_space<vmem>>, vector<32x32xf32>
    %c0_51 = arith.constant 0 : index
    %c0_52 = arith.constant 0 : index
    %129 = vector.load %arg14[%c0_51, %c0_52] : memref<1x32xf32, #tpu.memory_space<vmem>>, vector<1x32xf32>
    %130 = vector.extract_strided_slice %120 {offsets = [0, 0], sizes = [16, 8], strides = [1, 1]} : vector<16x32xf32> to vector<16x8xf32>
    %131 = vector.shape_cast %130 : vector<16x8xf32> to vector<2x8x8xf32>
    %132 = vector.extract_strided_slice %126 {offsets = [0, 0], sizes = [32, 8], strides = [1, 1]} : vector<32x32xf32> to vector<32x8xf32>
    %133 = vector.shape_cast %132 : vector<32x8xf32> to vector<2x16x8xf32>
    %134 = vector.extract_strided_slice %127 {offsets = [0, 0], sizes = [32, 8], strides = [1, 1]} : vector<32x32xf32> to vector<32x8xf32>
    %135 = vector.shape_cast %134 : vector<32x8xf32> to vector<2x16x8xf32>
    "tpu.trace_start"() <{level = 10 : i32, message = "bqd,bkd->bqk"}> : () -> ()
    %cst_53 = arith.constant dense<0.000000e+00> : vector<2x8x16xf32>
    %136 = tpu.matmul %131, %133, %cst_53 {dimension_numbers = #tpu.dot_dimension_numbers<[2], [2], [1], [1], [0, 0, 0, 1, 1, 1], [0], [0]>} : vector<2x8x8xf32>, vector<2x16x8xf32>, vector<2x8x16xf32> -> vector<2x8x16xf32>
    "tpu.trace_stop"() : () -> ()
    %cst_54 = arith.constant dense<0xFF800000> : vector<2x8xf32>
    %137 = vector.multi_reduction <maximumf>, %136, %cst_54 [2] : vector<2x8x16xf32> to vector<2x8xf32>
    %138 = vector.shape_cast %137 : vector<2x8xf32> to vector<2x8x1xf32>
    %139 = vector.broadcast %138 : vector<2x8x1xf32> to vector<2x8x16xf32>
    %140 = arith.subf %136, %139 : vector<2x8x16xf32>
    %141 = math.exp %140 : vector<2x8x16xf32>
    %cst_55 = arith.constant dense<0.000000e+00> : vector<2x8xf32>
    %142 = vector.multi_reduction <add>, %141, %cst_55 [2] : vector<2x8x16xf32> to vector<2x8xf32>
    %143 = vector.shape_cast %142 : vector<2x8xf32> to vector<2x8x1xf32>
    %144 = tpu.reciprocal %143 {approx = true} : vector<2x8x1xf32> -> vector<2x8x1xf32>
    %145 = vector.broadcast %144 : vector<2x8x1xf32> to vector<2x8x16xf32>
    %146 = arith.mulf %141, %145 : vector<2x8x16xf32>
    "tpu.trace_start"() <{level = 10 : i32, message = "bqk,bkd->bqd"}> : () -> ()
    %cst_56 = arith.constant dense<0.000000e+00> : vector<2x8x8xf32>
    %147 = tpu.matmul %146, %135, %cst_56 {dimension_numbers = #tpu.dot_dimension_numbers<[2], [1], [1], [2], [0, 0, 0, 1, 1, 2], [0], [0]>} : vector<2x8x16xf32>, vector<2x16x8xf32>, vector<2x8x8xf32> -> vector<2x8x8xf32>
    "tpu.trace_stop"() : () -> ()
    %148 = vector.extract_strided_slice %120 {offsets = [0, 8], sizes = [16, 8], strides = [1, 1]} : vector<16x32xf32> to vector<16x8xf32>
    %149 = vector.shape_cast %148 : vector<16x8xf32> to vector<2x8x8xf32>
    %150 = vector.extract_strided_slice %126 {offsets = [0, 8], sizes = [32, 8], strides = [1, 1]} : vector<32x32xf32> to vector<32x8xf32>
    %151 = vector.shape_cast %150 : vector<32x8xf32> to vector<2x16x8xf32>
    %152 = vector.extract_strided_slice %127 {offsets = [0, 8], sizes = [32, 8], strides = [1, 1]} : vector<32x32xf32> to vector<32x8xf32>
    %153 = vector.shape_cast %152 : vector<32x8xf32> to vector<2x16x8xf32>
    "tpu.trace_start"() <{level = 10 : i32, message = "bqd,bkd->bqk"}> : () -> ()
    %cst_57 = arith.constant dense<0.000000e+00> : vector<2x8x16xf32>
    %154 = tpu.matmul %149, %151, %cst_57 {dimension_numbers = #tpu.dot_dimension_numbers<[2], [2], [1], [1], [0, 0, 0, 1, 1, 1], [0], [0]>} : vector<2x8x8xf32>, vector<2x16x8xf32>, vector<2x8x16xf32> -> vector<2x8x16xf32>
    "tpu.trace_stop"() : () -> ()
    %cst_58 = arith.constant dense<0xFF800000> : vector<2x8xf32>
    %155 = vector.multi_reduction <maximumf>, %154, %cst_58 [2] : vector<2x8x16xf32> to vector<2x8xf32>
    %156 = vector.shape_cast %155 : vector<2x8xf32> to vector<2x8x1xf32>
    %157 = vector.broadcast %156 : vector<2x8x1xf32> to vector<2x8x16xf32>
    %158 = arith.subf %154, %157 : vector<2x8x16xf32>
    %159 = math.exp %158 : vector<2x8x16xf32>
    %cst_59 = arith.constant dense<0.000000e+00> : vector<2x8xf32>
    %160 = vector.multi_reduction <add>, %159, %cst_59 [2] : vector<2x8x16xf32> to vector<2x8xf32>
    %161 = vector.shape_cast %160 : vector<2x8xf32> to vector<2x8x1xf32>
    %162 = tpu.reciprocal %161 {approx = true} : vector<2x8x1xf32> -> vector<2x8x1xf32>
    %163 = vector.broadcast %162 : vector<2x8x1xf32> to vector<2x8x16xf32>
    %164 = arith.mulf %159, %163 : vector<2x8x16xf32>
    "tpu.trace_start"() <{level = 10 : i32, message = "bqk,bkd->bqd"}> : () -> ()
    %cst_60 = arith.constant dense<0.000000e+00> : vector<2x8x8xf32>
    %165 = tpu.matmul %164, %153, %cst_60 {dimension_numbers = #tpu.dot_dimension_numbers<[2], [1], [1], [2], [0, 0, 0, 1, 1, 2], [0], [0]>} : vector<2x8x16xf32>, vector<2x16x8xf32>, vector<2x8x8xf32> -> vector<2x8x8xf32>
    "tpu.trace_stop"() : () -> ()
    %166 = vector.extract_strided_slice %120 {offsets = [0, 16], sizes = [16, 8], strides = [1, 1]} : vector<16x32xf32> to vector<16x8xf32>
    %167 = vector.shape_cast %166 : vector<16x8xf32> to vector<2x8x8xf32>
    %168 = vector.extract_strided_slice %126 {offsets = [0, 16], sizes = [32, 8], strides = [1, 1]} : vector<32x32xf32> to vector<32x8xf32>
    %169 = vector.shape_cast %168 : vector<32x8xf32> to vector<2x16x8xf32>
    %170 = vector.extract_strided_slice %127 {offsets = [0, 16], sizes = [32, 8], strides = [1, 1]} : vector<32x32xf32> to vector<32x8xf32>
    %171 = vector.shape_cast %170 : vector<32x8xf32> to vector<2x16x8xf32>
    "tpu.trace_start"() <{level = 10 : i32, message = "bqd,bkd->bqk"}> : () -> ()
    %cst_61 = arith.constant dense<0.000000e+00> : vector<2x8x16xf32>
    %172 = tpu.matmul %167, %169, %cst_61 {dimension_numbers = #tpu.dot_dimension_numbers<[2], [2], [1], [1], [0, 0, 0, 1, 1, 1], [0], [0]>} : vector<2x8x8xf32>, vector<2x16x8xf32>, vector<2x8x16xf32> -> vector<2x8x16xf32>
    "tpu.trace_stop"() : () -> ()
    %cst_62 = arith.constant dense<0xFF800000> : vector<2x8xf32>
    %173 = vector.multi_reduction <maximumf>, %172, %cst_62 [2] : vector<2x8x16xf32> to vector<2x8xf32>
    %174 = vector.shape_cast %173 : vector<2x8xf32> to vector<2x8x1xf32>
    %175 = vector.broadcast %174 : vector<2x8x1xf32> to vector<2x8x16xf32>
    %176 = arith.subf %172, %175 : vector<2x8x16xf32>
    %177 = math.exp %176 : vector<2x8x16xf32>
    %cst_63 = arith.constant dense<0.000000e+00> : vector<2x8xf32>
    %178 = vector.multi_reduction <add>, %177, %cst_63 [2] : vector<2x8x16xf32> to vector<2x8xf32>
    %179 = vector.shape_cast %178 : vector<2x8xf32> to vector<2x8x1xf32>
    %180 = tpu.reciprocal %179 {approx = true} : vector<2x8x1xf32> -> vector<2x8x1xf32>
    %181 = vector.broadcast %180 : vector<2x8x1xf32> to vector<2x8x16xf32>
    %182 = arith.mulf %177, %181 : vector<2x8x16xf32>
    "tpu.trace_start"() <{level = 10 : i32, message = "bqk,bkd->bqd"}> : () -> ()
    %cst_64 = arith.constant dense<0.000000e+00> : vector<2x8x8xf32>
    %183 = tpu.matmul %182, %171, %cst_64 {dimension_numbers = #tpu.dot_dimension_numbers<[2], [1], [1], [2], [0, 0, 0, 1, 1, 2], [0], [0]>} : vector<2x8x16xf32>, vector<2x16x8xf32>, vector<2x8x8xf32> -> vector<2x8x8xf32>
    "tpu.trace_stop"() : () -> ()
    %184 = vector.extract_strided_slice %120 {offsets = [0, 24], sizes = [16, 8], strides = [1, 1]} : vector<16x32xf32> to vector<16x8xf32>
    %185 = vector.shape_cast %184 : vector<16x8xf32> to vector<2x8x8xf32>
    %186 = vector.extract_strided_slice %126 {offsets = [0, 24], sizes = [32, 8], strides = [1, 1]} : vector<32x32xf32> to vector<32x8xf32>
    %187 = vector.shape_cast %186 : vector<32x8xf32> to vector<2x16x8xf32>
    %188 = vector.extract_strided_slice %127 {offsets = [0, 24], sizes = [32, 8], strides = [1, 1]} : vector<32x32xf32> to vector<32x8xf32>
    %189 = vector.shape_cast %188 : vector<32x8xf32> to vector<2x16x8xf32>
    "tpu.trace_start"() <{level = 10 : i32, message = "bqd,bkd->bqk"}> : () -> ()
    %cst_65 = arith.constant dense<0.000000e+00> : vector<2x8x16xf32>
    %190 = tpu.matmul %185, %187, %cst_65 {dimension_numbers = #tpu.dot_dimension_numbers<[2], [2], [1], [1], [0, 0, 0, 1, 1, 1], [0], [0]>} : vector<2x8x8xf32>, vector<2x16x8xf32>, vector<2x8x16xf32> -> vector<2x8x16xf32>
    "tpu.trace_stop"() : () -> ()
    %cst_66 = arith.constant dense<0xFF800000> : vector<2x8xf32>
    %191 = vector.multi_reduction <maximumf>, %190, %cst_66 [2] : vector<2x8x16xf32> to vector<2x8xf32>
    %192 = vector.shape_cast %191 : vector<2x8xf32> to vector<2x8x1xf32>
    %193 = vector.broadcast %192 : vector<2x8x1xf32> to vector<2x8x16xf32>
    %194 = arith.subf %190, %193 : vector<2x8x16xf32>
    %195 = math.exp %194 : vector<2x8x16xf32>
    %cst_67 = arith.constant dense<0.000000e+00> : vector<2x8xf32>
    %196 = vector.multi_reduction <add>, %195, %cst_67 [2] : vector<2x8x16xf32> to vector<2x8xf32>
    %197 = vector.shape_cast %196 : vector<2x8xf32> to vector<2x8x1xf32>
    %198 = tpu.reciprocal %197 {approx = true} : vector<2x8x1xf32> -> vector<2x8x1xf32>
    %199 = vector.broadcast %198 : vector<2x8x1xf32> to vector<2x8x16xf32>
    %200 = arith.mulf %195, %199 : vector<2x8x16xf32>
    "tpu.trace_start"() <{level = 10 : i32, message = "bqk,bkd->bqd"}> : () -> ()
    %cst_68 = arith.constant dense<0.000000e+00> : vector<2x8x8xf32>
    %201 = tpu.matmul %200, %189, %cst_68 {dimension_numbers = #tpu.dot_dimension_numbers<[2], [1], [1], [2], [0, 0, 0, 1, 1, 2], [0], [0]>} : vector<2x8x16xf32>, vector<2x16x8xf32>, vector<2x8x8xf32> -> vector<2x8x8xf32>
    "tpu.trace_stop"() : () -> ()
    %202 = tpu.concatenate %147, %165, %183, %201 in 2 : vector<2x8x8xf32>, vector<2x8x8xf32>, vector<2x8x8xf32>, vector<2x8x8xf32> -> vector<2x8x32xf32>
    %203 = vector.shape_cast %202 : vector<2x8x32xf32> to vector<16x32xf32>
    %cst_69 = arith.constant dense<0.000000e+00> : vector<16x32xf32>
    %204 = tpu.matmul %203, %128, %cst_69 {dimension_numbers = #tpu.dot_dimension_numbers<[1], [0], [0], [1], [0, 0, 1, 1], [], []>} : vector<16x32xf32>, vector<32x32xf32>, vector<16x32xf32> -> vector<16x32xf32>
    %205 = vector.broadcast %129 : vector<1x32xf32> to vector<16x32xf32>
    %206 = arith.addf %204, %205 : vector<16x32xf32>
    %207 = arith.addf %115, %206 : vector<16x32xf32>
    %c0_70 = arith.constant 0 : index
    %c0_71 = arith.constant 0 : index
    %208 = vector.load %arg15[%c0_70, %c0_71] : memref<1x32xf32, #tpu.memory_space<vmem>>, vector<1x32xf32>
    %c0_72 = arith.constant 0 : index
    %c0_73 = arith.constant 0 : index
    %209 = vector.load %arg16[%c0_72, %c0_73] : memref<1x32xf32, #tpu.memory_space<vmem>>, vector<1x32xf32>
    %cst_74 = arith.constant dense<0.000000e+00> : vector<16xf32>
    %210 = vector.multi_reduction <add>, %207, %cst_74 [1] : vector<16x32xf32> to vector<16xf32>
    %211 = vector.shape_cast %210 : vector<16xf32> to vector<16x1xf32>
    %cst_75 = arith.constant 3.200000e+01 : f32
    %212 = vector.broadcast %cst_75 : f32 to vector<16x1xf32>
    %213 = arith.divf %211, %212 : vector<16x1xf32>
    %214 = vector.broadcast %213 : vector<16x1xf32> to vector<16x32xf32>
    %215 = arith.subf %207, %214 : vector<16x32xf32>
    %216 = arith.mulf %215, %215 : vector<16x32xf32>
    %cst_76 = arith.constant dense<0.000000e+00> : vector<16xf32>
    %217 = vector.multi_reduction <add>, %216, %cst_76 [1] : vector<16x32xf32> to vector<16xf32>
    %218 = vector.shape_cast %217 : vector<16xf32> to vector<16x1xf32>
    %cst_77 = arith.constant 3.200000e+01 : f32
    %219 = vector.broadcast %cst_77 : f32 to vector<16x1xf32>
    %220 = arith.divf %218, %219 : vector<16x1xf32>
    %221 = vector.broadcast %213 : vector<16x1xf32> to vector<16x32xf32>
    %222 = arith.subf %207, %221 : vector<16x32xf32>
    %cst_78 = arith.constant 9.99999974E-6 : f32
    %223 = vector.broadcast %cst_78 : f32 to vector<16x1xf32>
    %224 = arith.addf %220, %223 : vector<16x1xf32>
    %225 = math.rsqrt %224 : vector<16x1xf32>
    %226 = vector.broadcast %225 : vector<16x1xf32> to vector<16x32xf32>
    %227 = arith.mulf %222, %226 : vector<16x32xf32>
    %228 = vector.broadcast %208 : vector<1x32xf32> to vector<16x32xf32>
    %229 = arith.mulf %227, %228 : vector<16x32xf32>
    %230 = vector.broadcast %209 : vector<1x32xf32> to vector<16x32xf32>
    %231 = arith.addf %229, %230 : vector<16x32xf32>
    %c0_79 = arith.constant 0 : index
    %c0_80 = arith.constant 0 : index
    %232 = vector.load %arg17[%c0_79, %c0_80] : memref<32x128xf32, #tpu.memory_space<vmem>>, vector<32x128xf32>
    %cst_81 = arith.constant dense<0.000000e+00> : vector<16x128xf32>
    %233 = tpu.matmul %231, %232, %cst_81 {dimension_numbers = #tpu.dot_dimension_numbers<[1], [0], [0], [1], [0, 0, 1, 1], [], []>} : vector<16x32xf32>, vector<32x128xf32>, vector<16x128xf32> -> vector<16x128xf32>
    %c0_82 = arith.constant 0 : index
    %c0_83 = arith.constant 0 : index
    %234 = vector.load %arg18[%c0_82, %c0_83] : memref<1x128xf32, #tpu.memory_space<vmem>>, vector<1x128xf32>
    %235 = vector.broadcast %234 : vector<1x128xf32> to vector<16x128xf32>
    %236 = arith.addf %233, %235 : vector<16x128xf32>
    %cst_84 = arith.constant 0.000000e+00 : f32
    %237 = vector.broadcast %cst_84 : f32 to vector<16x128xf32>
    %238 = arith.maximumf %236, %237 : vector<16x128xf32>
    %c0_85 = arith.constant 0 : index
    %c0_86 = arith.constant 0 : index
    %239 = vector.load %arg19[%c0_85, %c0_86] : memref<128x32xf32, #tpu.memory_space<vmem>>, vector<128x32xf32>
    %cst_87 = arith.constant dense<0.000000e+00> : vector<16x32xf32>
    %240 = tpu.matmul %238, %239, %cst_87 {dimension_numbers = #tpu.dot_dimension_numbers<[1], [0], [0], [1], [0, 0, 1, 1], [], []>} : vector<16x128xf32>, vector<128x32xf32>, vector<16x32xf32> -> vector<16x32xf32>
    %c0_88 = arith.constant 0 : index
    %c0_89 = arith.constant 0 : index
    %241 = vector.load %arg20[%c0_88, %c0_89] : memref<1x32xf32, #tpu.memory_space<vmem>>, vector<1x32xf32>
    %242 = vector.broadcast %241 : vector<1x32xf32> to vector<16x32xf32>
    %243 = arith.addf %240, %242 : vector<16x32xf32>
    %244 = arith.addf %231, %243 : vector<16x32xf32>
    %c0_90 = arith.constant 0 : index
    %c0_91 = arith.constant 0 : index
    %245 = vector.load %arg21[%c0_90, %c0_91] : memref<1x32xf32, #tpu.memory_space<vmem>>, vector<1x32xf32>
    %c0_92 = arith.constant 0 : index
    %c0_93 = arith.constant 0 : index
    %246 = vector.load %arg22[%c0_92, %c0_93] : memref<1x32xf32, #tpu.memory_space<vmem>>, vector<1x32xf32>
    %cst_94 = arith.constant dense<0.000000e+00> : vector<16xf32>
    %247 = vector.multi_reduction <add>, %244, %cst_94 [1] : vector<16x32xf32> to vector<16xf32>
    %248 = vector.shape_cast %247 : vector<16xf32> to vector<16x1xf32>
    %cst_95 = arith.constant 3.200000e+01 : f32
    %249 = vector.broadcast %cst_95 : f32 to vector<16x1xf32>
    %250 = arith.divf %248, %249 : vector<16x1xf32>
    %251 = vector.broadcast %250 : vector<16x1xf32> to vector<16x32xf32>
    %252 = arith.subf %244, %251 : vector<16x32xf32>
    %253 = arith.mulf %252, %252 : vector<16x32xf32>
    %cst_96 = arith.constant dense<0.000000e+00> : vector<16xf32>
    %254 = vector.multi_reduction <add>, %253, %cst_96 [1] : vector<16x32xf32> to vector<16xf32>
    %255 = vector.shape_cast %254 : vector<16xf32> to vector<16x1xf32>
    %cst_97 = arith.constant 3.200000e+01 : f32
    %256 = vector.broadcast %cst_97 : f32 to vector<16x1xf32>
    %257 = arith.divf %255, %256 : vector<16x1xf32>
    %258 = vector.broadcast %250 : vector<16x1xf32> to vector<16x32xf32>
    %259 = arith.subf %244, %258 : vector<16x32xf32>
    %cst_98 = arith.constant 9.99999974E-6 : f32
    %260 = vector.broadcast %cst_98 : f32 to vector<16x1xf32>
    %261 = arith.addf %257, %260 : vector<16x1xf32>
    %262 = math.rsqrt %261 : vector<16x1xf32>
    %263 = vector.broadcast %262 : vector<16x1xf32> to vector<16x32xf32>
    %264 = arith.mulf %259, %263 : vector<16x32xf32>
    %265 = vector.broadcast %245 : vector<1x32xf32> to vector<16x32xf32>
    %266 = arith.mulf %264, %265 : vector<16x32xf32>
    %267 = vector.broadcast %246 : vector<1x32xf32> to vector<16x32xf32>
    %268 = arith.addf %266, %267 : vector<16x32xf32>
    %269 = vector.shape_cast %268 : vector<16x32xf32> to vector<2x8x32xf32>
    %c0_99 = arith.constant 0 : index
    %c0_100 = arith.constant 0 : index
    %c0_101 = arith.constant 0 : index
    %270 = vector.load %arg23[%c0_99, %c0_100, %c0_101] : memref<2x8x32xf32, #tpu.memory_space<vmem>>, vector<2x8x32xf32>
    tpu.vector_store %arg23[%c0_99, %c0_100, %c0_101], %269 {strides = array<i32>} : memref<2x8x32xf32, #tpu.memory_space<vmem>>, vector<2x8x32xf32>,
    return
  }
  func.func @transform_0(%arg0: i32) -> (i32, i32, i32) {
    %c0_i32 = arith.constant 0 : i32
    %c0_i32_0 = arith.constant 0 : i32
    %c0_i32_1 = arith.constant 0 : i32
    return %arg0, %c0_i32, %c0_i32_0 : i32, i32, i32
  }
  func.func @transform_1(%arg0: i32) -> (i32, i32, i32) {
    %c0_i32 = arith.constant 0 : i32
    %c0_i32_0 = arith.constant 0 : i32
    %c0_i32_1 = arith.constant 0 : i32
    return %arg0, %c0_i32, %c0_i32_0 : i32, i32, i32
  }
  func.func @transform_2(%arg0: i32) -> (i32, i32) {
    %c0_i32 = arith.constant 0 : i32
    %c0_i32_0 = arith.constant 0 : i32
    %c0_i32_1 = arith.constant 0 : i32
    return %c0_i32, %c0_i32_0 : i32, i32
  }
  func.func @transform_3(%arg0: i32) -> (i32, i32) {
    %c0_i32 = arith.constant 0 : i32
    %c0_i32_0 = arith.constant 0 : i32
    %c0_i32_1 = arith.constant 0 : i32
    return %c0_i32, %c0_i32_0 : i32, i32
  }
  func.func @transform_4(%arg0: i32) -> (i32, i32) {
    %c0_i32 = arith.constant 0 : i32
    %c0_i32_0 = arith.constant 0 : i32
    %c0_i32_1 = arith.constant 0 : i32
    return %c0_i32, %c0_i32_0 : i32, i32
  }
  func.func @transform_5(%arg0: i32) -> (i32, i32) {
    %c0_i32 = arith.constant 0 : i32
    %c0_i32_0 = arith.constant 0 : i32
    %c0_i32_1 = arith.constant 0 : i32
    return %c0_i32, %c0_i32_0 : i32, i32
  }
  func.func @transform_6(%arg0: i32) -> (i32, i32) {
    %c0_i32 = arith.constant 0 : i32
    %c0_i32_0 = arith.constant 0 : i32
    %c0_i32_1 = arith.constant 0 : i32
    return %c0_i32, %c0_i32_0 : i32, i32
  }
  func.func @transform_7(%arg0: i32) -> (i32, i32) {
    %c0_i32 = arith.constant 0 : i32
    %c0_i32_0 = arith.constant 0 : i32
    %c0_i32_1 = arith.constant 0 : i32
    return %c0_i32, %c0_i32_0 : i32, i32
  }
  func.func @transform_8(%arg0: i32) -> (i32, i32) {
    %c0_i32 = arith.constant 0 : i32
    %c0_i32_0 = arith.constant 0 : i32
    %c0_i32_1 = arith.constant 0 : i32
    return %c0_i32, %c0_i32_0 : i32, i32
  }
  func.func @transform_9(%arg0: i32) -> (i32, i32) {
    %c0_i32 = arith.constant 0 : i32
    %c0_i32_0 = arith.constant 0 : i32
    %c0_i32_1 = arith.constant 0 : i32
    return %c0_i32, %c0_i32_0 : i32, i32
  }
  func.func @transform_10(%arg0: i32) -> (i32, i32) {
    %c0_i32 = arith.constant 0 : i32
    %c0_i32_0 = arith.constant 0 : i32
    %c0_i32_1 = arith.constant 0 : i32
    return %c0_i32, %c0_i32_0 : i32, i32
  }
  func.func @transform_11(%arg0: i32) -> (i32, i32) {
    %c0_i32 = arith.constant 0 : i32
    %c0_i32_0 = arith.constant 0 : i32
    %c0_i32_1 = arith.constant 0 : i32
    return %c0_i32, %c0_i32_0 : i32, i32
  }
  func.func @transform_12(%arg0: i32) -> (i32, i32) {
    %c0_i32 = arith.constant 0 : i32
    %c0_i32_0 = arith.constant 0 : i32
    %c0_i32_1 = arith.constant 0 : i32
    return %c0_i32, %c0_i32_0 : i32, i32
  }
  func.func @transform_13(%arg0: i32) -> (i32, i32) {
    %c0_i32 = arith.constant 0 : i32
    %c0_i32_0 = arith.constant 0 : i32
    %c0_i32_1 = arith.constant 0 : i32
    return %c0_i32, %c0_i32_0 : i32, i32
  }
  func.func @transform_14(%arg0: i32) -> (i32, i32) {
    %c0_i32 = arith.constant 0 : i32
    %c0_i32_0 = arith.constant 0 : i32
    %c0_i32_1 = arith.constant 0 : i32
    return %c0_i32, %c0_i32_0 : i32, i32
  }
  func.func @transform_15(%arg0: i32) -> (i32, i32) {
    %c0_i32 = arith.constant 0 : i32
    %c0_i32_0 = arith.constant 0 : i32
    %c0_i32_1 = arith.constant 0 : i32
    return %c0_i32, %c0_i32_0 : i32, i32
  }
  func.func @transform_16(%arg0: i32) -> (i32, i32) {
    %c0_i32 = arith.constant 0 : i32
    %c0_i32_0 = arith.constant 0 : i32
    %c0_i32_1 = arith.constant 0 : i32
    return %c0_i32, %c0_i32_0 : i32, i32
  }
  func.func @transform_17(%arg0: i32) -> (i32, i32) {
    %c0_i32 = arith.constant 0 : i32
    %c0_i32_0 = arith.constant 0 : i32
    %c0_i32_1 = arith.constant 0 : i32
    return %c0_i32, %c0_i32_0 : i32, i32
  }
  func.func @transform_18(%arg0: i32) -> (i32, i32) {
    %c0_i32 = arith.constant 0 : i32
    %c0_i32_0 = arith.constant 0 : i32
    %c0_i32_1 = arith.constant 0 : i32
    return %c0_i32, %c0_i32_0 : i32, i32
  }
  func.func @transform_19(%arg0: i32) -> (i32, i32) {
    %c0_i32 = arith.constant 0 : i32
    %c0_i32_0 = arith.constant 0 : i32
    %c0_i32_1 = arith.constant 0 : i32
    return %c0_i32, %c0_i32_0 : i32, i32
  }
  func.func @transform_20(%arg0: i32) -> (i32, i32) {
    %c0_i32 = arith.constant 0 : i32
    %c0_i32_0 = arith.constant 0 : i32
    %c0_i32_1 = arith.constant 0 : i32
    return %c0_i32, %c0_i32_0 : i32, i32
  }
  func.func @transform_21(%arg0: i32) -> (i32, i32) {
    %c0_i32 = arith.constant 0 : i32
    %c0_i32_0 = arith.constant 0 : i32
    %c0_i32_1 = arith.constant 0 : i32
    return %c0_i32, %c0_i32_0 : i32, i32
  }
  func.func @transform_22(%arg0: i32) -> (i32, i32, i32) {
    %c0_i32 = arith.constant 0 : i32
    %c0_i32_0 = arith.constant 0 : i32
    %c0_i32_1 = arith.constant 0 : i32
    return %arg0, %c0_i32, %c0_i32_0 : i32, i32, i32
  }
}

module attributes {stable_mosaic.version = 11 : i64} {
  func.func @_decoder_layer_kernel(%arg0: i32, %arg1: memref<2x8x32xf32, #tpu.memory_space<vmem>>, %arg2: memref<2x16x32xf32, #tpu.memory_space<vmem>>, %arg3: memref<32x96xf32, #tpu.memory_space<vmem>>, %arg4: memref<1x96xf32, #tpu.memory_space<vmem>>, %arg5: memref<32x32xf32, #tpu.memory_space<vmem>>, %arg6: memref<1x32xf32, #tpu.memory_space<vmem>>, %arg7: memref<1x32xf32, #tpu.memory_space<vmem>>, %arg8: memref<1x32xf32, #tpu.memory_space<vmem>>, %arg9: memref<32x32xf32, #tpu.memory_space<vmem>>, %arg10: memref<1x32xf32, #tpu.memory_space<vmem>>, %arg11: memref<32x64xf32, #tpu.memory_space<vmem>>, %arg12: memref<1x64xf32, #tpu.memory_space<vmem>>, %arg13: memref<32x32xf32, #tpu.memory_space<vmem>>, %arg14: memref<1x32xf32, #tpu.memory_space<vmem>>, %arg15: memref<1x32xf32, #tpu.memory_space<vmem>>, %arg16: memref<1x32xf32, #tpu.memory_space<vmem>>, %arg17: memref<32x128xf32, #tpu.memory_space<vmem>>, %arg18: memref<1x128xf32, #tpu.memory_space<vmem>>, %arg19: memref<128x32xf32, #tpu.memory_space<vmem>>, %arg20: memref<1x32xf32, #tpu.memory_space<vmem>>, %arg21: memref<1x32xf32, #tpu.memory_space<vmem>>, %arg22: memref<1x32xf32, #tpu.memory_space<vmem>>, %arg23: memref<2x8x32xf32, #tpu.memory_space<vmem>>) attributes {dimension_semantics = [#tpu.dimension_semantics<parallel>], iteration_bounds = array<i64: 1>, scalar_prefetch = 0 : i64, scratch_operands = 0 : i64, tpu.core_type = #tpu.core_type<tc>, window_params = [{transform_indices = @transform_0, window_bounds = array<i64: 2, 8, 32>}, {transform_indices = @transform_1, window_bounds = array<i64: 2, 16, 32>}, {pipeline_mode = #tpu.pipeline_mode<synchronous>, transform_indices = @transform_2, window_bounds = array<i64: 32, 96>}, {pipeline_mode = #tpu.pipeline_mode<synchronous>, transform_indices = @transform_3, window_bounds = array<i64: 1, 96>}, {pipeline_mode = #tpu.pipeline_mode<synchronous>, transform_indices = @transform_4, window_bounds = array<i64: 32, 32>}, {pipeline_mode = #tpu.pipeline_mode<synchronous>, transform_indices = @transform_5, window_bounds = array<i64: 1, 32>}, {pipeline_mode = #tpu.pipeline_mode<synchronous>, transform_indices = @transform_6, window_bounds = array<i64: 1, 32>}, {pipeline_mode = #tpu.pipeline_mode<synchronous>, transform_indices = @transform_7, window_bounds = array<i64: 1, 32>}, {pipeline_mode = #tpu.pipeline_mode<synchronous>, transform_indices = @transform_8, window_bounds = array<i64: 32, 32>}, {pipeline_mode = #tpu.pipeline_mode<synchronous>, transform_indices = @transform_9, window_bounds = array<i64: 1, 32>}, {pipeline_mode = #tpu.pipeline_mode<synchronous>, transform_indices = @transform_10, window_bounds = array<i64: 32, 64>}, {pipeline_mode = #tpu.pipeline_mode<synchronous>, transform_indices = @transform_11, window_bounds = array<i64: 1, 64>}, {pipeline_mode = #tpu.pipeline_mode<synchronous>, transform_indices = @transform_12, window_bounds = array<i64: 32, 32>}, {pipeline_mode = #tpu.pipeline_mode<synchronous>, transform_indices = @transform_13, window_bounds = array<i64: 1, 32>}, {pipeline_mode = #tpu.pipeline_mode<synchronous>, transform_indices = @transform_14, window_bounds = array<i64: 1, 32>}, {pipeline_mode = #tpu.pipeline_mode<synchronous>, transform_indices = @transform_15, window_bounds = array<i64: 1, 32>}, {pipeline_mode = #tpu.pipeline_mode<synchronous>, transform_indices = @transform_16, window_bounds = array<i64: 32, 128>}, {pipeline_mode = #tpu.pipeline_mode<synchronous>, transform_indices = @transform_17, window_bounds = array<i64: 1, 128>}, {pipeline_mode = #tpu.pipeline_mode<synchronous>, transform_indices = @transform_18, window_bounds = array<i64: 128, 32>}, {pipeline_mode = #tpu.pipeline_mode<synchronous>, transform_indices = @transform_19, window_bounds = array<i64: 1, 32>}, {pipeline_mode = #tpu.pipeline_mode<synchronous>, transform_indices = @transform_20, window_bounds = array<i64: 1, 32>}, {pipeline_mode = #tpu.pipeline_mode<synchronous>, transform_indices = @transform_21, window_bounds = array<i64: 1, 32>}, {transform_indices = @transform_22, window_bounds = array<i64: 2, 8, 32>}]} {
    %c0 = arith.constant 0 : index
    %c0_0 = arith.constant 0 : index
    %c0_1 = arith.constant 0 : index
    %0 = vector.load %arg1[%c0, %c0_0, %c0_1] : memref<2x8x32xf32, #tpu.memory_space<vmem>>, vector<2x8x32xf32>
    %1 = vector.shape_cast %0 : vector<2x8x32xf32> to vector<16x32xf32>
    %c0_2 = arith.constant 0 : index
    %c0_3 = arith.constant 0 : index
    %c0_4 = arith.constant 0 : index
    %2 = vector.load %arg2[%c0_2, %c0_3, %c0_4] : memref<2x16x32xf32, #tpu.memory_space<vmem>>, vector<2x16x32xf32>
    %3 = vector.shape_cast %2 : vector<2x16x32xf32> to vector<32x32xf32>
    %c0_5 = arith.constant 0 : index
    %c0_6 = arith.constant 0 : index
    %4 = vector.load %arg3[%c0_5, %c0_6] : memref<32x96xf32, #tpu.memory_space<vmem>>, vector<32x96xf32>
    %cst = arith.constant dense<0.000000e+00> : vector<16x96xf32>
    %5 = tpu.matmul %1, %4, %cst {dimension_numbers = #tpu.dot_dimension_numbers<[1], [0], [0], [1], [0, 0, 1, 1], [], []>} : vector<16x32xf32>, vector<32x96xf32>, vector<16x96xf32> -> vector<16x96xf32>
    %c0_7 = arith.constant 0 : index
    %c0_8 = arith.constant 0 : index
    %6 = vector.load %arg4[%c0_7, %c0_8] : memref<1x96xf32, #tpu.memory_space<vmem>>, vector<1x96xf32>
    %7 = vector.broadcast %6 : vector<1x96xf32> to vector<16x96xf32>
    %8 = arith.addf %5, %7 : vector<16x96xf32>
    %9 = vector.extract_strided_slice %8 {offsets = [0, 0], sizes = [16, 32], strides = [1, 1]} : vector<16x96xf32> to vector<16x32xf32>
    %10 = vector.extract_strided_slice %8 {offsets = [0, 32], sizes = [16, 32], strides = [1, 1]} : vector<16x96xf32> to vector<16x32xf32>
    %11 = vector.extract_strided_slice %8 {offsets = [0, 64], sizes = [16, 32], strides = [1, 1]} : vector<16x96xf32> to vector<16x32xf32>
    %c0_9 = arith.constant 0 : index
    %c0_10 = arith.constant 0 : index
    %12 = vector.load %arg5[%c0_9, %c0_10] : memref<32x32xf32, #tpu.memory_space<vmem>>, vector<32x32xf32>
    %c0_11 = arith.constant 0 : index
    %c0_12 = arith.constant 0 : index
    %13 = vector.load %arg6[%c0_11, %c0_12] : memref<1x32xf32, #tpu.memory_space<vmem>>, vector<1x32xf32>
    %14 = vector.extract_strided_slice %9 {offsets = [0, 0], sizes = [16, 8], strides = [1, 1]} : vector<16x32xf32> to vector<16x8xf32>
    %15 = vector.shape_cast %14 : vector<16x8xf32> to vector<2x8x8xf32>
    %16 = vector.extract_strided_slice %10 {offsets = [0, 0], sizes = [16, 8], strides = [1, 1]} : vector<16x32xf32> to vector<16x8xf32>
    %17 = vector.shape_cast %16 : vector<16x8xf32> to vector<2x8x8xf32>
    %18 = vector.extract_strided_slice %11 {offsets = [0, 0], sizes = [16, 8], strides = [1, 1]} : vector<16x32xf32> to vector<16x8xf32>
    %19 = vector.shape_cast %18 : vector<16x8xf32> to vector<2x8x8xf32>
    "tpu.trace_start"() <{level = 10 : i32, message = "bqd,bkd->bqk"}> : () -> ()
    %cst_13 = arith.constant dense<0.000000e+00> : vector<2x8x8xf32>
    %20 = tpu.matmul %15, %17, %cst_13 {dimension_numbers = #tpu.dot_dimension_numbers<[2], [2], [1], [1], [0, 0, 0, 1, 1, 1], [0], [0]>} : vector<2x8x8xf32>, vector<2x8x8xf32>, vector<2x8x8xf32> -> vector<2x8x8xf32>
    "tpu.trace_stop"() : () -> ()
    %cst_14 = arith.constant dense<0xFF800000> : vector<2x8xf32>
    %21 = vector.multi_reduction <maximumf>, %20, %cst_14 [2] : vector<2x8x8xf32> to vector<2x8xf32>
    %22 = vector.shape_cast %21 : vector<2x8xf32> to vector<2x8x1xf32>
    %23 = vector.broadcast %22 : vector<2x8x1xf32> to vector<2x8x8xf32>
    %24 = arith.subf %20, %23 : vector<2x8x8xf32>
    %25 = math.exp %24 : vector<2x8x8xf32>
    %cst_15 = arith.constant dense<0.000000e+00> : vector<2x8xf32>
    %26 = vector.multi_reduction <add>, %25, %cst_15 [2] : vector<2x8x8xf32> to vector<2x8xf32>
    %27 = vector.shape_cast %26 : vector<2x8xf32> to vector<2x8x1xf32>
    %28 = tpu.reciprocal %27 {approx = true} : vector<2x8x1xf32> -> vector<2x8x1xf32>
    %29 = vector.broadcast %28 : vector<2x8x1xf32> to vector<2x8x8xf32>
    %30 = arith.mulf %25, %29 : vector<2x8x8xf32>
    "tpu.trace_start"() <{level = 10 : i32, message = "bqk,bkd->bqd"}> : () -> ()
    %cst_16 = arith.constant dense<0.000000e+00> : vector<2x8x8xf32>
    %31 = tpu.matmul %30, %19, %cst_16 {dimension_numbers = #tpu.dot_dimension_numbers<[2], [1], [1], [2], [0, 0, 0, 1, 1, 2], [0], [0]>} : vector<2x8x8xf32>, vector<2x8x8xf32>, vector<2x8x8xf32> -> vector<2x8x8xf32>
    "tpu.trace_stop"() : () -> ()
    %32 = vector.extract_strided_slice %9 {offsets = [0, 8], sizes = [16, 8], strides = [1, 1]} : vector<16x32xf32> to vector<16x8xf32>
    %33 = vector.shape_cast %32 : vector<16x8xf32> to vector<2x8x8xf32>
    %34 = vector.extract_strided_slice %10 {offsets = [0, 8], sizes = [16, 8], strides = [1, 1]} : vector<16x32xf32> to vector<16x8xf32>
    %35 = vector.shape_cast %34 : vector<16x8xf32> to vector<2x8x8xf32>
    %36 = vector.extract_strided_slice %11 {offsets = [0, 8], sizes = [16, 8], strides = [1, 1]} : vector<16x32xf32> to vector<16x8xf32>
    %37 = vector.shape_cast %36 : vector<16x8xf32> to vector<2x8x8xf32>
    "tpu.trace_start"() <{level = 10 : i32, message = "bqd,bkd->bqk"}> : () -> ()
    %cst_17 = arith.constant dense<0.000000e+00> : vector<2x8x8xf32>
    %38 = tpu.matmul %33, %35, %cst_17 {dimension_numbers = #tpu.dot_dimension_numbers<[2], [2], [1], [1], [0, 0, 0, 1, 1, 1], [0], [0]>} : vector<2x8x8xf32>, vector<2x8x8xf32>, vector<2x8x8xf32> -> vector<2x8x8xf32>
    "tpu.trace_stop"() : () -> ()
    %cst_18 = arith.constant dense<0xFF800000> : vector<2x8xf32>
    %39 = vector.multi_reduction <maximumf>, %38, %cst_18 [2] : vector<2x8x8xf32> to vector<2x8xf32>
    %40 = vector.shape_cast %39 : vector<2x8xf32> to vector<2x8x1xf32>
    %41 = vector.broadcast %40 : vector<2x8x1xf32> to vector<2x8x8xf32>
    %42 = arith.subf %38, %41 : vector<2x8x8xf32>
    %43 = math.exp %42 : vector<2x8x8xf32>
    %cst_19 = arith.constant dense<0.000000e+00> : vector<2x8xf32>
    %44 = vector.multi_reduction <add>, %43, %cst_19 [2] : vector<2x8x8xf32> to vector<2x8xf32>
    %45 = vector.shape_cast %44 : vector<2x8xf32> to vector<2x8x1xf32>
    %46 = tpu.reciprocal %45 {approx = true} : vector<2x8x1xf32> -> vector<2x8x1xf32>
    %47 = vector.broadcast %46 : vector<2x8x1xf32> to vector<2x8x8xf32>
    %48 = arith.mulf %43, %47 : vector<2x8x8xf32>
    "tpu.trace_start"() <{level = 10 : i32, message = "bqk,bkd->bqd"}> : () -> ()
    %cst_20 = arith.constant dense<0.000000e+00> : vector<2x8x8xf32>
    %49 = tpu.matmul %48, %37, %cst_20 {dimension_numbers = #tpu.dot_dimension_numbers<[2], [1], [1], [2], [0, 0, 0, 1, 1, 2], [0], [0]>} : vector<2x8x8xf32>, vector<2x8x8xf32>, vector<2x8x8xf32> -> vector<2x8x8xf32>
    "tpu.trace_stop"() : () -> ()
    %50 = vector.extract_strided_slice %9 {offsets = [0, 16], sizes = [16, 8], strides = [1, 1]} : vector<16x32xf32> to vector<16x8xf32>
    %51 = vector.shape_cast %50 : vector<16x8xf32> to vector<2x8x8xf32>
    %52 = vector.extract_strided_slice %10 {offsets = [0, 16], sizes = [16, 8], strides = [1, 1]} : vector<16x32xf32> to vector<16x8xf32>
    %53 = vector.shape_cast %52 : vector<16x8xf32> to vector<2x8x8xf32>
    %54 = vector.extract_strided_slice %11 {offsets = [0, 16], sizes = [16, 8], strides = [1, 1]} : vector<16x32xf32> to vector<16x8xf32>
    %55 = vector.shape_cast %54 : vector<16x8xf32> to vector<2x8x8xf32>
    "tpu.trace_start"() <{level = 10 : i32, message = "bqd,bkd->bqk"}> : () -> ()
    %cst_21 = arith.constant dense<0.000000e+00> : vector<2x8x8xf32>
    %56 = tpu.matmul %51, %53, %cst_21 {dimension_numbers = #tpu.dot_dimension_numbers<[2], [2], [1], [1], [0, 0, 0, 1, 1, 1], [0], [0]>} : vector<2x8x8xf32>, vector<2x8x8xf32>, vector<2x8x8xf32> -> vector<2x8x8xf32>
    "tpu.trace_stop"() : () -> ()
    %cst_22 = arith.constant dense<0xFF800000> : vector<2x8xf32>
    %57 = vector.multi_reduction <maximumf>, %56, %cst_22 [2] : vector<2x8x8xf32> to vector<2x8xf32>
    %58 = vector.shape_cast %57 : vector<2x8xf32> to vector<2x8x1xf32>
    %59 = vector.broadcast %58 : vector<2x8x1xf32> to vector<2x8x8xf32>
    %60 = arith.subf %56, %59 : vector<2x8x8xf32>
    %61 = math.exp %60 : vector<2x8x8xf32>
    %cst_23 = arith.constant dense<0.000000e+00> : vector<2x8xf32>
    %62 = vector.multi_reduction <add>, %61, %cst_23 [2] : vector<2x8x8xf32> to vector<2x8xf32>
    %63 = vector.shape_cast %62 : vector<2x8xf32> to vector<2x8x1xf32>
    %64 = tpu.reciprocal %63 {approx = true} : vector<2x8x1xf32> -> vector<2x8x1xf32>
    %65 = vector.broadcast %64 : vector<2x8x1xf32> to vector<2x8x8xf32>
    %66 = arith.mulf %61, %65 : vector<2x8x8xf32>
    "tpu.trace_start"() <{level = 10 : i32, message = "bqk,bkd->bqd"}> : () -> ()
    %cst_24 = arith.constant dense<0.000000e+00> : vector<2x8x8xf32>
    %67 = tpu.matmul %66, %55, %cst_24 {dimension_numbers = #tpu.dot_dimension_numbers<[2], [1], [1], [2], [0, 0, 0, 1, 1, 2], [0], [0]>} : vector<2x8x8xf32>, vector<2x8x8xf32>, vector<2x8x8xf32> -> vector<2x8x8xf32>
    "tpu.trace_stop"() : () -> ()
    %68 = vector.extract_strided_slice %9 {offsets = [0, 24], sizes = [16, 8], strides = [1, 1]} : vector<16x32xf32> to vector<16x8xf32>
    %69 = vector.shape_cast %68 : vector<16x8xf32> to vector<2x8x8xf32>
    %70 = vector.extract_strided_slice %10 {offsets = [0, 24], sizes = [16, 8], strides = [1, 1]} : vector<16x32xf32> to vector<16x8xf32>
    %71 = vector.shape_cast %70 : vector<16x8xf32> to vector<2x8x8xf32>
    %72 = vector.extract_strided_slice %11 {offsets = [0, 24], sizes = [16, 8], strides = [1, 1]} : vector<16x32xf32> to vector<16x8xf32>
    %73 = vector.shape_cast %72 : vector<16x8xf32> to vector<2x8x8xf32>
    "tpu.trace_start"() <{level = 10 : i32, message = "bqd,bkd->bqk"}> : () -> ()
    %cst_25 = arith.constant dense<0.000000e+00> : vector<2x8x8xf32>
    %74 = tpu.matmul %69, %71, %cst_25 {dimension_numbers = #tpu.dot_dimension_numbers<[2], [2], [1], [1], [0, 0, 0, 1, 1, 1], [0], [0]>} : vector<2x8x8xf32>, vector<2x8x8xf32>, vector<2x8x8xf32> -> vector<2x8x8xf32>
    "tpu.trace_stop"() : () -> ()
    %cst_26 = arith.constant dense<0xFF800000> : vector<2x8xf32>
    %75 = vector.multi_reduction <maximumf>, %74, %cst_26 [2] : vector<2x8x8xf32> to vector<2x8xf32>
    %76 = vector.shape_cast %75 : vector<2x8xf32> to vector<2x8x1xf32>
    %77 = vector.broadcast %76 : vector<2x8x1xf32> to vector<2x8x8xf32>
    %78 = arith.subf %74, %77 : vector<2x8x8xf32>
    %79 = math.exp %78 : vector<2x8x8xf32>
    %cst_27 = arith.constant dense<0.000000e+00> : vector<2x8xf32>
    %80 = vector.multi_reduction <add>, %79, %cst_27 [2] : vector<2x8x8xf32> to vector<2x8xf32>
    %81 = vector.shape_cast %80 : vector<2x8xf32> to vector<2x8x1xf32>
    %82 = tpu.reciprocal %81 {approx = true} : vector<2x8x1xf32> -> vector<2x8x1xf32>
    %83 = vector.broadcast %82 : vector<2x8x1xf32> to vector<2x8x8xf32>
    %84 = arith.mulf %79, %83 : vector<2x8x8xf32>
    "tpu.trace_start"() <{level = 10 : i32, message = "bqk,bkd->bqd"}> : () -> ()
    %cst_28 = arith.constant dense<0.000000e+00> : vector<2x8x8xf32>
    %85 = tpu.matmul %84, %73, %cst_28 {dimension_numbers = #tpu.dot_dimension_numbers<[2], [1], [1], [2], [0, 0, 0, 1, 1, 2], [0], [0]>} : vector<2x8x8xf32>, vector<2x8x8xf32>, vector<2x8x8xf32> -> vector<2x8x8xf32>
    %cst_29 = arith.constant 0.000000e+00 : f32
    "tpu.trace_stop"() : () -> ()
    %86 = vector.broadcast %cst_29 : f32 to vector<16x32xf32>
    %87 = vector.shape_cast %31 : vector<2x8x8xf32> to vector<16x8xf32>
    %88 = vector.extract_strided_slice %12 {offsets = [0, 0], sizes = [8, 32], strides = [1, 1]} : vector<32x32xf32> to vector<8x32xf32>
    %cst_30 = arith.constant dense<0.000000e+00> : vector<16x32xf32>
    %89 = tpu.matmul %87, %88, %cst_30 {dimension_numbers = #tpu.dot_dimension_numbers<[1], [0], [0], [1], [0, 0, 1, 1], [], []>} : vector<16x8xf32>, vector<8x32xf32>, vector<16x32xf32> -> vector<16x32xf32>
    %90 = arith.addf %86, %89 : vector<16x32xf32>
    %91 = vector.shape_cast %49 : vector<2x8x8xf32> to vector<16x8xf32>
    %92 = vector.extract_strided_slice %12 {offsets = [8, 0], sizes = [8, 32], strides = [1, 1]} : vector<32x32xf32> to vector<8x32xf32>
    %cst_31 = arith.constant dense<0.000000e+00> : vector<16x32xf32>
    %93 = tpu.matmul %91, %92, %cst_31 {dimension_numbers = #tpu.dot_dimension_numbers<[1], [0], [0], [1], [0, 0, 1, 1], [], []>} : vector<16x8xf32>, vector<8x32xf32>, vector<16x32xf32> -> vector<16x32xf32>
    %94 = arith.addf %90, %93 : vector<16x32xf32>
    %95 = vector.shape_cast %67 : vector<2x8x8xf32> to vector<16x8xf32>
    %96 = vector.extract_strided_slice %12 {offsets = [16, 0], sizes = [8, 32], strides = [1, 1]} : vector<32x32xf32> to vector<8x32xf32>
    %cst_32 = arith.constant dense<0.000000e+00> : vector<16x32xf32>
    %97 = tpu.matmul %95, %96, %cst_32 {dimension_numbers = #tpu.dot_dimension_numbers<[1], [0], [0], [1], [0, 0, 1, 1], [], []>} : vector<16x8xf32>, vector<8x32xf32>, vector<16x32xf32> -> vector<16x32xf32>
    %98 = arith.addf %94, %97 : vector<16x32xf32>
    %99 = vector.shape_cast %85 : vector<2x8x8xf32> to vector<16x8xf32>
    %100 = vector.extract_strided_slice %12 {offsets = [24, 0], sizes = [8, 32], strides = [1, 1]} : vector<32x32xf32> to vector<8x32xf32>
    %cst_33 = arith.constant dense<0.000000e+00> : vector<16x32xf32>
    %101 = tpu.matmul %99, %100, %cst_33 {dimension_numbers = #tpu.dot_dimension_numbers<[1], [0], [0], [1], [0, 0, 1, 1], [], []>} : vector<16x8xf32>, vector<8x32xf32>, vector<16x32xf32> -> vector<16x32xf32>
    %102 = arith.addf %98, %101 : vector<16x32xf32>
    %103 = vector.broadcast %13 : vector<1x32xf32> to vector<16x32xf32>
    %104 = arith.addf %102, %103 : vector<16x32xf32>
    %105 = arith.addf %1, %104 : vector<16x32xf32>
    %c0_34 = arith.constant 0 : index
    %c0_35 = arith.constant 0 : index
    %106 = vector.load %arg7[%c0_34, %c0_35] : memref<1x32xf32, #tpu.memory_space<vmem>>, vector<1x32xf32>
    %c0_36 = arith.constant 0 : index
    %c0_37 = arith.constant 0 : index
    %107 = vector.load %arg8[%c0_36, %c0_37] : memref<1x32xf32, #tpu.memory_space<vmem>>, vector<1x32xf32>
    %cst_38 = arith.constant dense<0.000000e+00> : vector<16xf32>
    %108 = vector.multi_reduction <add>, %105, %cst_38 [1] : vector<16x32xf32> to vector<16xf32>
    %109 = vector.shape_cast %108 : vector<16xf32> to vector<16x1xf32>
    %cst_39 = arith.constant 3.200000e+01 : f32
    %110 = vector.broadcast %cst_39 : f32 to vector<16x1xf32>
    %111 = arith.divf %109, %110 : vector<16x1xf32>
    %112 = vector.broadcast %111 : vector<16x1xf32> to vector<16x32xf32>
    %113 = arith.subf %105, %112 : vector<16x32xf32>
    %114 = arith.mulf %113, %113 : vector<16x32xf32>
    %cst_40 = arith.constant dense<0.000000e+00> : vector<16xf32>
    %115 = vector.multi_reduction <add>, %114, %cst_40 [1] : vector<16x32xf32> to vector<16xf32>
    %116 = vector.shape_cast %115 : vector<16xf32> to vector<16x1xf32>
    %cst_41 = arith.constant 3.200000e+01 : f32
    %117 = vector.broadcast %cst_41 : f32 to vector<16x1xf32>
    %118 = arith.divf %116, %117 : vector<16x1xf32>
    %119 = vector.broadcast %111 : vector<16x1xf32> to vector<16x32xf32>
    %120 = arith.subf %105, %119 : vector<16x32xf32>
    %cst_42 = arith.constant 9.99999974E-6 : f32
    %121 = vector.broadcast %cst_42 : f32 to vector<16x1xf32>
    %122 = arith.addf %118, %121 : vector<16x1xf32>
    %123 = math.rsqrt %122 : vector<16x1xf32>
    %124 = vector.broadcast %123 : vector<16x1xf32> to vector<16x32xf32>
    %125 = arith.mulf %120, %124 : vector<16x32xf32>
    %126 = vector.broadcast %106 : vector<1x32xf32> to vector<16x32xf32>
    %127 = arith.mulf %125, %126 : vector<16x32xf32>
    %128 = vector.broadcast %107 : vector<1x32xf32> to vector<16x32xf32>
    %129 = arith.addf %127, %128 : vector<16x32xf32>
    %c0_43 = arith.constant 0 : index
    %c0_44 = arith.constant 0 : index
    %130 = vector.load %arg9[%c0_43, %c0_44] : memref<32x32xf32, #tpu.memory_space<vmem>>, vector<32x32xf32>
    %cst_45 = arith.constant dense<0.000000e+00> : vector<16x32xf32>
    %131 = tpu.matmul %129, %130, %cst_45 {dimension_numbers = #tpu.dot_dimension_numbers<[1], [0], [0], [1], [0, 0, 1, 1], [], []>} : vector<16x32xf32>, vector<32x32xf32>, vector<16x32xf32> -> vector<16x32xf32>
    %c0_46 = arith.constant 0 : index
    %c0_47 = arith.constant 0 : index
    %132 = vector.load %arg10[%c0_46, %c0_47] : memref<1x32xf32, #tpu.memory_space<vmem>>, vector<1x32xf32>
    %133 = vector.broadcast %132 : vector<1x32xf32> to vector<16x32xf32>
    %134 = arith.addf %131, %133 : vector<16x32xf32>
    %c0_48 = arith.constant 0 : index
    %c0_49 = arith.constant 0 : index
    %135 = vector.load %arg11[%c0_48, %c0_49] : memref<32x64xf32, #tpu.memory_space<vmem>>, vector<32x64xf32>
    %cst_50 = arith.constant dense<0.000000e+00> : vector<32x64xf32>
    %136 = tpu.matmul %3, %135, %cst_50 {dimension_numbers = #tpu.dot_dimension_numbers<[1], [0], [0], [1], [0, 0, 1, 1], [], []>} : vector<32x32xf32>, vector<32x64xf32>, vector<32x64xf32> -> vector<32x64xf32>
    %c0_51 = arith.constant 0 : index
    %c0_52 = arith.constant 0 : index
    %137 = vector.load %arg12[%c0_51, %c0_52] : memref<1x64xf32, #tpu.memory_space<vmem>>, vector<1x64xf32>
    %138 = vector.broadcast %137 : vector<1x64xf32> to vector<32x64xf32>
    %139 = arith.addf %136, %138 : vector<32x64xf32>
    %140 = vector.extract_strided_slice %139 {offsets = [0, 0], sizes = [32, 32], strides = [1, 1]} : vector<32x64xf32> to vector<32x32xf32>
    %141 = vector.extract_strided_slice %139 {offsets = [0, 32], sizes = [32, 32], strides = [1, 1]} : vector<32x64xf32> to vector<32x32xf32>
    %c0_53 = arith.constant 0 : index
    %c0_54 = arith.constant 0 : index
    %142 = vector.load %arg13[%c0_53, %c0_54] : memref<32x32xf32, #tpu.memory_space<vmem>>, vector<32x32xf32>
    %c0_55 = arith.constant 0 : index
    %c0_56 = arith.constant 0 : index
    %143 = vector.load %arg14[%c0_55, %c0_56] : memref<1x32xf32, #tpu.memory_space<vmem>>, vector<1x32xf32>
    %144 = vector.extract_strided_slice %134 {offsets = [0, 0], sizes = [16, 8], strides = [1, 1]} : vector<16x32xf32> to vector<16x8xf32>
    %145 = vector.shape_cast %144 : vector<16x8xf32> to vector<2x8x8xf32>
    %146 = vector.extract_strided_slice %140 {offsets = [0, 0], sizes = [32, 8], strides = [1, 1]} : vector<32x32xf32> to vector<32x8xf32>
    %147 = vector.shape_cast %146 : vector<32x8xf32> to vector<2x16x8xf32>
    %148 = vector.extract_strided_slice %141 {offsets = [0, 0], sizes = [32, 8], strides = [1, 1]} : vector<32x32xf32> to vector<32x8xf32>
    %149 = vector.shape_cast %148 : vector<32x8xf32> to vector<2x16x8xf32>
    "tpu.trace_start"() <{level = 10 : i32, message = "bqd,bkd->bqk"}> : () -> ()
    %cst_57 = arith.constant dense<0.000000e+00> : vector<2x8x16xf32>
    %150 = tpu.matmul %145, %147, %cst_57 {dimension_numbers = #tpu.dot_dimension_numbers<[2], [2], [1], [1], [0, 0, 0, 1, 1, 1], [0], [0]>} : vector<2x8x8xf32>, vector<2x16x8xf32>, vector<2x8x16xf32> -> vector<2x8x16xf32>
    "tpu.trace_stop"() : () -> ()
    %cst_58 = arith.constant dense<0xFF800000> : vector<2x8xf32>
    %151 = vector.multi_reduction <maximumf>, %150, %cst_58 [2] : vector<2x8x16xf32> to vector<2x8xf32>
    %152 = vector.shape_cast %151 : vector<2x8xf32> to vector<2x8x1xf32>
    %153 = vector.broadcast %152 : vector<2x8x1xf32> to vector<2x8x16xf32>
    %154 = arith.subf %150, %153 : vector<2x8x16xf32>
    %155 = math.exp %154 : vector<2x8x16xf32>
    %cst_59 = arith.constant dense<0.000000e+00> : vector<2x8xf32>
    %156 = vector.multi_reduction <add>, %155, %cst_59 [2] : vector<2x8x16xf32> to vector<2x8xf32>
    %157 = vector.shape_cast %156 : vector<2x8xf32> to vector<2x8x1xf32>
    %158 = tpu.reciprocal %157 {approx = true} : vector<2x8x1xf32> -> vector<2x8x1xf32>
    %159 = vector.broadcast %158 : vector<2x8x1xf32> to vector<2x8x16xf32>
    %160 = arith.mulf %155, %159 : vector<2x8x16xf32>
    "tpu.trace_start"() <{level = 10 : i32, message = "bqk,bkd->bqd"}> : () -> ()
    %cst_60 = arith.constant dense<0.000000e+00> : vector<2x8x8xf32>
    %161 = tpu.matmul %160, %149, %cst_60 {dimension_numbers = #tpu.dot_dimension_numbers<[2], [1], [1], [2], [0, 0, 0, 1, 1, 2], [0], [0]>} : vector<2x8x16xf32>, vector<2x16x8xf32>, vector<2x8x8xf32> -> vector<2x8x8xf32>
    "tpu.trace_stop"() : () -> ()
    %162 = vector.extract_strided_slice %134 {offsets = [0, 8], sizes = [16, 8], strides = [1, 1]} : vector<16x32xf32> to vector<16x8xf32>
    %163 = vector.shape_cast %162 : vector<16x8xf32> to vector<2x8x8xf32>
    %164 = vector.extract_strided_slice %140 {offsets = [0, 8], sizes = [32, 8], strides = [1, 1]} : vector<32x32xf32> to vector<32x8xf32>
    %165 = vector.shape_cast %164 : vector<32x8xf32> to vector<2x16x8xf32>
    %166 = vector.extract_strided_slice %141 {offsets = [0, 8], sizes = [32, 8], strides = [1, 1]} : vector<32x32xf32> to vector<32x8xf32>
    %167 = vector.shape_cast %166 : vector<32x8xf32> to vector<2x16x8xf32>
    "tpu.trace_start"() <{level = 10 : i32, message = "bqd,bkd->bqk"}> : () -> ()
    %cst_61 = arith.constant dense<0.000000e+00> : vector<2x8x16xf32>
    %168 = tpu.matmul %163, %165, %cst_61 {dimension_numbers = #tpu.dot_dimension_numbers<[2], [2], [1], [1], [0, 0, 0, 1, 1, 1], [0], [0]>} : vector<2x8x8xf32>, vector<2x16x8xf32>, vector<2x8x16xf32> -> vector<2x8x16xf32>
    "tpu.trace_stop"() : () -> ()
    %cst_62 = arith.constant dense<0xFF800000> : vector<2x8xf32>
    %169 = vector.multi_reduction <maximumf>, %168, %cst_62 [2] : vector<2x8x16xf32> to vector<2x8xf32>
    %170 = vector.shape_cast %169 : vector<2x8xf32> to vector<2x8x1xf32>
    %171 = vector.broadcast %170 : vector<2x8x1xf32> to vector<2x8x16xf32>
    %172 = arith.subf %168, %171 : vector<2x8x16xf32>
    %173 = math.exp %172 : vector<2x8x16xf32>
    %cst_63 = arith.constant dense<0.000000e+00> : vector<2x8xf32>
    %174 = vector.multi_reduction <add>, %173, %cst_63 [2] : vector<2x8x16xf32> to vector<2x8xf32>
    %175 = vector.shape_cast %174 : vector<2x8xf32> to vector<2x8x1xf32>
    %176 = tpu.reciprocal %175 {approx = true} : vector<2x8x1xf32> -> vector<2x8x1xf32>
    %177 = vector.broadcast %176 : vector<2x8x1xf32> to vector<2x8x16xf32>
    %178 = arith.mulf %173, %177 : vector<2x8x16xf32>
    "tpu.trace_start"() <{level = 10 : i32, message = "bqk,bkd->bqd"}> : () -> ()
    %cst_64 = arith.constant dense<0.000000e+00> : vector<2x8x8xf32>
    %179 = tpu.matmul %178, %167, %cst_64 {dimension_numbers = #tpu.dot_dimension_numbers<[2], [1], [1], [2], [0, 0, 0, 1, 1, 2], [0], [0]>} : vector<2x8x16xf32>, vector<2x16x8xf32>, vector<2x8x8xf32> -> vector<2x8x8xf32>
    "tpu.trace_stop"() : () -> ()
    %180 = vector.extract_strided_slice %134 {offsets = [0, 16], sizes = [16, 8], strides = [1, 1]} : vector<16x32xf32> to vector<16x8xf32>
    %181 = vector.shape_cast %180 : vector<16x8xf32> to vector<2x8x8xf32>
    %182 = vector.extract_strided_slice %140 {offsets = [0, 16], sizes = [32, 8], strides = [1, 1]} : vector<32x32xf32> to vector<32x8xf32>
    %183 = vector.shape_cast %182 : vector<32x8xf32> to vector<2x16x8xf32>
    %184 = vector.extract_strided_slice %141 {offsets = [0, 16], sizes = [32, 8], strides = [1, 1]} : vector<32x32xf32> to vector<32x8xf32>
    %185 = vector.shape_cast %184 : vector<32x8xf32> to vector<2x16x8xf32>
    "tpu.trace_start"() <{level = 10 : i32, message = "bqd,bkd->bqk"}> : () -> ()
    %cst_65 = arith.constant dense<0.000000e+00> : vector<2x8x16xf32>
    %186 = tpu.matmul %181, %183, %cst_65 {dimension_numbers = #tpu.dot_dimension_numbers<[2], [2], [1], [1], [0, 0, 0, 1, 1, 1], [0], [0]>} : vector<2x8x8xf32>, vector<2x16x8xf32>, vector<2x8x16xf32> -> vector<2x8x16xf32>
    "tpu.trace_stop"() : () -> ()
    %cst_66 = arith.constant dense<0xFF800000> : vector<2x8xf32>
    %187 = vector.multi_reduction <maximumf>, %186, %cst_66 [2] : vector<2x8x16xf32> to vector<2x8xf32>
    %188 = vector.shape_cast %187 : vector<2x8xf32> to vector<2x8x1xf32>
    %189 = vector.broadcast %188 : vector<2x8x1xf32> to vector<2x8x16xf32>
    %190 = arith.subf %186, %189 : vector<2x8x16xf32>
    %191 = math.exp %190 : vector<2x8x16xf32>
    %cst_67 = arith.constant dense<0.000000e+00> : vector<2x8xf32>
    %192 = vector.multi_reduction <add>, %191, %cst_67 [2] : vector<2x8x16xf32> to vector<2x8xf32>
    %193 = vector.shape_cast %192 : vector<2x8xf32> to vector<2x8x1xf32>
    %194 = tpu.reciprocal %193 {approx = true} : vector<2x8x1xf32> -> vector<2x8x1xf32>
    %195 = vector.broadcast %194 : vector<2x8x1xf32> to vector<2x8x16xf32>
    %196 = arith.mulf %191, %195 : vector<2x8x16xf32>
    "tpu.trace_start"() <{level = 10 : i32, message = "bqk,bkd->bqd"}> : () -> ()
    %cst_68 = arith.constant dense<0.000000e+00> : vector<2x8x8xf32>
    %197 = tpu.matmul %196, %185, %cst_68 {dimension_numbers = #tpu.dot_dimension_numbers<[2], [1], [1], [2], [0, 0, 0, 1, 1, 2], [0], [0]>} : vector<2x8x16xf32>, vector<2x16x8xf32>, vector<2x8x8xf32> -> vector<2x8x8xf32>
    "tpu.trace_stop"() : () -> ()
    %198 = vector.extract_strided_slice %134 {offsets = [0, 24], sizes = [16, 8], strides = [1, 1]} : vector<16x32xf32> to vector<16x8xf32>
    %199 = vector.shape_cast %198 : vector<16x8xf32> to vector<2x8x8xf32>
    %200 = vector.extract_strided_slice %140 {offsets = [0, 24], sizes = [32, 8], strides = [1, 1]} : vector<32x32xf32> to vector<32x8xf32>
    %201 = vector.shape_cast %200 : vector<32x8xf32> to vector<2x16x8xf32>
    %202 = vector.extract_strided_slice %141 {offsets = [0, 24], sizes = [32, 8], strides = [1, 1]} : vector<32x32xf32> to vector<32x8xf32>
    %203 = vector.shape_cast %202 : vector<32x8xf32> to vector<2x16x8xf32>
    "tpu.trace_start"() <{level = 10 : i32, message = "bqd,bkd->bqk"}> : () -> ()
    %cst_69 = arith.constant dense<0.000000e+00> : vector<2x8x16xf32>
    %204 = tpu.matmul %199, %201, %cst_69 {dimension_numbers = #tpu.dot_dimension_numbers<[2], [2], [1], [1], [0, 0, 0, 1, 1, 1], [0], [0]>} : vector<2x8x8xf32>, vector<2x16x8xf32>, vector<2x8x16xf32> -> vector<2x8x16xf32>
    "tpu.trace_stop"() : () -> ()
    %cst_70 = arith.constant dense<0xFF800000> : vector<2x8xf32>
    %205 = vector.multi_reduction <maximumf>, %204, %cst_70 [2] : vector<2x8x16xf32> to vector<2x8xf32>
    %206 = vector.shape_cast %205 : vector<2x8xf32> to vector<2x8x1xf32>
    %207 = vector.broadcast %206 : vector<2x8x1xf32> to vector<2x8x16xf32>
    %208 = arith.subf %204, %207 : vector<2x8x16xf32>
    %209 = math.exp %208 : vector<2x8x16xf32>
    %cst_71 = arith.constant dense<0.000000e+00> : vector<2x8xf32>
    %210 = vector.multi_reduction <add>, %209, %cst_71 [2] : vector<2x8x16xf32> to vector<2x8xf32>
    %211 = vector.shape_cast %210 : vector<2x8xf32> to vector<2x8x1xf32>
    %212 = tpu.reciprocal %211 {approx = true} : vector<2x8x1xf32> -> vector<2x8x1xf32>
    %213 = vector.broadcast %212 : vector<2x8x1xf32> to vector<2x8x16xf32>
    %214 = arith.mulf %209, %213 : vector<2x8x16xf32>
    "tpu.trace_start"() <{level = 10 : i32, message = "bqk,bkd->bqd"}> : () -> ()
    %cst_72 = arith.constant dense<0.000000e+00> : vector<2x8x8xf32>
    %215 = tpu.matmul %214, %203, %cst_72 {dimension_numbers = #tpu.dot_dimension_numbers<[2], [1], [1], [2], [0, 0, 0, 1, 1, 2], [0], [0]>} : vector<2x8x16xf32>, vector<2x16x8xf32>, vector<2x8x8xf32> -> vector<2x8x8xf32>
    %cst_73 = arith.constant 0.000000e+00 : f32
    "tpu.trace_stop"() : () -> ()
    %216 = vector.broadcast %cst_73 : f32 to vector<16x32xf32>
    %217 = vector.shape_cast %161 : vector<2x8x8xf32> to vector<16x8xf32>
    %218 = vector.extract_strided_slice %142 {offsets = [0, 0], sizes = [8, 32], strides = [1, 1]} : vector<32x32xf32> to vector<8x32xf32>
    %cst_74 = arith.constant dense<0.000000e+00> : vector<16x32xf32>
    %219 = tpu.matmul %217, %218, %cst_74 {dimension_numbers = #tpu.dot_dimension_numbers<[1], [0], [0], [1], [0, 0, 1, 1], [], []>} : vector<16x8xf32>, vector<8x32xf32>, vector<16x32xf32> -> vector<16x32xf32>
    %220 = arith.addf %216, %219 : vector<16x32xf32>
    %221 = vector.shape_cast %179 : vector<2x8x8xf32> to vector<16x8xf32>
    %222 = vector.extract_strided_slice %142 {offsets = [8, 0], sizes = [8, 32], strides = [1, 1]} : vector<32x32xf32> to vector<8x32xf32>
    %cst_75 = arith.constant dense<0.000000e+00> : vector<16x32xf32>
    %223 = tpu.matmul %221, %222, %cst_75 {dimension_numbers = #tpu.dot_dimension_numbers<[1], [0], [0], [1], [0, 0, 1, 1], [], []>} : vector<16x8xf32>, vector<8x32xf32>, vector<16x32xf32> -> vector<16x32xf32>
    %224 = arith.addf %220, %223 : vector<16x32xf32>
    %225 = vector.shape_cast %197 : vector<2x8x8xf32> to vector<16x8xf32>
    %226 = vector.extract_strided_slice %142 {offsets = [16, 0], sizes = [8, 32], strides = [1, 1]} : vector<32x32xf32> to vector<8x32xf32>
    %cst_76 = arith.constant dense<0.000000e+00> : vector<16x32xf32>
    %227 = tpu.matmul %225, %226, %cst_76 {dimension_numbers = #tpu.dot_dimension_numbers<[1], [0], [0], [1], [0, 0, 1, 1], [], []>} : vector<16x8xf32>, vector<8x32xf32>, vector<16x32xf32> -> vector<16x32xf32>
    %228 = arith.addf %224, %227 : vector<16x32xf32>
    %229 = vector.shape_cast %215 : vector<2x8x8xf32> to vector<16x8xf32>
    %230 = vector.extract_strided_slice %142 {offsets = [24, 0], sizes = [8, 32], strides = [1, 1]} : vector<32x32xf32> to vector<8x32xf32>
    %cst_77 = arith.constant dense<0.000000e+00> : vector<16x32xf32>
    %231 = tpu.matmul %229, %230, %cst_77 {dimension_numbers = #tpu.dot_dimension_numbers<[1], [0], [0], [1], [0, 0, 1, 1], [], []>} : vector<16x8xf32>, vector<8x32xf32>, vector<16x32xf32> -> vector<16x32xf32>
    %232 = arith.addf %228, %231 : vector<16x32xf32>
    %233 = vector.broadcast %143 : vector<1x32xf32> to vector<16x32xf32>
    %234 = arith.addf %232, %233 : vector<16x32xf32>
    %235 = arith.addf %129, %234 : vector<16x32xf32>
    %c0_78 = arith.constant 0 : index
    %c0_79 = arith.constant 0 : index
    %236 = vector.load %arg15[%c0_78, %c0_79] : memref<1x32xf32, #tpu.memory_space<vmem>>, vector<1x32xf32>
    %c0_80 = arith.constant 0 : index
    %c0_81 = arith.constant 0 : index
    %237 = vector.load %arg16[%c0_80, %c0_81] : memref<1x32xf32, #tpu.memory_space<vmem>>, vector<1x32xf32>
    %cst_82 = arith.constant dense<0.000000e+00> : vector<16xf32>
    %238 = vector.multi_reduction <add>, %235, %cst_82 [1] : vector<16x32xf32> to vector<16xf32>
    %239 = vector.shape_cast %238 : vector<16xf32> to vector<16x1xf32>
    %cst_83 = arith.constant 3.200000e+01 : f32
    %240 = vector.broadcast %cst_83 : f32 to vector<16x1xf32>
    %241 = arith.divf %239, %240 : vector<16x1xf32>
    %242 = vector.broadcast %241 : vector<16x1xf32> to vector<16x32xf32>
    %243 = arith.subf %235, %242 : vector<16x32xf32>
    %244 = arith.mulf %243, %243 : vector<16x32xf32>
    %cst_84 = arith.constant dense<0.000000e+00> : vector<16xf32>
    %245 = vector.multi_reduction <add>, %244, %cst_84 [1] : vector<16x32xf32> to vector<16xf32>
    %246 = vector.shape_cast %245 : vector<16xf32> to vector<16x1xf32>
    %cst_85 = arith.constant 3.200000e+01 : f32
    %247 = vector.broadcast %cst_85 : f32 to vector<16x1xf32>
    %248 = arith.divf %246, %247 : vector<16x1xf32>
    %249 = vector.broadcast %241 : vector<16x1xf32> to vector<16x32xf32>
    %250 = arith.subf %235, %249 : vector<16x32xf32>
    %cst_86 = arith.constant 9.99999974E-6 : f32
    %251 = vector.broadcast %cst_86 : f32 to vector<16x1xf32>
    %252 = arith.addf %248, %251 : vector<16x1xf32>
    %253 = math.rsqrt %252 : vector<16x1xf32>
    %254 = vector.broadcast %253 : vector<16x1xf32> to vector<16x32xf32>
    %255 = arith.mulf %250, %254 : vector<16x32xf32>
    %256 = vector.broadcast %236 : vector<1x32xf32> to vector<16x32xf32>
    %257 = arith.mulf %255, %256 : vector<16x32xf32>
    %258 = vector.broadcast %237 : vector<1x32xf32> to vector<16x32xf32>
    %259 = arith.addf %257, %258 : vector<16x32xf32>
    %c0_87 = arith.constant 0 : index
    %c0_88 = arith.constant 0 : index
    %260 = vector.load %arg17[%c0_87, %c0_88] : memref<32x128xf32, #tpu.memory_space<vmem>>, vector<32x128xf32>
    %cst_89 = arith.constant dense<0.000000e+00> : vector<16x128xf32>
    %261 = tpu.matmul %259, %260, %cst_89 {dimension_numbers = #tpu.dot_dimension_numbers<[1], [0], [0], [1], [0, 0, 1, 1], [], []>} : vector<16x32xf32>, vector<32x128xf32>, vector<16x128xf32> -> vector<16x128xf32>
    %c0_90 = arith.constant 0 : index
    %c0_91 = arith.constant 0 : index
    %262 = vector.load %arg18[%c0_90, %c0_91] : memref<1x128xf32, #tpu.memory_space<vmem>>, vector<1x128xf32>
    %263 = vector.broadcast %262 : vector<1x128xf32> to vector<16x128xf32>
    %264 = arith.addf %261, %263 : vector<16x128xf32>
    %cst_92 = arith.constant 0.000000e+00 : f32
    %265 = vector.broadcast %cst_92 : f32 to vector<16x128xf32>
    %266 = arith.maximumf %264, %265 : vector<16x128xf32>
    %c0_93 = arith.constant 0 : index
    %c0_94 = arith.constant 0 : index
    %267 = vector.load %arg19[%c0_93, %c0_94] : memref<128x32xf32, #tpu.memory_space<vmem>>, vector<128x32xf32>
    %cst_95 = arith.constant dense<0.000000e+00> : vector<16x32xf32>
    %268 = tpu.matmul %266, %267, %cst_95 {dimension_numbers = #tpu.dot_dimension_numbers<[1], [0], [0], [1], [0, 0, 1, 1], [], []>} : vector<16x128xf32>, vector<128x32xf32>, vector<16x32xf32> -> vector<16x32xf32>
    %c0_96 = arith.constant 0 : index
    %c0_97 = arith.constant 0 : index
    %269 = vector.load %arg20[%c0_96, %c0_97] : memref<1x32xf32, #tpu.memory_space<vmem>>, vector<1x32xf32>
    %270 = vector.broadcast %269 : vector<1x32xf32> to vector<16x32xf32>
    %271 = arith.addf %268, %270 : vector<16x32xf32>
    %272 = arith.addf %259, %271 : vector<16x32xf32>
    %c0_98 = arith.constant 0 : index
    %c0_99 = arith.constant 0 : index
    %273 = vector.load %arg21[%c0_98, %c0_99] : memref<1x32xf32, #tpu.memory_space<vmem>>, vector<1x32xf32>
    %c0_100 = arith.constant 0 : index
    %c0_101 = arith.constant 0 : index
    %274 = vector.load %arg22[%c0_100, %c0_101] : memref<1x32xf32, #tpu.memory_space<vmem>>, vector<1x32xf32>
    %cst_102 = arith.constant dense<0.000000e+00> : vector<16xf32>
    %275 = vector.multi_reduction <add>, %272, %cst_102 [1] : vector<16x32xf32> to vector<16xf32>
    %276 = vector.shape_cast %275 : vector<16xf32> to vector<16x1xf32>
    %cst_103 = arith.constant 3.200000e+01 : f32
    %277 = vector.broadcast %cst_103 : f32 to vector<16x1xf32>
    %278 = arith.divf %276, %277 : vector<16x1xf32>
    %279 = vector.broadcast %278 : vector<16x1xf32> to vector<16x32xf32>
    %280 = arith.subf %272, %279 : vector<16x32xf32>
    %281 = arith.mulf %280, %280 : vector<16x32xf32>
    %cst_104 = arith.constant dense<0.000000e+00> : vector<16xf32>
    %282 = vector.multi_reduction <add>, %281, %cst_104 [1] : vector<16x32xf32> to vector<16xf32>
    %283 = vector.shape_cast %282 : vector<16xf32> to vector<16x1xf32>
    %cst_105 = arith.constant 3.200000e+01 : f32
    %284 = vector.broadcast %cst_105 : f32 to vector<16x1xf32>
    %285 = arith.divf %283, %284 : vector<16x1xf32>
    %286 = vector.broadcast %278 : vector<16x1xf32> to vector<16x32xf32>
    %287 = arith.subf %272, %286 : vector<16x32xf32>
    %cst_106 = arith.constant 9.99999974E-6 : f32
    %288 = vector.broadcast %cst_106 : f32 to vector<16x1xf32>
    %289 = arith.addf %285, %288 : vector<16x1xf32>
    %290 = math.rsqrt %289 : vector<16x1xf32>
    %291 = vector.broadcast %290 : vector<16x1xf32> to vector<16x32xf32>
    %292 = arith.mulf %287, %291 : vector<16x32xf32>
    %293 = vector.broadcast %273 : vector<1x32xf32> to vector<16x32xf32>
    %294 = arith.mulf %292, %293 : vector<16x32xf32>
    %295 = vector.broadcast %274 : vector<1x32xf32> to vector<16x32xf32>
    %296 = arith.addf %294, %295 : vector<16x32xf32>
    %297 = vector.shape_cast %296 : vector<16x32xf32> to vector<2x8x32xf32>
    %c0_107 = arith.constant 0 : index
    %c0_108 = arith.constant 0 : index
    %c0_109 = arith.constant 0 : index
    %298 = vector.load %arg23[%c0_107, %c0_108, %c0_109] : memref<2x8x32xf32, #tpu.memory_space<vmem>>, vector<2x8x32xf32>
    tpu.vector_store %arg23[%c0_107, %c0_108, %c0_109], %297 {strides = array<i32>} : memref<2x8x32xf32, #tpu.memory_space<vmem>>, vector<2x8x32xf32>,
    return
  }
  func.func @transform_0(%arg0: i32) -> (i32, i32, i32) {
    %c0_i32 = arith.constant 0 : i32
    %c0_i32_0 = arith.constant 0 : i32
    %c0_i32_1 = arith.constant 0 : i32
    return %arg0, %c0_i32, %c0_i32_0 : i32, i32, i32
  }
  func.func @transform_1(%arg0: i32) -> (i32, i32, i32) {
    %c0_i32 = arith.constant 0 : i32
    %c0_i32_0 = arith.constant 0 : i32
    %c0_i32_1 = arith.constant 0 : i32
    return %arg0, %c0_i32, %c0_i32_0 : i32, i32, i32
  }
  func.func @transform_2(%arg0: i32) -> (i32, i32) {
    %c0_i32 = arith.constant 0 : i32
    %c0_i32_0 = arith.constant 0 : i32
    %c0_i32_1 = arith.constant 0 : i32
    return %c0_i32, %c0_i32_0 : i32, i32
  }
  func.func @transform_3(%arg0: i32) -> (i32, i32) {
    %c0_i32 = arith.constant 0 : i32
    %c0_i32_0 = arith.constant 0 : i32
    %c0_i32_1 = arith.constant 0 : i32
    return %c0_i32, %c0_i32_0 : i32, i32
  }
  func.func @transform_4(%arg0: i32) -> (i32, i32) {
    %c0_i32 = arith.constant 0 : i32
    %c0_i32_0 = arith.constant 0 : i32
    %c0_i32_1 = arith.constant 0 : i32
    return %c0_i32, %c0_i32_0 : i32, i32
  }
  func.func @transform_5(%arg0: i32) -> (i32, i32) {
    %c0_i32 = arith.constant 0 : i32
    %c0_i32_0 = arith.constant 0 : i32
    %c0_i32_1 = arith.constant 0 : i32
    return %c0_i32, %c0_i32_0 : i32, i32
  }
  func.func @transform_6(%arg0: i32) -> (i32, i32) {
    %c0_i32 = arith.constant 0 : i32
    %c0_i32_0 = arith.constant 0 : i32
    %c0_i32_1 = arith.constant 0 : i32
    return %c0_i32, %c0_i32_0 : i32, i32
  }
  func.func @transform_7(%arg0: i32) -> (i32, i32) {
    %c0_i32 = arith.constant 0 : i32
    %c0_i32_0 = arith.constant 0 : i32
    %c0_i32_1 = arith.constant 0 : i32
    return %c0_i32, %c0_i32_0 : i32, i32
  }
  func.func @transform_8(%arg0: i32) -> (i32, i32) {
    %c0_i32 = arith.constant 0 : i32
    %c0_i32_0 = arith.constant 0 : i32
    %c0_i32_1 = arith.constant 0 : i32
    return %c0_i32, %c0_i32_0 : i32, i32
  }
  func.func @transform_9(%arg0: i32) -> (i32, i32) {
    %c0_i32 = arith.constant 0 : i32
    %c0_i32_0 = arith.constant 0 : i32
    %c0_i32_1 = arith.constant 0 : i32
    return %c0_i32, %c0_i32_0 : i32, i32
  }
  func.func @transform_10(%arg0: i32) -> (i32, i32) {
    %c0_i32 = arith.constant 0 : i32
    %c0_i32_0 = arith.constant 0 : i32
    %c0_i32_1 = arith.constant 0 : i32
    return %c0_i32, %c0_i32_0 : i32, i32
  }
  func.func @transform_11(%arg0: i32) -> (i32, i32) {
    %c0_i32 = arith.constant 0 : i32
    %c0_i32_0 = arith.constant 0 : i32
    %c0_i32_1 = arith.constant 0 : i32
    return %c0_i32, %c0_i32_0 : i32, i32
  }
  func.func @transform_12(%arg0: i32) -> (i32, i32) {
    %c0_i32 = arith.constant 0 : i32
    %c0_i32_0 = arith.constant 0 : i32
    %c0_i32_1 = arith.constant 0 : i32
    return %c0_i32, %c0_i32_0 : i32, i32
  }
  func.func @transform_13(%arg0: i32) -> (i32, i32) {
    %c0_i32 = arith.constant 0 : i32
    %c0_i32_0 = arith.constant 0 : i32
    %c0_i32_1 = arith.constant 0 : i32
    return %c0_i32, %c0_i32_0 : i32, i32
  }
  func.func @transform_14(%arg0: i32) -> (i32, i32) {
    %c0_i32 = arith.constant 0 : i32
    %c0_i32_0 = arith.constant 0 : i32
    %c0_i32_1 = arith.constant 0 : i32
    return %c0_i32, %c0_i32_0 : i32, i32
  }
  func.func @transform_15(%arg0: i32) -> (i32, i32) {
    %c0_i32 = arith.constant 0 : i32
    %c0_i32_0 = arith.constant 0 : i32
    %c0_i32_1 = arith.constant 0 : i32
    return %c0_i32, %c0_i32_0 : i32, i32
  }
  func.func @transform_16(%arg0: i32) -> (i32, i32) {
    %c0_i32 = arith.constant 0 : i32
    %c0_i32_0 = arith.constant 0 : i32
    %c0_i32_1 = arith.constant 0 : i32
    return %c0_i32, %c0_i32_0 : i32, i32
  }
  func.func @transform_17(%arg0: i32) -> (i32, i32) {
    %c0_i32 = arith.constant 0 : i32
    %c0_i32_0 = arith.constant 0 : i32
    %c0_i32_1 = arith.constant 0 : i32
    return %c0_i32, %c0_i32_0 : i32, i32
  }
  func.func @transform_18(%arg0: i32) -> (i32, i32) {
    %c0_i32 = arith.constant 0 : i32
    %c0_i32_0 = arith.constant 0 : i32
    %c0_i32_1 = arith.constant 0 : i32
    return %c0_i32, %c0_i32_0 : i32, i32
  }
  func.func @transform_19(%arg0: i32) -> (i32, i32) {
    %c0_i32 = arith.constant 0 : i32
    %c0_i32_0 = arith.constant 0 : i32
    %c0_i32_1 = arith.constant 0 : i32
    return %c0_i32, %c0_i32_0 : i32, i32
  }
  func.func @transform_20(%arg0: i32) -> (i32, i32) {
    %c0_i32 = arith.constant 0 : i32
    %c0_i32_0 = arith.constant 0 : i32
    %c0_i32_1 = arith.constant 0 : i32
    return %c0_i32, %c0_i32_0 : i32, i32
  }
  func.func @transform_21(%arg0: i32) -> (i32, i32) {
    %c0_i32 = arith.constant 0 : i32
    %c0_i32_0 = arith.constant 0 : i32
    %c0_i32_1 = arith.constant 0 : i32
    return %c0_i32, %c0_i32_0 : i32, i32
  }
  func.func @transform_22(%arg0: i32) -> (i32, i32, i32) {
    %c0_i32 = arith.constant 0 : i32
    %c0_i32_0 = arith.constant 0 : i32
    %c0_i32_1 = arith.constant 0 : i32
    return %arg0, %c0_i32, %c0_i32_0 : i32, i32, i32
  }
}

</mosaic_0001>

<llo_original>
// kernel: tpu_custom_call.1
$region0: #{tpu_custom_call.1}
  #allocation0 [shape = 'u32[]', space=smem, size = 0x4, offset = 0x4, fixed_abs, tag = 'smem constant byte address 0x4 - core index']
  #allocation1 [shape = 'u32[72,128]{1,0:T(1,128)}', space=vmem, size = 0x9000, scoped, tag = 'internal scratch']
  %s0 = inlined_call_operand.hbm [shape: f32[2,8,32], index: 0, kind: input, shape index: {}]
  %s1 = inlined_call_operand.vmem [shape: f32[2,16,32], index: 1, kind: input, shape index: {}]
  %s2 = inlined_call_operand.vmem [shape: f32[32,96], index: 2, kind: input, shape index: {}]
  %s3 = inlined_call_operand.vmem [shape: f32[1,96], index: 3, kind: input, shape index: {}]
  %s4 = inlined_call_operand.vmem [shape: f32[32,32], index: 4, kind: input, shape index: {}]
  %s5 = inlined_call_operand.vmem [shape: f32[1,32], index: 5, kind: input, shape index: {}]
  %s6 = inlined_call_operand.vmem [shape: f32[1,32], index: 6, kind: input, shape index: {}]
  %s7 = inlined_call_operand.vmem [shape: f32[1,32], index: 7, kind: input, shape index: {}]
  %s8 = inlined_call_operand.vmem [shape: f32[32,32], index: 8, kind: input, shape index: {}]
  %s9 = inlined_call_operand.vmem [shape: f32[1,32], index: 9, kind: input, shape index: {}]
  %s10 = inlined_call_operand.vmem [shape: f32[32,64], index: 10, kind: input, shape index: {}]
  %s11 = inlined_call_operand.vmem [shape: f32[1,64], index: 11, kind: input, shape index: {}]
  %s12 = inlined_call_operand.hbm [shape: f32[32,32], index: 12, kind: input, shape index: {}]
  %s13 = inlined_call_operand.vmem [shape: f32[1,32], index: 13, kind: input, shape index: {}]
  %s14 = inlined_call_operand.vmem [shape: f32[1,32], index: 14, kind: input, shape index: {}]
  %s15 = inlined_call_operand.vmem [shape: f32[1,32], index: 15, kind: input, shape index: {}]
  %s16 = inlined_call_operand.hbm [shape: f32[32,128], index: 16, kind: input, shape index: {}]
  %s17 = inlined_call_operand.vmem [shape: f32[1,128], index: 17, kind: input, shape index: {}]
  %s18 = inlined_call_operand.vmem [shape: f32[128,32], index: 18, kind: input, shape index: {}]
  %s19 = inlined_call_operand.vmem [shape: f32[1,32], index: 19, kind: input, shape index: {}]
  %s20 = inlined_call_operand.vmem [shape: f32[1,32], index: 20, kind: input, shape index: {}]
  %s21 = inlined_call_operand.vmem [shape: f32[1,32], index: 21, kind: input, shape index: {}]
  %s22 = inlined_call_operand.hbm [shape: f32[2,8,32], index: 22, kind: output, shape index: {}]
  %s23 = sld [smem:[#allocation0]]
  $region110: #{tpu_custom_call.1} parent=0
    _
  %s25 = ssub.s32 1, %s23
  %s26 = scalar_select 0, %s25, %s23
  $region1: #{tpu_custom_call.1} parent=0
    #allocation2 [shape = 'u8[8192]{0}', space=vmem, size = 0x2000, scoped, tag = 'input window, operand 0, single buffered']
    #allocation3 [shape = 's32[1]{0}', space=sflag, size = 0x4, scoped, tag = 'scoped memory for tpu_custom_call.1']
    #allocation4 [shape = 's32[1]{0}', space=sflag, size = 0x4, scoped, tag = 'scoped memory for tpu_custom_call.1']
    #allocation5 [shape = 'u8[16384]{0}', space=vmem, size = 0x4000, scoped, tag = 'input window, operand 12, single buffered']
    #allocation6 [shape = 's32[1]{0}', space=sflag, size = 0x4, scoped, tag = 'scoped memory for tpu_custom_call.1']
    #allocation7 [shape = 'u8[16384]{0}', space=vmem, size = 0x4000, scoped, tag = 'input window, operand 16, single buffered']
    #allocation8 [shape = 'u8[8192]{0}', space=vmem, size = 0x2000, scoped, tag = 'output window, operand 0, single buffered']
    %27 = vsyncpa [#allocation3], 0
    %28 = vsyncpa [#allocation6], 0
    %29 = vsyncpa [#allocation4], 0
    // Predicated region
    $region2: #{tpu_custom_call.1} parent=1 // pred_check
      _
    $region3: #{tpu_custom_call.1} parent=1 // pred_check_branch
      %31 = sbr.rel (0) target = $region5
    $region4: #{tpu_custom_call.1} parent=1 // pred_region
      %33 = vsyncadd [#allocation3], 0
      %s34 = sshll.u32 %s0, 4
      %s35 = int_to_ptr.hbm [resolvable:$true] %s34
      %s36 = sshll.u32 [#allocation2], 4
      %s37 = int_to_ptr.vmem [resolvable:$true] %s36
      %42 = dma.hbm_to_vmem [thread:$0]  %s35, 256, %s37, [#allocation3], 128, 128, 8
    $region5: #{tpu_custom_call.1} parent=1 // pred_fallthru
      _
    // Predicated region
    $region6: #{tpu_custom_call.1} parent=1 // pred_check
      _
    $region7: #{tpu_custom_call.1} parent=1 // pred_check_branch
      %44 = sbr.rel (0) target = $region9
    $region8: #{tpu_custom_call.1} parent=1 // pred_region
      _
    $region9: #{tpu_custom_call.1} parent=1 // pred_fallthru
      _
    // Predicated region
    $region10: #{tpu_custom_call.1} parent=1 // pred_check
      _
    $region11: #{tpu_custom_call.1} parent=1 // pred_check_branch
      %46 = sbr.rel (0) target = $region13
    $region12: #{tpu_custom_call.1} parent=1 // pred_region
      _
    $region13: #{tpu_custom_call.1} parent=1 // pred_fallthru
      _
    // Predicated region
    $region14: #{tpu_custom_call.1} parent=1 // pred_check
      _
    $region15: #{tpu_custom_call.1} parent=1 // pred_check_branch
      %48 = sbr.rel (0) target = $region17
    $region16: #{tpu_custom_call.1} parent=1 // pred_region
      _
    $region17: #{tpu_custom_call.1} parent=1 // pred_fallthru
      _
    // Predicated region
    $region18: #{tpu_custom_call.1} parent=1 // pred_check
      _
    $region19: #{tpu_custom_call.1} parent=1 // pred_check_branch
      %50 = sbr.rel (0) target = $region21
    $region20: #{tpu_custom_call.1} parent=1 // pred_region
      _
    $region21: #{tpu_custom_call.1} parent=1 // pred_fallthru
      _
    // Predicated region
    $region22: #{tpu_custom_call.1} parent=1 // pred_check
      _
    $region23: #{tpu_custom_call.1} parent=1 // pred_check_branch
      %52 = sbr.rel (0) target = $region25
    $region24: #{tpu_custom_call.1} parent=1 // pred_region
      _
    $region25: #{tpu_custom_call.1} parent=1 // pred_fallthru
      _
    // Predicated region
    $region26: #{tpu_custom_call.1} parent=1 // pred_check
      _
    $region27: #{tpu_custom_call.1} parent=1 // pred_check_branch
      %54 = sbr.rel (0) target = $region29
    $region28: #{tpu_custom_call.1} parent=1 // pred_region
      _
    $region29: #{tpu_custom_call.1} parent=1 // pred_fallthru
      _
    // Predicated region
    $region30: #{tpu_custom_call.1} parent=1 // pred_check
      _
    $region31: #{tpu_custom_call.1} parent=1 // pred_check_branch
      %56 = sbr.rel (0) target = $region33
    $region32: #{tpu_custom_call.1} parent=1 // pred_region
      _
    $region33: #{tpu_custom_call.1} parent=1 // pred_fallthru
      _
    // Predicated region
    $region34: #{tpu_custom_call.1} parent=1 // pred_check
      _
    $region35: #{tpu_custom_call.1} parent=1 // pred_check_branch
      %58 = sbr.rel (0) target = $region37
    $region36: #{tpu_custom_call.1} parent=1 // pred_region
      _
    $region37: #{tpu_custom_call.1} parent=1 // pred_fallthru
      _
    // Predicated region
    $region38: #{tpu_custom_call.1} parent=1 // pred_check
      _
    $region39: #{tpu_custom_call.1} parent=1 // pred_check_branch
      %60 = sbr.rel (0) target = $region41
    $region40: #{tpu_custom_call.1} parent=1 // pred_region
      _
    $region41: #{tpu_custom_call.1} parent=1 // pred_fallthru
      _
    // Predicated region
    $region42: #{tpu_custom_call.1} parent=1 // pred_check
      _
    $region43: #{tpu_custom_call.1} parent=1 // pred_check_branch
      %62 = sbr.rel (0) target = $region45
    $region44: #{tpu_custom_call.1} parent=1 // pred_region
      _
    $region45: #{tpu_custom_call.1} parent=1 // pred_fallthru
      _
    // Predicated region
    $region46: #{tpu_custom_call.1} parent=1 // pred_check
      _
    $region47: #{tpu_custom_call.1} parent=1 // pred_check_branch
      %64 = sbr.rel (0) target = $region49
    $region48: #{tpu_custom_call.1} parent=1 // pred_region
      _
    $region49: #{tpu_custom_call.1} parent=1 // pred_fallthru
      _
    // Predicated region
    $region50: #{tpu_custom_call.1} parent=1 // pred_check
      _
    $region51: #{tpu_custom_call.1} parent=1 // pred_check_branch
      %66 = sbr.rel (0) target = $region53
    $region52: #{tpu_custom_call.1} parent=1 // pred_region
      %68 = vsyncadd [#allocation6], 0
      %s69 = sshll.u32 %s12, 4
      %s70 = int_to_ptr.hbm [resolvable:$true] %s69
      %s71 = sshll.u32 [#allocation5], 4
      %s72 = int_to_ptr.vmem [resolvable:$true] %s71
      %77 = dma.hbm_to_vmem [thread:$0]  %s70, 512, %s72, [#allocation6], 128, 128, 8
    $region53: #{tpu_custom_call.1} parent=1 // pred_fallthru
      _
    // Predicated region
    $region54: #{tpu_custom_call.1} parent=1 // pred_check
      _
    $region55: #{tpu_custom_call.1} parent=1 // pred_check_branch
      %79 = sbr.rel (0) target = $region57
    $region56: #{tpu_custom_call.1} parent=1 // pred_region
      _
    $region57: #{tpu_custom_call.1} parent=1 // pred_fallthru
      _
    // Predicated region
    $region58: #{tpu_custom_call.1} parent=1 // pred_check
      _
    $region59: #{tpu_custom_call.1} parent=1 // pred_check_branch
      %81 = sbr.rel (0) target = $region61
    $region60: #{tpu_custom_call.1} parent=1 // pred_region
      _
    $region61: #{tpu_custom_call.1} parent=1 // pred_fallthru
      _
    // Predicated region
    $region62: #{tpu_custom_call.1} parent=1 // pred_check
      _
    $region63: #{tpu_custom_call.1} parent=1 // pred_check_branch
      %83 = sbr.rel (0) target = $region65
    $region64: #{tpu_custom_call.1} parent=1 // pred_region
      _
    $region65: #{tpu_custom_call.1} parent=1 // pred_fallthru
      _
    // Predicated region
    $region66: #{tpu_custom_call.1} parent=1 // pred_check
      _
    $region67: #{tpu_custom_call.1} parent=1 // pred_check_branch
      %85 = sbr.rel (0) target = $region69
    $region68: #{tpu_custom_call.1} parent=1 // pred_region
      %87 = vsyncadd [#allocation6], 0
      %s88 = sshll.u32 %s16, 4
      %s89 = int_to_ptr.hbm [resolvable:$true] %s88
      %s90 = sshll.u32 [#allocation7], 4
      %s91 = int_to_ptr.vmem [resolvable:$true] %s90
      %96 = dma.hbm_to_vmem [thread:$0]  %s89, 512, %s91, [#allocation6], 128, 128, 8
    $region69: #{tpu_custom_call.1} parent=1 // pred_fallthru
      _
    // Predicated region
    $region70: #{tpu_custom_call.1} parent=1 // pred_check
      _
    $region71: #{tpu_custom_call.1} parent=1 // pred_check_branch
      %98 = sbr.rel (0) target = $region73
    $region72: #{tpu_custom_call.1} parent=1 // pred_region
      _
    $region73: #{tpu_custom_call.1} parent=1 // pred_fallthru
      _
    // Predicated region
    $region74: #{tpu_custom_call.1} parent=1 // pred_check
      _
    $region75: #{tpu_custom_call.1} parent=1 // pred_check_branch
      %100 = sbr.rel (0) target = $region77
    $region76: #{tpu_custom_call.1} parent=1 // pred_region
      _
    $region77: #{tpu_custom_call.1} parent=1 // pred_fallthru
      _
    // Predicated region
    $region78: #{tpu_custom_call.1} parent=1 // pred_check
      _
    $region79: #{tpu_custom_call.1} parent=1 // pred_check_branch
      %102 = sbr.rel (0) target = $region81
    $region80: #{tpu_custom_call.1} parent=1 // pred_region
      _
    $region81: #{tpu_custom_call.1} parent=1 // pred_fallthru
      _
    // Predicated region
    $region82: #{tpu_custom_call.1} parent=1 // pred_check
      _
    $region83: #{tpu_custom_call.1} parent=1 // pred_check_branch
      %104 = sbr.rel (0) target = $region85
    $region84: #{tpu_custom_call.1} parent=1 // pred_region
      _
    $region85: #{tpu_custom_call.1} parent=1 // pred_fallthru
      _
    // Predicated region
    $region86: #{tpu_custom_call.1} parent=1 // pred_check
      _
    $region87: #{tpu_custom_call.1} parent=1 // pred_check_branch
      %106 = sbr.rel (0) target = $region89
    $region88: #{tpu_custom_call.1} parent=1 // pred_region
      _
    $region89: #{tpu_custom_call.1} parent=1 // pred_fallthru
      _
    // Predicated region
    $region90: #{tpu_custom_call.1} parent=1 // pred_check
      _
    $region91: #{tpu_custom_call.1} parent=1 // pred_check_branch
      %108 = sbr.rel (0) target = $region93
    $region92: #{tpu_custom_call.1} parent=1 // pred_region
      %110 = dma.done [#allocation3], 256
    $region93: #{tpu_custom_call.1} parent=1 // pred_fallthru
      _
    // Predicated region
    $region94: #{tpu_custom_call.1} parent=1 // pred_check
      _
    $region95: #{tpu_custom_call.1} parent=1 // pred_check_branch
      %112 = sbr.rel (0) target = $region97
    $region96: #{tpu_custom_call.1} parent=1 // pred_region
      %114 = dma.done [#allocation6], 512
    $region97: #{tpu_custom_call.1} parent=1 // pred_fallthru
      _
    // Predicated region
    $region98: #{tpu_custom_call.1} parent=1 // pred_check
      _
    $region99: #{tpu_custom_call.1} parent=1 // pred_check_branch
      %116 = sbr.rel (0) target = $region101
    $region100: #{tpu_custom_call.1} parent=1 // pred_region
      %118 = dma.done [#allocation6], 512
    $region101: #{tpu_custom_call.1} parent=1 // pred_fallthru
      _
    %v119 = vld [vmem:[#allocation2] sm:$0xff]
    %v120 = vld [vmem:[#allocation2 + $0x8] sm:$0xff]
    %v121 = vld [vmem:[%s1] sm:$0xff]
    %v122 = vld [vmem:[%s1 + $0x8] sm:$0xff]
    %v123 = vld [vmem:[%s1 + $0x10] sm:$0xff]
    %v124 = vld [vmem:[%s1 + $0x18] sm:$0xff]
    %v125 = vld [vmem:[%s2] sm:$0xff]
    %v126 = vld [vmem:[%s2 + $0x8] sm:$0xff]
    %v127 = vld [vmem:[%s2 + $0x10] sm:$0xff]
    %v128 = vld [vmem:[%s2 + $0x18] sm:$0xff]
    %v129 = vld [vmem:[%s3] sm:$0x1]
    %v131 = vperm.slane %v129, 0
    %vm133 = vcmask 261120
    %v135 = vsel %vm133, %v119, 0
    %v138 = vsel %vm133, %v120, 0
    %140 = vmatpush.msra.mxu0 0.0
    %141 = vmatpush.msra.mxu0 0.0
    %142 = vmatpush.msra.mxu0 0.0
    %143 = vmatpush.msra.mxu0 0.0
    %144 = vmatpush.msra.mxu0 0.0
    %145 = vmatpush.msra.mxu0 0.0
    %146 = vmatpush.msra.mxu0 0.0
    %147 = vmatpush.msra.mxu0 0.0
    %148 = vmatpush.msra.mxu0 0.0
    %149 = vmatpush.msra.mxu0 0.0
    %150 = vmatpush.msra.mxu0 0.0
    %151 = vmatpush.msra.mxu0 0.0
    %152 = vmatpush.msra.mxu0 %v128
    %153 = vmatpush.msra.mxu0 %v127
    %154 = vmatpush.msra.mxu0 %v126
    %155 = vmatpush.msra.mxu0 %v125
    %156 = vmatmul.f32.gmra.mxu0 %v135
    %v157 = vpop.f32.mrf.mxu0
    %v158 = vadd.f32 %v131, %v157
    %159 = vmatmul.f32.gmra.mxu0 %v138
    %v160 = vpop.f32.mrf.mxu0
    %v161 = vadd.f32 %v131, %v160
    %162 = vdwg.mxu0
    %v163 = vld [vmem:[%s4] sm:$0xff]
    %v164 = vld [vmem:[%s4 + $0x8] sm:$0xff]
    %v165 = vld [vmem:[%s4 + $0x10] sm:$0xff]
    %v166 = vld [vmem:[%s4 + $0x18] sm:$0xff]
    %v167 = vld [vmem:[%s5] sm:$0x1]
    %169 = vrot.lane.b32.xlu0 %v158, 96
    %v170 = vpop.permute.xlu0 %169
    %vm171 = vcmask 64512
    %v172 = vsel %vm171, %v158, 0
    %v174 = vsel %vm171, %v170, 0
    %176 = vmatpush.xpose.msra.mxu0 0.0
    %177 = vmatpush.xpose.msra.mxu0 0.0
    %178 = vmatpush.xpose.msra.mxu0 0.0
    %179 = vmatpush.xpose.msra.mxu0 0.0
    %180 = vmatpush.xpose.msra.mxu0 0.0
    %181 = vmatpush.xpose.msra.mxu0 0.0
    %182 = vmatpush.xpose.msra.mxu0 0.0
    %183 = vmatpush.xpose.msra.mxu0 0.0
    %184 = vmatpush.xpose.msra.mxu0 0.0
    %185 = vmatpush.xpose.msra.mxu0 0.0
    %186 = vmatpush.xpose.msra.mxu0 0.0
    %187 = vmatpush.xpose.msra.mxu0 0.0
    %188 = vmatpush.xpose.msra.mxu0 0.0
    %189 = vmatpush.xpose.msra.mxu0 0.0
    %190 = vmatpush.xpose.msra.mxu0 0.0
    %191 = vmatpush.xpose.msra.mxu0 %v174
    %192 = vmatmul.f32.gmra.mxu0 %v172
    %v193 = vpop.f32.mrf.mxu0
    %v194 = vadd.f32 0.0, %v193
    %195 = vdwg.mxu0
    %197 = vrot.lane.b32.xlu0 %v161, 96
    %v198 = vpop.permute.xlu0 %197
    %v199 = vsel %vm171, %v161, 0
    %v201 = vsel %vm171, %v198, 0
    %203 = vmatpush.xpose.msra.mxu0 0.0
    %204 = vmatpush.xpose.msra.mxu0 0.0
    %205 = vmatpush.xpose.msra.mxu0 0.0
    %206 = vmatpush.xpose.msra.mxu0 0.0
    %207 = vmatpush.xpose.msra.mxu0 0.0
    %208 = vmatpush.xpose.msra.mxu0 0.0
    %209 = vmatpush.xpose.msra.mxu0 0.0
    %210 = vmatpush.xpose.msra.mxu0 0.0
    %211 = vmatpush.xpose.msra.mxu0 0.0
    %212 = vmatpush.xpose.msra.mxu0 0.0
    %213 = vmatpush.xpose.msra.mxu0 0.0
    %214 = vmatpush.xpose.msra.mxu0 0.0
    %215 = vmatpush.xpose.msra.mxu0 0.0
    %216 = vmatpush.xpose.msra.mxu0 0.0
    %217 = vmatpush.xpose.msra.mxu0 0.0
    %218 = vmatpush.xpose.msra.mxu0 %v201
    %219 = vmatmul.f32.gmra.mxu0 %v199
    %v220 = vpop.f32.mrf.mxu0
    %v221 = vadd.f32 0.0, %v220
    %222 = vdwg.mxu0
    %v223 = vsel %vm171, %v194, -inf
    %224 = vmax.xlane.f32.xlu0 %v223
    %v225 = vpop.xlane.xlu0 %224
    %v226 = vsel %vm171, %v221, -inf
    %227 = vmax.xlane.f32.xlu0 %v226
    %v228 = vpop.xlane.xlu0 %227
    %v229 = vsub.f32 %v194, %v225
    %v230 = vsub.f32 %v221, %v228
    %v231 = vmul.f32 %v229, 1.442695
    %v232 = vpow.pop %v231
    %v233 = vmul.f32 %v230, 1.442695
    %v234 = vpow.pop %v233
    %v235 = vsel %vm171, %v232, 0.0
    %236 = vadd.xlane.f32.xlu0 %v235
    %v237 = vpop.xlane.xlu0 %236
    %v238 = vsel %vm171, %v234, 0.0
    %239 = vadd.xlane.f32.xlu0 %v238
    %v240 = vpop.xlane.xlu0 %239
    %v241 = vrcp.pop %v237
    %v242 = vrcp.pop %v240
    %v243 = vmul.f32 %v232, %v241
    %v244 = vmul.f32 %v234, %v242
    %245 = vrot.lane.b32.xlu0 %v158, 64
    %v246 = vpop.permute.xlu0 %245
    %v249 = vsel %vm171, %v243, 0
    %251 = vmatpush.msra.mxu0 0.0
    %252 = vmatpush.msra.mxu0 0.0
    %253 = vmatpush.msra.mxu0 0.0
    %254 = vmatpush.msra.mxu0 0.0
    %255 = vmatpush.msra.mxu0 0.0
    %256 = vmatpush.msra.mxu0 0.0
    %257 = vmatpush.msra.mxu0 0.0
    %258 = vmatpush.msra.mxu0 0.0
    %259 = vmatpush.msra.mxu0 0.0
    %260 = vmatpush.msra.mxu0 0.0
    %261 = vmatpush.msra.mxu0 0.0
    %262 = vmatpush.msra.mxu0 0.0
    %263 = vmatpush.msra.mxu0 0.0
    %264 = vmatpush.msra.mxu0 0.0
    %265 = vmatpush.msra.mxu0 0.0
    %266 = vmatpush.msra.mxu0 %v246
    %267 = vmatmul.f32.gmra.mxu0 %v249
    %v268 = vpop.f32.mrf.mxu0
    %v269 = vadd.f32 0.0, %v268
    %270 = vdwg.mxu0
    %271 = vrot.lane.b32.xlu0 %v161, 64
    %v272 = vpop.permute.xlu0 %271
    %v275 = vsel %vm171, %v244, 0
    %277 = vmatpush.msra.mxu0 0.0
    %278 = vmatpush.msra.mxu0 0.0
    %279 = vmatpush.msra.mxu0 0.0
    %280 = vmatpush.msra.mxu0 0.0
    %281 = vmatpush.msra.mxu0 0.0
    %282 = vmatpush.msra.mxu0 0.0
    %283 = vmatpush.msra.mxu0 0.0
    %284 = vmatpush.msra.mxu0 0.0
    %285 = vmatpush.msra.mxu0 0.0
    %286 = vmatpush.msra.mxu0 0.0
    %287 = vmatpush.msra.mxu0 0.0
    %288 = vmatpush.msra.mxu0 0.0
    %289 = vmatpush.msra.mxu0 0.0
    %290 = vmatpush.msra.mxu0 0.0
    %291 = vmatpush.msra.mxu0 0.0
    %292 = vmatpush.msra.mxu0 %v272
    %293 = vmatmul.f32.gmra.mxu0 %v275
    %v294 = vpop.f32.mrf.mxu0
    %v295 = vadd.f32 0.0, %v294
    %296 = vdwg.mxu0
    %297 = vrot.lane.b32.xlu0 %v158, 120
    %v298 = vpop.permute.xlu0 %297
    %299 = vrot.lane.b32.xlu0 %v158, 88
    %v300 = vpop.permute.xlu0 %299
    %v301 = vsel %vm171, %v298, 0
    %v303 = vsel %vm171, %v300, 0
    %305 = vmatpush.xpose.msra.mxu0 0.0
    %306 = vmatpush.xpose.msra.mxu0 0.0
    %307 = vmatpush.xpose.msra.mxu0 0.0
    %308 = vmatpush.xpose.msra.mxu0 0.0
    %309 = vmatpush.xpose.msra.mxu0 0.0
    %310 = vmatpush.xpose.msra.mxu0 0.0
    %311 = vmatpush.xpose.msra.mxu0 0.0
    %312 = vmatpush.xpose.msra.mxu0 0.0
    %313 = vmatpush.xpose.msra.mxu0 0.0
    %314 = vmatpush.xpose.msra.mxu0 0.0
    %315 = vmatpush.xpose.msra.mxu0 0.0
    %316 = vmatpush.xpose.msra.mxu0 0.0
    %317 = vmatpush.xpose.msra.mxu0 0.0
    %318 = vmatpush.xpose.msra.mxu0 0.0
    %319 = vmatpush.xpose.msra.mxu0 0.0
    %320 = vmatpush.xpose.msra.mxu0 %v303
    %321 = vmatmul.f32.gmra.mxu0 %v301
    %v322 = vpop.f32.mrf.mxu0
    %v323 = vadd.f32 0.0, %v322
    %324 = vdwg.mxu0
    %325 = vrot.lane.b32.xlu0 %v161, 120
    %v326 = vpop.permute.xlu0 %325
    %327 = vrot.lane.b32.xlu0 %v161, 88
    %v328 = vpop.permute.xlu0 %327
    %v329 = vsel %vm171, %v326, 0
    %v331 = vsel %vm171, %v328, 0
    %333 = vmatpush.xpose.msra.mxu0 0.0
    %334 = vmatpush.xpose.msra.mxu0 0.0
    %335 = vmatpush.xpose.msra.mxu0 0.0
    %336 = vmatpush.xpose.msra.mxu0 0.0
    %337 = vmatpush.xpose.msra.mxu0 0.0
    %338 = vmatpush.xpose.msra.mxu0 0.0
    %339 = vmatpush.xpose.msra.mxu0 0.0
    %340 = vmatpush.xpose.msra.mxu0 0.0
    %341 = vmatpush.xpose.msra.mxu0 0.0
    %342 = vmatpush.xpose.msra.mxu0 0.0
    %343 = vmatpush.xpose.msra.mxu0 0.0
    %344 = vmatpush.xpose.msra.mxu0 0.0
    %345 = vmatpush.xpose.msra.mxu0 0.0
    %346 = vmatpush.xpose.msra.mxu0 0.0
    %347 = vmatpush.xpose.msra.mxu0 0.0
    %348 = vmatpush.xpose.msra.mxu0 %v331
    %349 = vmatmul.f32.gmra.mxu0 %v329
    %v350 = vpop.f32.mrf.mxu0
    %v351 = vadd.f32 0.0, %v350
    %352 = vdwg.mxu0
    %v353 = vsel %vm171, %v323, -inf
    %354 = vmax.xlane.f32.xlu0 %v353
    %v355 = vpop.xlane.xlu0 %354
    %v356 = vsel %vm171, %v351, -inf
    %357 = vmax.xlane.f32.xlu0 %v356
    %v358 = vpop.xlane.xlu0 %357
    %v359 = vsub.f32 %v323, %v355
    %v360 = vsub.f32 %v351, %v358
    %v361 = vmul.f32 %v359, 1.442695
    %v362 = vpow.pop %v361
    %v363 = vmul.f32 %v360, 1.442695
    %v364 = vpow.pop %v363
    %v365 = vsel %vm171, %v362, 0.0
    %366 = vadd.xlane.f32.xlu0 %v365
    %v367 = vpop.xlane.xlu0 %366
    %v368 = vsel %vm171, %v364, 0.0
    %369 = vadd.xlane.f32.xlu0 %v368
    %v370 = vpop.xlane.xlu0 %369
    %v371 = vrcp.pop %v367
    %v372 = vrcp.pop %v370
    %v373 = vmul.f32 %v362, %v371
    %v374 = vmul.f32 %v364, %v372
    %375 = vrot.lane.b32.xlu0 %v158, 56
    %v376 = vpop.permute.xlu0 %375
    %v379 = vsel %vm171, %v373, 0
    %381 = vmatpush.msra.mxu0 0.0
    %382 = vmatpush.msra.mxu0 0.0
    %383 = vmatpush.msra.mxu0 0.0
    %384 = vmatpush.msra.mxu0 0.0
    %385 = vmatpush.msra.mxu0 0.0
    %386 = vmatpush.msra.mxu0 0.0
    %387 = vmatpush.msra.mxu0 0.0
    %388 = vmatpush.msra.mxu0 0.0
    %389 = vmatpush.msra.mxu0 0.0
    %390 = vmatpush.msra.mxu0 0.0
    %391 = vmatpush.msra.mxu0 0.0
    %392 = vmatpush.msra.mxu0 0.0
    %393 = vmatpush.msra.mxu0 0.0
    %394 = vmatpush.msra.mxu0 0.0
    %395 = vmatpush.msra.mxu0 0.0
    %396 = vmatpush.msra.mxu0 %v376
    %397 = vmatmul.f32.gmra.mxu0 %v379
    %v398 = vpop.f32.mrf.mxu0
    %v399 = vadd.f32 0.0, %v398
    %400 = vdwg.mxu0
    %401 = vrot.lane.b32.xlu0 %v161, 56
    %v402 = vpop.permute.xlu0 %401
    %v405 = vsel %vm171, %v374, 0
    %407 = vmatpush.msra.mxu0 0.0
    %408 = vmatpush.msra.mxu0 0.0
    %409 = vmatpush.msra.mxu0 0.0
    %410 = vmatpush.msra.mxu0 0.0
    %411 = vmatpush.msra.mxu0 0.0
    %412 = vmatpush.msra.mxu0 0.0
    %413 = vmatpush.msra.mxu0 0.0
    %414 = vmatpush.msra.mxu0 0.0
    %415 = vmatpush.msra.mxu0 0.0
    %416 = vmatpush.msra.mxu0 0.0
    %417 = vmatpush.msra.mxu0 0.0
    %418 = vmatpush.msra.mxu0 0.0
    %419 = vmatpush.msra.mxu0 0.0
    %420 = vmatpush.msra.mxu0 0.0
    %421 = vmatpush.msra.mxu0 0.0
    %422 = vmatpush.msra.mxu0 %v402
    %423 = vmatmul.f32.gmra.mxu0 %v405
    %v424 = vpop.f32.mrf.mxu0
    %v425 = vadd.f32 0.0, %v424
    %426 = vdwg.mxu0
    %427 = vrot.lane.b32.xlu0 %v158, 112
    %v428 = vpop.permute.xlu0 %427
    %429 = vrot.lane.b32.xlu0 %v158, 80
    %v430 = vpop.permute.xlu0 %429
    %v431 = vsel %vm171, %v428, 0
    %v433 = vsel %vm171, %v430, 0
    %435 = vmatpush.xpose.msra.mxu0 0.0
    %436 = vmatpush.xpose.msra.mxu0 0.0
    %437 = vmatpush.xpose.msra.mxu0 0.0
    %438 = vmatpush.xpose.msra.mxu0 0.0
    %439 = vmatpush.xpose.msra.mxu0 0.0
    %440 = vmatpush.xpose.msra.mxu0 0.0
    %441 = vmatpush.xpose.msra.mxu0 0.0
    %442 = vmatpush.xpose.msra.mxu0 0.0
    %443 = vmatpush.xpose.msra.mxu0 0.0
    %444 = vmatpush.xpose.msra.mxu0 0.0
    %445 = vmatpush.xpose.msra.mxu0 0.0
    %446 = vmatpush.xpose.msra.mxu0 0.0
    %447 = vmatpush.xpose.msra.mxu0 0.0
    %448 = vmatpush.xpose.msra.mxu0 0.0
    %449 = vmatpush.xpose.msra.mxu0 0.0
    %450 = vmatpush.xpose.msra.mxu0 %v433
    %451 = vmatmul.f32.gmra.mxu0 %v431
    %v452 = vpop.f32.mrf.mxu0
    %v453 = vadd.f32 0.0, %v452
    %454 = vdwg.mxu0
    %455 = vrot.lane.b32.xlu0 %v161, 112
    %v456 = vpop.permute.xlu0 %455
    %457 = vrot.lane.b32.xlu0 %v161, 80
    %v458 = vpop.permute.xlu0 %457
    %v459 = vsel %vm171, %v456, 0
    %v461 = vsel %vm171, %v458, 0
    %463 = vmatpush.xpose.msra.mxu0 0.0
    %464 = vmatpush.xpose.msra.mxu0 0.0
    %465 = vmatpush.xpose.msra.mxu0 0.0
    %466 = vmatpush.xpose.msra.mxu0 0.0
    %467 = vmatpush.xpose.msra.mxu0 0.0
    %468 = vmatpush.xpose.msra.mxu0 0.0
    %469 = vmatpush.xpose.msra.mxu0 0.0
    %470 = vmatpush.xpose.msra.mxu0 0.0
    %471 = vmatpush.xpose.msra.mxu0 0.0
    %472 = vmatpush.xpose.msra.mxu0 0.0
    %473 = vmatpush.xpose.msra.mxu0 0.0
    %474 = vmatpush.xpose.msra.mxu0 0.0
    %475 = vmatpush.xpose.msra.mxu0 0.0
    %476 = vmatpush.xpose.msra.mxu0 0.0
    %477 = vmatpush.xpose.msra.mxu0 0.0
    %478 = vmatpush.xpose.msra.mxu0 %v461
    %479 = vmatmul.f32.gmra.mxu0 %v459
    %v480 = vpop.f32.mrf.mxu0
    %v481 = vadd.f32 0.0, %v480
    %482 = vdwg.mxu0
    %v483 = vsel %vm171, %v453, -inf
    %484 = vmax.xlane.f32.xlu0 %v483
    %v485 = vpop.xlane.xlu0 %484
    %v486 = vsel %vm171, %v481, -inf
    %487 = vmax.xlane.f32.xlu0 %v486
    %v488 = vpop.xlane.xlu0 %487
    %v489 = vsub.f32 %v453, %v485
    %v490 = vsub.f32 %v481, %v488
    %v491 = vmul.f32 %v489, 1.442695
    %v492 = vpow.pop %v491
    %v493 = vmul.f32 %v490, 1.442695
    %v494 = vpow.pop %v493
    %v495 = vsel %vm171, %v492, 0.0
    %496 = vadd.xlane.f32.xlu0 %v495
    %v497 = vpop.xlane.xlu0 %496
    %v498 = vsel %vm171, %v494, 0.0
    %499 = vadd.xlane.f32.xlu0 %v498
    %v500 = vpop.xlane.xlu0 %499
    %v501 = vrcp.pop %v497
    %v502 = vrcp.pop %v500
    %v503 = vmul.f32 %v492, %v501
    %v504 = vmul.f32 %v494, %v502
    %505 = vrot.lane.b32.xlu0 %v158, 48
    %v506 = vpop.permute.xlu0 %505
    %v509 = vsel %vm171, %v503, 0
    %511 = vmatpush.msra.mxu0 0.0
    %512 = vmatpush.msra.mxu0 0.0
    %513 = vmatpush.msra.mxu0 0.0
    %514 = vmatpush.msra.mxu0 0.0
    %515 = vmatpush.msra.mxu0 0.0
    %516 = vmatpush.msra.mxu0 0.0
    %517 = vmatpush.msra.mxu0 0.0
    %518 = vmatpush.msra.mxu0 0.0
    %519 = vmatpush.msra.mxu0 0.0
    %520 = vmatpush.msra.mxu0 0.0
    %521 = vmatpush.msra.mxu0 0.0
    %522 = vmatpush.msra.mxu0 0.0
    %523 = vmatpush.msra.mxu0 0.0
    %524 = vmatpush.msra.mxu0 0.0
    %525 = vmatpush.msra.mxu0 0.0
    %526 = vmatpush.msra.mxu0 %v506
    %527 = vmatmul.f32.gmra.mxu0 %v509
    %v528 = vpop.f32.mrf.mxu0
    %v529 = vadd.f32 0.0, %v528
    %530 = vdwg.mxu0
    %531 = vrot.lane.b32.xlu0 %v161, 48
    %v532 = vpop.permute.xlu0 %531
    %v535 = vsel %vm171, %v504, 0
    %537 = vmatpush.msra.mxu0 0.0
    %538 = vmatpush.msra.mxu0 0.0
    %539 = vmatpush.msra.mxu0 0.0
    %540 = vmatpush.msra.mxu0 0.0
    %541 = vmatpush.msra.mxu0 0.0
    %542 = vmatpush.msra.mxu0 0.0
    %543 = vmatpush.msra.mxu0 0.0
    %544 = vmatpush.msra.mxu0 0.0
    %545 = vmatpush.msra.mxu0 0.0
    %546 = vmatpush.msra.mxu0 0.0
    %547 = vmatpush.msra.mxu0 0.0
    %548 = vmatpush.msra.mxu0 0.0
    %549 = vmatpush.msra.mxu0 0.0
    %550 = vmatpush.msra.mxu0 0.0
    %551 = vmatpush.msra.mxu0 0.0
    %552 = vmatpush.msra.mxu0 %v532
    %553 = vmatmul.f32.gmra.mxu0 %v535
    %v554 = vpop.f32.mrf.mxu0
    %v555 = vadd.f32 0.0, %v554
    %556 = vdwg.mxu0
    %557 = vrot.lane.b32.xlu0 %v158, 104
    %v558 = vpop.permute.xlu0 %557
    %559 = vrot.lane.b32.xlu0 %v158, 72
    %v560 = vpop.permute.xlu0 %559
    %v561 = vsel %vm171, %v558, 0
    %v563 = vsel %vm171, %v560, 0
    %565 = vmatpush.xpose.msra.mxu0 0.0
    %566 = vmatpush.xpose.msra.mxu0 0.0
    %567 = vmatpush.xpose.msra.mxu0 0.0
    %568 = vmatpush.xpose.msra.mxu0 0.0
    %569 = vmatpush.xpose.msra.mxu0 0.0
    %570 = vmatpush.xpose.msra.mxu0 0.0
    %571 = vmatpush.xpose.msra.mxu0 0.0
    %572 = vmatpush.xpose.msra.mxu0 0.0
    %573 = vmatpush.xpose.msra.mxu0 0.0
    %574 = vmatpush.xpose.msra.mxu0 0.0
    %575 = vmatpush.xpose.msra.mxu0 0.0
    %576 = vmatpush.xpose.msra.mxu0 0.0
    %577 = vmatpush.xpose.msra.mxu0 0.0
    %578 = vmatpush.xpose.msra.mxu0 0.0
    %579 = vmatpush.xpose.msra.mxu0 0.0
    %580 = vmatpush.xpose.msra.mxu0 %v563
    %581 = vmatmul.f32.gmra.mxu0 %v561
    %v582 = vpop.f32.mrf.mxu0
    %v583 = vadd.f32 0.0, %v582
    %584 = vdwg.mxu0
    %585 = vrot.lane.b32.xlu0 %v161, 104
    %v586 = vpop.permute.xlu0 %585
    %587 = vrot.lane.b32.xlu0 %v161, 72
    %v588 = vpop.permute.xlu0 %587
    %v589 = vsel %vm171, %v586, 0
    %v591 = vsel %vm171, %v588, 0
    %593 = vmatpush.xpose.msra.mxu0 0.0
    %594 = vmatpush.xpose.msra.mxu0 0.0
    %595 = vmatpush.xpose.msra.mxu0 0.0
    %596 = vmatpush.xpose.msra.mxu0 0.0
    %597 = vmatpush.xpose.msra.mxu0 0.0
    %598 = vmatpush.xpose.msra.mxu0 0.0
    %599 = vmatpush.xpose.msra.mxu0 0.0
    %600 = vmatpush.xpose.msra.mxu0 0.0
    %601 = vmatpush.xpose.msra.mxu0 0.0
    %602 = vmatpush.xpose.msra.mxu0 0.0
    %603 = vmatpush.xpose.msra.mxu0 0.0
    %604 = vmatpush.xpose.msra.mxu0 0.0
    %605 = vmatpush.xpose.msra.mxu0 0.0
    %606 = vmatpush.xpose.msra.mxu0 0.0
    %607 = vmatpush.xpose.msra.mxu0 0.0
    %608 = vmatpush.xpose.msra.mxu0 %v591
    %609 = vmatmul.f32.gmra.mxu0 %v589
    %v610 = vpop.f32.mrf.mxu0
    %v611 = vadd.f32 0.0, %v610
    %612 = vdwg.mxu0
    %v613 = vsel %vm171, %v583, -inf
    %614 = vmax.xlane.f32.xlu0 %v613
    %v615 = vpop.xlane.xlu0 %614
    %v616 = vsel %vm171, %v611, -inf
    %617 = vmax.xlane.f32.xlu0 %v616
    %v618 = vpop.xlane.xlu0 %617
    %v619 = vsub.f32 %v583, %v615
    %v620 = vsub.f32 %v611, %v618
    %v621 = vmul.f32 %v619, 1.442695
    %v622 = vpow.pop %v621
    %v623 = vmul.f32 %v620, 1.442695
    %v624 = vpow.pop %v623
    %v625 = vsel %vm171, %v622, 0.0
    %626 = vadd.xlane.f32.xlu0 %v625
    %v627 = vpop.xlane.xlu0 %626
    %v628 = vsel %vm171, %v624, 0.0
    %629 = vadd.xlane.f32.xlu0 %v628
    %v630 = vpop.xlane.xlu0 %629
    %v631 = vrcp.pop %v627
    %v632 = vrcp.pop %v630
    %v633 = vmul.f32 %v622, %v631
    %v634 = vmul.f32 %v624, %v632
    %635 = vrot.lane.b32.xlu0 %v158, 40
    %v636 = vpop.permute.xlu0 %635
    %v639 = vsel %vm171, %v633, 0
    %641 = vmatpush.msra.mxu0 0.0
    %642 = vmatpush.msra.mxu0 0.0
    %643 = vmatpush.msra.mxu0 0.0
    %644 = vmatpush.msra.mxu0 0.0
    %645 = vmatpush.msra.mxu0 0.0
    %646 = vmatpush.msra.mxu0 0.0
    %647 = vmatpush.msra.mxu0 0.0
    %648 = vmatpush.msra.mxu0 0.0
    %649 = vmatpush.msra.mxu0 0.0
    %650 = vmatpush.msra.mxu0 0.0
    %651 = vmatpush.msra.mxu0 0.0
    %652 = vmatpush.msra.mxu0 0.0
    %653 = vmatpush.msra.mxu0 0.0
    %654 = vmatpush.msra.mxu0 0.0
    %655 = vmatpush.msra.mxu0 0.0
    %656 = vmatpush.msra.mxu0 %v636
    %657 = vmatmul.f32.gmra.mxu0 %v639
    %v658 = vpop.f32.mrf.mxu0
    %v659 = vadd.f32 0.0, %v658
    %660 = vdwg.mxu0
    %661 = vrot.lane.b32.xlu0 %v161, 40
    %v662 = vpop.permute.xlu0 %661
    %v665 = vsel %vm171, %v634, 0
    %667 = vmatpush.msra.mxu0 0.0
    %668 = vmatpush.msra.mxu0 0.0
    %669 = vmatpush.msra.mxu0 0.0
    %670 = vmatpush.msra.mxu0 0.0
    %671 = vmatpush.msra.mxu0 0.0
    %672 = vmatpush.msra.mxu0 0.0
    %673 = vmatpush.msra.mxu0 0.0
    %674 = vmatpush.msra.mxu0 0.0
    %675 = vmatpush.msra.mxu0 0.0
    %676 = vmatpush.msra.mxu0 0.0
    %677 = vmatpush.msra.mxu0 0.0
    %678 = vmatpush.msra.mxu0 0.0
    %679 = vmatpush.msra.mxu0 0.0
    %680 = vmatpush.msra.mxu0 0.0
    %681 = vmatpush.msra.mxu0 0.0
    %682 = vmatpush.msra.mxu0 %v662
    %683 = vmatmul.f32.gmra.mxu0 %v665
    %v684 = vpop.f32.mrf.mxu0
    %v685 = vadd.f32 0.0, %v684
    %686 = vdwg.mxu0
    %689 = vrot.lane.b32.xlu0 %v399, 8
    %v690 = vpop.permute.xlu0 %689
    %691 = vrot.lane.b32.xlu0 %v425, 8
    %v692 = vpop.permute.xlu0 %691
    %697 = vrot.lane.b32.xlu0 %v529, 16
    %v698 = vpop.permute.xlu0 %697
    %699 = vrot.lane.b32.xlu0 %v555, 16
    %v700 = vpop.permute.xlu0 %699
    %705 = vrot.lane.b32.xlu0 %v659, 24
    %v706 = vpop.permute.xlu0 %705
    %707 = vrot.lane.b32.xlu0 %v685, 24
    %v708 = vpop.permute.xlu0 %707
    %v711 = vsel %vm171, %v269, %v690
    %v712 = vsel %vm171, %v295, %v692
    %vm713 = vcmask 130048
    %v714 = vsel %vm713, %v711, %v698
    %v715 = vsel %vm713, %v712, %v700
    %vm716 = vcmask 195584
    %v717 = vsel %vm716, %v714, %v706
    %v718 = vsel %vm716, %v715, %v708
    %v720 = vperm.slane %v167, 0
    %v723 = vsel %vm133, %v717, 0
    %v726 = vsel %vm133, %v718, 0
    %728 = vmatpush.msra.mxu0 0.0
    %729 = vmatpush.msra.mxu0 0.0
    %730 = vmatpush.msra.mxu0 0.0
    %731 = vmatpush.msra.mxu0 0.0
    %732 = vmatpush.msra.mxu0 0.0
    %733 = vmatpush.msra.mxu0 0.0
    %734 = vmatpush.msra.mxu0 0.0
    %735 = vmatpush.msra.mxu0 0.0
    %736 = vmatpush.msra.mxu0 0.0
    %737 = vmatpush.msra.mxu0 0.0
    %738 = vmatpush.msra.mxu0 0.0
    %739 = vmatpush.msra.mxu0 0.0
    %740 = vmatpush.msra.mxu0 %v166
    %741 = vmatpush.msra.mxu0 %v165
    %742 = vmatpush.msra.mxu0 %v164
    %743 = vmatpush.msra.mxu0 %v163
    %744 = vmatmul.f32.gmra.mxu0 %v723
    %v745 = vpop.f32.mrf.mxu0
    %v746 = vadd.f32 %v720, %v745
    %747 = vmatmul.f32.gmra.mxu0 %v726
    %v748 = vpop.f32.mrf.mxu0
    %v749 = vadd.f32 %v720, %v748
    %750 = vdwg.mxu0
    %v751 = vadd.f32 %v119, %v746
    %v752 = vadd.f32 %v120, %v749
    %v753 = vld [vmem:[%s6] sm:$0x1]
    %v754 = vld [vmem:[%s7] sm:$0x1]
    %v755 = vsel %vm133, %v751, 0.0
    %756 = vadd.xlane.f32.xlu0 %v755
    %v757 = vpop.xlane.xlu0 %756
    %v758 = vsel %vm133, %v752, 0.0
    %759 = vadd.xlane.f32.xlu0 %v758
    %v760 = vpop.xlane.xlu0 %759
    %v761 = vrcp.pop 32.0
    %v762 = vmul.f32 32.0, %v761
    %v763 = vsub.f32 1.0, %v762
    %v764 = vmul.f32 %v761, %v763
    %v765 = vadd.f32 %v761, %v764
    %vm766 = vweird.f32 %v761
    %v767 = vsel %vm766, %v761, %v765
    %v768 = vmul.f32 %v757, %v767
    %v769 = vmul.f32 %v760, %v767
    %v770 = vsub.f32 %v751, %v768
    %v771 = vsub.f32 %v752, %v769
    %v772 = vmul.f32 %v770, %v770
    %v773 = vmul.f32 %v771, %v771
    %v774 = vsel %vm133, %v772, 0.0
    %775 = vadd.xlane.f32.xlu0 %v774
    %v776 = vpop.xlane.xlu0 %775
    %v777 = vsel %vm133, %v773, 0.0
    %778 = vadd.xlane.f32.xlu0 %v777
    %v779 = vpop.xlane.xlu0 %778
    %v780 = vmul.f32 %v776, %v767
    %v781 = vmul.f32 %v779, %v767
    %v782 = vadd.f32 %v780, 1e-05
    %v783 = vadd.f32 %v781, 1e-05
    %v784 = vrsqrt.pop %v782
    %v785 = vmul.f32 %v784, %v782
    %v786 = vmul.f32 %v785, %v784
    %v787 = vmul.f32 0.5, %v786
    %v788 = vsub.f32 1.5, %v787
    %v789 = vmul.f32 %v784, %v788
    %vm790 = vweird.f32 %v782
    %vm791 = vweird.f32 %v784
    %vm792 = vmor %vm790, %vm791
    %v793 = vsel %vm792, %v784, %v789
    %v794 = vrsqrt.pop %v783
    %v795 = vmul.f32 %v794, %v783
    %v796 = vmul.f32 %v795, %v794
    %v797 = vmul.f32 0.5, %v796
    %v798 = vsub.f32 1.5, %v797
    %v799 = vmul.f32 %v794, %v798
    %vm800 = vweird.f32 %v783
    %vm801 = vweird.f32 %v794
    %vm802 = vmor %vm800, %vm801
    %v803 = vsel %vm802, %v794, %v799
    %v804 = vmul.f32 %v770, %v793
    %v805 = vmul.f32 %v771, %v803
    %v807 = vperm.slane %v753, 0
    %v809 = vmul.f32 %v804, %v807
    %v810 = vmul.f32 %v805, %v807
    %v812 = vperm.slane %v754, 0
    %v814 = vadd.f32 %v809, %v812
    %v815 = vadd.f32 %v810, %v812
    %v816 = vld [vmem:[%s8] sm:$0xff]
    %v817 = vld [vmem:[%s8 + $0x8] sm:$0xff]
    %v818 = vld [vmem:[%s8 + $0x10] sm:$0xff]
    %v819 = vld [vmem:[%s8 + $0x18] sm:$0xff]
    %v820 = vld [vmem:[%s9] sm:$0x1]
    %v822 = vperm.slane %v820, 0
    %v825 = vsel %vm133, %v814, 0
    %v828 = vsel %vm133, %v815, 0
    %830 = vmatpush.msra.mxu0 0.0
    %831 = vmatpush.msra.mxu0 0.0
    %832 = vmatpush.msra.mxu0 0.0
    %833 = vmatpush.msra.mxu0 0.0
    %834 = vmatpush.msra.mxu0 0.0
    %835 = vmatpush.msra.mxu0 0.0
    %836 = vmatpush.msra.mxu0 0.0
    %837 = vmatpush.msra.mxu0 0.0
    %838 = vmatpush.msra.mxu0 0.0
    %839 = vmatpush.msra.mxu0 0.0
    %840 = vmatpush.msra.mxu0 0.0
    %841 = vmatpush.msra.mxu0 0.0
    %842 = vmatpush.msra.mxu0 %v819
    %843 = vmatpush.msra.mxu0 %v818
    %844 = vmatpush.msra.mxu0 %v817
    %845 = vmatpush.msra.mxu0 %v816
    %846 = vmatmul.f32.gmra.mxu0 %v825
    %v847 = vpop.f32.mrf.mxu0
    %v848 = vadd.f32 %v822, %v847
    %849 = vmatmul.f32.gmra.mxu0 %v828
    %v850 = vpop.f32.mrf.mxu0
    %v851 = vadd.f32 %v822, %v850
    %852 = vdwg.mxu0
    %v853 = vld [vmem:[%s10] sm:$0xff]
    %v854 = vld [vmem:[%s10 + $0x8] sm:$0xff]
    %v855 = vld [vmem:[%s10 + $0x10] sm:$0xff]
    %v856 = vld [vmem:[%s10 + $0x18] sm:$0xff]
    %v857 = vld [vmem:[%s11] sm:$0x1]
    %v859 = vperm.slane %v857, 0
    %v862 = vsel %vm133, %v121, 0
    %v865 = vsel %vm133, %v122, 0
    %v868 = vsel %vm133, %v123, 0
    %v871 = vsel %vm133, %v124, 0
    %873 = vmatpush.msra.mxu0 0.0
    %874 = vmatpush.msra.mxu0 0.0
    %875 = vmatpush.msra.mxu0 0.0
    %876 = vmatpush.msra.mxu0 0.0
    %877 = vmatpush.msra.mxu0 0.0
    %878 = vmatpush.msra.mxu0 0.0
    %879 = vmatpush.msra.mxu0 0.0
    %880 = vmatpush.msra.mxu0 0.0
    %881 = vmatpush.msra.mxu0 0.0
    %882 = vmatpush.msra.mxu0 0.0
    %883 = vmatpush.msra.mxu0 0.0
    %884 = vmatpush.msra.mxu0 0.0
    %885 = vmatpush.msra.mxu0 %v856
    %886 = vmatpush.msra.mxu0 %v855
    %887 = vmatpush.msra.mxu0 %v854
    %888 = vmatpush.msra.mxu0 %v853
    %889 = vmatmul.f32.gmra.mxu0 %v862
    %v890 = vpop.f32.mrf.mxu0
    %v891 = vadd.f32 %v859, %v890
    %892 = vmatmul.f32.gmra.mxu0 %v865
    %v893 = vpop.f32.mrf.mxu0
    %v894 = vadd.f32 %v859, %v893
    %895 = vmatmul.f32.gmra.mxu0 %v868
    %v896 = vpop.f32.mrf.mxu0
    %v897 = vadd.f32 %v859, %v896
    %898 = vmatmul.f32.gmra.mxu0 %v871
    %v899 = vpop.f32.mrf.mxu0
    %v900 = vadd.f32 %v859, %v899
    %901 = vdwg.mxu0
    %v902 = vld [vmem:[#allocation5] sm:$0xff]
    %v903 = vld [vmem:[#allocation5 + $0x8] sm:$0xff]
    %v904 = vld [vmem:[#allocation5 + $0x10] sm:$0xff]
    %v905 = vld [vmem:[#allocation5 + $0x18] sm:$0xff]
    %v906 = vld [vmem:[%s13] sm:$0x1]
    %v908 = vsel %vm171, %v848, 0
    %v911 = vsel %vm171, %v891, 0
    %v914 = vsel %vm171, %v894, 0
    %916 = vmatpush.xpose.msra.mxu0 0.0
    %917 = vmatpush.xpose.msra.mxu0 0.0
    %918 = vmatpush.xpose.msra.mxu0 0.0
    %919 = vmatpush.xpose.msra.mxu0 0.0
    %920 = vmatpush.xpose.msra.mxu0 0.0
    %921 = vmatpush.xpose.msra.mxu0 0.0
    %922 = vmatpush.xpose.msra.mxu0 0.0
    %923 = vmatpush.xpose.msra.mxu0 0.0
    %924 = vmatpush.xpose.msra.mxu0 0.0
    %925 = vmatpush.xpose.msra.mxu0 0.0
    %926 = vmatpush.xpose.msra.mxu0 0.0
    %927 = vmatpush.xpose.msra.mxu0 0.0
    %928 = vmatpush.xpose.msra.mxu0 0.0
    %929 = vmatpush.xpose.msra.mxu0 0.0
    %930 = vmatpush.xpose.msra.mxu0 %v914
    %931 = vmatpush.xpose.msra.mxu0 %v911
    %932 = vmatmul.f32.gmra.mxu0 %v908
    %v933 = vpop.f32.mrf.mxu0
    %v934 = vadd.f32 0.0, %v933
    %935 = vdwg.mxu0
    %v937 = vsel %vm171, %v851, 0
    %v940 = vsel %vm171, %v897, 0
    %v943 = vsel %vm171, %v900, 0
    %945 = vmatpush.xpose.msra.mxu0 0.0
    %946 = vmatpush.xpose.msra.mxu0 0.0
    %947 = vmatpush.xpose.msra.mxu0 0.0
    %948 = vmatpush.xpose.msra.mxu0 0.0
    %949 = vmatpush.xpose.msra.mxu0 0.0
    %950 = vmatpush.xpose.msra.mxu0 0.0
    %951 = vmatpush.xpose.msra.mxu0 0.0
    %952 = vmatpush.xpose.msra.mxu0 0.0
    %953 = vmatpush.xpose.msra.mxu0 0.0
    %954 = vmatpush.xpose.msra.mxu0 0.0
    %955 = vmatpush.xpose.msra.mxu0 0.0
    %956 = vmatpush.xpose.msra.mxu0 0.0
    %957 = vmatpush.xpose.msra.mxu0 0.0
    %958 = vmatpush.xpose.msra.mxu0 0.0
    %959 = vmatpush.xpose.msra.mxu0 %v943
    %960 = vmatpush.xpose.msra.mxu0 %v940
    %961 = vmatmul.f32.gmra.mxu0 %v937
    %v962 = vpop.f32.mrf.mxu0
    %v963 = vadd.f32 0.0, %v962
    %964 = vdwg.mxu0
    %v965 = vsel %vm713, %v934, -inf
    %966 = vmax.xlane.f32.xlu0 %v965
    %v967 = vpop.xlane.xlu0 %966
    %v968 = vsel %vm713, %v963, -inf
    %969 = vmax.xlane.f32.xlu0 %v968
    %v970 = vpop.xlane.xlu0 %969
    %v971 = vsub.f32 %v934, %v967
    %v972 = vsub.f32 %v963, %v970
    %v973 = vmul.f32 %v971, 1.442695
    %v974 = vpow.pop %v973
    %v975 = vmul.f32 %v972, 1.442695
    %v976 = vpow.pop %v975
    %v977 = vsel %vm713, %v974, 0.0
    %978 = vadd.xlane.f32.xlu0 %v977
    %v979 = vpop.xlane.xlu0 %978
    %v980 = vsel %vm713, %v976, 0.0
    %981 = vadd.xlane.f32.xlu0 %v980
    %v982 = vpop.xlane.xlu0 %981
    %v983 = vrcp.pop %v979
    %v984 = vrcp.pop %v982
    %v985 = vmul.f32 %v974, %v983
    %v986 = vmul.f32 %v976, %v984
    %987 = vrot.lane.b32.xlu0 %v891, 96
    %v988 = vpop.permute.xlu0 %987
    %989 = vrot.lane.b32.xlu0 %v894, 96
    %v990 = vpop.permute.xlu0 %989
    %v994 = vsel %vm713, %v985, 0
    %996 = vmatpush.msra.mxu0 0.0
    %997 = vmatpush.msra.mxu0 0.0
    %998 = vmatpush.msra.mxu0 0.0
    %999 = vmatpush.msra.mxu0 0.0
    %1000 = vmatpush.msra.mxu0 0.0
    %1001 = vmatpush.msra.mxu0 0.0
    %1002 = vmatpush.msra.mxu0 0.0
    %1003 = vmatpush.msra.mxu0 0.0
    %1004 = vmatpush.msra.mxu0 0.0
    %1005 = vmatpush.msra.mxu0 0.0
    %1006 = vmatpush.msra.mxu0 0.0
    %1007 = vmatpush.msra.mxu0 0.0
    %1008 = vmatpush.msra.mxu0 0.0
    %1009 = vmatpush.msra.mxu0 0.0
    %1010 = vmatpush.msra.mxu0 %v990
    %1011 = vmatpush.msra.mxu0 %v988
    %1012 = vmatmul.f32.gmra.mxu0 %v994
    %v1013 = vpop.f32.mrf.mxu0
    %v1014 = vadd.f32 0.0, %v1013
    %1015 = vdwg.mxu0
    %1016 = vrot.lane.b32.xlu0 %v897, 96
    %v1017 = vpop.permute.xlu0 %1016
    %1018 = vrot.lane.b32.xlu0 %v900, 96
    %v1019 = vpop.permute.xlu0 %1018
    %v1023 = vsel %vm713, %v986, 0
    %1025 = vmatpush.msra.mxu0 0.0
    %1026 = vmatpush.msra.mxu0 0.0
    %1027 = vmatpush.msra.mxu0 0.0
    %1028 = vmatpush.msra.mxu0 0.0
    %1029 = vmatpush.msra.mxu0 0.0
    %1030 = vmatpush.msra.mxu0 0.0
    %1031 = vmatpush.msra.mxu0 0.0
    %1032 = vmatpush.msra.mxu0 0.0
    %1033 = vmatpush.msra.mxu0 0.0
    %1034 = vmatpush.msra.mxu0 0.0
    %1035 = vmatpush.msra.mxu0 0.0
    %1036 = vmatpush.msra.mxu0 0.0
    %1037 = vmatpush.msra.mxu0 0.0
    %1038 = vmatpush.msra.mxu0 0.0
    %1039 = vmatpush.msra.mxu0 %v1019
    %1040 = vmatpush.msra.mxu0 %v1017
    %1041 = vmatmul.f32.gmra.mxu0 %v1023
    %v1042 = vpop.f32.mrf.mxu0
    %v1043 = vadd.f32 0.0, %v1042
    %1044 = vdwg.mxu0
    %1045 = vrot.lane.b32.xlu0 %v848, 120
    %v1046 = vpop.permute.xlu0 %1045
    %1047 = vrot.lane.b32.xlu0 %v891, 120
    %v1048 = vpop.permute.xlu0 %1047
    %1049 = vrot.lane.b32.xlu0 %v894, 120
    %v1050 = vpop.permute.xlu0 %1049
    %v1051 = vsel %vm171, %v1046, 0
    %v1053 = vsel %vm171, %v1048, 0
    %v1055 = vsel %vm171, %v1050, 0
    %1057 = vmatpush.xpose.msra.mxu0 0.0
    %1058 = vmatpush.xpose.msra.mxu0 0.0
    %1059 = vmatpush.xpose.msra.mxu0 0.0
    %1060 = vmatpush.xpose.msra.mxu0 0.0
    %1061 = vmatpush.xpose.msra.mxu0 0.0
    %1062 = vmatpush.xpose.msra.mxu0 0.0
    %1063 = vmatpush.xpose.msra.mxu0 0.0
    %1064 = vmatpush.xpose.msra.mxu0 0.0
    %1065 = vmatpush.xpose.msra.mxu0 0.0
    %1066 = vmatpush.xpose.msra.mxu0 0.0
    %1067 = vmatpush.xpose.msra.mxu0 0.0
    %1068 = vmatpush.xpose.msra.mxu0 0.0
    %1069 = vmatpush.xpose.msra.mxu0 0.0
    %1070 = vmatpush.xpose.msra.mxu0 0.0
    %1071 = vmatpush.xpose.msra.mxu0 %v1055
    %1072 = vmatpush.xpose.msra.mxu0 %v1053
    %1073 = vmatmul.f32.gmra.mxu0 %v1051
    %v1074 = vpop.f32.mrf.mxu0
    %v1075 = vadd.f32 0.0, %v1074
    %1076 = vdwg.mxu0
    %1077 = vrot.lane.b32.xlu0 %v851, 120
    %v1078 = vpop.permute.xlu0 %1077
    %1079 = vrot.lane.b32.xlu0 %v897, 120
    %v1080 = vpop.permute.xlu0 %1079
    %1081 = vrot.lane.b32.xlu0 %v900, 120
    %v1082 = vpop.permute.xlu0 %1081
    %v1083 = vsel %vm171, %v1078, 0
    %v1085 = vsel %vm171, %v1080, 0
    %v1087 = vsel %vm171, %v1082, 0
    %1089 = vmatpush.xpose.msra.mxu0 0.0
    %1090 = vmatpush.xpose.msra.mxu0 0.0
    %1091 = vmatpush.xpose.msra.mxu0 0.0
    %1092 = vmatpush.xpose.msra.mxu0 0.0
    %1093 = vmatpush.xpose.msra.mxu0 0.0
    %1094 = vmatpush.xpose.msra.mxu0 0.0
    %1095 = vmatpush.xpose.msra.mxu0 0.0
    %1096 = vmatpush.xpose.msra.mxu0 0.0
    %1097 = vmatpush.xpose.msra.mxu0 0.0
    %1098 = vmatpush.xpose.msra.mxu0 0.0
    %1099 = vmatpush.xpose.msra.mxu0 0.0
    %1100 = vmatpush.xpose.msra.mxu0 0.0
    %1101 = vmatpush.xpose.msra.mxu0 0.0
    %1102 = vmatpush.xpose.msra.mxu0 0.0
    %1103 = vmatpush.xpose.msra.mxu0 %v1087
    %1104 = vmatpush.xpose.msra.mxu0 %v1085
    %1105 = vmatmul.f32.gmra.mxu0 %v1083
    %v1106 = vpop.f32.mrf.mxu0
    %v1107 = vadd.f32 0.0, %v1106
    %1108 = vdwg.mxu0
    %v1109 = vsel %vm713, %v1075, -inf
    %1110 = vmax.xlane.f32.xlu0 %v1109
    %v1111 = vpop.xlane.xlu0 %1110
    %v1112 = vsel %vm713, %v1107, -inf
    %1113 = vmax.xlane.f32.xlu0 %v1112
    %v1114 = vpop.xlane.xlu0 %1113
    %v1115 = vsub.f32 %v1075, %v1111
    %v1116 = vsub.f32 %v1107, %v1114
    %v1117 = vmul.f32 %v1115, 1.442695
    %v1118 = vpow.pop %v1117
    %v1119 = vmul.f32 %v1116, 1.442695
    %v1120 = vpow.pop %v1119
    %v1121 = vsel %vm713, %v1118, 0.0
    %1122 = vadd.xlane.f32.xlu0 %v1121
    %v1123 = vpop.xlane.xlu0 %1122
    %v1124 = vsel %vm713, %v1120, 0.0
    %1125 = vadd.xlane.f32.xlu0 %v1124
    %v1126 = vpop.xlane.xlu0 %1125
    %v1127 = vrcp.pop %v1123
    %v1128 = vrcp.pop %v1126
    %v1129 = vmul.f32 %v1118, %v1127
    %v1130 = vmul.f32 %v1120, %v1128
    %1131 = vrot.lane.b32.xlu0 %v891, 88
    %v1132 = vpop.permute.xlu0 %1131
    %1133 = vrot.lane.b32.xlu0 %v894, 88
    %v1134 = vpop.permute.xlu0 %1133
    %v1138 = vsel %vm713, %v1129, 0
    %1140 = vmatpush.msra.mxu0 0.0
    %1141 = vmatpush.msra.mxu0 0.0
    %1142 = vmatpush.msra.mxu0 0.0
    %1143 = vmatpush.msra.mxu0 0.0
    %1144 = vmatpush.msra.mxu0 0.0
    %1145 = vmatpush.msra.mxu0 0.0
    %1146 = vmatpush.msra.mxu0 0.0
    %1147 = vmatpush.msra.mxu0 0.0
    %1148 = vmatpush.msra.mxu0 0.0
    %1149 = vmatpush.msra.mxu0 0.0
    %1150 = vmatpush.msra.mxu0 0.0
    %1151 = vmatpush.msra.mxu0 0.0
    %1152 = vmatpush.msra.mxu0 0.0
    %1153 = vmatpush.msra.mxu0 0.0
    %1154 = vmatpush.msra.mxu0 %v1134
    %1155 = vmatpush.msra.mxu0 %v1132
    %1156 = vmatmul.f32.gmra.mxu0 %v1138
    %v1157 = vpop.f32.mrf.mxu0
    %v1158 = vadd.f32 0.0, %v1157
    %1159 = vdwg.mxu0
    %1160 = vrot.lane.b32.xlu0 %v897, 88
    %v1161 = vpop.permute.xlu0 %1160
    %1162 = vrot.lane.b32.xlu0 %v900, 88
    %v1163 = vpop.permute.xlu0 %1162
    %v1167 = vsel %vm713, %v1130, 0
    %1169 = vmatpush.msra.mxu0 0.0
    %1170 = vmatpush.msra.mxu0 0.0
    %1171 = vmatpush.msra.mxu0 0.0
    %1172 = vmatpush.msra.mxu0 0.0
    %1173 = vmatpush.msra.mxu0 0.0
    %1174 = vmatpush.msra.mxu0 0.0
    %1175 = vmatpush.msra.mxu0 0.0
    %1176 = vmatpush.msra.mxu0 0.0
    %1177 = vmatpush.msra.mxu0 0.0
    %1178 = vmatpush.msra.mxu0 0.0
    %1179 = vmatpush.msra.mxu0 0.0
    %1180 = vmatpush.msra.mxu0 0.0
    %1181 = vmatpush.msra.mxu0 0.0
    %1182 = vmatpush.msra.mxu0 0.0
    %1183 = vmatpush.msra.mxu0 %v1163
    %1184 = vmatpush.msra.mxu0 %v1161
    %1185 = vmatmul.f32.gmra.mxu0 %v1167
    %v1186 = vpop.f32.mrf.mxu0
    %v1187 = vadd.f32 0.0, %v1186
    %1188 = vdwg.mxu0
    %1189 = vrot.lane.b32.xlu0 %v848, 112
    %v1190 = vpop.permute.xlu0 %1189
    %1191 = vrot.lane.b32.xlu0 %v891, 112
    %v1192 = vpop.permute.xlu0 %1191
    %1193 = vrot.lane.b32.xlu0 %v894, 112
    %v1194 = vpop.permute.xlu0 %1193
    %v1195 = vsel %vm171, %v1190, 0
    %v1197 = vsel %vm171, %v1192, 0
    %v1199 = vsel %vm171, %v1194, 0
    %1201 = vmatpush.xpose.msra.mxu0 0.0
    %1202 = vmatpush.xpose.msra.mxu0 0.0
    %1203 = vmatpush.xpose.msra.mxu0 0.0
    %1204 = vmatpush.xpose.msra.mxu0 0.0
    %1205 = vmatpush.xpose.msra.mxu0 0.0
    %1206 = vmatpush.xpose.msra.mxu0 0.0
    %1207 = vmatpush.xpose.msra.mxu0 0.0
    %1208 = vmatpush.xpose.msra.mxu0 0.0
    %1209 = vmatpush.xpose.msra.mxu0 0.0
    %1210 = vmatpush.xpose.msra.mxu0 0.0
    %1211 = vmatpush.xpose.msra.mxu0 0.0
    %1212 = vmatpush.xpose.msra.mxu0 0.0
    %1213 = vmatpush.xpose.msra.mxu0 0.0
    %1214 = vmatpush.xpose.msra.mxu0 0.0
    %1215 = vmatpush.xpose.msra.mxu0 %v1199
    %1216 = vmatpush.xpose.msra.mxu0 %v1197
    %1217 = vmatmul.f32.gmra.mxu0 %v1195
    %v1218 = vpop.f32.mrf.mxu0
    %v1219 = vadd.f32 0.0, %v1218
    %1220 = vdwg.mxu0
    %1221 = vrot.lane.b32.xlu0 %v851, 112
    %v1222 = vpop.permute.xlu0 %1221
    %1223 = vrot.lane.b32.xlu0 %v897, 112
    %v1224 = vpop.permute.xlu0 %1223
    %1225 = vrot.lane.b32.xlu0 %v900, 112
    %v1226 = vpop.permute.xlu0 %1225
    %v1227 = vsel %vm171, %v1222, 0
    %v1229 = vsel %vm171, %v1224, 0
    %v1231 = vsel %vm171, %v1226, 0
    %1233 = vmatpush.xpose.msra.mxu0 0.0
    %1234 = vmatpush.xpose.msra.mxu0 0.0
    %1235 = vmatpush.xpose.msra.mxu0 0.0
    %1236 = vmatpush.xpose.msra.mxu0 0.0
    %1237 = vmatpush.xpose.msra.mxu0 0.0
    %1238 = vmatpush.xpose.msra.mxu0 0.0
    %1239 = vmatpush.xpose.msra.mxu0 0.0
    %1240 = vmatpush.xpose.msra.mxu0 0.0
    %1241 = vmatpush.xpose.msra.mxu0 0.0
    %1242 = vmatpush.xpose.msra.mxu0 0.0
    %1243 = vmatpush.xpose.msra.mxu0 0.0
    %1244 = vmatpush.xpose.msra.mxu0 0.0
    %1245 = vmatpush.xpose.msra.mxu0 0.0
    %1246 = vmatpush.xpose.msra.mxu0 0.0
    %1247 = vmatpush.xpose.msra.mxu0 %v1231
    %1248 = vmatpush.xpose.msra.mxu0 %v1229
    %1249 = vmatmul.f32.gmra.mxu0 %v1227
    %v1250 = vpop.f32.mrf.mxu0
    %v1251 = vadd.f32 0.0, %v1250
    %1252 = vdwg.mxu0
    %v1253 = vsel %vm713, %v1219, -inf
    %1254 = vmax.xlane.f32.xlu0 %v1253
    %v1255 = vpop.xlane.xlu0 %1254
    %v1256 = vsel %vm713, %v1251, -inf
    %1257 = vmax.xlane.f32.xlu0 %v1256
    %v1258 = vpop.xlane.xlu0 %1257
    %v1259 = vsub.f32 %v1219, %v1255
    %v1260 = vsub.f32 %v1251, %v1258
    %v1261 = vmul.f32 %v1259, 1.442695
    %v1262 = vpow.pop %v1261
    %v1263 = vmul.f32 %v1260, 1.442695
    %v1264 = vpow.pop %v1263
    %v1265 = vsel %vm713, %v1262, 0.0
    %1266 = vadd.xlane.f32.xlu0 %v1265
    %v1267 = vpop.xlane.xlu0 %1266
    %v1268 = vsel %vm713, %v1264, 0.0
    %1269 = vadd.xlane.f32.xlu0 %v1268
    %v1270 = vpop.xlane.xlu0 %1269
    %v1271 = vrcp.pop %v1267
    %v1272 = vrcp.pop %v1270
    %v1273 = vmul.f32 %v1262, %v1271
    %v1274 = vmul.f32 %v1264, %v1272
    %1275 = vrot.lane.b32.xlu0 %v891, 80
    %v1276 = vpop.permute.xlu0 %1275
    %1277 = vrot.lane.b32.xlu0 %v894, 80
    %v1278 = vpop.permute.xlu0 %1277
    %v1282 = vsel %vm713, %v1273, 0
    %1284 = vmatpush.msra.mxu0 0.0
    %1285 = vmatpush.msra.mxu0 0.0
    %1286 = vmatpush.msra.mxu0 0.0
    %1287 = vmatpush.msra.mxu0 0.0
    %1288 = vmatpush.msra.mxu0 0.0
    %1289 = vmatpush.msra.mxu0 0.0
    %1290 = vmatpush.msra.mxu0 0.0
    %1291 = vmatpush.msra.mxu0 0.0
    %1292 = vmatpush.msra.mxu0 0.0
    %1293 = vmatpush.msra.mxu0 0.0
    %1294 = vmatpush.msra.mxu0 0.0
    %1295 = vmatpush.msra.mxu0 0.0
    %1296 = vmatpush.msra.mxu0 0.0
    %1297 = vmatpush.msra.mxu0 0.0
    %1298 = vmatpush.msra.mxu0 %v1278
    %1299 = vmatpush.msra.mxu0 %v1276
    %1300 = vmatmul.f32.gmra.mxu0 %v1282
    %v1301 = vpop.f32.mrf.mxu0
    %v1302 = vadd.f32 0.0, %v1301
    %1303 = vdwg.mxu0
    %1304 = vrot.lane.b32.xlu0 %v897, 80
    %v1305 = vpop.permute.xlu0 %1304
    %1306 = vrot.lane.b32.xlu0 %v900, 80
    %v1307 = vpop.permute.xlu0 %1306
    %v1311 = vsel %vm713, %v1274, 0
    %1313 = vmatpush.msra.mxu0 0.0
    %1314 = vmatpush.msra.mxu0 0.0
    %1315 = vmatpush.msra.mxu0 0.0
    %1316 = vmatpush.msra.mxu0 0.0
    %1317 = vmatpush.msra.mxu0 0.0
    %1318 = vmatpush.msra.mxu0 0.0
    %1319 = vmatpush.msra.mxu0 0.0
    %1320 = vmatpush.msra.mxu0 0.0
    %1321 = vmatpush.msra.mxu0 0.0
    %1322 = vmatpush.msra.mxu0 0.0
    %1323 = vmatpush.msra.mxu0 0.0
    %1324 = vmatpush.msra.mxu0 0.0
    %1325 = vmatpush.msra.mxu0 0.0
    %1326 = vmatpush.msra.mxu0 0.0
    %1327 = vmatpush.msra.mxu0 %v1307
    %1328 = vmatpush.msra.mxu0 %v1305
    %1329 = vmatmul.f32.gmra.mxu0 %v1311
    %v1330 = vpop.f32.mrf.mxu0
    %v1331 = vadd.f32 0.0, %v1330
    %1332 = vdwg.mxu0
    %1333 = vrot.lane.b32.xlu0 %v848, 104
    %v1334 = vpop.permute.xlu0 %1333
    %1335 = vrot.lane.b32.xlu0 %v891, 104
    %v1336 = vpop.permute.xlu0 %1335
    %1337 = vrot.lane.b32.xlu0 %v894, 104
    %v1338 = vpop.permute.xlu0 %1337
    %v1339 = vsel %vm171, %v1334, 0
    %v1341 = vsel %vm171, %v1336, 0
    %v1343 = vsel %vm171, %v1338, 0
    %1345 = vmatpush.xpose.msra.mxu0 0.0
    %1346 = vmatpush.xpose.msra.mxu0 0.0
    %1347 = vmatpush.xpose.msra.mxu0 0.0
    %1348 = vmatpush.xpose.msra.mxu0 0.0
    %1349 = vmatpush.xpose.msra.mxu0 0.0
    %1350 = vmatpush.xpose.msra.mxu0 0.0
    %1351 = vmatpush.xpose.msra.mxu0 0.0
    %1352 = vmatpush.xpose.msra.mxu0 0.0
    %1353 = vmatpush.xpose.msra.mxu0 0.0
    %1354 = vmatpush.xpose.msra.mxu0 0.0
    %1355 = vmatpush.xpose.msra.mxu0 0.0
    %1356 = vmatpush.xpose.msra.mxu0 0.0
    %1357 = vmatpush.xpose.msra.mxu0 0.0
    %1358 = vmatpush.xpose.msra.mxu0 0.0
    %1359 = vmatpush.xpose.msra.mxu0 %v1343
    %1360 = vmatpush.xpose.msra.mxu0 %v1341
    %1361 = vmatmul.f32.gmra.mxu0 %v1339
    %v1362 = vpop.f32.mrf.mxu0
    %v1363 = vadd.f32 0.0, %v1362
    %1364 = vdwg.mxu0
    %1365 = vrot.lane.b32.xlu0 %v851, 104
    %v1366 = vpop.permute.xlu0 %1365
    %1367 = vrot.lane.b32.xlu0 %v897, 104
    %v1368 = vpop.permute.xlu0 %1367
    %1369 = vrot.lane.b32.xlu0 %v900, 104
    %v1370 = vpop.permute.xlu0 %1369
    %v1371 = vsel %vm171, %v1366, 0
    %v1373 = vsel %vm171, %v1368, 0
    %v1375 = vsel %vm171, %v1370, 0
    %1377 = vmatpush.xpose.msra.mxu0 0.0
    %1378 = vmatpush.xpose.msra.mxu0 0.0
    %1379 = vmatpush.xpose.msra.mxu0 0.0
    %1380 = vmatpush.xpose.msra.mxu0 0.0
    %1381 = vmatpush.xpose.msra.mxu0 0.0
    %1382 = vmatpush.xpose.msra.mxu0 0.0
    %1383 = vmatpush.xpose.msra.mxu0 0.0
    %1384 = vmatpush.xpose.msra.mxu0 0.0
    %1385 = vmatpush.xpose.msra.mxu0 0.0
    %1386 = vmatpush.xpose.msra.mxu0 0.0
    %1387 = vmatpush.xpose.msra.mxu0 0.0
    %1388 = vmatpush.xpose.msra.mxu0 0.0
    %1389 = vmatpush.xpose.msra.mxu0 0.0
    %1390 = vmatpush.xpose.msra.mxu0 0.0
    %1391 = vmatpush.xpose.msra.mxu0 %v1375
    %1392 = vmatpush.xpose.msra.mxu0 %v1373
    %1393 = vmatmul.f32.gmra.mxu0 %v1371
    %v1394 = vpop.f32.mrf.mxu0
    %v1395 = vadd.f32 0.0, %v1394
    %1396 = vdwg.mxu0
    %v1397 = vsel %vm713, %v1363, -inf
    %1398 = vmax.xlane.f32.xlu0 %v1397
    %v1399 = vpop.xlane.xlu0 %1398
    %v1400 = vsel %vm713, %v1395, -inf
    %1401 = vmax.xlane.f32.xlu0 %v1400
    %v1402 = vpop.xlane.xlu0 %1401
    %v1403 = vsub.f32 %v1363, %v1399
    %v1404 = vsub.f32 %v1395, %v1402
    %v1405 = vmul.f32 %v1403, 1.442695
    %v1406 = vpow.pop %v1405
    %v1407 = vmul.f32 %v1404, 1.442695
    %v1408 = vpow.pop %v1407
    %v1409 = vsel %vm713, %v1406, 0.0
    %1410 = vadd.xlane.f32.xlu0 %v1409
    %v1411 = vpop.xlane.xlu0 %1410
    %v1412 = vsel %vm713, %v1408, 0.0
    %1413 = vadd.xlane.f32.xlu0 %v1412
    %v1414 = vpop.xlane.xlu0 %1413
    %v1415 = vrcp.pop %v1411
    %v1416 = vrcp.pop %v1414
    %v1417 = vmul.f32 %v1406, %v1415
    %v1418 = vmul.f32 %v1408, %v1416
    %1419 = vrot.lane.b32.xlu0 %v891, 72
    %v1420 = vpop.permute.xlu0 %1419
    %1421 = vrot.lane.b32.xlu0 %v894, 72
    %v1422 = vpop.permute.xlu0 %1421
    %v1426 = vsel %vm713, %v1417, 0
    %1428 = vmatpush.msra.mxu0 0.0
    %1429 = vmatpush.msra.mxu0 0.0
    %1430 = vmatpush.msra.mxu0 0.0
    %1431 = vmatpush.msra.mxu0 0.0
    %1432 = vmatpush.msra.mxu0 0.0
    %1433 = vmatpush.msra.mxu0 0.0
    %1434 = vmatpush.msra.mxu0 0.0
    %1435 = vmatpush.msra.mxu0 0.0
    %1436 = vmatpush.msra.mxu0 0.0
    %1437 = vmatpush.msra.mxu0 0.0
    %1438 = vmatpush.msra.mxu0 0.0
    %1439 = vmatpush.msra.mxu0 0.0
    %1440 = vmatpush.msra.mxu0 0.0
    %1441 = vmatpush.msra.mxu0 0.0
    %1442 = vmatpush.msra.mxu0 %v1422
    %1443 = vmatpush.msra.mxu0 %v1420
    %1444 = vmatmul.f32.gmra.mxu0 %v1426
    %v1445 = vpop.f32.mrf.mxu0
    %v1446 = vadd.f32 0.0, %v1445
    %1447 = vdwg.mxu0
    %1448 = vrot.lane.b32.xlu0 %v897, 72
    %v1449 = vpop.permute.xlu0 %1448
    %1450 = vrot.lane.b32.xlu0 %v900, 72
    %v1451 = vpop.permute.xlu0 %1450
    %v1455 = vsel %vm713, %v1418, 0
    %1457 = vmatpush.msra.mxu0 0.0
    %1458 = vmatpush.msra.mxu0 0.0
    %1459 = vmatpush.msra.mxu0 0.0
    %1460 = vmatpush.msra.mxu0 0.0
    %1461 = vmatpush.msra.mxu0 0.0
    %1462 = vmatpush.msra.mxu0 0.0
    %1463 = vmatpush.msra.mxu0 0.0
    %1464 = vmatpush.msra.mxu0 0.0
    %1465 = vmatpush.msra.mxu0 0.0
    %1466 = vmatpush.msra.mxu0 0.0
    %1467 = vmatpush.msra.mxu0 0.0
    %1468 = vmatpush.msra.mxu0 0.0
    %1469 = vmatpush.msra.mxu0 0.0
    %1470 = vmatpush.msra.mxu0 0.0
    %1471 = vmatpush.msra.mxu0 %v1451
    %1472 = vmatpush.msra.mxu0 %v1449
    %1473 = vmatmul.f32.gmra.mxu0 %v1455
    %v1474 = vpop.f32.mrf.mxu0
    %v1475 = vadd.f32 0.0, %v1474
    %1476 = vdwg.mxu0
    %1479 = vrot.lane.b32.xlu0 %v1158, 8
    %v1480 = vpop.permute.xlu0 %1479
    %1481 = vrot.lane.b32.xlu0 %v1187, 8
    %v1482 = vpop.permute.xlu0 %1481
    %1487 = vrot.lane.b32.xlu0 %v1302, 16
    %v1488 = vpop.permute.xlu0 %1487
    %1489 = vrot.lane.b32.xlu0 %v1331, 16
    %v1490 = vpop.permute.xlu0 %1489
    %1495 = vrot.lane.b32.xlu0 %v1446, 24
    %v1496 = vpop.permute.xlu0 %1495
    %1497 = vrot.lane.b32.xlu0 %v1475, 24
    %v1498 = vpop.permute.xlu0 %1497
    %v1501 = vsel %vm171, %v1014, %v1480
    %v1502 = vsel %vm171, %v1043, %v1482
    %v1503 = vsel %vm713, %v1501, %v1488
    %v1504 = vsel %vm713, %v1502, %v1490
    %v1505 = vsel %vm716, %v1503, %v1496
    %v1506 = vsel %vm716, %v1504, %v1498
    %v1508 = vperm.slane %v906, 0
    %v1511 = vsel %vm133, %v1505, 0
    %v1514 = vsel %vm133, %v1506, 0
    %1516 = vmatpush.msra.mxu0 0.0
    %1517 = vmatpush.msra.mxu0 0.0
    %1518 = vmatpush.msra.mxu0 0.0
    %1519 = vmatpush.msra.mxu0 0.0
    %1520 = vmatpush.msra.mxu0 0.0
    %1521 = vmatpush.msra.mxu0 0.0
    %1522 = vmatpush.msra.mxu0 0.0
    %1523 = vmatpush.msra.mxu0 0.0
    %1524 = vmatpush.msra.mxu0 0.0
    %1525 = vmatpush.msra.mxu0 0.0
    %1526 = vmatpush.msra.mxu0 0.0
    %1527 = vmatpush.msra.mxu0 0.0
    %1528 = vmatpush.msra.mxu0 %v905
    %1529 = vmatpush.msra.mxu0 %v904
    %1530 = vmatpush.msra.mxu0 %v903
    %1531 = vmatpush.msra.mxu0 %v902
    %1532 = vmatmul.f32.gmra.mxu0 %v1511
    %v1533 = vpop.f32.mrf.mxu0
    %v1534 = vadd.f32 %v1508, %v1533
    %1535 = vmatmul.f32.gmra.mxu0 %v1514
    %v1536 = vpop.f32.mrf.mxu0
    %v1537 = vadd.f32 %v1508, %v1536
    %1538 = vdwg.mxu0
    %v1539 = vadd.f32 %v814, %v1534
    %v1540 = vadd.f32 %v815, %v1537
    %v1541 = vld [vmem:[%s14] sm:$0x1]
    %v1542 = vld [vmem:[%s15] sm:$0x1]
    %v1543 = vsel %vm133, %v1539, 0.0
    %1544 = vadd.xlane.f32.xlu0 %v1543
    %v1545 = vpop.xlane.xlu0 %1544
    %v1546 = vsel %vm133, %v1540, 0.0
    %1547 = vadd.xlane.f32.xlu0 %v1546
    %v1548 = vpop.xlane.xlu0 %1547
    %v1549 = vmul.f32 %v1545, %v767
    %v1550 = vmul.f32 %v1548, %v767
    %v1551 = vsub.f32 %v1539, %v1549
    %v1552 = vsub.f32 %v1540, %v1550
    %v1553 = vmul.f32 %v1551, %v1551
    %v1554 = vmul.f32 %v1552, %v1552
    %v1555 = vsel %vm133, %v1553, 0.0
    %1556 = vadd.xlane.f32.xlu0 %v1555
    %v1557 = vpop.xlane.xlu0 %1556
    %v1558 = vsel %vm133, %v1554, 0.0
    %1559 = vadd.xlane.f32.xlu0 %v1558
    %v1560 = vpop.xlane.xlu0 %1559
    %v1561 = vmul.f32 %v1557, %v767
    %v1562 = vmul.f32 %v1560, %v767
    %v1563 = vadd.f32 %v1561, 1e-05
    %v1564 = vadd.f32 %v1562, 1e-05
    %v1565 = vrsqrt.pop %v1563
    %v1566 = vmul.f32 %v1565, %v1563
    %v1567 = vmul.f32 %v1566, %v1565
    %v1568 = vmul.f32 0.5, %v1567
    %v1569 = vsub.f32 1.5, %v1568
    %v1570 = vmul.f32 %v1565, %v1569
    %vm1571 = vweird.f32 %v1563
    %vm1572 = vweird.f32 %v1565
    %vm1573 = vmor %vm1571, %vm1572
    %v1574 = vsel %vm1573, %v1565, %v1570
    %v1575 = vrsqrt.pop %v1564
    %v1576 = vmul.f32 %v1575, %v1564
    %v1577 = vmul.f32 %v1576, %v1575
    %v1578 = vmul.f32 0.5, %v1577
    %v1579 = vsub.f32 1.5, %v1578
    %v1580 = vmul.f32 %v1575, %v1579
    %vm1581 = vweird.f32 %v1564
    %vm1582 = vweird.f32 %v1575
    %vm1583 = vmor %vm1581, %vm1582
    %v1584 = vsel %vm1583, %v1575, %v1580
    %v1585 = vmul.f32 %v1551, %v1574
    %v1586 = vmul.f32 %v1552, %v1584
    %v1588 = vperm.slane %v1541, 0
    %v1590 = vmul.f32 %v1585, %v1588
    %v1591 = vmul.f32 %v1586, %v1588
    %v1593 = vperm.slane %v1542, 0
    %v1595 = vadd.f32 %v1590, %v1593
    %v1596 = vadd.f32 %v1591, %v1593
    %v1597 = vld [vmem:[#allocation7] sm:$0xff]
    %v1598 = vld [vmem:[#allocation7 + $0x8] sm:$0xff]
    %v1599 = vld [vmem:[#allocation7 + $0x10] sm:$0xff]
    %v1600 = vld [vmem:[#allocation7 + $0x18] sm:$0xff]
    %v1601 = vld [vmem:[%s17] sm:$0x1]
    %v1603 = vperm.slane %v1601, 0
    %v1606 = vsel %vm133, %v1595, 0
    %v1609 = vsel %vm133, %v1596, 0
    %1611 = vmatpush.msra.mxu0 0.0
    %1612 = vmatpush.msra.mxu0 0.0
    %1613 = vmatpush.msra.mxu0 0.0
    %1614 = vmatpush.msra.mxu0 0.0
    %1615 = vmatpush.msra.mxu0 0.0
    %1616 = vmatpush.msra.mxu0 0.0
    %1617 = vmatpush.msra.mxu0 0.0
    %1618 = vmatpush.msra.mxu0 0.0
    %1619 = vmatpush.msra.mxu0 0.0
    %1620 = vmatpush.msra.mxu0 0.0
    %1621 = vmatpush.msra.mxu0 0.0
    %1622 = vmatpush.msra.mxu0 0.0
    %1623 = vmatpush.msra.mxu0 %v1600
    %1624 = vmatpush.msra.mxu0 %v1599
    %1625 = vmatpush.msra.mxu0 %v1598
    %1626 = vmatpush.msra.mxu0 %v1597
    %1627 = vmatmul.f32.gmra.mxu0 %v1606
    %v1628 = vpop.f32.mrf.mxu0
    %v1629 = vadd.f32 %v1603, %v1628
    %1630 = vmatmul.f32.gmra.mxu0 %v1609
    %v1631 = vpop.f32.mrf.mxu0
    %v1632 = vadd.f32 %v1603, %v1631
    %1633 = vdwg.mxu0
    %v1634 = vmax.f32 %v1629, 0.0
    %v1635 = vmax.f32 %v1632, 0.0
    %v1636 = vld [vmem:[%s18] sm:$0xff]
    %v1637 = vld [vmem:[%s18 + $0x8] sm:$0xff]
    %v1638 = vld [vmem:[%s18 + $0x10] sm:$0xff]
    %v1639 = vld [vmem:[%s18 + $0x18] sm:$0xff]
    %v1640 = vld [vmem:[%s18 + $0x20] sm:$0xff]
    %v1641 = vld [vmem:[%s18 + $0x28] sm:$0xff]
    %v1642 = vld [vmem:[%s18 + $0x30] sm:$0xff]
    %v1643 = vld [vmem:[%s18 + $0x38] sm:$0xff]
    %v1644 = vld [vmem:[%s18 + $0x40] sm:$0xff]
    %v1645 = vld [vmem:[%s18 + $0x48] sm:$0xff]
    %v1646 = vld [vmem:[%s18 + $0x50] sm:$0xff]
    %v1647 = vld [vmem:[%s18 + $0x58] sm:$0xff]
    %v1648 = vld [vmem:[%s18 + $0x60] sm:$0xff]
    %v1649 = vld [vmem:[%s18 + $0x68] sm:$0xff]
    %v1650 = vld [vmem:[%s18 + $0x70] sm:$0xff]
    %v1651 = vld [vmem:[%s18 + $0x78] sm:$0xff]
    %v1652 = vld [vmem:[%s19] sm:$0x1]
    %v1654 = vperm.slane %v1652, 0
    %1656 = vmatpush.msra.mxu0 %v1651
    %1657 = vmatpush.msra.mxu0 %v1650
    %1658 = vmatpush.msra.mxu0 %v1649
    %1659 = vmatpush.msra.mxu0 %v1648
    %1660 = vmatpush.msra.mxu0 %v1647
    %1661 = vmatpush.msra.mxu0 %v1646
    %1662 = vmatpush.msra.mxu0 %v1645
    %1663 = vmatpush.msra.mxu0 %v1644
    %1664 = vmatpush.msra.mxu0 %v1643
    %1665 = vmatpush.msra.mxu0 %v1642
    %1666 = vmatpush.msra.mxu0 %v1641
    %1667 = vmatpush.msra.mxu0 %v1640
    %1668 = vmatpush.msra.mxu0 %v1639
    %1669 = vmatpush.msra.mxu0 %v1638
    %1670 = vmatpush.msra.mxu0 %v1637
    %1671 = vmatpush.msra.mxu0 %v1636
    %1672 = vmatmul.f32.gmra.mxu0 %v1634
    %v1673 = vpop.f32.mrf.mxu0
    %v1674 = vadd.f32 %v1654, %v1673
    %1675 = vmatmul.f32.gmra.mxu0 %v1635
    %v1676 = vpop.f32.mrf.mxu0
    %v1677 = vadd.f32 %v1654, %v1676
    %1678 = vdwg.mxu0
    %v1679 = vadd.f32 %v1595, %v1674
    %v1680 = vadd.f32 %v1596, %v1677
    %v1681 = vld [vmem:[%s20] sm:$0x1]
    %v1682 = vld [vmem:[%s21] sm:$0x1]
    %v1683 = vsel %vm133, %v1679, 0.0
    %1684 = vadd.xlane.f32.xlu0 %v1683
    %v1685 = vpop.xlane.xlu0 %1684
    %v1686 = vsel %vm133, %v1680, 0.0
    %1687 = vadd.xlane.f32.xlu0 %v1686
    %v1688 = vpop.xlane.xlu0 %1687
    %v1689 = vmul.f32 %v1685, %v767
    %v1690 = vmul.f32 %v1688, %v767
    %v1691 = vsub.f32 %v1679, %v1689
    %v1692 = vsub.f32 %v1680, %v1690
    %v1693 = vmul.f32 %v1691, %v1691
    %v1694 = vmul.f32 %v1692, %v1692
    %v1695 = vsel %vm133, %v1693, 0.0
    %1696 = vadd.xlane.f32.xlu0 %v1695
    %v1697 = vpop.xlane.xlu0 %1696
    %v1698 = vsel %vm133, %v1694, 0.0
    %1699 = vadd.xlane.f32.xlu0 %v1698
    %v1700 = vpop.xlane.xlu0 %1699
    %v1701 = vmul.f32 %v1697, %v767
    %v1702 = vmul.f32 %v1700, %v767
    %v1703 = vadd.f32 %v1701, 1e-05
    %v1704 = vadd.f32 %v1702, 1e-05
    %v1705 = vrsqrt.pop %v1703
    %v1706 = vmul.f32 %v1705, %v1703
    %v1707 = vmul.f32 %v1706, %v1705
    %v1708 = vmul.f32 0.5, %v1707
    %v1709 = vsub.f32 1.5, %v1708
    %v1710 = vmul.f32 %v1705, %v1709
    %vm1711 = vweird.f32 %v1703
    %vm1712 = vweird.f32 %v1705
    %vm1713 = vmor %vm1711, %vm1712
    %v1714 = vsel %vm1713, %v1705, %v1710
    %v1715 = vrsqrt.pop %v1704
    %v1716 = vmul.f32 %v1715, %v1704
    %v1717 = vmul.f32 %v1716, %v1715
    %v1718 = vmul.f32 0.5, %v1717
    %v1719 = vsub.f32 1.5, %v1718
    %v1720 = vmul.f32 %v1715, %v1719
    %vm1721 = vweird.f32 %v1704
    %vm1722 = vweird.f32 %v1715
    %vm1723 = vmor %vm1721, %vm1722
    %v1724 = vsel %vm1723, %v1715, %v1720
    %v1725 = vmul.f32 %v1691, %v1714
    %v1726 = vmul.f32 %v1692, %v1724
    %v1728 = vperm.slane %v1681, 0
    %v1730 = vmul.f32 %v1725, %v1728
    %v1731 = vmul.f32 %v1726, %v1728
    %v1733 = vperm.slane %v1682, 0
    %v1735 = vadd.f32 %v1730, %v1733
    %v1736 = vadd.f32 %v1731, %v1733
    %1737 = vst.msk [vmem:[#allocation8] sm:$0xff] %vm133, %v1735
    %1738 = vst.msk [vmem:[#allocation8 + $0x8] sm:$0xff] %vm133, %v1736
    // Predicated region
    $region102: #{tpu_custom_call.1} parent=1 // pred_check
      _
    $region103: #{tpu_custom_call.1} parent=1 // pred_check_branch
      %1740 = sbr.rel (0) target = $region105
    $region104: #{tpu_custom_call.1} parent=1 // pred_region
      %1742 = vsyncadd [#allocation4], 0
      %s1743 = sshll.u32 [#allocation8], 4
      %s1744 = int_to_ptr.vmem [resolvable:$true] %s1743
      %s1745 = sshll.u32 %s22, 4
      %s1746 = int_to_ptr.hbm [resolvable:$true] %s1745
      %1751 = dma.vmem_to_hbm [thread:$0]  %s1744, 256, %s1746, [#allocation4], 128, 128, 8
    $region105: #{tpu_custom_call.1} parent=1 // pred_fallthru
      _
    // Predicated region
    $region106: #{tpu_custom_call.1} parent=1 // pred_check
      _
    $region107: #{tpu_custom_call.1} parent=1 // pred_check_branch
      %1753 = sbr.rel (0) target = $region109
    $region108: #{tpu_custom_call.1} parent=1 // pred_region
      %1755 = dma.done [#allocation4], 256
    $region109: #{tpu_custom_call.1} parent=1 // pred_fallthru
      _
    %1756 = vsyncpa [#allocation3], 1
    %1757 = vsyncpa [#allocation6], 1
    %1758 = vsyncpa [#allocation4], 1

// kernel: tpu_custom_call.1
$region0: #{tpu_custom_call.1}
  #allocation0 [shape = 'u32[]', space=smem, size = 0x4, offset = 0x4, fixed_abs, tag = 'smem constant byte address 0x4 - core index']
  #allocation1 [shape = 'u32[72,128]{1,0:T(1,128)}', space=vmem, size = 0x9000, scoped, tag = 'internal scratch']
  %s0 = inlined_call_operand.hbm [shape: f32[2,8,32], index: 0, kind: input, shape index: {}]
  %s1 = inlined_call_operand.vmem [shape: f32[2,16,32], index: 1, kind: input, shape index: {}]
  %s2 = inlined_call_operand.vmem [shape: f32[32,96], index: 2, kind: input, shape index: {}]
  %s3 = inlined_call_operand.vmem [shape: f32[1,96], index: 3, kind: input, shape index: {}]
  %s4 = inlined_call_operand.vmem [shape: f32[32,32], index: 4, kind: input, shape index: {}]
  %s5 = inlined_call_operand.vmem [shape: f32[1,32], index: 5, kind: input, shape index: {}]
  %s6 = inlined_call_operand.vmem [shape: f32[1,32], index: 6, kind: input, shape index: {}]
  %s7 = inlined_call_operand.vmem [shape: f32[1,32], index: 7, kind: input, shape index: {}]
  %s8 = inlined_call_operand.vmem [shape: f32[32,32], index: 8, kind: input, shape index: {}]
  %s9 = inlined_call_operand.vmem [shape: f32[1,32], index: 9, kind: input, shape index: {}]
  %s10 = inlined_call_operand.vmem [shape: f32[32,64], index: 10, kind: input, shape index: {}]
  %s11 = inlined_call_operand.vmem [shape: f32[1,64], index: 11, kind: input, shape index: {}]
  %s12 = inlined_call_operand.hbm [shape: f32[32,32], index: 12, kind: input, shape index: {}]
  %s13 = inlined_call_operand.vmem [shape: f32[1,32], index: 13, kind: input, shape index: {}]
  %s14 = inlined_call_operand.vmem [shape: f32[1,32], index: 14, kind: input, shape index: {}]
  %s15 = inlined_call_operand.vmem [shape: f32[1,32], index: 15, kind: input, shape index: {}]
  %s16 = inlined_call_operand.hbm [shape: f32[32,128], index: 16, kind: input, shape index: {}]
  %s17 = inlined_call_operand.vmem [shape: f32[1,128], index: 17, kind: input, shape index: {}]
  %s18 = inlined_call_operand.vmem [shape: f32[128,32], index: 18, kind: input, shape index: {}]
  %s19 = inlined_call_operand.vmem [shape: f32[1,32], index: 19, kind: input, shape index: {}]
  %s20 = inlined_call_operand.vmem [shape: f32[1,32], index: 20, kind: input, shape index: {}]
  %s21 = inlined_call_operand.vmem [shape: f32[1,32], index: 21, kind: input, shape index: {}]
  %s22 = inlined_call_operand.hbm [shape: f32[2,8,32], index: 22, kind: output, shape index: {}]
  %s23 = sld [smem:[#allocation0]]
  $region110: #{tpu_custom_call.1} parent=0
    _
  %s25 = ssub.s32 1, %s23
  %s26 = scalar_select 0, %s25, %s23
  $region1: #{tpu_custom_call.1} parent=0
    #allocation2 [shape = 'u8[8192]{0}', space=vmem, size = 0x2000, scoped, tag = 'input window, operand 0, single buffered']
    #allocation3 [shape = 's32[1]{0}', space=sflag, size = 0x4, scoped, tag = 'scoped memory for tpu_custom_call.1']
    #allocation4 [shape = 's32[1]{0}', space=sflag, size = 0x4, scoped, tag = 'scoped memory for tpu_custom_call.1']
    #allocation5 [shape = 'u8[16384]{0}', space=vmem, size = 0x4000, scoped, tag = 'input window, operand 12, single buffered']
    #allocation6 [shape = 's32[1]{0}', space=sflag, size = 0x4, scoped, tag = 'scoped memory for tpu_custom_call.1']
    #allocation7 [shape = 'u8[16384]{0}', space=vmem, size = 0x4000, scoped, tag = 'input window, operand 16, single buffered']
    #allocation8 [shape = 'u8[8192]{0}', space=vmem, size = 0x2000, scoped, tag = 'output window, operand 0, single buffered']
    %27 = vsyncpa [#allocation3], 0
    %28 = vsyncpa [#allocation6], 0
    %29 = vsyncpa [#allocation4], 0
    // Predicated region
    $region2: #{tpu_custom_call.1} parent=1 // pred_check
      _
    $region3: #{tpu_custom_call.1} parent=1 // pred_check_branch
      %31 = sbr.rel (0) target = $region5
    $region4: #{tpu_custom_call.1} parent=1 // pred_region
      %33 = vsyncadd [#allocation3], 0
      %s34 = sshll.u32 %s0, 4
      %s35 = int_to_ptr.hbm [resolvable:$true] %s34
      %s36 = sshll.u32 [#allocation2], 4
      %s37 = int_to_ptr.vmem [resolvable:$true] %s36
      %42 = dma.hbm_to_vmem [thread:$0]  %s35, 256, %s37, [#allocation3], 128, 128, 8
    $region5: #{tpu_custom_call.1} parent=1 // pred_fallthru
      _
    // Predicated region
    $region6: #{tpu_custom_call.1} parent=1 // pred_check
      _
    $region7: #{tpu_custom_call.1} parent=1 // pred_check_branch
      %44 = sbr.rel (0) target = $region9
    $region8: #{tpu_custom_call.1} parent=1 // pred_region
      _
    $region9: #{tpu_custom_call.1} parent=1 // pred_fallthru
      _
    // Predicated region
    $region10: #{tpu_custom_call.1} parent=1 // pred_check
      _
    $region11: #{tpu_custom_call.1} parent=1 // pred_check_branch
      %46 = sbr.rel (0) target = $region13
    $region12: #{tpu_custom_call.1} parent=1 // pred_region
      _
    $region13: #{tpu_custom_call.1} parent=1 // pred_fallthru
      _
    // Predicated region
    $region14: #{tpu_custom_call.1} parent=1 // pred_check
      _
    $region15: #{tpu_custom_call.1} parent=1 // pred_check_branch
      %48 = sbr.rel (0) target = $region17
    $region16: #{tpu_custom_call.1} parent=1 // pred_region
      _
    $region17: #{tpu_custom_call.1} parent=1 // pred_fallthru
      _
    // Predicated region
    $region18: #{tpu_custom_call.1} parent=1 // pred_check
      _
    $region19: #{tpu_custom_call.1} parent=1 // pred_check_branch
      %50 = sbr.rel (0) target = $region21
    $region20: #{tpu_custom_call.1} parent=1 // pred_region
      _
    $region21: #{tpu_custom_call.1} parent=1 // pred_fallthru
      _
    // Predicated region
    $region22: #{tpu_custom_call.1} parent=1 // pred_check
      _
    $region23: #{tpu_custom_call.1} parent=1 // pred_check_branch
      %52 = sbr.rel (0) target = $region25
    $region24: #{tpu_custom_call.1} parent=1 // pred_region
      _
    $region25: #{tpu_custom_call.1} parent=1 // pred_fallthru
      _
    // Predicated region
    $region26: #{tpu_custom_call.1} parent=1 // pred_check
      _
    $region27: #{tpu_custom_call.1} parent=1 // pred_check_branch
      %54 = sbr.rel (0) target = $region29
    $region28: #{tpu_custom_call.1} parent=1 // pred_region
      _
    $region29: #{tpu_custom_call.1} parent=1 // pred_fallthru
      _
    // Predicated region
    $region30: #{tpu_custom_call.1} parent=1 // pred_check
      _
    $region31: #{tpu_custom_call.1} parent=1 // pred_check_branch
      %56 = sbr.rel (0) target = $region33
    $region32: #{tpu_custom_call.1} parent=1 // pred_region
      _
    $region33: #{tpu_custom_call.1} parent=1 // pred_fallthru
      _
    // Predicated region
    $region34: #{tpu_custom_call.1} parent=1 // pred_check
      _
    $region35: #{tpu_custom_call.1} parent=1 // pred_check_branch
      %58 = sbr.rel (0) target = $region37
    $region36: #{tpu_custom_call.1} parent=1 // pred_region
      _
    $region37: #{tpu_custom_call.1} parent=1 // pred_fallthru
      _
    // Predicated region
    $region38: #{tpu_custom_call.1} parent=1 // pred_check
      _
    $region39: #{tpu_custom_call.1} parent=1 // pred_check_branch
      %60 = sbr.rel (0) target = $region41
    $region40: #{tpu_custom_call.1} parent=1 // pred_region
      _
    $region41: #{tpu_custom_call.1} parent=1 // pred_fallthru
      _
    // Predicated region
    $region42: #{tpu_custom_call.1} parent=1 // pred_check
      _
    $region43: #{tpu_custom_call.1} parent=1 // pred_check_branch
      %62 = sbr.rel (0) target = $region45
    $region44: #{tpu_custom_call.1} parent=1 // pred_region
      _
    $region45: #{tpu_custom_call.1} parent=1 // pred_fallthru
      _
    // Predicated region
    $region46: #{tpu_custom_call.1} parent=1 // pred_check
      _
    $region47: #{tpu_custom_call.1} parent=1 // pred_check_branch
      %64 = sbr.rel (0) target = $region49
    $region48: #{tpu_custom_call.1} parent=1 // pred_region
      _
    $region49: #{tpu_custom_call.1} parent=1 // pred_fallthru
      _
    // Predicated region
    $region50: #{tpu_custom_call.1} parent=1 // pred_check
      _
    $region51: #{tpu_custom_call.1} parent=1 // pred_check_branch
      %66 = sbr.rel (0) target = $region53
    $region52: #{tpu_custom_call.1} parent=1 // pred_region
      %68 = vsyncadd [#allocation6], 0
      %s69 = sshll.u32 %s12, 4
      %s70 = int_to_ptr.hbm [resolvable:$true] %s69
      %s71 = sshll.u32 [#allocation5], 4
      %s72 = int_to_ptr.vmem [resolvable:$true] %s71
      %77 = dma.hbm_to_vmem [thread:$0]  %s70, 512, %s72, [#allocation6], 128, 128, 8
    $region53: #{tpu_custom_call.1} parent=1 // pred_fallthru
      _
    // Predicated region
    $region54: #{tpu_custom_call.1} parent=1 // pred_check
      _
    $region55: #{tpu_custom_call.1} parent=1 // pred_check_branch
      %79 = sbr.rel (0) target = $region57
    $region56: #{tpu_custom_call.1} parent=1 // pred_region
      _
    $region57: #{tpu_custom_call.1} parent=1 // pred_fallthru
      _
    // Predicated region
    $region58: #{tpu_custom_call.1} parent=1 // pred_check
      _
    $region59: #{tpu_custom_call.1} parent=1 // pred_check_branch
      %81 = sbr.rel (0) target = $region61
    $region60: #{tpu_custom_call.1} parent=1 // pred_region
      _
    $region61: #{tpu_custom_call.1} parent=1 // pred_fallthru
      _
    // Predicated region
    $region62: #{tpu_custom_call.1} parent=1 // pred_check
      _
    $region63: #{tpu_custom_call.1} parent=1 // pred_check_branch
      %83 = sbr.rel (0) target = $region65
    $region64: #{tpu_custom_call.1} parent=1 // pred_region
      _
    $region65: #{tpu_custom_call.1} parent=1 // pred_fallthru
      _
    // Predicated region
    $region66: #{tpu_custom_call.1} parent=1 // pred_check
      _
    $region67: #{tpu_custom_call.1} parent=1 // pred_check_branch
      %85 = sbr.rel (0) target = $region69
    $region68: #{tpu_custom_call.1} parent=1 // pred_region
      %87 = vsyncadd [#allocation6], 0
      %s88 = sshll.u32 %s16, 4
      %s89 = int_to_ptr.hbm [resolvable:$true] %s88
      %s90 = sshll.u32 [#allocation7], 4
      %s91 = int_to_ptr.vmem [resolvable:$true] %s90
      %96 = dma.hbm_to_vmem [thread:$0]  %s89, 512, %s91, [#allocation6], 128, 128, 8
    $region69: #{tpu_custom_call.1} parent=1 // pred_fallthru
      _
    // Predicated region
    $region70: #{tpu_custom_call.1} parent=1 // pred_check
      _
    $region71: #{tpu_custom_call.1} parent=1 // pred_check_branch
      %98 = sbr.rel (0) target = $region73
    $region72: #{tpu_custom_call.1} parent=1 // pred_region
      _
    $region73: #{tpu_custom_call.1} parent=1 // pred_fallthru
      _
    // Predicated region
    $region74: #{tpu_custom_call.1} parent=1 // pred_check
      _
    $region75: #{tpu_custom_call.1} parent=1 // pred_check_branch
      %100 = sbr.rel (0) target = $region77
    $region76: #{tpu_custom_call.1} parent=1 // pred_region
      _
    $region77: #{tpu_custom_call.1} parent=1 // pred_fallthru
      _
    // Predicated region
    $region78: #{tpu_custom_call.1} parent=1 // pred_check
      _
    $region79: #{tpu_custom_call.1} parent=1 // pred_check_branch
      %102 = sbr.rel (0) target = $region81
    $region80: #{tpu_custom_call.1} parent=1 // pred_region
      _
    $region81: #{tpu_custom_call.1} parent=1 // pred_fallthru
      _
    // Predicated region
    $region82: #{tpu_custom_call.1} parent=1 // pred_check
      _
    $region83: #{tpu_custom_call.1} parent=1 // pred_check_branch
      %104 = sbr.rel (0) target = $region85
    $region84: #{tpu_custom_call.1} parent=1 // pred_region
      _
    $region85: #{tpu_custom_call.1} parent=1 // pred_fallthru
      _
    // Predicated region
    $region86: #{tpu_custom_call.1} parent=1 // pred_check
      _
    $region87: #{tpu_custom_call.1} parent=1 // pred_check_branch
      %106 = sbr.rel (0) target = $region89
    $region88: #{tpu_custom_call.1} parent=1 // pred_region
      _
    $region89: #{tpu_custom_call.1} parent=1 // pred_fallthru
      _
    // Predicated region
    $region90: #{tpu_custom_call.1} parent=1 // pred_check
      _
    $region91: #{tpu_custom_call.1} parent=1 // pred_check_branch
      %108 = sbr.rel (0) target = $region93
    $region92: #{tpu_custom_call.1} parent=1 // pred_region
      %110 = dma.done [#allocation3], 256
    $region93: #{tpu_custom_call.1} parent=1 // pred_fallthru
      _
    // Predicated region
    $region94: #{tpu_custom_call.1} parent=1 // pred_check
      _
    $region95: #{tpu_custom_call.1} parent=1 // pred_check_branch
      %112 = sbr.rel (0) target = $region97
    $region96: #{tpu_custom_call.1} parent=1 // pred_region
      %114 = dma.done [#allocation6], 512
    $region97: #{tpu_custom_call.1} parent=1 // pred_fallthru
      _
    // Predicated region
    $region98: #{tpu_custom_call.1} parent=1 // pred_check
      _
    $region99: #{tpu_custom_call.1} parent=1 // pred_check_branch
      %116 = sbr.rel (0) target = $region101
    $region100: #{tpu_custom_call.1} parent=1 // pred_region
      %118 = dma.done [#allocation6], 512
    $region101: #{tpu_custom_call.1} parent=1 // pred_fallthru
      _
    %v119 = vld [vmem:[#allocation2] sm:$0xff]
    %v120 = vld [vmem:[#allocation2 + $0x8] sm:$0xff]
    %v121 = vld [vmem:[%s1] sm:$0xff]
    %v122 = vld [vmem:[%s1 + $0x8] sm:$0xff]
    %v123 = vld [vmem:[%s1 + $0x10] sm:$0xff]
    %v124 = vld [vmem:[%s1 + $0x18] sm:$0xff]
    %v125 = vld [vmem:[%s2] sm:$0xff]
    %v126 = vld [vmem:[%s2 + $0x8] sm:$0xff]
    %v127 = vld [vmem:[%s2 + $0x10] sm:$0xff]
    %v128 = vld [vmem:[%s2 + $0x18] sm:$0xff]
    %v129 = vld [vmem:[%s3] sm:$0x1]
    %v131 = vperm.slane %v129, 0
    %vm133 = vcmask 261120
    %v135 = vsel %vm133, %v119, 0
    %v138 = vsel %vm133, %v120, 0
    %140 = vmatpush.msra.mxu0 0.0
    %141 = vmatpush.msra.mxu0 0.0
    %142 = vmatpush.msra.mxu0 0.0
    %143 = vmatpush.msra.mxu0 0.0
    %144 = vmatpush.msra.mxu0 0.0
    %145 = vmatpush.msra.mxu0 0.0
    %146 = vmatpush.msra.mxu0 0.0
    %147 = vmatpush.msra.mxu0 0.0
    %148 = vmatpush.msra.mxu0 0.0
    %149 = vmatpush.msra.mxu0 0.0
    %150 = vmatpush.msra.mxu0 0.0
    %151 = vmatpush.msra.mxu0 0.0
    %152 = vmatpush.msra.mxu0 %v128
    %153 = vmatpush.msra.mxu0 %v127
    %154 = vmatpush.msra.mxu0 %v126
    %155 = vmatpush.msra.mxu0 %v125
    %156 = vmatmul.f32.gmra.mxu0 %v135
    %v157 = vpop.f32.mrf.mxu0
    %v158 = vadd.f32 %v131, %v157
    %159 = vmatmul.f32.gmra.mxu0 %v138
    %v160 = vpop.f32.mrf.mxu0
    %v161 = vadd.f32 %v131, %v160
    %162 = vdwg.mxu0
    %v163 = vld [vmem:[%s4] sm:$0xff]
    %v164 = vld [vmem:[%s4 + $0x8] sm:$0xff]
    %v165 = vld [vmem:[%s4 + $0x10] sm:$0xff]
    %v166 = vld [vmem:[%s4 + $0x18] sm:$0xff]
    %v167 = vld [vmem:[%s5] sm:$0x1]
    %169 = vrot.lane.b32.xlu0 %v158, 96
    %v170 = vpop.permute.xlu0 %169
    %vm171 = vcmask 64512
    %v172 = vsel %vm171, %v158, 0
    %v174 = vsel %vm171, %v170, 0
    %176 = vmatpush.xpose.msra.mxu0 0.0
    %177 = vmatpush.xpose.msra.mxu0 0.0
    %178 = vmatpush.xpose.msra.mxu0 0.0
    %179 = vmatpush.xpose.msra.mxu0 0.0
    %180 = vmatpush.xpose.msra.mxu0 0.0
    %181 = vmatpush.xpose.msra.mxu0 0.0
    %182 = vmatpush.xpose.msra.mxu0 0.0
    %183 = vmatpush.xpose.msra.mxu0 0.0
    %184 = vmatpush.xpose.msra.mxu0 0.0
    %185 = vmatpush.xpose.msra.mxu0 0.0
    %186 = vmatpush.xpose.msra.mxu0 0.0
    %187 = vmatpush.xpose.msra.mxu0 0.0
    %188 = vmatpush.xpose.msra.mxu0 0.0
    %189 = vmatpush.xpose.msra.mxu0 0.0
    %190 = vmatpush.xpose.msra.mxu0 0.0
    %191 = vmatpush.xpose.msra.mxu0 %v174
    %192 = vmatmul.f32.gmra.mxu0 %v172
    %v193 = vpop.f32.mrf.mxu0
    %v194 = vadd.f32 0.0, %v193
    %195 = vdwg.mxu0
    %197 = vrot.lane.b32.xlu0 %v161, 96
    %v198 = vpop.permute.xlu0 %197
    %v199 = vsel %vm171, %v161, 0
    %v201 = vsel %vm171, %v198, 0
    %203 = vmatpush.xpose.msra.mxu0 0.0
    %204 = vmatpush.xpose.msra.mxu0 0.0
    %205 = vmatpush.xpose.msra.mxu0 0.0
    %206 = vmatpush.xpose.msra.mxu0 0.0
    %207 = vmatpush.xpose.msra.mxu0 0.0
    %208 = vmatpush.xpose.msra.mxu0 0.0
    %209 = vmatpush.xpose.msra.mxu0 0.0
    %210 = vmatpush.xpose.msra.mxu0 0.0
    %211 = vmatpush.xpose.msra.mxu0 0.0
    %212 = vmatpush.xpose.msra.mxu0 0.0
    %213 = vmatpush.xpose.msra.mxu0 0.0
    %214 = vmatpush.xpose.msra.mxu0 0.0
    %215 = vmatpush.xpose.msra.mxu0 0.0
    %216 = vmatpush.xpose.msra.mxu0 0.0
    %217 = vmatpush.xpose.msra.mxu0 0.0
    %218 = vmatpush.xpose.msra.mxu0 %v201
    %219 = vmatmul.f32.gmra.mxu0 %v199
    %v220 = vpop.f32.mrf.mxu0
    %v221 = vadd.f32 0.0, %v220
    %222 = vdwg.mxu0
    %v223 = vsel %vm171, %v194, -inf
    %224 = vmax.xlane.f32.xlu0 %v223
    %v225 = vpop.xlane.xlu0 %224
    %v226 = vsel %vm171, %v221, -inf
    %227 = vmax.xlane.f32.xlu0 %v226
    %v228 = vpop.xlane.xlu0 %227
    %v229 = vsub.f32 %v194, %v225
    %v230 = vsub.f32 %v221, %v228
    %v231 = vmul.f32 %v229, 1.442695
    %v232 = vpow.pop %v231
    %v233 = vmul.f32 %v230, 1.442695
    %v234 = vpow.pop %v233
    %v235 = vsel %vm171, %v232, 0.0
    %236 = vadd.xlane.f32.xlu0 %v235
    %v237 = vpop.xlane.xlu0 %236
    %v238 = vsel %vm171, %v234, 0.0
    %239 = vadd.xlane.f32.xlu0 %v238
    %v240 = vpop.xlane.xlu0 %239
    %v241 = vrcp.pop %v237
    %v242 = vrcp.pop %v240
    %v243 = vmul.f32 %v232, %v241
    %v244 = vmul.f32 %v234, %v242
    %245 = vrot.lane.b32.xlu0 %v158, 64
    %v246 = vpop.permute.xlu0 %245
    %v249 = vsel %vm171, %v243, 0
    %251 = vmatpush.msra.mxu0 0.0
    %252 = vmatpush.msra.mxu0 0.0
    %253 = vmatpush.msra.mxu0 0.0
    %254 = vmatpush.msra.mxu0 0.0
    %255 = vmatpush.msra.mxu0 0.0
    %256 = vmatpush.msra.mxu0 0.0
    %257 = vmatpush.msra.mxu0 0.0
    %258 = vmatpush.msra.mxu0 0.0
    %259 = vmatpush.msra.mxu0 0.0
    %260 = vmatpush.msra.mxu0 0.0
    %261 = vmatpush.msra.mxu0 0.0
    %262 = vmatpush.msra.mxu0 0.0
    %263 = vmatpush.msra.mxu0 0.0
    %264 = vmatpush.msra.mxu0 0.0
    %265 = vmatpush.msra.mxu0 0.0
    %266 = vmatpush.msra.mxu0 %v246
    %267 = vmatmul.f32.gmra.mxu0 %v249
    %v268 = vpop.f32.mrf.mxu0
    %v269 = vadd.f32 0.0, %v268
    %270 = vdwg.mxu0
    %271 = vrot.lane.b32.xlu0 %v161, 64
    %v272 = vpop.permute.xlu0 %271
    %v275 = vsel %vm171, %v244, 0
    %277 = vmatpush.msra.mxu0 0.0
    %278 = vmatpush.msra.mxu0 0.0
    %279 = vmatpush.msra.mxu0 0.0
    %280 = vmatpush.msra.mxu0 0.0
    %281 = vmatpush.msra.mxu0 0.0
    %282 = vmatpush.msra.mxu0 0.0
    %283 = vmatpush.msra.mxu0 0.0
    %284 = vmatpush.msra.mxu0 0.0
    %285 = vmatpush.msra.mxu0 0.0
    %286 = vmatpush.msra.mxu0 0.0
    %287 = vmatpush.msra.mxu0 0.0
    %288 = vmatpush.msra.mxu0 0.0
    %289 = vmatpush.msra.mxu0 0.0
    %290 = vmatpush.msra.mxu0 0.0
    %291 = vmatpush.msra.mxu0 0.0
    %292 = vmatpush.msra.mxu0 %v272
    %293 = vmatmul.f32.gmra.mxu0 %v275
    %v294 = vpop.f32.mrf.mxu0
    %v295 = vadd.f32 0.0, %v294
    %296 = vdwg.mxu0
    %297 = vrot.lane.b32.xlu0 %v158, 120
    %v298 = vpop.permute.xlu0 %297
    %299 = vrot.lane.b32.xlu0 %v158, 88
    %v300 = vpop.permute.xlu0 %299
    %v301 = vsel %vm171, %v298, 0
    %v303 = vsel %vm171, %v300, 0
    %305 = vmatpush.xpose.msra.mxu0 0.0
    %306 = vmatpush.xpose.msra.mxu0 0.0
    %307 = vmatpush.xpose.msra.mxu0 0.0
    %308 = vmatpush.xpose.msra.mxu0 0.0
    %309 = vmatpush.xpose.msra.mxu0 0.0
    %310 = vmatpush.xpose.msra.mxu0 0.0
    %311 = vmatpush.xpose.msra.mxu0 0.0
    %312 = vmatpush.xpose.msra.mxu0 0.0
    %313 = vmatpush.xpose.msra.mxu0 0.0
    %314 = vmatpush.xpose.msra.mxu0 0.0
    %315 = vmatpush.xpose.msra.mxu0 0.0
    %316 = vmatpush.xpose.msra.mxu0 0.0
    %317 = vmatpush.xpose.msra.mxu0 0.0
    %318 = vmatpush.xpose.msra.mxu0 0.0
    %319 = vmatpush.xpose.msra.mxu0 0.0
    %320 = vmatpush.xpose.msra.mxu0 %v303
    %321 = vmatmul.f32.gmra.mxu0 %v301
    %v322 = vpop.f32.mrf.mxu0
    %v323 = vadd.f32 0.0, %v322
    %324 = vdwg.mxu0
    %325 = vrot.lane.b32.xlu0 %v161, 120
    %v326 = vpop.permute.xlu0 %325
    %327 = vrot.lane.b32.xlu0 %v161, 88
    %v328 = vpop.permute.xlu0 %327
    %v329 = vsel %vm171, %v326, 0
    %v331 = vsel %vm171, %v328, 0
    %333 = vmatpush.xpose.msra.mxu0 0.0
    %334 = vmatpush.xpose.msra.mxu0 0.0
    %335 = vmatpush.xpose.msra.mxu0 0.0
    %336 = vmatpush.xpose.msra.mxu0 0.0
    %337 = vmatpush.xpose.msra.mxu0 0.0
    %338 = vmatpush.xpose.msra.mxu0 0.0
    %339 = vmatpush.xpose.msra.mxu0 0.0
    %340 = vmatpush.xpose.msra.mxu0 0.0
    %341 = vmatpush.xpose.msra.mxu0 0.0
    %342 = vmatpush.xpose.msra.mxu0 0.0
    %343 = vmatpush.xpose.msra.mxu0 0.0
    %344 = vmatpush.xpose.msra.mxu0 0.0
    %345 = vmatpush.xpose.msra.mxu0 0.0
    %346 = vmatpush.xpose.msra.mxu0 0.0
    %347 = vmatpush.xpose.msra.mxu0 0.0
    %348 = vmatpush.xpose.msra.mxu0 %v331
    %349 = vmatmul.f32.gmra.mxu0 %v329
    %v350 = vpop.f32.mrf.mxu0
    %v351 = vadd.f32 0.0, %v350
    %352 = vdwg.mxu0
    %v353 = vsel %vm171, %v323, -inf
    %354 = vmax.xlane.f32.xlu0 %v353
    %v355 = vpop.xlane.xlu0 %354
    %v356 = vsel %vm171, %v351, -inf
    %357 = vmax.xlane.f32.xlu0 %v356
    %v358 = vpop.xlane.xlu0 %357
    %v359 = vsub.f32 %v323, %v355
    %v360 = vsub.f32 %v351, %v358
    %v361 = vmul.f32 %v359, 1.442695
    %v362 = vpow.pop %v361
    %v363 = vmul.f32 %v360, 1.442695
    %v364 = vpow.pop %v363
    %v365 = vsel %vm171, %v362, 0.0
    %366 = vadd.xlane.f32.xlu0 %v365
    %v367 = vpop.xlane.xlu0 %366
    %v368 = vsel %vm171, %v364, 0.0
    %369 = vadd.xlane.f32.xlu0 %v368
    %v370 = vpop.xlane.xlu0 %369
    %v371 = vrcp.pop %v367
    %v372 = vrcp.pop %v370
    %v373 = vmul.f32 %v362, %v371
    %v374 = vmul.f32 %v364, %v372
    %375 = vrot.lane.b32.xlu0 %v158, 56
    %v376 = vpop.permute.xlu0 %375
    %v379 = vsel %vm171, %v373, 0
    %381 = vmatpush.msra.mxu0 0.0
    %382 = vmatpush.msra.mxu0 0.0
    %383 = vmatpush.msra.mxu0 0.0
    %384 = vmatpush.msra.mxu0 0.0
    %385 = vmatpush.msra.mxu0 0.0
    %386 = vmatpush.msra.mxu0 0.0
    %387 = vmatpush.msra.mxu0 0.0
    %388 = vmatpush.msra.mxu0 0.0
    %389 = vmatpush.msra.mxu0 0.0
    %390 = vmatpush.msra.mxu0 0.0
    %391 = vmatpush.msra.mxu0 0.0
    %392 = vmatpush.msra.mxu0 0.0
    %393 = vmatpush.msra.mxu0 0.0
    %394 = vmatpush.msra.mxu0 0.0
    %395 = vmatpush.msra.mxu0 0.0
    %396 = vmatpush.msra.mxu0 %v376
    %397 = vmatmul.f32.gmra.mxu0 %v379
    %v398 = vpop.f32.mrf.mxu0
    %v399 = vadd.f32 0.0, %v398
    %400 = vdwg.mxu0
    %401 = vrot.lane.b32.xlu0 %v161, 56
    %v402 = vpop.permute.xlu0 %401
    %v405 = vsel %vm171, %v374, 0
    %407 = vmatpush.msra.mxu0 0.0
    %408 = vmatpush.msra.mxu0 0.0
    %409 = vmatpush.msra.mxu0 0.0
    %410 = vmatpush.msra.mxu0 0.0
    %411 = vmatpush.msra.mxu0 0.0
    %412 = vmatpush.msra.mxu0 0.0
    %413 = vmatpush.msra.mxu0 0.0
    %414 = vmatpush.msra.mxu0 0.0
    %415 = vmatpush.msra.mxu0 0.0
    %416 = vmatpush.msra.mxu0 0.0
    %417 = vmatpush.msra.mxu0 0.0
    %418 = vmatpush.msra.mxu0 0.0
    %419 = vmatpush.msra.mxu0 0.0
    %420 = vmatpush.msra.mxu0 0.0
    %421 = vmatpush.msra.mxu0 0.0
    %422 = vmatpush.msra.mxu0 %v402
    %423 = vmatmul.f32.gmra.mxu0 %v405
    %v424 = vpop.f32.mrf.mxu0
    %v425 = vadd.f32 0.0, %v424
    %426 = vdwg.mxu0
    %427 = vrot.lane.b32.xlu0 %v158, 112
    %v428 = vpop.permute.xlu0 %427
    %429 = vrot.lane.b32.xlu0 %v158, 80
    %v430 = vpop.permute.xlu0 %429
    %v431 = vsel %vm171, %v428, 0
    %v433 = vsel %vm171, %v430, 0
    %435 = vmatpush.xpose.msra.mxu0 0.0
    %436 = vmatpush.xpose.msra.mxu0 0.0
    %437 = vmatpush.xpose.msra.mxu0 0.0
    %438 = vmatpush.xpose.msra.mxu0 0.0
    %439 = vmatpush.xpose.msra.mxu0 0.0
    %440 = vmatpush.xpose.msra.mxu0 0.0
    %441 = vmatpush.xpose.msra.mxu0 0.0
    %442 = vmatpush.xpose.msra.mxu0 0.0
    %443 = vmatpush.xpose.msra.mxu0 0.0
    %444 = vmatpush.xpose.msra.mxu0 0.0
    %445 = vmatpush.xpose.msra.mxu0 0.0
    %446 = vmatpush.xpose.msra.mxu0 0.0
    %447 = vmatpush.xpose.msra.mxu0 0.0
    %448 = vmatpush.xpose.msra.mxu0 0.0
    %449 = vmatpush.xpose.msra.mxu0 0.0
    %450 = vmatpush.xpose.msra.mxu0 %v433
    %451 = vmatmul.f32.gmra.mxu0 %v431
    %v452 = vpop.f32.mrf.mxu0
    %v453 = vadd.f32 0.0, %v452
    %454 = vdwg.mxu0
    %455 = vrot.lane.b32.xlu0 %v161, 112
    %v456 = vpop.permute.xlu0 %455
    %457 = vrot.lane.b32.xlu0 %v161, 80
    %v458 = vpop.permute.xlu0 %457
    %v459 = vsel %vm171, %v456, 0
    %v461 = vsel %vm171, %v458, 0
    %463 = vmatpush.xpose.msra.mxu0 0.0
    %464 = vmatpush.xpose.msra.mxu0 0.0
    %465 = vmatpush.xpose.msra.mxu0 0.0
    %466 = vmatpush.xpose.msra.mxu0 0.0
    %467 = vmatpush.xpose.msra.mxu0 0.0
    %468 = vmatpush.xpose.msra.mxu0 0.0
    %469 = vmatpush.xpose.msra.mxu0 0.0
    %470 = vmatpush.xpose.msra.mxu0 0.0
    %471 = vmatpush.xpose.msra.mxu0 0.0
    %472 = vmatpush.xpose.msra.mxu0 0.0
    %473 = vmatpush.xpose.msra.mxu0 0.0
    %474 = vmatpush.xpose.msra.mxu0 0.0
    %475 = vmatpush.xpose.msra.mxu0 0.0
    %476 = vmatpush.xpose.msra.mxu0 0.0
    %477 = vmatpush.xpose.msra.mxu0 0.0
    %478 = vmatpush.xpose.msra.mxu0 %v461
    %479 = vmatmul.f32.gmra.mxu0 %v459
    %v480 = vpop.f32.mrf.mxu0
    %v481 = vadd.f32 0.0, %v480
    %482 = vdwg.mxu0
    %v483 = vsel %vm171, %v453, -inf
    %484 = vmax.xlane.f32.xlu0 %v483
    %v485 = vpop.xlane.xlu0 %484
    %v486 = vsel %vm171, %v481, -inf
    %487 = vmax.xlane.f32.xlu0 %v486
    %v488 = vpop.xlane.xlu0 %487
    %v489 = vsub.f32 %v453, %v485
    %v490 = vsub.f32 %v481, %v488
    %v491 = vmul.f32 %v489, 1.442695
    %v492 = vpow.pop %v491
    %v493 = vmul.f32 %v490, 1.442695
    %v494 = vpow.pop %v493
    %v495 = vsel %vm171, %v492, 0.0
    %496 = vadd.xlane.f32.xlu0 %v495
    %v497 = vpop.xlane.xlu0 %496
    %v498 = vsel %vm171, %v494, 0.0
    %499 = vadd.xlane.f32.xlu0 %v498
    %v500 = vpop.xlane.xlu0 %499
    %v501 = vrcp.pop %v497
    %v502 = vrcp.pop %v500
    %v503 = vmul.f32 %v492, %v501
    %v504 = vmul.f32 %v494, %v502
    %505 = vrot.lane.b32.xlu0 %v158, 48
    %v506 = vpop.permute.xlu0 %505
    %v509 = vsel %vm171, %v503, 0
    %511 = vmatpush.msra.mxu0 0.0
    %512 = vmatpush.msra.mxu0 0.0
    %513 = vmatpush.msra.mxu0 0.0
    %514 = vmatpush.msra.mxu0 0.0
    %515 = vmatpush.msra.mxu0 0.0
    %516 = vmatpush.msra.mxu0 0.0
    %517 = vmatpush.msra.mxu0 0.0
    %518 = vmatpush.msra.mxu0 0.0
    %519 = vmatpush.msra.mxu0 0.0
    %520 = vmatpush.msra.mxu0 0.0
    %521 = vmatpush.msra.mxu0 0.0
    %522 = vmatpush.msra.mxu0 0.0
    %523 = vmatpush.msra.mxu0 0.0
    %524 = vmatpush.msra.mxu0 0.0
    %525 = vmatpush.msra.mxu0 0.0
    %526 = vmatpush.msra.mxu0 %v506
    %527 = vmatmul.f32.gmra.mxu0 %v509
    %v528 = vpop.f32.mrf.mxu0
    %v529 = vadd.f32 0.0, %v528
    %530 = vdwg.mxu0
    %531 = vrot.lane.b32.xlu0 %v161, 48
    %v532 = vpop.permute.xlu0 %531
    %v535 = vsel %vm171, %v504, 0
    %537 = vmatpush.msra.mxu0 0.0
    %538 = vmatpush.msra.mxu0 0.0
    %539 = vmatpush.msra.mxu0 0.0
    %540 = vmatpush.msra.mxu0 0.0
    %541 = vmatpush.msra.mxu0 0.0
    %542 = vmatpush.msra.mxu0 0.0
    %543 = vmatpush.msra.mxu0 0.0
    %544 = vmatpush.msra.mxu0 0.0
    %545 = vmatpush.msra.mxu0 0.0
    %546 = vmatpush.msra.mxu0 0.0
    %547 = vmatpush.msra.mxu0 0.0
    %548 = vmatpush.msra.mxu0 0.0
    %549 = vmatpush.msra.mxu0 0.0
    %550 = vmatpush.msra.mxu0 0.0
    %551 = vmatpush.msra.mxu0 0.0
    %552 = vmatpush.msra.mxu0 %v532
    %553 = vmatmul.f32.gmra.mxu0 %v535
    %v554 = vpop.f32.mrf.mxu0
    %v555 = vadd.f32 0.0, %v554
    %556 = vdwg.mxu0
    %557 = vrot.lane.b32.xlu0 %v158, 104
    %v558 = vpop.permute.xlu0 %557
    %559 = vrot.lane.b32.xlu0 %v158, 72
    %v560 = vpop.permute.xlu0 %559
    %v561 = vsel %vm171, %v558, 0
    %v563 = vsel %vm171, %v560, 0
    %565 = vmatpush.xpose.msra.mxu0 0.0
    %566 = vmatpush.xpose.msra.mxu0 0.0
    %567 = vmatpush.xpose.msra.mxu0 0.0
    %568 = vmatpush.xpose.msra.mxu0 0.0
    %569 = vmatpush.xpose.msra.mxu0 0.0
    %570 = vmatpush.xpose.msra.mxu0 0.0
    %571 = vmatpush.xpose.msra.mxu0 0.0
    %572 = vmatpush.xpose.msra.mxu0 0.0
    %573 = vmatpush.xpose.msra.mxu0 0.0
    %574 = vmatpush.xpose.msra.mxu0 0.0
    %575 = vmatpush.xpose.msra.mxu0 0.0
    %576 = vmatpush.xpose.msra.mxu0 0.0
    %577 = vmatpush.xpose.msra.mxu0 0.0
    %578 = vmatpush.xpose.msra.mxu0 0.0
    %579 = vmatpush.xpose.msra.mxu0 0.0
    %580 = vmatpush.xpose.msra.mxu0 %v563
    %581 = vmatmul.f32.gmra.mxu0 %v561
    %v582 = vpop.f32.mrf.mxu0
    %v583 = vadd.f32 0.0, %v582
    %584 = vdwg.mxu0
    %585 = vrot.lane.b32.xlu0 %v161, 104
    %v586 = vpop.permute.xlu0 %585
    %587 = vrot.lane.b32.xlu0 %v161, 72
    %v588 = vpop.permute.xlu0 %587
    %v589 = vsel %vm171, %v586, 0
    %v591 = vsel %vm171, %v588, 0
    %593 = vmatpush.xpose.msra.mxu0 0.0
    %594 = vmatpush.xpose.msra.mxu0 0.0
    %595 = vmatpush.xpose.msra.mxu0 0.0
    %596 = vmatpush.xpose.msra.mxu0 0.0
    %597 = vmatpush.xpose.msra.mxu0 0.0
    %598 = vmatpush.xpose.msra.mxu0 0.0
    %599 = vmatpush.xpose.msra.mxu0 0.0
    %600 = vmatpush.xpose.msra.mxu0 0.0
    %601 = vmatpush.xpose.msra.mxu0 0.0
    %602 = vmatpush.xpose.msra.mxu0 0.0
    %603 = vmatpush.xpose.msra.mxu0 0.0
    %604 = vmatpush.xpose.msra.mxu0 0.0
    %605 = vmatpush.xpose.msra.mxu0 0.0
    %606 = vmatpush.xpose.msra.mxu0 0.0
    %607 = vmatpush.xpose.msra.mxu0 0.0
    %608 = vmatpush.xpose.msra.mxu0 %v591
    %609 = vmatmul.f32.gmra.mxu0 %v589
    %v610 = vpop.f32.mrf.mxu0
    %v611 = vadd.f32 0.0, %v610
    %612 = vdwg.mxu0
    %v613 = vsel %vm171, %v583, -inf
    %614 = vmax.xlane.f32.xlu0 %v613
    %v615 = vpop.xlane.xlu0 %614
    %v616 = vsel %vm171, %v611, -inf
    %617 = vmax.xlane.f32.xlu0 %v616
    %v618 = vpop.xlane.xlu0 %617
    %v619 = vsub.f32 %v583, %v615
    %v620 = vsub.f32 %v611, %v618
    %v621 = vmul.f32 %v619, 1.442695
    %v622 = vpow.pop %v621
    %v623 = vmul.f32 %v620, 1.442695
    %v624 = vpow.pop %v623
    %v625 = vsel %vm171, %v622, 0.0
    %626 = vadd.xlane.f32.xlu0 %v625
    %v627 = vpop.xlane.xlu0 %626
    %v628 = vsel %vm171, %v624, 0.0
    %629 = vadd.xlane.f32.xlu0 %v628
    %v630 = vpop.xlane.xlu0 %629
    %v631 = vrcp.pop %v627
    %v632 = vrcp.pop %v630
    %v633 = vmul.f32 %v622, %v631
    %v634 = vmul.f32 %v624, %v632
    %635 = vrot.lane.b32.xlu0 %v158, 40
    %v636 = vpop.permute.xlu0 %635
    %v639 = vsel %vm171, %v633, 0
    %641 = vmatpush.msra.mxu0 0.0
    %642 = vmatpush.msra.mxu0 0.0
    %643 = vmatpush.msra.mxu0 0.0
    %644 = vmatpush.msra.mxu0 0.0
    %645 = vmatpush.msra.mxu0 0.0
    %646 = vmatpush.msra.mxu0 0.0
    %647 = vmatpush.msra.mxu0 0.0
    %648 = vmatpush.msra.mxu0 0.0
    %649 = vmatpush.msra.mxu0 0.0
    %650 = vmatpush.msra.mxu0 0.0
    %651 = vmatpush.msra.mxu0 0.0
    %652 = vmatpush.msra.mxu0 0.0
    %653 = vmatpush.msra.mxu0 0.0
    %654 = vmatpush.msra.mxu0 0.0
    %655 = vmatpush.msra.mxu0 0.0
    %656 = vmatpush.msra.mxu0 %v636
    %657 = vmatmul.f32.gmra.mxu0 %v639
    %v658 = vpop.f32.mrf.mxu0
    %v659 = vadd.f32 0.0, %v658
    %660 = vdwg.mxu0
    %661 = vrot.lane.b32.xlu0 %v161, 40
    %v662 = vpop.permute.xlu0 %661
    %v665 = vsel %vm171, %v634, 0
    %667 = vmatpush.msra.mxu0 0.0
    %668 = vmatpush.msra.mxu0 0.0
    %669 = vmatpush.msra.mxu0 0.0
    %670 = vmatpush.msra.mxu0 0.0
    %671 = vmatpush.msra.mxu0 0.0
    %672 = vmatpush.msra.mxu0 0.0
    %673 = vmatpush.msra.mxu0 0.0
    %674 = vmatpush.msra.mxu0 0.0
    %675 = vmatpush.msra.mxu0 0.0
    %676 = vmatpush.msra.mxu0 0.0
    %677 = vmatpush.msra.mxu0 0.0
    %678 = vmatpush.msra.mxu0 0.0
    %679 = vmatpush.msra.mxu0 0.0
    %680 = vmatpush.msra.mxu0 0.0
    %681 = vmatpush.msra.mxu0 0.0
    %682 = vmatpush.msra.mxu0 %v662
    %683 = vmatmul.f32.gmra.mxu0 %v665
    %v684 = vpop.f32.mrf.mxu0
    %v685 = vadd.f32 0.0, %v684
    %686 = vdwg.mxu0
    %v688 = vsel %vm171, %v399, 0
    %v691 = vsel %vm171, %v425, 0
    %693 = vmatpush.msra.mxu0 0.0
    %694 = vmatpush.msra.mxu0 0.0
    %695 = vmatpush.msra.mxu0 0.0
    %696 = vmatpush.msra.mxu0 0.0
    %697 = vmatpush.msra.mxu0 0.0
    %698 = vmatpush.msra.mxu0 0.0
    %699 = vmatpush.msra.mxu0 0.0
    %700 = vmatpush.msra.mxu0 0.0
    %701 = vmatpush.msra.mxu0 0.0
    %702 = vmatpush.msra.mxu0 0.0
    %703 = vmatpush.msra.mxu0 0.0
    %704 = vmatpush.msra.mxu0 0.0
    %705 = vmatpush.msra.mxu0 0.0
    %706 = vmatpush.msra.mxu0 0.0
    %707 = vmatpush.msra.mxu0 0.0
    %708 = vmatpush.msra.mxu0 %v164
    %709 = vmatmul.f32.gmra.mxu0 %v688
    %v710 = vpop.f32.mrf.mxu0
    %v711 = vadd.f32 0.0, %v710
    %712 = vmatmul.f32.gmra.mxu0 %v691
    %v713 = vpop.f32.mrf.mxu0
    %v714 = vadd.f32 0.0, %v713
    %715 = vdwg.mxu0
    %v717 = vsel %vm171, %v269, 0
    %v720 = vsel %vm171, %v295, 0
    %722 = vmatpush.msra.mxu0 0.0
    %723 = vmatpush.msra.mxu0 0.0
    %724 = vmatpush.msra.mxu0 0.0
    %725 = vmatpush.msra.mxu0 0.0
    %726 = vmatpush.msra.mxu0 0.0
    %727 = vmatpush.msra.mxu0 0.0
    %728 = vmatpush.msra.mxu0 0.0
    %729 = vmatpush.msra.mxu0 0.0
    %730 = vmatpush.msra.mxu0 0.0
    %731 = vmatpush.msra.mxu0 0.0
    %732 = vmatpush.msra.mxu0 0.0
    %733 = vmatpush.msra.mxu0 0.0
    %734 = vmatpush.msra.mxu0 0.0
    %735 = vmatpush.msra.mxu0 0.0
    %736 = vmatpush.msra.mxu0 0.0
    %737 = vmatpush.msra.mxu0 %v163
    %738 = vmatmul.f32.gmra.mxu0 %v717
    %v739 = vpop.f32.mrf.mxu0
    %v740 = vadd.f32 %v711, %v739
    %741 = vmatmul.f32.gmra.mxu0 %v720
    %v742 = vpop.f32.mrf.mxu0
    %v743 = vadd.f32 %v714, %v742
    %744 = vdwg.mxu0
    %v746 = vsel %vm171, %v529, 0
    %v749 = vsel %vm171, %v555, 0
    %751 = vmatpush.msra.mxu0 0.0
    %752 = vmatpush.msra.mxu0 0.0
    %753 = vmatpush.msra.mxu0 0.0
    %754 = vmatpush.msra.mxu0 0.0
    %755 = vmatpush.msra.mxu0 0.0
    %756 = vmatpush.msra.mxu0 0.0
    %757 = vmatpush.msra.mxu0 0.0
    %758 = vmatpush.msra.mxu0 0.0
    %759 = vmatpush.msra.mxu0 0.0
    %760 = vmatpush.msra.mxu0 0.0
    %761 = vmatpush.msra.mxu0 0.0
    %762 = vmatpush.msra.mxu0 0.0
    %763 = vmatpush.msra.mxu0 0.0
    %764 = vmatpush.msra.mxu0 0.0
    %765 = vmatpush.msra.mxu0 0.0
    %766 = vmatpush.msra.mxu0 %v165
    %767 = vmatmul.f32.gmra.mxu0 %v746
    %v768 = vpop.f32.mrf.mxu0
    %v769 = vadd.f32 0.0, %v768
    %770 = vmatmul.f32.gmra.mxu0 %v749
    %v771 = vpop.f32.mrf.mxu0
    %v772 = vadd.f32 0.0, %v771
    %773 = vdwg.mxu0
    %v774 = vadd.f32 %v740, %v769
    %v775 = vadd.f32 %v743, %v772
    %v777 = vsel %vm171, %v659, 0
    %v780 = vsel %vm171, %v685, 0
    %782 = vmatpush.msra.mxu0 0.0
    %783 = vmatpush.msra.mxu0 0.0
    %784 = vmatpush.msra.mxu0 0.0
    %785 = vmatpush.msra.mxu0 0.0
    %786 = vmatpush.msra.mxu0 0.0
    %787 = vmatpush.msra.mxu0 0.0
    %788 = vmatpush.msra.mxu0 0.0
    %789 = vmatpush.msra.mxu0 0.0
    %790 = vmatpush.msra.mxu0 0.0
    %791 = vmatpush.msra.mxu0 0.0
    %792 = vmatpush.msra.mxu0 0.0
    %793 = vmatpush.msra.mxu0 0.0
    %794 = vmatpush.msra.mxu0 0.0
    %795 = vmatpush.msra.mxu0 0.0
    %796 = vmatpush.msra.mxu0 0.0
    %797 = vmatpush.msra.mxu0 %v166
    %798 = vmatmul.f32.gmra.mxu0 %v777
    %v799 = vpop.f32.mrf.mxu0
    %v800 = vadd.f32 0.0, %v799
    %801 = vmatmul.f32.gmra.mxu0 %v780
    %v802 = vpop.f32.mrf.mxu0
    %v803 = vadd.f32 0.0, %v802
    %804 = vdwg.mxu0
    %v805 = vadd.f32 %v774, %v800
    %v806 = vadd.f32 %v775, %v803
    %v808 = vperm.slane %v167, 0
    %v810 = vadd.f32 %v805, %v808
    %v811 = vadd.f32 %v806, %v808
    %v812 = vadd.f32 %v119, %v810
    %v813 = vadd.f32 %v120, %v811
    %v814 = vld [vmem:[%s6] sm:$0x1]
    %v815 = vld [vmem:[%s7] sm:$0x1]
    %v816 = vsel %vm133, %v812, 0.0
    %817 = vadd.xlane.f32.xlu0 %v816
    %v818 = vpop.xlane.xlu0 %817
    %v819 = vsel %vm133, %v813, 0.0
    %820 = vadd.xlane.f32.xlu0 %v819
    %v821 = vpop.xlane.xlu0 %820
    %v822 = vrcp.pop 32.0
    %v823 = vmul.f32 32.0, %v822
    %v824 = vsub.f32 1.0, %v823
    %v825 = vmul.f32 %v822, %v824
    %v826 = vadd.f32 %v822, %v825
    %vm827 = vweird.f32 %v822
    %v828 = vsel %vm827, %v822, %v826
    %v829 = vmul.f32 %v818, %v828
    %v830 = vmul.f32 %v821, %v828
    %v831 = vsub.f32 %v812, %v829
    %v832 = vsub.f32 %v813, %v830
    %v833 = vmul.f32 %v831, %v831
    %v834 = vmul.f32 %v832, %v832
    %v835 = vsel %vm133, %v833, 0.0
    %836 = vadd.xlane.f32.xlu0 %v835
    %v837 = vpop.xlane.xlu0 %836
    %v838 = vsel %vm133, %v834, 0.0
    %839 = vadd.xlane.f32.xlu0 %v838
    %v840 = vpop.xlane.xlu0 %839
    %v841 = vmul.f32 %v837, %v828
    %v842 = vmul.f32 %v840, %v828
    %v843 = vadd.f32 %v841, 1e-05
    %v844 = vadd.f32 %v842, 1e-05
    %v845 = vrsqrt.pop %v843
    %v846 = vmul.f32 %v845, %v843
    %v847 = vmul.f32 %v846, %v845
    %v848 = vmul.f32 0.5, %v847
    %v849 = vsub.f32 1.5, %v848
    %v850 = vmul.f32 %v845, %v849
    %vm851 = vweird.f32 %v843
    %vm852 = vweird.f32 %v845
    %vm853 = vmor %vm851, %vm852
    %v854 = vsel %vm853, %v845, %v850
    %v855 = vrsqrt.pop %v844
    %v856 = vmul.f32 %v855, %v844
    %v857 = vmul.f32 %v856, %v855
    %v858 = vmul.f32 0.5, %v857
    %v859 = vsub.f32 1.5, %v858
    %v860 = vmul.f32 %v855, %v859
    %vm861 = vweird.f32 %v844
    %vm862 = vweird.f32 %v855
    %vm863 = vmor %vm861, %vm862
    %v864 = vsel %vm863, %v855, %v860
    %v865 = vmul.f32 %v831, %v854
    %v866 = vmul.f32 %v832, %v864
    %v868 = vperm.slane %v814, 0
    %v870 = vmul.f32 %v865, %v868
    %v871 = vmul.f32 %v866, %v868
    %v873 = vperm.slane %v815, 0
    %v875 = vadd.f32 %v870, %v873
    %v876 = vadd.f32 %v871, %v873
    %v877 = vld [vmem:[%s8] sm:$0xff]
    %v878 = vld [vmem:[%s8 + $0x8] sm:$0xff]
    %v879 = vld [vmem:[%s8 + $0x10] sm:$0xff]
    %v880 = vld [vmem:[%s8 + $0x18] sm:$0xff]
    %v881 = vld [vmem:[%s9] sm:$0x1]
    %v883 = vperm.slane %v881, 0
    %v886 = vsel %vm133, %v875, 0
    %v889 = vsel %vm133, %v876, 0
    %891 = vmatpush.msra.mxu0 0.0
    %892 = vmatpush.msra.mxu0 0.0
    %893 = vmatpush.msra.mxu0 0.0
    %894 = vmatpush.msra.mxu0 0.0
    %895 = vmatpush.msra.mxu0 0.0
    %896 = vmatpush.msra.mxu0 0.0
    %897 = vmatpush.msra.mxu0 0.0
    %898 = vmatpush.msra.mxu0 0.0
    %899 = vmatpush.msra.mxu0 0.0
    %900 = vmatpush.msra.mxu0 0.0
    %901 = vmatpush.msra.mxu0 0.0
    %902 = vmatpush.msra.mxu0 0.0
    %903 = vmatpush.msra.mxu0 %v880
    %904 = vmatpush.msra.mxu0 %v879
    %905 = vmatpush.msra.mxu0 %v878
    %906 = vmatpush.msra.mxu0 %v877
    %907 = vmatmul.f32.gmra.mxu0 %v886
    %v908 = vpop.f32.mrf.mxu0
    %v909 = vadd.f32 %v883, %v908
    %910 = vmatmul.f32.gmra.mxu0 %v889
    %v911 = vpop.f32.mrf.mxu0
    %v912 = vadd.f32 %v883, %v911
    %913 = vdwg.mxu0
    %v914 = vld [vmem:[%s10] sm:$0xff]
    %v915 = vld [vmem:[%s10 + $0x8] sm:$0xff]
    %v916 = vld [vmem:[%s10 + $0x10] sm:$0xff]
    %v917 = vld [vmem:[%s10 + $0x18] sm:$0xff]
    %v918 = vld [vmem:[%s11] sm:$0x1]
    %v920 = vperm.slane %v918, 0
    %v923 = vsel %vm133, %v121, 0
    %v926 = vsel %vm133, %v122, 0
    %v929 = vsel %vm133, %v123, 0
    %v932 = vsel %vm133, %v124, 0
    %934 = vmatpush.msra.mxu0 0.0
    %935 = vmatpush.msra.mxu0 0.0
    %936 = vmatpush.msra.mxu0 0.0
    %937 = vmatpush.msra.mxu0 0.0
    %938 = vmatpush.msra.mxu0 0.0
    %939 = vmatpush.msra.mxu0 0.0
    %940 = vmatpush.msra.mxu0 0.0
    %941 = vmatpush.msra.mxu0 0.0
    %942 = vmatpush.msra.mxu0 0.0
    %943 = vmatpush.msra.mxu0 0.0
    %944 = vmatpush.msra.mxu0 0.0
    %945 = vmatpush.msra.mxu0 0.0
    %946 = vmatpush.msra.mxu0 %v917
    %947 = vmatpush.msra.mxu0 %v916
    %948 = vmatpush.msra.mxu0 %v915
    %949 = vmatpush.msra.mxu0 %v914
    %950 = vmatmul.f32.gmra.mxu0 %v923
    %v951 = vpop.f32.mrf.mxu0
    %v952 = vadd.f32 %v920, %v951
    %953 = vmatmul.f32.gmra.mxu0 %v926
    %v954 = vpop.f32.mrf.mxu0
    %v955 = vadd.f32 %v920, %v954
    %956 = vmatmul.f32.gmra.mxu0 %v929
    %v957 = vpop.f32.mrf.mxu0
    %v958 = vadd.f32 %v920, %v957
    %959 = vmatmul.f32.gmra.mxu0 %v932
    %v960 = vpop.f32.mrf.mxu0
    %v961 = vadd.f32 %v920, %v960
    %962 = vdwg.mxu0
    %v963 = vld [vmem:[#allocation5] sm:$0xff]
    %v964 = vld [vmem:[#allocation5 + $0x8] sm:$0xff]
    %v965 = vld [vmem:[#allocation5 + $0x10] sm:$0xff]
    %v966 = vld [vmem:[#allocation5 + $0x18] sm:$0xff]
    %v967 = vld [vmem:[%s13] sm:$0x1]
    %v969 = vsel %vm171, %v909, 0
    %v972 = vsel %vm171, %v952, 0
    %v975 = vsel %vm171, %v955, 0
    %977 = vmatpush.xpose.msra.mxu0 0.0
    %978 = vmatpush.xpose.msra.mxu0 0.0
    %979 = vmatpush.xpose.msra.mxu0 0.0
    %980 = vmatpush.xpose.msra.mxu0 0.0
    %981 = vmatpush.xpose.msra.mxu0 0.0
    %982 = vmatpush.xpose.msra.mxu0 0.0
    %983 = vmatpush.xpose.msra.mxu0 0.0
    %984 = vmatpush.xpose.msra.mxu0 0.0
    %985 = vmatpush.xpose.msra.mxu0 0.0
    %986 = vmatpush.xpose.msra.mxu0 0.0
    %987 = vmatpush.xpose.msra.mxu0 0.0
    %988 = vmatpush.xpose.msra.mxu0 0.0
    %989 = vmatpush.xpose.msra.mxu0 0.0
    %990 = vmatpush.xpose.msra.mxu0 0.0
    %991 = vmatpush.xpose.msra.mxu0 %v975
    %992 = vmatpush.xpose.msra.mxu0 %v972
    %993 = vmatmul.f32.gmra.mxu0 %v969
    %v994 = vpop.f32.mrf.mxu0
    %v995 = vadd.f32 0.0, %v994
    %996 = vdwg.mxu0
    %v998 = vsel %vm171, %v912, 0
    %v1001 = vsel %vm171, %v958, 0
    %v1004 = vsel %vm171, %v961, 0
    %1006 = vmatpush.xpose.msra.mxu0 0.0
    %1007 = vmatpush.xpose.msra.mxu0 0.0
    %1008 = vmatpush.xpose.msra.mxu0 0.0
    %1009 = vmatpush.xpose.msra.mxu0 0.0
    %1010 = vmatpush.xpose.msra.mxu0 0.0
    %1011 = vmatpush.xpose.msra.mxu0 0.0
    %1012 = vmatpush.xpose.msra.mxu0 0.0
    %1013 = vmatpush.xpose.msra.mxu0 0.0
    %1014 = vmatpush.xpose.msra.mxu0 0.0
    %1015 = vmatpush.xpose.msra.mxu0 0.0
    %1016 = vmatpush.xpose.msra.mxu0 0.0
    %1017 = vmatpush.xpose.msra.mxu0 0.0
    %1018 = vmatpush.xpose.msra.mxu0 0.0
    %1019 = vmatpush.xpose.msra.mxu0 0.0
    %1020 = vmatpush.xpose.msra.mxu0 %v1004
    %1021 = vmatpush.xpose.msra.mxu0 %v1001
    %1022 = vmatmul.f32.gmra.mxu0 %v998
    %v1023 = vpop.f32.mrf.mxu0
    %v1024 = vadd.f32 0.0, %v1023
    %1025 = vdwg.mxu0
    %vm1026 = vcmask 130048
    %v1027 = vsel %vm1026, %v995, -inf
    %1028 = vmax.xlane.f32.xlu0 %v1027
    %v1029 = vpop.xlane.xlu0 %1028
    %v1030 = vsel %vm1026, %v1024, -inf
    %1031 = vmax.xlane.f32.xlu0 %v1030
    %v1032 = vpop.xlane.xlu0 %1031
    %v1033 = vsub.f32 %v995, %v1029
    %v1034 = vsub.f32 %v1024, %v1032
    %v1035 = vmul.f32 %v1033, 1.442695
    %v1036 = vpow.pop %v1035
    %v1037 = vmul.f32 %v1034, 1.442695
    %v1038 = vpow.pop %v1037
    %v1039 = vsel %vm1026, %v1036, 0.0
    %1040 = vadd.xlane.f32.xlu0 %v1039
    %v1041 = vpop.xlane.xlu0 %1040
    %v1042 = vsel %vm1026, %v1038, 0.0
    %1043 = vadd.xlane.f32.xlu0 %v1042
    %v1044 = vpop.xlane.xlu0 %1043
    %v1045 = vrcp.pop %v1041
    %v1046 = vrcp.pop %v1044
    %v1047 = vmul.f32 %v1036, %v1045
    %v1048 = vmul.f32 %v1038, %v1046
    %1049 = vrot.lane.b32.xlu0 %v952, 96
    %v1050 = vpop.permute.xlu0 %1049
    %1051 = vrot.lane.b32.xlu0 %v955, 96
    %v1052 = vpop.permute.xlu0 %1051
    %v1056 = vsel %vm1026, %v1047, 0
    %1058 = vmatpush.msra.mxu0 0.0
    %1059 = vmatpush.msra.mxu0 0.0
    %1060 = vmatpush.msra.mxu0 0.0
    %1061 = vmatpush.msra.mxu0 0.0
    %1062 = vmatpush.msra.mxu0 0.0
    %1063 = vmatpush.msra.mxu0 0.0
    %1064 = vmatpush.msra.mxu0 0.0
    %1065 = vmatpush.msra.mxu0 0.0
    %1066 = vmatpush.msra.mxu0 0.0
    %1067 = vmatpush.msra.mxu0 0.0
    %1068 = vmatpush.msra.mxu0 0.0
    %1069 = vmatpush.msra.mxu0 0.0
    %1070 = vmatpush.msra.mxu0 0.0
    %1071 = vmatpush.msra.mxu0 0.0
    %1072 = vmatpush.msra.mxu0 %v1052
    %1073 = vmatpush.msra.mxu0 %v1050
    %1074 = vmatmul.f32.gmra.mxu0 %v1056
    %v1075 = vpop.f32.mrf.mxu0
    %v1076 = vadd.f32 0.0, %v1075
    %1077 = vdwg.mxu0
    %1078 = vrot.lane.b32.xlu0 %v958, 96
    %v1079 = vpop.permute.xlu0 %1078
    %1080 = vrot.lane.b32.xlu0 %v961, 96
    %v1081 = vpop.permute.xlu0 %1080
    %v1085 = vsel %vm1026, %v1048, 0
    %1087 = vmatpush.msra.mxu0 0.0
    %1088 = vmatpush.msra.mxu0 0.0
    %1089 = vmatpush.msra.mxu0 0.0
    %1090 = vmatpush.msra.mxu0 0.0
    %1091 = vmatpush.msra.mxu0 0.0
    %1092 = vmatpush.msra.mxu0 0.0
    %1093 = vmatpush.msra.mxu0 0.0
    %1094 = vmatpush.msra.mxu0 0.0
    %1095 = vmatpush.msra.mxu0 0.0
    %1096 = vmatpush.msra.mxu0 0.0
    %1097 = vmatpush.msra.mxu0 0.0
    %1098 = vmatpush.msra.mxu0 0.0
    %1099 = vmatpush.msra.mxu0 0.0
    %1100 = vmatpush.msra.mxu0 0.0
    %1101 = vmatpush.msra.mxu0 %v1081
    %1102 = vmatpush.msra.mxu0 %v1079
    %1103 = vmatmul.f32.gmra.mxu0 %v1085
    %v1104 = vpop.f32.mrf.mxu0
    %v1105 = vadd.f32 0.0, %v1104
    %1106 = vdwg.mxu0
    %1107 = vrot.lane.b32.xlu0 %v909, 120
    %v1108 = vpop.permute.xlu0 %1107
    %1109 = vrot.lane.b32.xlu0 %v952, 120
    %v1110 = vpop.permute.xlu0 %1109
    %1111 = vrot.lane.b32.xlu0 %v955, 120
    %v1112 = vpop.permute.xlu0 %1111
    %v1113 = vsel %vm171, %v1108, 0
    %v1115 = vsel %vm171, %v1110, 0
    %v1117 = vsel %vm171, %v1112, 0
    %1119 = vmatpush.xpose.msra.mxu0 0.0
    %1120 = vmatpush.xpose.msra.mxu0 0.0
    %1121 = vmatpush.xpose.msra.mxu0 0.0
    %1122 = vmatpush.xpose.msra.mxu0 0.0
    %1123 = vmatpush.xpose.msra.mxu0 0.0
    %1124 = vmatpush.xpose.msra.mxu0 0.0
    %1125 = vmatpush.xpose.msra.mxu0 0.0
    %1126 = vmatpush.xpose.msra.mxu0 0.0
    %1127 = vmatpush.xpose.msra.mxu0 0.0
    %1128 = vmatpush.xpose.msra.mxu0 0.0
    %1129 = vmatpush.xpose.msra.mxu0 0.0
    %1130 = vmatpush.xpose.msra.mxu0 0.0
    %1131 = vmatpush.xpose.msra.mxu0 0.0
    %1132 = vmatpush.xpose.msra.mxu0 0.0
    %1133 = vmatpush.xpose.msra.mxu0 %v1117
    %1134 = vmatpush.xpose.msra.mxu0 %v1115
    %1135 = vmatmul.f32.gmra.mxu0 %v1113
    %v1136 = vpop.f32.mrf.mxu0
    %v1137 = vadd.f32 0.0, %v1136
    %1138 = vdwg.mxu0
    %1139 = vrot.lane.b32.xlu0 %v912, 120
    %v1140 = vpop.permute.xlu0 %1139
    %1141 = vrot.lane.b32.xlu0 %v958, 120
    %v1142 = vpop.permute.xlu0 %1141
    %1143 = vrot.lane.b32.xlu0 %v961, 120
    %v1144 = vpop.permute.xlu0 %1143
    %v1145 = vsel %vm171, %v1140, 0
    %v1147 = vsel %vm171, %v1142, 0
    %v1149 = vsel %vm171, %v1144, 0
    %1151 = vmatpush.xpose.msra.mxu0 0.0
    %1152 = vmatpush.xpose.msra.mxu0 0.0
    %1153 = vmatpush.xpose.msra.mxu0 0.0
    %1154 = vmatpush.xpose.msra.mxu0 0.0
    %1155 = vmatpush.xpose.msra.mxu0 0.0
    %1156 = vmatpush.xpose.msra.mxu0 0.0
    %1157 = vmatpush.xpose.msra.mxu0 0.0
    %1158 = vmatpush.xpose.msra.mxu0 0.0
    %1159 = vmatpush.xpose.msra.mxu0 0.0
    %1160 = vmatpush.xpose.msra.mxu0 0.0
    %1161 = vmatpush.xpose.msra.mxu0 0.0
    %1162 = vmatpush.xpose.msra.mxu0 0.0
    %1163 = vmatpush.xpose.msra.mxu0 0.0
    %1164 = vmatpush.xpose.msra.mxu0 0.0
    %1165 = vmatpush.xpose.msra.mxu0 %v1149
    %1166 = vmatpush.xpose.msra.mxu0 %v1147
    %1167 = vmatmul.f32.gmra.mxu0 %v1145
    %v1168 = vpop.f32.mrf.mxu0
    %v1169 = vadd.f32 0.0, %v1168
    %1170 = vdwg.mxu0
    %v1171 = vsel %vm1026, %v1137, -inf
    %1172 = vmax.xlane.f32.xlu0 %v1171
    %v1173 = vpop.xlane.xlu0 %1172
    %v1174 = vsel %vm1026, %v1169, -inf
    %1175 = vmax.xlane.f32.xlu0 %v1174
    %v1176 = vpop.xlane.xlu0 %1175
    %v1177 = vsub.f32 %v1137, %v1173
    %v1178 = vsub.f32 %v1169, %v1176
    %v1179 = vmul.f32 %v1177, 1.442695
    %v1180 = vpow.pop %v1179
    %v1181 = vmul.f32 %v1178, 1.442695
    %v1182 = vpow.pop %v1181
    %v1183 = vsel %vm1026, %v1180, 0.0
    %1184 = vadd.xlane.f32.xlu0 %v1183
    %v1185 = vpop.xlane.xlu0 %1184
    %v1186 = vsel %vm1026, %v1182, 0.0
    %1187 = vadd.xlane.f32.xlu0 %v1186
    %v1188 = vpop.xlane.xlu0 %1187
    %v1189 = vrcp.pop %v1185
    %v1190 = vrcp.pop %v1188
    %v1191 = vmul.f32 %v1180, %v1189
    %v1192 = vmul.f32 %v1182, %v1190
    %1193 = vrot.lane.b32.xlu0 %v952, 88
    %v1194 = vpop.permute.xlu0 %1193
    %1195 = vrot.lane.b32.xlu0 %v955, 88
    %v1196 = vpop.permute.xlu0 %1195
    %v1200 = vsel %vm1026, %v1191, 0
    %1202 = vmatpush.msra.mxu0 0.0
    %1203 = vmatpush.msra.mxu0 0.0
    %1204 = vmatpush.msra.mxu0 0.0
    %1205 = vmatpush.msra.mxu0 0.0
    %1206 = vmatpush.msra.mxu0 0.0
    %1207 = vmatpush.msra.mxu0 0.0
    %1208 = vmatpush.msra.mxu0 0.0
    %1209 = vmatpush.msra.mxu0 0.0
    %1210 = vmatpush.msra.mxu0 0.0
    %1211 = vmatpush.msra.mxu0 0.0
    %1212 = vmatpush.msra.mxu0 0.0
    %1213 = vmatpush.msra.mxu0 0.0
    %1214 = vmatpush.msra.mxu0 0.0
    %1215 = vmatpush.msra.mxu0 0.0
    %1216 = vmatpush.msra.mxu0 %v1196
    %1217 = vmatpush.msra.mxu0 %v1194
    %1218 = vmatmul.f32.gmra.mxu0 %v1200
    %v1219 = vpop.f32.mrf.mxu0
    %v1220 = vadd.f32 0.0, %v1219
    %1221 = vdwg.mxu0
    %1222 = vrot.lane.b32.xlu0 %v958, 88
    %v1223 = vpop.permute.xlu0 %1222
    %1224 = vrot.lane.b32.xlu0 %v961, 88
    %v1225 = vpop.permute.xlu0 %1224
    %v1229 = vsel %vm1026, %v1192, 0
    %1231 = vmatpush.msra.mxu0 0.0
    %1232 = vmatpush.msra.mxu0 0.0
    %1233 = vmatpush.msra.mxu0 0.0
    %1234 = vmatpush.msra.mxu0 0.0
    %1235 = vmatpush.msra.mxu0 0.0
    %1236 = vmatpush.msra.mxu0 0.0
    %1237 = vmatpush.msra.mxu0 0.0
    %1238 = vmatpush.msra.mxu0 0.0
    %1239 = vmatpush.msra.mxu0 0.0
    %1240 = vmatpush.msra.mxu0 0.0
    %1241 = vmatpush.msra.mxu0 0.0
    %1242 = vmatpush.msra.mxu0 0.0
    %1243 = vmatpush.msra.mxu0 0.0
    %1244 = vmatpush.msra.mxu0 0.0
    %1245 = vmatpush.msra.mxu0 %v1225
    %1246 = vmatpush.msra.mxu0 %v1223
    %1247 = vmatmul.f32.gmra.mxu0 %v1229
    %v1248 = vpop.f32.mrf.mxu0
    %v1249 = vadd.f32 0.0, %v1248
    %1250 = vdwg.mxu0
    %1251 = vrot.lane.b32.xlu0 %v909, 112
    %v1252 = vpop.permute.xlu0 %1251
    %1253 = vrot.lane.b32.xlu0 %v952, 112
    %v1254 = vpop.permute.xlu0 %1253
    %1255 = vrot.lane.b32.xlu0 %v955, 112
    %v1256 = vpop.permute.xlu0 %1255
    %v1257 = vsel %vm171, %v1252, 0
    %v1259 = vsel %vm171, %v1254, 0
    %v1261 = vsel %vm171, %v1256, 0
    %1263 = vmatpush.xpose.msra.mxu0 0.0
    %1264 = vmatpush.xpose.msra.mxu0 0.0
    %1265 = vmatpush.xpose.msra.mxu0 0.0
    %1266 = vmatpush.xpose.msra.mxu0 0.0
    %1267 = vmatpush.xpose.msra.mxu0 0.0
    %1268 = vmatpush.xpose.msra.mxu0 0.0
    %1269 = vmatpush.xpose.msra.mxu0 0.0
    %1270 = vmatpush.xpose.msra.mxu0 0.0
    %1271 = vmatpush.xpose.msra.mxu0 0.0
    %1272 = vmatpush.xpose.msra.mxu0 0.0
    %1273 = vmatpush.xpose.msra.mxu0 0.0
    %1274 = vmatpush.xpose.msra.mxu0 0.0
    %1275 = vmatpush.xpose.msra.mxu0 0.0
    %1276 = vmatpush.xpose.msra.mxu0 0.0
    %1277 = vmatpush.xpose.msra.mxu0 %v1261
    %1278 = vmatpush.xpose.msra.mxu0 %v1259
    %1279 = vmatmul.f32.gmra.mxu0 %v1257
    %v1280 = vpop.f32.mrf.mxu0
    %v1281 = vadd.f32 0.0, %v1280
    %1282 = vdwg.mxu0
    %1283 = vrot.lane.b32.xlu0 %v912, 112
    %v1284 = vpop.permute.xlu0 %1283
    %1285 = vrot.lane.b32.xlu0 %v958, 112
    %v1286 = vpop.permute.xlu0 %1285
    %1287 = vrot.lane.b32.xlu0 %v961, 112
    %v1288 = vpop.permute.xlu0 %1287
    %v1289 = vsel %vm171, %v1284, 0
    %v1291 = vsel %vm171, %v1286, 0
    %v1293 = vsel %vm171, %v1288, 0
    %1295 = vmatpush.xpose.msra.mxu0 0.0
    %1296 = vmatpush.xpose.msra.mxu0 0.0
    %1297 = vmatpush.xpose.msra.mxu0 0.0
    %1298 = vmatpush.xpose.msra.mxu0 0.0
    %1299 = vmatpush.xpose.msra.mxu0 0.0
    %1300 = vmatpush.xpose.msra.mxu0 0.0
    %1301 = vmatpush.xpose.msra.mxu0 0.0
    %1302 = vmatpush.xpose.msra.mxu0 0.0
    %1303 = vmatpush.xpose.msra.mxu0 0.0
    %1304 = vmatpush.xpose.msra.mxu0 0.0
    %1305 = vmatpush.xpose.msra.mxu0 0.0
    %1306 = vmatpush.xpose.msra.mxu0 0.0
    %1307 = vmatpush.xpose.msra.mxu0 0.0
    %1308 = vmatpush.xpose.msra.mxu0 0.0
    %1309 = vmatpush.xpose.msra.mxu0 %v1293
    %1310 = vmatpush.xpose.msra.mxu0 %v1291
    %1311 = vmatmul.f32.gmra.mxu0 %v1289
    %v1312 = vpop.f32.mrf.mxu0
    %v1313 = vadd.f32 0.0, %v1312
    %1314 = vdwg.mxu0
    %v1315 = vsel %vm1026, %v1281, -inf
    %1316 = vmax.xlane.f32.xlu0 %v1315
    %v1317 = vpop.xlane.xlu0 %1316
    %v1318 = vsel %vm1026, %v1313, -inf
    %1319 = vmax.xlane.f32.xlu0 %v1318
    %v1320 = vpop.xlane.xlu0 %1319
    %v1321 = vsub.f32 %v1281, %v1317
    %v1322 = vsub.f32 %v1313, %v1320
    %v1323 = vmul.f32 %v1321, 1.442695
    %v1324 = vpow.pop %v1323
    %v1325 = vmul.f32 %v1322, 1.442695
    %v1326 = vpow.pop %v1325
    %v1327 = vsel %vm1026, %v1324, 0.0
    %1328 = vadd.xlane.f32.xlu0 %v1327
    %v1329 = vpop.xlane.xlu0 %1328
    %v1330 = vsel %vm1026, %v1326, 0.0
    %1331 = vadd.xlane.f32.xlu0 %v1330
    %v1332 = vpop.xlane.xlu0 %1331
    %v1333 = vrcp.pop %v1329
    %v1334 = vrcp.pop %v1332
    %v1335 = vmul.f32 %v1324, %v1333
    %v1336 = vmul.f32 %v1326, %v1334
    %1337 = vrot.lane.b32.xlu0 %v952, 80
    %v1338 = vpop.permute.xlu0 %1337
    %1339 = vrot.lane.b32.xlu0 %v955, 80
    %v1340 = vpop.permute.xlu0 %1339
    %v1344 = vsel %vm1026, %v1335, 0
    %1346 = vmatpush.msra.mxu0 0.0
    %1347 = vmatpush.msra.mxu0 0.0
    %1348 = vmatpush.msra.mxu0 0.0
    %1349 = vmatpush.msra.mxu0 0.0
    %1350 = vmatpush.msra.mxu0 0.0
    %1351 = vmatpush.msra.mxu0 0.0
    %1352 = vmatpush.msra.mxu0 0.0
    %1353 = vmatpush.msra.mxu0 0.0
    %1354 = vmatpush.msra.mxu0 0.0
    %1355 = vmatpush.msra.mxu0 0.0
    %1356 = vmatpush.msra.mxu0 0.0
    %1357 = vmatpush.msra.mxu0 0.0
    %1358 = vmatpush.msra.mxu0 0.0
    %1359 = vmatpush.msra.mxu0 0.0
    %1360 = vmatpush.msra.mxu0 %v1340
    %1361 = vmatpush.msra.mxu0 %v1338
    %1362 = vmatmul.f32.gmra.mxu0 %v1344
    %v1363 = vpop.f32.mrf.mxu0
    %v1364 = vadd.f32 0.0, %v1363
    %1365 = vdwg.mxu0
    %1366 = vrot.lane.b32.xlu0 %v958, 80
    %v1367 = vpop.permute.xlu0 %1366
    %1368 = vrot.lane.b32.xlu0 %v961, 80
    %v1369 = vpop.permute.xlu0 %1368
    %v1373 = vsel %vm1026, %v1336, 0
    %1375 = vmatpush.msra.mxu0 0.0
    %1376 = vmatpush.msra.mxu0 0.0
    %1377 = vmatpush.msra.mxu0 0.0
    %1378 = vmatpush.msra.mxu0 0.0
    %1379 = vmatpush.msra.mxu0 0.0
    %1380 = vmatpush.msra.mxu0 0.0
    %1381 = vmatpush.msra.mxu0 0.0
    %1382 = vmatpush.msra.mxu0 0.0
    %1383 = vmatpush.msra.mxu0 0.0
    %1384 = vmatpush.msra.mxu0 0.0
    %1385 = vmatpush.msra.mxu0 0.0
    %1386 = vmatpush.msra.mxu0 0.0
    %1387 = vmatpush.msra.mxu0 0.0
    %1388 = vmatpush.msra.mxu0 0.0
    %1389 = vmatpush.msra.mxu0 %v1369
    %1390 = vmatpush.msra.mxu0 %v1367
    %1391 = vmatmul.f32.gmra.mxu0 %v1373
    %v1392 = vpop.f32.mrf.mxu0
    %v1393 = vadd.f32 0.0, %v1392
    %1394 = vdwg.mxu0
    %1395 = vrot.lane.b32.xlu0 %v909, 104
    %v1396 = vpop.permute.xlu0 %1395
    %1397 = vrot.lane.b32.xlu0 %v952, 104
    %v1398 = vpop.permute.xlu0 %1397
    %1399 = vrot.lane.b32.xlu0 %v955, 104
    %v1400 = vpop.permute.xlu0 %1399
    %v1401 = vsel %vm171, %v1396, 0
    %v1403 = vsel %vm171, %v1398, 0
    %v1405 = vsel %vm171, %v1400, 0
    %1407 = vmatpush.xpose.msra.mxu0 0.0
    %1408 = vmatpush.xpose.msra.mxu0 0.0
    %1409 = vmatpush.xpose.msra.mxu0 0.0
    %1410 = vmatpush.xpose.msra.mxu0 0.0
    %1411 = vmatpush.xpose.msra.mxu0 0.0
    %1412 = vmatpush.xpose.msra.mxu0 0.0
    %1413 = vmatpush.xpose.msra.mxu0 0.0
    %1414 = vmatpush.xpose.msra.mxu0 0.0
    %1415 = vmatpush.xpose.msra.mxu0 0.0
    %1416 = vmatpush.xpose.msra.mxu0 0.0
    %1417 = vmatpush.xpose.msra.mxu0 0.0
    %1418 = vmatpush.xpose.msra.mxu0 0.0
    %1419 = vmatpush.xpose.msra.mxu0 0.0
    %1420 = vmatpush.xpose.msra.mxu0 0.0
    %1421 = vmatpush.xpose.msra.mxu0 %v1405
    %1422 = vmatpush.xpose.msra.mxu0 %v1403
    %1423 = vmatmul.f32.gmra.mxu0 %v1401
    %v1424 = vpop.f32.mrf.mxu0
    %v1425 = vadd.f32 0.0, %v1424
    %1426 = vdwg.mxu0
    %1427 = vrot.lane.b32.xlu0 %v912, 104
    %v1428 = vpop.permute.xlu0 %1427
    %1429 = vrot.lane.b32.xlu0 %v958, 104
    %v1430 = vpop.permute.xlu0 %1429
    %1431 = vrot.lane.b32.xlu0 %v961, 104
    %v1432 = vpop.permute.xlu0 %1431
    %v1433 = vsel %vm171, %v1428, 0
    %v1435 = vsel %vm171, %v1430, 0
    %v1437 = vsel %vm171, %v1432, 0
    %1439 = vmatpush.xpose.msra.mxu0 0.0
    %1440 = vmatpush.xpose.msra.mxu0 0.0
    %1441 = vmatpush.xpose.msra.mxu0 0.0
    %1442 = vmatpush.xpose.msra.mxu0 0.0
    %1443 = vmatpush.xpose.msra.mxu0 0.0
    %1444 = vmatpush.xpose.msra.mxu0 0.0
    %1445 = vmatpush.xpose.msra.mxu0 0.0
    %1446 = vmatpush.xpose.msra.mxu0 0.0
    %1447 = vmatpush.xpose.msra.mxu0 0.0
    %1448 = vmatpush.xpose.msra.mxu0 0.0
    %1449 = vmatpush.xpose.msra.mxu0 0.0
    %1450 = vmatpush.xpose.msra.mxu0 0.0
    %1451 = vmatpush.xpose.msra.mxu0 0.0
    %1452 = vmatpush.xpose.msra.mxu0 0.0
    %1453 = vmatpush.xpose.msra.mxu0 %v1437
    %1454 = vmatpush.xpose.msra.mxu0 %v1435
    %1455 = vmatmul.f32.gmra.mxu0 %v1433
    %v1456 = vpop.f32.mrf.mxu0
    %v1457 = vadd.f32 0.0, %v1456
    %1458 = vdwg.mxu0
    %v1459 = vsel %vm1026, %v1425, -inf
    %1460 = vmax.xlane.f32.xlu0 %v1459
    %v1461 = vpop.xlane.xlu0 %1460
    %v1462 = vsel %vm1026, %v1457, -inf
    %1463 = vmax.xlane.f32.xlu0 %v1462
    %v1464 = vpop.xlane.xlu0 %1463
    %v1465 = vsub.f32 %v1425, %v1461
    %v1466 = vsub.f32 %v1457, %v1464
    %v1467 = vmul.f32 %v1465, 1.442695
    %v1468 = vpow.pop %v1467
    %v1469 = vmul.f32 %v1466, 1.442695
    %v1470 = vpow.pop %v1469
    %v1471 = vsel %vm1026, %v1468, 0.0
    %1472 = vadd.xlane.f32.xlu0 %v1471
    %v1473 = vpop.xlane.xlu0 %1472
    %v1474 = vsel %vm1026, %v1470, 0.0
    %1475 = vadd.xlane.f32.xlu0 %v1474
    %v1476 = vpop.xlane.xlu0 %1475
    %v1477 = vrcp.pop %v1473
    %v1478 = vrcp.pop %v1476
    %v1479 = vmul.f32 %v1468, %v1477
    %v1480 = vmul.f32 %v1470, %v1478
    %1481 = vrot.lane.b32.xlu0 %v952, 72
    %v1482 = vpop.permute.xlu0 %1481
    %1483 = vrot.lane.b32.xlu0 %v955, 72
    %v1484 = vpop.permute.xlu0 %1483
    %v1488 = vsel %vm1026, %v1479, 0
    %1490 = vmatpush.msra.mxu0 0.0
    %1491 = vmatpush.msra.mxu0 0.0
    %1492 = vmatpush.msra.mxu0 0.0
    %1493 = vmatpush.msra.mxu0 0.0
    %1494 = vmatpush.msra.mxu0 0.0
    %1495 = vmatpush.msra.mxu0 0.0
    %1496 = vmatpush.msra.mxu0 0.0
    %1497 = vmatpush.msra.mxu0 0.0
    %1498 = vmatpush.msra.mxu0 0.0
    %1499 = vmatpush.msra.mxu0 0.0
    %1500 = vmatpush.msra.mxu0 0.0
    %1501 = vmatpush.msra.mxu0 0.0
    %1502 = vmatpush.msra.mxu0 0.0
    %1503 = vmatpush.msra.mxu0 0.0
    %1504 = vmatpush.msra.mxu0 %v1484
    %1505 = vmatpush.msra.mxu0 %v1482
    %1506 = vmatmul.f32.gmra.mxu0 %v1488
    %v1507 = vpop.f32.mrf.mxu0
    %v1508 = vadd.f32 0.0, %v1507
    %1509 = vdwg.mxu0
    %1510 = vrot.lane.b32.xlu0 %v958, 72
    %v1511 = vpop.permute.xlu0 %1510
    %1512 = vrot.lane.b32.xlu0 %v961, 72
    %v1513 = vpop.permute.xlu0 %1512
    %v1517 = vsel %vm1026, %v1480, 0
    %1519 = vmatpush.msra.mxu0 0.0
    %1520 = vmatpush.msra.mxu0 0.0
    %1521 = vmatpush.msra.mxu0 0.0
    %1522 = vmatpush.msra.mxu0 0.0
    %1523 = vmatpush.msra.mxu0 0.0
    %1524 = vmatpush.msra.mxu0 0.0
    %1525 = vmatpush.msra.mxu0 0.0
    %1526 = vmatpush.msra.mxu0 0.0
    %1527 = vmatpush.msra.mxu0 0.0
    %1528 = vmatpush.msra.mxu0 0.0
    %1529 = vmatpush.msra.mxu0 0.0
    %1530 = vmatpush.msra.mxu0 0.0
    %1531 = vmatpush.msra.mxu0 0.0
    %1532 = vmatpush.msra.mxu0 0.0
    %1533 = vmatpush.msra.mxu0 %v1513
    %1534 = vmatpush.msra.mxu0 %v1511
    %1535 = vmatmul.f32.gmra.mxu0 %v1517
    %v1536 = vpop.f32.mrf.mxu0
    %v1537 = vadd.f32 0.0, %v1536
    %1538 = vdwg.mxu0
    %v1540 = vsel %vm171, %v1220, 0
    %v1543 = vsel %vm171, %v1249, 0
    %1545 = vmatpush.msra.mxu0 0.0
    %1546 = vmatpush.msra.mxu0 0.0
    %1547 = vmatpush.msra.mxu0 0.0
    %1548 = vmatpush.msra.mxu0 0.0
    %1549 = vmatpush.msra.mxu0 0.0
    %1550 = vmatpush.msra.mxu0 0.0
    %1551 = vmatpush.msra.mxu0 0.0
    %1552 = vmatpush.msra.mxu0 0.0
    %1553 = vmatpush.msra.mxu0 0.0
    %1554 = vmatpush.msra.mxu0 0.0
    %1555 = vmatpush.msra.mxu0 0.0
    %1556 = vmatpush.msra.mxu0 0.0
    %1557 = vmatpush.msra.mxu0 0.0
    %1558 = vmatpush.msra.mxu0 0.0
    %1559 = vmatpush.msra.mxu0 0.0
    %1560 = vmatpush.msra.mxu0 %v964
    %1561 = vmatmul.f32.gmra.mxu0 %v1540
    %v1562 = vpop.f32.mrf.mxu0
    %v1563 = vadd.f32 0.0, %v1562
    %1564 = vmatmul.f32.gmra.mxu0 %v1543
    %v1565 = vpop.f32.mrf.mxu0
    %v1566 = vadd.f32 0.0, %v1565
    %1567 = vdwg.mxu0
    %v1569 = vsel %vm171, %v1076, 0
    %v1572 = vsel %vm171, %v1105, 0
    %1574 = vmatpush.msra.mxu0 0.0
    %1575 = vmatpush.msra.mxu0 0.0
    %1576 = vmatpush.msra.mxu0 0.0
    %1577 = vmatpush.msra.mxu0 0.0
    %1578 = vmatpush.msra.mxu0 0.0
    %1579 = vmatpush.msra.mxu0 0.0
    %1580 = vmatpush.msra.mxu0 0.0
    %1581 = vmatpush.msra.mxu0 0.0
    %1582 = vmatpush.msra.mxu0 0.0
    %1583 = vmatpush.msra.mxu0 0.0
    %1584 = vmatpush.msra.mxu0 0.0
    %1585 = vmatpush.msra.mxu0 0.0
    %1586 = vmatpush.msra.mxu0 0.0
    %1587 = vmatpush.msra.mxu0 0.0
    %1588 = vmatpush.msra.mxu0 0.0
    %1589 = vmatpush.msra.mxu0 %v963
    %1590 = vmatmul.f32.gmra.mxu0 %v1569
    %v1591 = vpop.f32.mrf.mxu0
    %v1592 = vadd.f32 %v1563, %v1591
    %1593 = vmatmul.f32.gmra.mxu0 %v1572
    %v1594 = vpop.f32.mrf.mxu0
    %v1595 = vadd.f32 %v1566, %v1594
    %1596 = vdwg.mxu0
    %v1598 = vsel %vm171, %v1364, 0
    %v1601 = vsel %vm171, %v1393, 0
    %1603 = vmatpush.msra.mxu0 0.0
    %1604 = vmatpush.msra.mxu0 0.0
    %1605 = vmatpush.msra.mxu0 0.0
    %1606 = vmatpush.msra.mxu0 0.0
    %1607 = vmatpush.msra.mxu0 0.0
    %1608 = vmatpush.msra.mxu0 0.0
    %1609 = vmatpush.msra.mxu0 0.0
    %1610 = vmatpush.msra.mxu0 0.0
    %1611 = vmatpush.msra.mxu0 0.0
    %1612 = vmatpush.msra.mxu0 0.0
    %1613 = vmatpush.msra.mxu0 0.0
    %1614 = vmatpush.msra.mxu0 0.0
    %1615 = vmatpush.msra.mxu0 0.0
    %1616 = vmatpush.msra.mxu0 0.0
    %1617 = vmatpush.msra.mxu0 0.0
    %1618 = vmatpush.msra.mxu0 %v965
    %1619 = vmatmul.f32.gmra.mxu0 %v1598
    %v1620 = vpop.f32.mrf.mxu0
    %v1621 = vadd.f32 0.0, %v1620
    %1622 = vmatmul.f32.gmra.mxu0 %v1601
    %v1623 = vpop.f32.mrf.mxu0
    %v1624 = vadd.f32 0.0, %v1623
    %1625 = vdwg.mxu0
    %v1626 = vadd.f32 %v1592, %v1621
    %v1627 = vadd.f32 %v1595, %v1624
    %v1629 = vsel %vm171, %v1508, 0
    %v1632 = vsel %vm171, %v1537, 0
    %1634 = vmatpush.msra.mxu0 0.0
    %1635 = vmatpush.msra.mxu0 0.0
    %1636 = vmatpush.msra.mxu0 0.0
    %1637 = vmatpush.msra.mxu0 0.0
    %1638 = vmatpush.msra.mxu0 0.0
    %1639 = vmatpush.msra.mxu0 0.0
    %1640 = vmatpush.msra.mxu0 0.0
    %1641 = vmatpush.msra.mxu0 0.0
    %1642 = vmatpush.msra.mxu0 0.0
    %1643 = vmatpush.msra.mxu0 0.0
    %1644 = vmatpush.msra.mxu0 0.0
    %1645 = vmatpush.msra.mxu0 0.0
    %1646 = vmatpush.msra.mxu0 0.0
    %1647 = vmatpush.msra.mxu0 0.0
    %1648 = vmatpush.msra.mxu0 0.0
    %1649 = vmatpush.msra.mxu0 %v966
    %1650 = vmatmul.f32.gmra.mxu0 %v1629
    %v1651 = vpop.f32.mrf.mxu0
    %v1652 = vadd.f32 0.0, %v1651
    %1653 = vmatmul.f32.gmra.mxu0 %v1632
    %v1654 = vpop.f32.mrf.mxu0
    %v1655 = vadd.f32 0.0, %v1654
    %1656 = vdwg.mxu0
    %v1657 = vadd.f32 %v1626, %v1652
    %v1658 = vadd.f32 %v1627, %v1655
    %v1660 = vperm.slane %v967, 0
    %v1662 = vadd.f32 %v1657, %v1660
    %v1663 = vadd.f32 %v1658, %v1660
    %v1664 = vadd.f32 %v875, %v1662
    %v1665 = vadd.f32 %v876, %v1663
    %v1666 = vld [vmem:[%s14] sm:$0x1]
    %v1667 = vld [vmem:[%s15] sm:$0x1]
    %v1668 = vsel %vm133, %v1664, 0.0
    %1669 = vadd.xlane.f32.xlu0 %v1668
    %v1670 = vpop.xlane.xlu0 %1669
    %v1671 = vsel %vm133, %v1665, 0.0
    %1672 = vadd.xlane.f32.xlu0 %v1671
    %v1673 = vpop.xlane.xlu0 %1672
    %v1674 = vmul.f32 %v1670, %v828
    %v1675 = vmul.f32 %v1673, %v828
    %v1676 = vsub.f32 %v1664, %v1674
    %v1677 = vsub.f32 %v1665, %v1675
    %v1678 = vmul.f32 %v1676, %v1676
    %v1679 = vmul.f32 %v1677, %v1677
    %v1680 = vsel %vm133, %v1678, 0.0
    %1681 = vadd.xlane.f32.xlu0 %v1680
    %v1682 = vpop.xlane.xlu0 %1681
    %v1683 = vsel %vm133, %v1679, 0.0
    %1684 = vadd.xlane.f32.xlu0 %v1683
    %v1685 = vpop.xlane.xlu0 %1684
    %v1686 = vmul.f32 %v1682, %v828
    %v1687 = vmul.f32 %v1685, %v828
    %v1688 = vadd.f32 %v1686, 1e-05
    %v1689 = vadd.f32 %v1687, 1e-05
    %v1690 = vrsqrt.pop %v1688
    %v1691 = vmul.f32 %v1690, %v1688
    %v1692 = vmul.f32 %v1691, %v1690
    %v1693 = vmul.f32 0.5, %v1692
    %v1694 = vsub.f32 1.5, %v1693
    %v1695 = vmul.f32 %v1690, %v1694
    %vm1696 = vweird.f32 %v1688
    %vm1697 = vweird.f32 %v1690
    %vm1698 = vmor %vm1696, %vm1697
    %v1699 = vsel %vm1698, %v1690, %v1695
    %v1700 = vrsqrt.pop %v1689
    %v1701 = vmul.f32 %v1700, %v1689
    %v1702 = vmul.f32 %v1701, %v1700
    %v1703 = vmul.f32 0.5, %v1702
    %v1704 = vsub.f32 1.5, %v1703
    %v1705 = vmul.f32 %v1700, %v1704
    %vm1706 = vweird.f32 %v1689
    %vm1707 = vweird.f32 %v1700
    %vm1708 = vmor %vm1706, %vm1707
    %v1709 = vsel %vm1708, %v1700, %v1705
    %v1710 = vmul.f32 %v1676, %v1699
    %v1711 = vmul.f32 %v1677, %v1709
    %v1713 = vperm.slane %v1666, 0
    %v1715 = vmul.f32 %v1710, %v1713
    %v1716 = vmul.f32 %v1711, %v1713
    %v1718 = vperm.slane %v1667, 0
    %v1720 = vadd.f32 %v1715, %v1718
    %v1721 = vadd.f32 %v1716, %v1718
    %v1722 = vld [vmem:[#allocation7] sm:$0xff]
    %v1723 = vld [vmem:[#allocation7 + $0x8] sm:$0xff]
    %v1724 = vld [vmem:[#allocation7 + $0x10] sm:$0xff]
    %v1725 = vld [vmem:[#allocation7 + $0x18] sm:$0xff]
    %v1726 = vld [vmem:[%s17] sm:$0x1]
    %v1728 = vperm.slane %v1726, 0
    %v1731 = vsel %vm133, %v1720, 0
    %v1734 = vsel %vm133, %v1721, 0
    %1736 = vmatpush.msra.mxu0 0.0
    %1737 = vmatpush.msra.mxu0 0.0
    %1738 = vmatpush.msra.mxu0 0.0
    %1739 = vmatpush.msra.mxu0 0.0
    %1740 = vmatpush.msra.mxu0 0.0
    %1741 = vmatpush.msra.mxu0 0.0
    %1742 = vmatpush.msra.mxu0 0.0
    %1743 = vmatpush.msra.mxu0 0.0
    %1744 = vmatpush.msra.mxu0 0.0
    %1745 = vmatpush.msra.mxu0 0.0
    %1746 = vmatpush.msra.mxu0 0.0
    %1747 = vmatpush.msra.mxu0 0.0
    %1748 = vmatpush.msra.mxu0 %v1725
    %1749 = vmatpush.msra.mxu0 %v1724
    %1750 = vmatpush.msra.mxu0 %v1723
    %1751 = vmatpush.msra.mxu0 %v1722
    %1752 = vmatmul.f32.gmra.mxu0 %v1731
    %v1753 = vpop.f32.mrf.mxu0
    %v1754 = vadd.f32 %v1728, %v1753
    %1755 = vmatmul.f32.gmra.mxu0 %v1734
    %v1756 = vpop.f32.mrf.mxu0
    %v1757 = vadd.f32 %v1728, %v1756
    %1758 = vdwg.mxu0
    %v1759 = vmax.f32 %v1754, 0.0
    %v1760 = vmax.f32 %v1757, 0.0
    %v1761 = vld [vmem:[%s18] sm:$0xff]
    %v1762 = vld [vmem:[%s18 + $0x8] sm:$0xff]
    %v1763 = vld [vmem:[%s18 + $0x10] sm:$0xff]
    %v1764 = vld [vmem:[%s18 + $0x18] sm:$0xff]
    %v1765 = vld [vmem:[%s18 + $0x20] sm:$0xff]
    %v1766 = vld [vmem:[%s18 + $0x28] sm:$0xff]
    %v1767 = vld [vmem:[%s18 + $0x30] sm:$0xff]
    %v1768 = vld [vmem:[%s18 + $0x38] sm:$0xff]
    %v1769 = vld [vmem:[%s18 + $0x40] sm:$0xff]
    %v1770 = vld [vmem:[%s18 + $0x48] sm:$0xff]
    %v1771 = vld [vmem:[%s18 + $0x50] sm:$0xff]
    %v1772 = vld [vmem:[%s18 + $0x58] sm:$0xff]
    %v1773 = vld [vmem:[%s18 + $0x60] sm:$0xff]
    %v1774 = vld [vmem:[%s18 + $0x68] sm:$0xff]
    %v1775 = vld [vmem:[%s18 + $0x70] sm:$0xff]
    %v1776 = vld [vmem:[%s18 + $0x78] sm:$0xff]
    %v1777 = vld [vmem:[%s19] sm:$0x1]
    %v1779 = vperm.slane %v1777, 0
    %1781 = vmatpush.msra.mxu0 %v1776
    %1782 = vmatpush.msra.mxu0 %v1775
    %1783 = vmatpush.msra.mxu0 %v1774
    %1784 = vmatpush.msra.mxu0 %v1773
    %1785 = vmatpush.msra.mxu0 %v1772
    %1786 = vmatpush.msra.mxu0 %v1771
    %1787 = vmatpush.msra.mxu0 %v1770
    %1788 = vmatpush.msra.mxu0 %v1769
    %1789 = vmatpush.msra.mxu0 %v1768
    %1790 = vmatpush.msra.mxu0 %v1767
    %1791 = vmatpush.msra.mxu0 %v1766
    %1792 = vmatpush.msra.mxu0 %v1765
    %1793 = vmatpush.msra.mxu0 %v1764
    %1794 = vmatpush.msra.mxu0 %v1763
    %1795 = vmatpush.msra.mxu0 %v1762
    %1796 = vmatpush.msra.mxu0 %v1761
    %1797 = vmatmul.f32.gmra.mxu0 %v1759
    %v1798 = vpop.f32.mrf.mxu0
    %v1799 = vadd.f32 %v1779, %v1798
    %1800 = vmatmul.f32.gmra.mxu0 %v1760
    %v1801 = vpop.f32.mrf.mxu0
    %v1802 = vadd.f32 %v1779, %v1801
    %1803 = vdwg.mxu0
    %v1804 = vadd.f32 %v1720, %v1799
    %v1805 = vadd.f32 %v1721, %v1802
    %v1806 = vld [vmem:[%s20] sm:$0x1]
    %v1807 = vld [vmem:[%s21] sm:$0x1]
    %v1808 = vsel %vm133, %v1804, 0.0
    %1809 = vadd.xlane.f32.xlu0 %v1808
    %v1810 = vpop.xlane.xlu0 %1809
    %v1811 = vsel %vm133, %v1805, 0.0
    %1812 = vadd.xlane.f32.xlu0 %v1811
    %v1813 = vpop.xlane.xlu0 %1812
    %v1814 = vmul.f32 %v1810, %v828
    %v1815 = vmul.f32 %v1813, %v828
    %v1816 = vsub.f32 %v1804, %v1814
    %v1817 = vsub.f32 %v1805, %v1815
    %v1818 = vmul.f32 %v1816, %v1816
    %v1819 = vmul.f32 %v1817, %v1817
    %v1820 = vsel %vm133, %v1818, 0.0
    %1821 = vadd.xlane.f32.xlu0 %v1820
    %v1822 = vpop.xlane.xlu0 %1821
    %v1823 = vsel %vm133, %v1819, 0.0
    %1824 = vadd.xlane.f32.xlu0 %v1823
    %v1825 = vpop.xlane.xlu0 %1824
    %v1826 = vmul.f32 %v1822, %v828
    %v1827 = vmul.f32 %v1825, %v828
    %v1828 = vadd.f32 %v1826, 1e-05
    %v1829 = vadd.f32 %v1827, 1e-05
    %v1830 = vrsqrt.pop %v1828
    %v1831 = vmul.f32 %v1830, %v1828
    %v1832 = vmul.f32 %v1831, %v1830
    %v1833 = vmul.f32 0.5, %v1832
    %v1834 = vsub.f32 1.5, %v1833
    %v1835 = vmul.f32 %v1830, %v1834
    %vm1836 = vweird.f32 %v1828
    %vm1837 = vweird.f32 %v1830
    %vm1838 = vmor %vm1836, %vm1837
    %v1839 = vsel %vm1838, %v1830, %v1835
    %v1840 = vrsqrt.pop %v1829
    %v1841 = vmul.f32 %v1840, %v1829
    %v1842 = vmul.f32 %v1841, %v1840
    %v1843 = vmul.f32 0.5, %v1842
    %v1844 = vsub.f32 1.5, %v1843
    %v1845 = vmul.f32 %v1840, %v1844
    %vm1846 = vweird.f32 %v1829
    %vm1847 = vweird.f32 %v1840
    %vm1848 = vmor %vm1846, %vm1847
    %v1849 = vsel %vm1848, %v1840, %v1845
    %v1850 = vmul.f32 %v1816, %v1839
    %v1851 = vmul.f32 %v1817, %v1849
    %v1853 = vperm.slane %v1806, 0
    %v1855 = vmul.f32 %v1850, %v1853
    %v1856 = vmul.f32 %v1851, %v1853
    %v1858 = vperm.slane %v1807, 0
    %v1860 = vadd.f32 %v1855, %v1858
    %v1861 = vadd.f32 %v1856, %v1858
    %1862 = vst.msk [vmem:[#allocation8] sm:$0xff] %vm133, %v1860
    %1863 = vst.msk [vmem:[#allocation8 + $0x8] sm:$0xff] %vm133, %v1861
    // Predicated region
    $region102: #{tpu_custom_call.1} parent=1 // pred_check
      _
    $region103: #{tpu_custom_call.1} parent=1 // pred_check_branch
      %1865 = sbr.rel (0) target = $region105
    $region104: #{tpu_custom_call.1} parent=1 // pred_region
      %1867 = vsyncadd [#allocation4], 0
      %s1868 = sshll.u32 [#allocation8], 4
      %s1869 = int_to_ptr.vmem [resolvable:$true] %s1868
      %s1870 = sshll.u32 %s22, 4
      %s1871 = int_to_ptr.hbm [resolvable:$true] %s1870
      %1876 = dma.vmem_to_hbm [thread:$0]  %s1869, 256, %s1871, [#allocation4], 128, 128, 8
    $region105: #{tpu_custom_call.1} parent=1 // pred_fallthru
      _
    // Predicated region
    $region106: #{tpu_custom_call.1} parent=1 // pred_check
      _
    $region107: #{tpu_custom_call.1} parent=1 // pred_check_branch
      %1878 = sbr.rel (0) target = $region109
    $region108: #{tpu_custom_call.1} parent=1 // pred_region
      %1880 = dma.done [#allocation4], 256
    $region109: #{tpu_custom_call.1} parent=1 // pred_fallthru
      _
    %1881 = vsyncpa [#allocation3], 1
    %1882 = vsyncpa [#allocation6], 1
    %1883 = vsyncpa [#allocation4], 1

// kernel: tpu_custom_call.1
$region0: #{tpu_custom_call.1}
  #allocation0 [shape = 'u32[]', space=smem, size = 0x4, offset = 0x4, fixed_abs, tag = 'smem constant byte address 0x4 - core index']
  #allocation1 [shape = 'u32[72,128]{1,0:T(1,128)}', space=vmem, size = 0x9000, scoped, tag = 'internal scratch']
  %s0 = inlined_call_operand.hbm [shape: f32[2,8,32], index: 0, kind: input, shape index: {}]
  %s1 = inlined_call_operand.vmem [shape: f32[2,16,32], index: 1, kind: input, shape index: {}]
  %s2 = inlined_call_operand.vmem [shape: f32[32,96], index: 2, kind: input, shape index: {}]
  %s3 = inlined_call_operand.vmem [shape: f32[1,96], index: 3, kind: input, shape index: {}]
  %s4 = inlined_call_operand.vmem [shape: f32[32,32], index: 4, kind: input, shape index: {}]
  %s5 = inlined_call_operand.vmem [shape: f32[1,32], index: 5, kind: input, shape index: {}]
  %s6 = inlined_call_operand.vmem [shape: f32[1,32], index: 6, kind: input, shape index: {}]
  %s7 = inlined_call_operand.vmem [shape: f32[1,32], index: 7, kind: input, shape index: {}]
  %s8 = inlined_call_operand.vmem [shape: f32[32,32], index: 8, kind: input, shape index: {}]
  %s9 = inlined_call_operand.vmem [shape: f32[1,32], index: 9, kind: input, shape index: {}]
  %s10 = inlined_call_operand.vmem [shape: f32[32,64], index: 10, kind: input, shape index: {}]
  %s11 = inlined_call_operand.vmem [shape: f32[1,64], index: 11, kind: input, shape index: {}]
  %s12 = inlined_call_operand.hbm [shape: f32[32,32], index: 12, kind: input, shape index: {}]
  %s13 = inlined_call_operand.vmem [shape: f32[1,32], index: 13, kind: input, shape index: {}]
  %s14 = inlined_call_operand.vmem [shape: f32[1,32], index: 14, kind: input, shape index: {}]
  %s15 = inlined_call_operand.vmem [shape: f32[1,32], index: 15, kind: input, shape index: {}]
  %s16 = inlined_call_operand.hbm [shape: f32[32,128], index: 16, kind: input, shape index: {}]
  %s17 = inlined_call_operand.vmem [shape: f32[1,128], index: 17, kind: input, shape index: {}]
  %s18 = inlined_call_operand.vmem [shape: f32[128,32], index: 18, kind: input, shape index: {}]
  %s19 = inlined_call_operand.vmem [shape: f32[1,32], index: 19, kind: input, shape index: {}]
  %s20 = inlined_call_operand.vmem [shape: f32[1,32], index: 20, kind: input, shape index: {}]
  %s21 = inlined_call_operand.vmem [shape: f32[1,32], index: 21, kind: input, shape index: {}]
  %s22 = inlined_call_operand.hbm [shape: f32[2,8,32], index: 22, kind: output, shape index: {}]
  %s23 = sld [smem:[#allocation0]]
  $region110: #{tpu_custom_call.1} parent=0
    _
  %s25 = ssub.s32 1, %s23
  %s26 = scalar_select 0, %s25, %s23
  $region1: #{tpu_custom_call.1} parent=0
    #allocation2 [shape = 'u8[8192]{0}', space=vmem, size = 0x2000, scoped, tag = 'input window, operand 0, single buffered']
    #allocation3 [shape = 's32[1]{0}', space=sflag, size = 0x4, scoped, tag = 'scoped memory for tpu_custom_call.1']
    #allocation4 [shape = 's32[1]{0}', space=sflag, size = 0x4, scoped, tag = 'scoped memory for tpu_custom_call.1']
    #allocation5 [shape = 'u8[16384]{0}', space=vmem, size = 0x4000, scoped, tag = 'input window, operand 12, single buffered']
    #allocation6 [shape = 's32[1]{0}', space=sflag, size = 0x4, scoped, tag = 'scoped memory for tpu_custom_call.1']
    #allocation7 [shape = 'u8[16384]{0}', space=vmem, size = 0x4000, scoped, tag = 'input window, operand 16, single buffered']
    #allocation8 [shape = 'u8[8192]{0}', space=vmem, size = 0x2000, scoped, tag = 'output window, operand 0, single buffered']
    %27 = vsyncpa [#allocation3], 0
    %28 = vsyncpa [#allocation6], 0
    %29 = vsyncpa [#allocation4], 0
    // Predicated region
    $region2: #{tpu_custom_call.1} parent=1 // pred_check
      _
    $region3: #{tpu_custom_call.1} parent=1 // pred_check_branch
      %31 = sbr.rel (0) target = $region5
    $region4: #{tpu_custom_call.1} parent=1 // pred_region
      %33 = vsyncadd [#allocation3], 0
      %s34 = sshll.u32 %s0, 4
      %s35 = int_to_ptr.hbm [resolvable:$true] %s34
      %s36 = sshll.u32 [#allocation2], 4
      %s37 = int_to_ptr.vmem [resolvable:$true] %s36
      %42 = dma.hbm_to_vmem [thread:$0]  %s35, 256, %s37, [#allocation3], 128, 128, 8
    $region5: #{tpu_custom_call.1} parent=1 // pred_fallthru
      _
    // Predicated region
    $region6: #{tpu_custom_call.1} parent=1 // pred_check
      _
    $region7: #{tpu_custom_call.1} parent=1 // pred_check_branch
      %44 = sbr.rel (0) target = $region9
    $region8: #{tpu_custom_call.1} parent=1 // pred_region
      _
    $region9: #{tpu_custom_call.1} parent=1 // pred_fallthru
      _
    // Predicated region
    $region10: #{tpu_custom_call.1} parent=1 // pred_check
      _
    $region11: #{tpu_custom_call.1} parent=1 // pred_check_branch
      %46 = sbr.rel (0) target = $region13
    $region12: #{tpu_custom_call.1} parent=1 // pred_region
      _
    $region13: #{tpu_custom_call.1} parent=1 // pred_fallthru
      _
    // Predicated region
    $region14: #{tpu_custom_call.1} parent=1 // pred_check
      _
    $region15: #{tpu_custom_call.1} parent=1 // pred_check_branch
      %48 = sbr.rel (0) target = $region17
    $region16: #{tpu_custom_call.1} parent=1 // pred_region
      _
    $region17: #{tpu_custom_call.1} parent=1 // pred_fallthru
      _
    // Predicated region
    $region18: #{tpu_custom_call.1} parent=1 // pred_check
      _
    $region19: #{tpu_custom_call.1} parent=1 // pred_check_branch
      %50 = sbr.rel (0) target = $region21
    $region20: #{tpu_custom_call.1} parent=1 // pred_region
      _
    $region21: #{tpu_custom_call.1} parent=1 // pred_fallthru
      _
    // Predicated region
    $region22: #{tpu_custom_call.1} parent=1 // pred_check
      _
    $region23: #{tpu_custom_call.1} parent=1 // pred_check_branch
      %52 = sbr.rel (0) target = $region25
    $region24: #{tpu_custom_call.1} parent=1 // pred_region
      _
    $region25: #{tpu_custom_call.1} parent=1 // pred_fallthru
      _
    // Predicated region
    $region26: #{tpu_custom_call.1} parent=1 // pred_check
      _
    $region27: #{tpu_custom_call.1} parent=1 // pred_check_branch
      %54 = sbr.rel (0) target = $region29
    $region28: #{tpu_custom_call.1} parent=1 // pred_region
      _
    $region29: #{tpu_custom_call.1} parent=1 // pred_fallthru
      _
    // Predicated region
    $region30: #{tpu_custom_call.1} parent=1 // pred_check
      _
    $region31: #{tpu_custom_call.1} parent=1 // pred_check_branch
      %56 = sbr.rel (0) target = $region33
    $region32: #{tpu_custom_call.1} parent=1 // pred_region
      _
    $region33: #{tpu_custom_call.1} parent=1 // pred_fallthru
      _
    // Predicated region
    $region34: #{tpu_custom_call.1} parent=1 // pred_check
      _
    $region35: #{tpu_custom_call.1} parent=1 // pred_check_branch
      %58 = sbr.rel (0) target = $region37
    $region36: #{tpu_custom_call.1} parent=1 // pred_region
      _
    $region37: #{tpu_custom_call.1} parent=1 // pred_fallthru
      _
    // Predicated region
    $region38: #{tpu_custom_call.1} parent=1 // pred_check
      _
    $region39: #{tpu_custom_call.1} parent=1 // pred_check_branch
      %60 = sbr.rel (0) target = $region41
    $region40: #{tpu_custom_call.1} parent=1 // pred_region
      _
    $region41: #{tpu_custom_call.1} parent=1 // pred_fallthru
      _
    // Predicated region
    $region42: #{tpu_custom_call.1} parent=1 // pred_check
      _
    $region43: #{tpu_custom_call.1} parent=1 // pred_check_branch
      %62 = sbr.rel (0) target = $region45
    $region44: #{tpu_custom_call.1} parent=1 // pred_region
      _
    $region45: #{tpu_custom_call.1} parent=1 // pred_fallthru
      _
    // Predicated region
    $region46: #{tpu_custom_call.1} parent=1 // pred_check
      _
    $region47: #{tpu_custom_call.1} parent=1 // pred_check_branch
      %64 = sbr.rel (0) target = $region49
    $region48: #{tpu_custom_call.1} parent=1 // pred_region
      _
    $region49: #{tpu_custom_call.1} parent=1 // pred_fallthru
      _
    // Predicated region
    $region50: #{tpu_custom_call.1} parent=1 // pred_check
      _
    $region51: #{tpu_custom_call.1} parent=1 // pred_check_branch
      %66 = sbr.rel (0) target = $region53
    $region52: #{tpu_custom_call.1} parent=1 // pred_region
      %68 = vsyncadd [#allocation6], 0
      %s69 = sshll.u32 %s12, 4
      %s70 = int_to_ptr.hbm [resolvable:$true] %s69
      %s71 = sshll.u32 [#allocation5], 4
      %s72 = int_to_ptr.vmem [resolvable:$true] %s71
      %77 = dma.hbm_to_vmem [thread:$0]  %s70, 512, %s72, [#allocation6], 128, 128, 8
    $region53: #{tpu_custom_call.1} parent=1 // pred_fallthru
      _
    // Predicated region
    $region54: #{tpu_custom_call.1} parent=1 // pred_check
      _
    $region55: #{tpu_custom_call.1} parent=1 // pred_check_branch
      %79 = sbr.rel (0) target = $region57
    $region56: #{tpu_custom_call.1} parent=1 // pred_region
      _
    $region57: #{tpu_custom_call.1} parent=1 // pred_fallthru
      _
    // Predicated region
    $region58: #{tpu_custom_call.1} parent=1 // pred_check
      _
    $region59: #{tpu_custom_call.1} parent=1 // pred_check_branch
      %81 = sbr.rel (0) target = $region61
    $region60: #{tpu_custom_call.1} parent=1 // pred_region
      _
    $region61: #{tpu_custom_call.1} parent=1 // pred_fallthru
      _
    // Predicated region
    $region62: #{tpu_custom_call.1} parent=1 // pred_check
      _
    $region63: #{tpu_custom_call.1} parent=1 // pred_check_branch
      %83 = sbr.rel (0) target = $region65
    $region64: #{tpu_custom_call.1} parent=1 // pred_region
      _
    $region65: #{tpu_custom_call.1} parent=1 // pred_fallthru
      _
    // Predicated region
    $region66: #{tpu_custom_call.1} parent=1 // pred_check
      _
    $region67: #{tpu_custom_call.1} parent=1 // pred_check_branch
      %85 = sbr.rel (0) target = $region69
    $region68: #{tpu_custom_call.1} parent=1 // pred_region
      %87 = vsyncadd [#allocation6], 0
      %s88 = sshll.u32 %s16, 4
      %s89 = int_to_ptr.hbm [resolvable:$true] %s88
      %s90 = sshll.u32 [#allocation7], 4
      %s91 = int_to_ptr.vmem [resolvable:$true] %s90
      %96 = dma.hbm_to_vmem [thread:$0]  %s89, 512, %s91, [#allocation6], 128, 128, 8
    $region69: #{tpu_custom_call.1} parent=1 // pred_fallthru
      _
    // Predicated region
    $region70: #{tpu_custom_call.1} parent=1 // pred_check
      _
    $region71: #{tpu_custom_call.1} parent=1 // pred_check_branch
      %98 = sbr.rel (0) target = $region73
    $region72: #{tpu_custom_call.1} parent=1 // pred_region
      _
    $region73: #{tpu_custom_call.1} parent=1 // pred_fallthru
      _
    // Predicated region
    $region74: #{tpu_custom_call.1} parent=1 // pred_check
      _
    $region75: #{tpu_custom_call.1} parent=1 // pred_check_branch
      %100 = sbr.rel (0) target = $region77
    $region76: #{tpu_custom_call.1} parent=1 // pred_region
      _
    $region77: #{tpu_custom_call.1} parent=1 // pred_fallthru
      _
    // Predicated region
    $region78: #{tpu_custom_call.1} parent=1 // pred_check
      _
    $region79: #{tpu_custom_call.1} parent=1 // pred_check_branch
      %102 = sbr.rel (0) target = $region81
    $region80: #{tpu_custom_call.1} parent=1 // pred_region
      _
    $region81: #{tpu_custom_call.1} parent=1 // pred_fallthru
      _
    // Predicated region
    $region82: #{tpu_custom_call.1} parent=1 // pred_check
      _
    $region83: #{tpu_custom_call.1} parent=1 // pred_check_branch
      %104 = sbr.rel (0) target = $region85
    $region84: #{tpu_custom_call.1} parent=1 // pred_region
      _
    $region85: #{tpu_custom_call.1} parent=1 // pred_fallthru
      _
    // Predicated region
    $region86: #{tpu_custom_call.1} parent=1 // pred_check
      _
    $region87: #{tpu_custom_call.1} parent=1 // pred_check_branch
      %106 = sbr.rel (0) target = $region89
    $region88: #{tpu_custom_call.1} parent=1 // pred_region
      _
    $region89: #{tpu_custom_call.1} parent=1 // pred_fallthru
      _
    // Predicated region
    $region90: #{tpu_custom_call.1} parent=1 // pred_check
      _
    $region91: #{tpu_custom_call.1} parent=1 // pred_check_branch
      %108 = sbr.rel (0) target = $region93
    $region92: #{tpu_custom_call.1} parent=1 // pred_region
      %110 = dma.done [#allocation3], 256
    $region93: #{tpu_custom_call.1} parent=1 // pred_fallthru
      _
    // Predicated region
    $region94: #{tpu_custom_call.1} parent=1 // pred_check
      _
    $region95: #{tpu_custom_call.1} parent=1 // pred_check_branch
      %112 = sbr.rel (0) target = $region97
    $region96: #{tpu_custom_call.1} parent=1 // pred_region
      %114 = dma.done [#allocation6], 512
    $region97: #{tpu_custom_call.1} parent=1 // pred_fallthru
      _
    // Predicated region
    $region98: #{tpu_custom_call.1} parent=1 // pred_check
      _
    $region99: #{tpu_custom_call.1} parent=1 // pred_check_branch
      %116 = sbr.rel (0) target = $region101
    $region100: #{tpu_custom_call.1} parent=1 // pred_region
      %118 = dma.done [#allocation6], 512
    $region101: #{tpu_custom_call.1} parent=1 // pred_fallthru
      _
    %v119 = vld [vmem:[#allocation2] sm:$0xff]
    %v120 = vld [vmem:[#allocation2 + $0x8] sm:$0xff]
    %v121 = vld [vmem:[%s1] sm:$0xff]
    %v122 = vld [vmem:[%s1 + $0x8] sm:$0xff]
    %v123 = vld [vmem:[%s1 + $0x10] sm:$0xff]
    %v124 = vld [vmem:[%s1 + $0x18] sm:$0xff]
    %v125 = vld [vmem:[%s2] sm:$0xff]
    %v126 = vld [vmem:[%s2 + $0x8] sm:$0xff]
    %v127 = vld [vmem:[%s2 + $0x10] sm:$0xff]
    %v128 = vld [vmem:[%s2 + $0x18] sm:$0xff]
    %v129 = vld [vmem:[%s3] sm:$0x1]
    %v131 = vperm.slane %v129, 0
    %vm133 = vcmask 261120
    %v135 = vsel %vm133, %v119, 0
    %v138 = vsel %vm133, %v120, 0
    %140 = vmatpush.msra.mxu0 0.0
    %141 = vmatpush.msra.mxu0 0.0
    %142 = vmatpush.msra.mxu0 0.0
    %143 = vmatpush.msra.mxu0 0.0
    %144 = vmatpush.msra.mxu0 0.0
    %145 = vmatpush.msra.mxu0 0.0
    %146 = vmatpush.msra.mxu0 0.0
    %147 = vmatpush.msra.mxu0 0.0
    %148 = vmatpush.msra.mxu0 0.0
    %149 = vmatpush.msra.mxu0 0.0
    %150 = vmatpush.msra.mxu0 0.0
    %151 = vmatpush.msra.mxu0 0.0
    %152 = vmatpush.msra.mxu0 %v128
    %153 = vmatpush.msra.mxu0 %v127
    %154 = vmatpush.msra.mxu0 %v126
    %155 = vmatpush.msra.mxu0 %v125
    %156 = vmatmul.f32.gmra.mxu0 %v135
    %v157 = vpop.f32.mrf.mxu0
    %v158 = vadd.f32 %v131, %v157
    %159 = vmatmul.f32.gmra.mxu0 %v138
    %v160 = vpop.f32.mrf.mxu0
    %v161 = vadd.f32 %v131, %v160
    %162 = vdwg.mxu0
    %v163 = vld [vmem:[%s4] sm:$0xff]
    %v164 = vld [vmem:[%s4 + $0x8] sm:$0xff]
    %v165 = vld [vmem:[%s4 + $0x10] sm:$0xff]
    %v166 = vld [vmem:[%s4 + $0x18] sm:$0xff]
    %v167 = vld [vmem:[%s5] sm:$0x1]
    %169 = vrot.lane.b32.xlu0 %v158, 96
    %v170 = vpop.permute.xlu0 %169
    %vm171 = vcmask 64512
    %v172 = vsel %vm171, %v158, 0
    %v174 = vsel %vm171, %v170, 0
    %176 = vmatpush.xpose.msra.mxu0 0.0
    %177 = vmatpush.xpose.msra.mxu0 0.0
    %178 = vmatpush.xpose.msra.mxu0 0.0
    %179 = vmatpush.xpose.msra.mxu0 0.0
    %180 = vmatpush.xpose.msra.mxu0 0.0
    %181 = vmatpush.xpose.msra.mxu0 0.0
    %182 = vmatpush.xpose.msra.mxu0 0.0
    %183 = vmatpush.xpose.msra.mxu0 0.0
    %184 = vmatpush.xpose.msra.mxu0 0.0
    %185 = vmatpush.xpose.msra.mxu0 0.0
    %186 = vmatpush.xpose.msra.mxu0 0.0
    %187 = vmatpush.xpose.msra.mxu0 0.0
    %188 = vmatpush.xpose.msra.mxu0 0.0
    %189 = vmatpush.xpose.msra.mxu0 0.0
    %190 = vmatpush.xpose.msra.mxu0 0.0
    %191 = vmatpush.xpose.msra.mxu0 %v174
    %192 = vmatmul.f32.gmra.mxu0 %v172
    %v193 = vpop.f32.mrf.mxu0
    %v194 = vadd.f32 0.0, %v193
    %195 = vdwg.mxu0
    %197 = vrot.lane.b32.xlu0 %v161, 96
    %v198 = vpop.permute.xlu0 %197
    %v199 = vsel %vm171, %v161, 0
    %v201 = vsel %vm171, %v198, 0
    %203 = vmatpush.xpose.msra.mxu0 0.0
    %204 = vmatpush.xpose.msra.mxu0 0.0
    %205 = vmatpush.xpose.msra.mxu0 0.0
    %206 = vmatpush.xpose.msra.mxu0 0.0
    %207 = vmatpush.xpose.msra.mxu0 0.0
    %208 = vmatpush.xpose.msra.mxu0 0.0
    %209 = vmatpush.xpose.msra.mxu0 0.0
    %210 = vmatpush.xpose.msra.mxu0 0.0
    %211 = vmatpush.xpose.msra.mxu0 0.0
    %212 = vmatpush.xpose.msra.mxu0 0.0
    %213 = vmatpush.xpose.msra.mxu0 0.0
    %214 = vmatpush.xpose.msra.mxu0 0.0
    %215 = vmatpush.xpose.msra.mxu0 0.0
    %216 = vmatpush.xpose.msra.mxu0 0.0
    %217 = vmatpush.xpose.msra.mxu0 0.0
    %218 = vmatpush.xpose.msra.mxu0 %v201
    %219 = vmatmul.f32.gmra.mxu0 %v199
    %v220 = vpop.f32.mrf.mxu0
    %v221 = vadd.f32 0.0, %v220
    %222 = vdwg.mxu0
    %v223 = vsel %vm171, %v194, -inf
    %224 = vmax.xlane.f32.xlu0 %v223
    %v225 = vpop.xlane.xlu0 %224
    %v226 = vsel %vm171, %v221, -inf
    %227 = vmax.xlane.f32.xlu0 %v226
    %v228 = vpop.xlane.xlu0 %227
    %v229 = vsub.f32 %v194, %v225
    %v230 = vsub.f32 %v221, %v228
    %v231 = vmul.f32 %v229, 1.442695
    %v232 = vpow.pop %v231
    %v233 = vmul.f32 %v230, 1.442695
    %v234 = vpow.pop %v233
    %v235 = vsel %vm171, %v232, 0.0
    %236 = vadd.xlane.f32.xlu0 %v235
    %v237 = vpop.xlane.xlu0 %236
    %v238 = vsel %vm171, %v234, 0.0
    %239 = vadd.xlane.f32.xlu0 %v238
    %v240 = vpop.xlane.xlu0 %239
    %v241 = vrcp.pop %v237
    %v242 = vrcp.pop %v240
    %v243 = vmul.f32 %v232, %v241
    %v244 = vmul.f32 %v234, %v242
    %245 = vrot.lane.b32.xlu0 %v158, 64
    %v246 = vpop.permute.xlu0 %245
    %v249 = vsel %vm171, %v243, 0
    %251 = vmatpush.msra.mxu0 0.0
    %252 = vmatpush.msra.mxu0 0.0
    %253 = vmatpush.msra.mxu0 0.0
    %254 = vmatpush.msra.mxu0 0.0
    %255 = vmatpush.msra.mxu0 0.0
    %256 = vmatpush.msra.mxu0 0.0
    %257 = vmatpush.msra.mxu0 0.0
    %258 = vmatpush.msra.mxu0 0.0
    %259 = vmatpush.msra.mxu0 0.0
    %260 = vmatpush.msra.mxu0 0.0
    %261 = vmatpush.msra.mxu0 0.0
    %262 = vmatpush.msra.mxu0 0.0
    %263 = vmatpush.msra.mxu0 0.0
    %264 = vmatpush.msra.mxu0 0.0
    %265 = vmatpush.msra.mxu0 0.0
    %266 = vmatpush.msra.mxu0 %v246
    %267 = vmatmul.f32.gmra.mxu0 %v249
    %v268 = vpop.f32.mrf.mxu0
    %v269 = vadd.f32 0.0, %v268
    %270 = vdwg.mxu0
    %271 = vrot.lane.b32.xlu0 %v161, 64
    %v272 = vpop.permute.xlu0 %271
    %v275 = vsel %vm171, %v244, 0
    %277 = vmatpush.msra.mxu0 0.0
    %278 = vmatpush.msra.mxu0 0.0
    %279 = vmatpush.msra.mxu0 0.0
    %280 = vmatpush.msra.mxu0 0.0
    %281 = vmatpush.msra.mxu0 0.0
    %282 = vmatpush.msra.mxu0 0.0
    %283 = vmatpush.msra.mxu0 0.0
    %284 = vmatpush.msra.mxu0 0.0
    %285 = vmatpush.msra.mxu0 0.0
    %286 = vmatpush.msra.mxu0 0.0
    %287 = vmatpush.msra.mxu0 0.0
    %288 = vmatpush.msra.mxu0 0.0
    %289 = vmatpush.msra.mxu0 0.0
    %290 = vmatpush.msra.mxu0 0.0
    %291 = vmatpush.msra.mxu0 0.0
    %292 = vmatpush.msra.mxu0 %v272
    %293 = vmatmul.f32.gmra.mxu0 %v275
    %v294 = vpop.f32.mrf.mxu0
    %v295 = vadd.f32 0.0, %v294
    %296 = vdwg.mxu0
    %297 = vrot.lane.b32.xlu0 %v158, 120
    %v298 = vpop.permute.xlu0 %297
    %299 = vrot.lane.b32.xlu0 %v158, 88
    %v300 = vpop.permute.xlu0 %299
    %v301 = vsel %vm171, %v298, 0
    %v303 = vsel %vm171, %v300, 0
    %305 = vmatpush.xpose.msra.mxu0 0.0
    %306 = vmatpush.xpose.msra.mxu0 0.0
    %307 = vmatpush.xpose.msra.mxu0 0.0
    %308 = vmatpush.xpose.msra.mxu0 0.0
    %309 = vmatpush.xpose.msra.mxu0 0.0
    %310 = vmatpush.xpose.msra.mxu0 0.0
    %311 = vmatpush.xpose.msra.mxu0 0.0
    %312 = vmatpush.xpose.msra.mxu0 0.0
    %313 = vmatpush.xpose.msra.mxu0 0.0
    %314 = vmatpush.xpose.msra.mxu0 0.0
    %315 = vmatpush.xpose.msra.mxu0 0.0
    %316 = vmatpush.xpose.msra.mxu0 0.0
    %317 = vmatpush.xpose.msra.mxu0 0.0
    %318 = vmatpush.xpose.msra.mxu0 0.0
    %319 = vmatpush.xpose.msra.mxu0 0.0
    %320 = vmatpush.xpose.msra.mxu0 %v303
    %321 = vmatmul.f32.gmra.mxu0 %v301
    %v322 = vpop.f32.mrf.mxu0
    %v323 = vadd.f32 0.0, %v322
    %324 = vdwg.mxu0
    %325 = vrot.lane.b32.xlu0 %v161, 120
    %v326 = vpop.permute.xlu0 %325
    %327 = vrot.lane.b32.xlu0 %v161, 88
    %v328 = vpop.permute.xlu0 %327
    %v329 = vsel %vm171, %v326, 0
    %v331 = vsel %vm171, %v328, 0
    %333 = vmatpush.xpose.msra.mxu0 0.0
    %334 = vmatpush.xpose.msra.mxu0 0.0
    %335 = vmatpush.xpose.msra.mxu0 0.0
    %336 = vmatpush.xpose.msra.mxu0 0.0
    %337 = vmatpush.xpose.msra.mxu0 0.0
    %338 = vmatpush.xpose.msra.mxu0 0.0
    %339 = vmatpush.xpose.msra.mxu0 0.0
    %340 = vmatpush.xpose.msra.mxu0 0.0
    %341 = vmatpush.xpose.msra.mxu0 0.0
    %342 = vmatpush.xpose.msra.mxu0 0.0
    %343 = vmatpush.xpose.msra.mxu0 0.0
    %344 = vmatpush.xpose.msra.mxu0 0.0
    %345 = vmatpush.xpose.msra.mxu0 0.0
    %346 = vmatpush.xpose.msra.mxu0 0.0
    %347 = vmatpush.xpose.msra.mxu0 0.0
    %348 = vmatpush.xpose.msra.mxu0 %v331
    %349 = vmatmul.f32.gmra.mxu0 %v329
    %v350 = vpop.f32.mrf.mxu0
    %v351 = vadd.f32 0.0, %v350
    %352 = vdwg.mxu0
    %v353 = vsel %vm171, %v323, -inf
    %354 = vmax.xlane.f32.xlu0 %v353
    %v355 = vpop.xlane.xlu0 %354
    %v356 = vsel %vm171, %v351, -inf
    %357 = vmax.xlane.f32.xlu0 %v356
    %v358 = vpop.xlane.xlu0 %357
    %v359 = vsub.f32 %v323, %v355
    %v360 = vsub.f32 %v351, %v358
    %v361 = vmul.f32 %v359, 1.442695
    %v362 = vpow.pop %v361
    %v363 = vmul.f32 %v360, 1.442695
    %v364 = vpow.pop %v363
    %v365 = vsel %vm171, %v362, 0.0
    %366 = vadd.xlane.f32.xlu0 %v365
    %v367 = vpop.xlane.xlu0 %366
    %v368 = vsel %vm171, %v364, 0.0
    %369 = vadd.xlane.f32.xlu0 %v368
    %v370 = vpop.xlane.xlu0 %369
    %v371 = vrcp.pop %v367
    %v372 = vrcp.pop %v370
    %v373 = vmul.f32 %v362, %v371
    %v374 = vmul.f32 %v364, %v372
    %375 = vrot.lane.b32.xlu0 %v158, 56
    %v376 = vpop.permute.xlu0 %375
    %v379 = vsel %vm171, %v373, 0
    %381 = vmatpush.msra.mxu0 0.0
    %382 = vmatpush.msra.mxu0 0.0
    %383 = vmatpush.msra.mxu0 0.0
    %384 = vmatpush.msra.mxu0 0.0
    %385 = vmatpush.msra.mxu0 0.0
    %386 = vmatpush.msra.mxu0 0.0
    %387 = vmatpush.msra.mxu0 0.0
    %388 = vmatpush.msra.mxu0 0.0
    %389 = vmatpush.msra.mxu0 0.0
    %390 = vmatpush.msra.mxu0 0.0
    %391 = vmatpush.msra.mxu0 0.0
    %392 = vmatpush.msra.mxu0 0.0
    %393 = vmatpush.msra.mxu0 0.0
    %394 = vmatpush.msra.mxu0 0.0
    %395 = vmatpush.msra.mxu0 0.0
    %396 = vmatpush.msra.mxu0 %v376
    %397 = vmatmul.f32.gmra.mxu0 %v379
    %v398 = vpop.f32.mrf.mxu0
    %v399 = vadd.f32 0.0, %v398
    %400 = vdwg.mxu0
    %401 = vrot.lane.b32.xlu0 %v161, 56
    %v402 = vpop.permute.xlu0 %401
    %v405 = vsel %vm171, %v374, 0
    %407 = vmatpush.msra.mxu0 0.0
    %408 = vmatpush.msra.mxu0 0.0
    %409 = vmatpush.msra.mxu0 0.0
    %410 = vmatpush.msra.mxu0 0.0
    %411 = vmatpush.msra.mxu0 0.0
    %412 = vmatpush.msra.mxu0 0.0
    %413 = vmatpush.msra.mxu0 0.0
    %414 = vmatpush.msra.mxu0 0.0
    %415 = vmatpush.msra.mxu0 0.0
    %416 = vmatpush.msra.mxu0 0.0
    %417 = vmatpush.msra.mxu0 0.0
    %418 = vmatpush.msra.mxu0 0.0
    %419 = vmatpush.msra.mxu0 0.0
    %420 = vmatpush.msra.mxu0 0.0
    %421 = vmatpush.msra.mxu0 0.0
    %422 = vmatpush.msra.mxu0 %v402
    %423 = vmatmul.f32.gmra.mxu0 %v405
    %v424 = vpop.f32.mrf.mxu0
    %v425 = vadd.f32 0.0, %v424
    %426 = vdwg.mxu0
    %427 = vrot.lane.b32.xlu0 %v158, 112
    %v428 = vpop.permute.xlu0 %427
    %429 = vrot.lane.b32.xlu0 %v158, 80
    %v430 = vpop.permute.xlu0 %429
    %v431 = vsel %vm171, %v428, 0
    %v433 = vsel %vm171, %v430, 0
    %435 = vmatpush.xpose.msra.mxu0 0.0
    %436 = vmatpush.xpose.msra.mxu0 0.0
    %437 = vmatpush.xpose.msra.mxu0 0.0
    %438 = vmatpush.xpose.msra.mxu0 0.0
    %439 = vmatpush.xpose.msra.mxu0 0.0
    %440 = vmatpush.xpose.msra.mxu0 0.0
    %441 = vmatpush.xpose.msra.mxu0 0.0
    %442 = vmatpush.xpose.msra.mxu0 0.0
    %443 = vmatpush.xpose.msra.mxu0 0.0
    %444 = vmatpush.xpose.msra.mxu0 0.0
    %445 = vmatpush.xpose.msra.mxu0 0.0
    %446 = vmatpush.xpose.msra.mxu0 0.0
    %447 = vmatpush.xpose.msra.mxu0 0.0
    %448 = vmatpush.xpose.msra.mxu0 0.0
    %449 = vmatpush.xpose.msra.mxu0 0.0
    %450 = vmatpush.xpose.msra.mxu0 %v433
    %451 = vmatmul.f32.gmra.mxu0 %v431
    %v452 = vpop.f32.mrf.mxu0
    %v453 = vadd.f32 0.0, %v452
    %454 = vdwg.mxu0
    %455 = vrot.lane.b32.xlu0 %v161, 112
    %v456 = vpop.permute.xlu0 %455
    %457 = vrot.lane.b32.xlu0 %v161, 80
    %v458 = vpop.permute.xlu0 %457
    %v459 = vsel %vm171, %v456, 0
    %v461 = vsel %vm171, %v458, 0
    %463 = vmatpush.xpose.msra.mxu0 0.0
    %464 = vmatpush.xpose.msra.mxu0 0.0
    %465 = vmatpush.xpose.msra.mxu0 0.0
    %466 = vmatpush.xpose.msra.mxu0 0.0
    %467 = vmatpush.xpose.msra.mxu0 0.0
    %468 = vmatpush.xpose.msra.mxu0 0.0
    %469 = vmatpush.xpose.msra.mxu0 0.0
    %470 = vmatpush.xpose.msra.mxu0 0.0
    %471 = vmatpush.xpose.msra.mxu0 0.0
    %472 = vmatpush.xpose.msra.mxu0 0.0
    %473 = vmatpush.xpose.msra.mxu0 0.0
    %474 = vmatpush.xpose.msra.mxu0 0.0
    %475 = vmatpush.xpose.msra.mxu0 0.0
    %476 = vmatpush.xpose.msra.mxu0 0.0
    %477 = vmatpush.xpose.msra.mxu0 0.0
    %478 = vmatpush.xpose.msra.mxu0 %v461
    %479 = vmatmul.f32.gmra.mxu0 %v459
    %v480 = vpop.f32.mrf.mxu0
    %v481 = vadd.f32 0.0, %v480
    %482 = vdwg.mxu0
    %v483 = vsel %vm171, %v453, -inf
    %484 = vmax.xlane.f32.xlu0 %v483
    %v485 = vpop.xlane.xlu0 %484
    %v486 = vsel %vm171, %v481, -inf
    %487 = vmax.xlane.f32.xlu0 %v486
    %v488 = vpop.xlane.xlu0 %487
    %v489 = vsub.f32 %v453, %v485
    %v490 = vsub.f32 %v481, %v488
    %v491 = vmul.f32 %v489, 1.442695
    %v492 = vpow.pop %v491
    %v493 = vmul.f32 %v490, 1.442695
    %v494 = vpow.pop %v493
    %v495 = vsel %vm171, %v492, 0.0
    %496 = vadd.xlane.f32.xlu0 %v495
    %v497 = vpop.xlane.xlu0 %496
    %v498 = vsel %vm171, %v494, 0.0
    %499 = vadd.xlane.f32.xlu0 %v498
    %v500 = vpop.xlane.xlu0 %499
    %v501 = vrcp.pop %v497
    %v502 = vrcp.pop %v500
    %v503 = vmul.f32 %v492, %v501
    %v504 = vmul.f32 %v494, %v502
    %505 = vrot.lane.b32.xlu0 %v158, 48
    %v506 = vpop.permute.xlu0 %505
    %v509 = vsel %vm171, %v503, 0
    %511 = vmatpush.msra.mxu0 0.0
    %512 = vmatpush.msra.mxu0 0.0
    %513 = vmatpush.msra.mxu0 0.0
    %514 = vmatpush.msra.mxu0 0.0
    %515 = vmatpush.msra.mxu0 0.0
    %516 = vmatpush.msra.mxu0 0.0
    %517 = vmatpush.msra.mxu0 0.0
    %518 = vmatpush.msra.mxu0 0.0
    %519 = vmatpush.msra.mxu0 0.0
    %520 = vmatpush.msra.mxu0 0.0
    %521 = vmatpush.msra.mxu0 0.0
    %522 = vmatpush.msra.mxu0 0.0
    %523 = vmatpush.msra.mxu0 0.0
    %524 = vmatpush.msra.mxu0 0.0
    %525 = vmatpush.msra.mxu0 0.0
    %526 = vmatpush.msra.mxu0 %v506
    %527 = vmatmul.f32.gmra.mxu0 %v509
    %v528 = vpop.f32.mrf.mxu0
    %v529 = vadd.f32 0.0, %v528
    %530 = vdwg.mxu0
    %531 = vrot.lane.b32.xlu0 %v161, 48
    %v532 = vpop.permute.xlu0 %531
    %v535 = vsel %vm171, %v504, 0
    %537 = vmatpush.msra.mxu0 0.0
    %538 = vmatpush.msra.mxu0 0.0
    %539 = vmatpush.msra.mxu0 0.0
    %540 = vmatpush.msra.mxu0 0.0
    %541 = vmatpush.msra.mxu0 0.0
    %542 = vmatpush.msra.mxu0 0.0
    %543 = vmatpush.msra.mxu0 0.0
    %544 = vmatpush.msra.mxu0 0.0
    %545 = vmatpush.msra.mxu0 0.0
    %546 = vmatpush.msra.mxu0 0.0
    %547 = vmatpush.msra.mxu0 0.0
    %548 = vmatpush.msra.mxu0 0.0
    %549 = vmatpush.msra.mxu0 0.0
    %550 = vmatpush.msra.mxu0 0.0
    %551 = vmatpush.msra.mxu0 0.0
    %552 = vmatpush.msra.mxu0 %v532
    %553 = vmatmul.f32.gmra.mxu0 %v535
    %v554 = vpop.f32.mrf.mxu0
    %v555 = vadd.f32 0.0, %v554
    %556 = vdwg.mxu0
    %557 = vrot.lane.b32.xlu0 %v158, 104
    %v558 = vpop.permute.xlu0 %557
    %559 = vrot.lane.b32.xlu0 %v158, 72
    %v560 = vpop.permute.xlu0 %559
    %v561 = vsel %vm171, %v558, 0
    %v563 = vsel %vm171, %v560, 0
    %565 = vmatpush.xpose.msra.mxu0 0.0
    %566 = vmatpush.xpose.msra.mxu0 0.0
    %567 = vmatpush.xpose.msra.mxu0 0.0
    %568 = vmatpush.xpose.msra.mxu0 0.0
    %569 = vmatpush.xpose.msra.mxu0 0.0
    %570 = vmatpush.xpose.msra.mxu0 0.0
    %571 = vmatpush.xpose.msra.mxu0 0.0
    %572 = vmatpush.xpose.msra.mxu0 0.0
    %573 = vmatpush.xpose.msra.mxu0 0.0
    %574 = vmatpush.xpose.msra.mxu0 0.0
    %575 = vmatpush.xpose.msra.mxu0 0.0
    %576 = vmatpush.xpose.msra.mxu0 0.0
    %577 = vmatpush.xpose.msra.mxu0 0.0
    %578 = vmatpush.xpose.msra.mxu0 0.0
    %579 = vmatpush.xpose.msra.mxu0 0.0
    %580 = vmatpush.xpose.msra.mxu0 %v563
    %581 = vmatmul.f32.gmra.mxu0 %v561
    %v582 = vpop.f32.mrf.mxu0
    %v583 = vadd.f32 0.0, %v582
    %584 = vdwg.mxu0
    %585 = vrot.lane.b32.xlu0 %v161, 104
    %v586 = vpop.permute.xlu0 %585
    %587 = vrot.lane.b32.xlu0 %v161, 72
    %v588 = vpop.permute.xlu0 %587
    %v589 = vsel %vm171, %v586, 0
    %v591 = vsel %vm171, %v588, 0
    %593 = vmatpush.xpose.msra.mxu0 0.0
    %594 = vmatpush.xpose.msra.mxu0 0.0
    %595 = vmatpush.xpose.msra.mxu0 0.0
    %596 = vmatpush.xpose.msra.mxu0 0.0
    %597 = vmatpush.xpose.msra.mxu0 0.0
    %598 = vmatpush.xpose.msra.mxu0 0.0
    %599 = vmatpush.xpose.msra.mxu0 0.0
    %600 = vmatpush.xpose.msra.mxu0 0.0
    %601 = vmatpush.xpose.msra.mxu0 0.0
    %602 = vmatpush.xpose.msra.mxu0 0.0
    %603 = vmatpush.xpose.msra.mxu0 0.0
    %604 = vmatpush.xpose.msra.mxu0 0.0
    %605 = vmatpush.xpose.msra.mxu0 0.0
    %606 = vmatpush.xpose.msra.mxu0 0.0
    %607 = vmatpush.xpose.msra.mxu0 0.0
    %608 = vmatpush.xpose.msra.mxu0 %v591
    %609 = vmatmul.f32.gmra.mxu0 %v589
    %v610 = vpop.f32.mrf.mxu0
    %v611 = vadd.f32 0.0, %v610
    %612 = vdwg.mxu0
    %v613 = vsel %vm171, %v583, -inf
    %614 = vmax.xlane.f32.xlu0 %v613
    %v615 = vpop.xlane.xlu0 %614
    %v616 = vsel %vm171, %v611, -inf
    %617 = vmax.xlane.f32.xlu0 %v616
    %v618 = vpop.xlane.xlu0 %617
    %v619 = vsub.f32 %v583, %v615
    %v620 = vsub.f32 %v611, %v618
    %v621 = vmul.f32 %v619, 1.442695
    %v622 = vpow.pop %v621
    %v623 = vmul.f32 %v620, 1.442695
    %v624 = vpow.pop %v623
    %v625 = vsel %vm171, %v622, 0.0
    %626 = vadd.xlane.f32.xlu0 %v625
    %v627 = vpop.xlane.xlu0 %626
    %v628 = vsel %vm171, %v624, 0.0
    %629 = vadd.xlane.f32.xlu0 %v628
    %v630 = vpop.xlane.xlu0 %629
    %v631 = vrcp.pop %v627
    %v632 = vrcp.pop %v630
    %v633 = vmul.f32 %v622, %v631
    %v634 = vmul.f32 %v624, %v632
    %635 = vrot.lane.b32.xlu0 %v158, 40
    %v636 = vpop.permute.xlu0 %635
    %v639 = vsel %vm171, %v633, 0
    %641 = vmatpush.msra.mxu0 0.0
    %642 = vmatpush.msra.mxu0 0.0
    %643 = vmatpush.msra.mxu0 0.0
    %644 = vmatpush.msra.mxu0 0.0
    %645 = vmatpush.msra.mxu0 0.0
    %646 = vmatpush.msra.mxu0 0.0
    %647 = vmatpush.msra.mxu0 0.0
    %648 = vmatpush.msra.mxu0 0.0
    %649 = vmatpush.msra.mxu0 0.0
    %650 = vmatpush.msra.mxu0 0.0
    %651 = vmatpush.msra.mxu0 0.0
    %652 = vmatpush.msra.mxu0 0.0
    %653 = vmatpush.msra.mxu0 0.0
    %654 = vmatpush.msra.mxu0 0.0
    %655 = vmatpush.msra.mxu0 0.0
    %656 = vmatpush.msra.mxu0 %v636
    %657 = vmatmul.f32.gmra.mxu0 %v639
    %v658 = vpop.f32.mrf.mxu0
    %v659 = vadd.f32 0.0, %v658
    %660 = vdwg.mxu0
    %661 = vrot.lane.b32.xlu0 %v161, 40
    %v662 = vpop.permute.xlu0 %661
    %v665 = vsel %vm171, %v634, 0
    %667 = vmatpush.msra.mxu0 0.0
    %668 = vmatpush.msra.mxu0 0.0
    %669 = vmatpush.msra.mxu0 0.0
    %670 = vmatpush.msra.mxu0 0.0
    %671 = vmatpush.msra.mxu0 0.0
    %672 = vmatpush.msra.mxu0 0.0
    %673 = vmatpush.msra.mxu0 0.0
    %674 = vmatpush.msra.mxu0 0.0
    %675 = vmatpush.msra.mxu0 0.0
    %676 = vmatpush.msra.mxu0 0.0
    %677 = vmatpush.msra.mxu0 0.0
    %678 = vmatpush.msra.mxu0 0.0
    %679 = vmatpush.msra.mxu0 0.0
    %680 = vmatpush.msra.mxu0 0.0
    %681 = vmatpush.msra.mxu0 0.0
    %682 = vmatpush.msra.mxu0 %v662
    %683 = vmatmul.f32.gmra.mxu0 %v665
    %v684 = vpop.f32.mrf.mxu0
    %v685 = vadd.f32 0.0, %v684
    %686 = vdwg.mxu0
    %689 = vrot.lane.b32.xlu0 %v399, 8
    %v690 = vpop.permute.xlu0 %689
    %691 = vrot.lane.b32.xlu0 %v425, 8
    %v692 = vpop.permute.xlu0 %691
    %697 = vrot.lane.b32.xlu0 %v529, 16
    %v698 = vpop.permute.xlu0 %697
    %699 = vrot.lane.b32.xlu0 %v555, 16
    %v700 = vpop.permute.xlu0 %699
    %705 = vrot.lane.b32.xlu0 %v659, 24
    %v706 = vpop.permute.xlu0 %705
    %707 = vrot.lane.b32.xlu0 %v685, 24
    %v708 = vpop.permute.xlu0 %707
    %v711 = vsel %vm171, %v269, %v690
    %v712 = vsel %vm171, %v295, %v692
    %vm713 = vcmask 130048
    %v714 = vsel %vm713, %v711, %v698
    %v715 = vsel %vm713, %v712, %v700
    %vm716 = vcmask 195584
    %v717 = vsel %vm716, %v714, %v706
    %v718 = vsel %vm716, %v715, %v708
    %v720 = vperm.slane %v167, 0
    %v723 = vsel %vm133, %v717, 0
    %v726 = vsel %vm133, %v718, 0
    %728 = vmatpush.msra.mxu0 0.0
    %729 = vmatpush.msra.mxu0 0.0
    %730 = vmatpush.msra.mxu0 0.0
    %731 = vmatpush.msra.mxu0 0.0
    %732 = vmatpush.msra.mxu0 0.0
    %733 = vmatpush.msra.mxu0 0.0
    %734 = vmatpush.msra.mxu0 0.0
    %735 = vmatpush.msra.mxu0 0.0
    %736 = vmatpush.msra.mxu0 0.0
    %737 = vmatpush.msra.mxu0 0.0
    %738 = vmatpush.msra.mxu0 0.0
    %739 = vmatpush.msra.mxu0 0.0
    %740 = vmatpush.msra.mxu0 %v166
    %741 = vmatpush.msra.mxu0 %v165
    %742 = vmatpush.msra.mxu0 %v164
    %743 = vmatpush.msra.mxu0 %v163
    %744 = vmatmul.f32.gmra.mxu0 %v723
    %v745 = vpop.f32.mrf.mxu0
    %v746 = vadd.f32 %v720, %v745
    %747 = vmatmul.f32.gmra.mxu0 %v726
    %v748 = vpop.f32.mrf.mxu0
    %v749 = vadd.f32 %v720, %v748
    %750 = vdwg.mxu0
    %v751 = vadd.f32 %v119, %v746
    %v752 = vadd.f32 %v120, %v749
    %v753 = vld [vmem:[%s6] sm:$0x1]
    %v754 = vld [vmem:[%s7] sm:$0x1]
    %v755 = vsel %vm133, %v751, 0.0
    %756 = vadd.xlane.f32.xlu0 %v755
    %v757 = vpop.xlane.xlu0 %756
    %v758 = vsel %vm133, %v752, 0.0
    %759 = vadd.xlane.f32.xlu0 %v758
    %v760 = vpop.xlane.xlu0 %759
    %v761 = vrcp.pop 32.0
    %v762 = vmul.f32 32.0, %v761
    %v763 = vsub.f32 1.0, %v762
    %v764 = vmul.f32 %v761, %v763
    %v765 = vadd.f32 %v761, %v764
    %vm766 = vweird.f32 %v761
    %v767 = vsel %vm766, %v761, %v765
    %v768 = vmul.f32 %v757, %v767
    %v769 = vmul.f32 %v760, %v767
    %v770 = vsub.f32 %v751, %v768
    %v771 = vsub.f32 %v752, %v769
    %v772 = vmul.f32 %v770, %v770
    %v773 = vmul.f32 %v771, %v771
    %v774 = vsel %vm133, %v772, 0.0
    %775 = vadd.xlane.f32.xlu0 %v774
    %v776 = vpop.xlane.xlu0 %775
    %v777 = vsel %vm133, %v773, 0.0
    %778 = vadd.xlane.f32.xlu0 %v777
    %v779 = vpop.xlane.xlu0 %778
    %v780 = vmul.f32 %v776, %v767
    %v781 = vmul.f32 %v779, %v767
    %v782 = vadd.f32 %v780, 1e-05
    %v783 = vadd.f32 %v781, 1e-05
    %v784 = vrsqrt.pop %v782
    %v785 = vmul.f32 %v784, %v782
    %v786 = vmul.f32 %v785, %v784
    %v787 = vmul.f32 0.5, %v786
    %v788 = vsub.f32 1.5, %v787
    %v789 = vmul.f32 %v784, %v788
    %vm790 = vweird.f32 %v782
    %vm791 = vweird.f32 %v784
    %vm792 = vmor %vm790, %vm791
    %v793 = vsel %vm792, %v784, %v789
    %v794 = vrsqrt.pop %v783
    %v795 = vmul.f32 %v794, %v783
    %v796 = vmul.f32 %v795, %v794
    %v797 = vmul.f32 0.5, %v796
    %v798 = vsub.f32 1.5, %v797
    %v799 = vmul.f32 %v794, %v798
    %vm800 = vweird.f32 %v783
    %vm801 = vweird.f32 %v794
    %vm802 = vmor %vm800, %vm801
    %v803 = vsel %vm802, %v794, %v799
    %v804 = vmul.f32 %v770, %v793
    %v805 = vmul.f32 %v771, %v803
    %v807 = vperm.slane %v753, 0
    %v809 = vmul.f32 %v804, %v807
    %v810 = vmul.f32 %v805, %v807
    %v812 = vperm.slane %v754, 0
    %v814 = vadd.f32 %v809, %v812
    %v815 = vadd.f32 %v810, %v812
    %v816 = vld [vmem:[%s8] sm:$0xff]
    %v817 = vld [vmem:[%s8 + $0x8] sm:$0xff]
    %v818 = vld [vmem:[%s8 + $0x10] sm:$0xff]
    %v819 = vld [vmem:[%s8 + $0x18] sm:$0xff]
    %v820 = vld [vmem:[%s9] sm:$0x1]
    %v822 = vperm.slane %v820, 0
    %v825 = vsel %vm133, %v814, 0
    %v828 = vsel %vm133, %v815, 0
    %830 = vmatpush.msra.mxu0 0.0
    %831 = vmatpush.msra.mxu0 0.0
    %832 = vmatpush.msra.mxu0 0.0
    %833 = vmatpush.msra.mxu0 0.0
    %834 = vmatpush.msra.mxu0 0.0
    %835 = vmatpush.msra.mxu0 0.0
    %836 = vmatpush.msra.mxu0 0.0
    %837 = vmatpush.msra.mxu0 0.0
    %838 = vmatpush.msra.mxu0 0.0
    %839 = vmatpush.msra.mxu0 0.0
    %840 = vmatpush.msra.mxu0 0.0
    %841 = vmatpush.msra.mxu0 0.0
    %842 = vmatpush.msra.mxu0 %v819
    %843 = vmatpush.msra.mxu0 %v818
    %844 = vmatpush.msra.mxu0 %v817
    %845 = vmatpush.msra.mxu0 %v816
    %846 = vmatmul.f32.gmra.mxu0 %v825
    %v847 = vpop.f32.mrf.mxu0
    %v848 = vadd.f32 %v822, %v847
    %849 = vmatmul.f32.gmra.mxu0 %v828
    %v850 = vpop.f32.mrf.mxu0
    %v851 = vadd.f32 %v822, %v850
    %852 = vdwg.mxu0
    %v853 = vld [vmem:[%s10] sm:$0xff]
    %v854 = vld [vmem:[%s10 + $0x8] sm:$0xff]
    %v855 = vld [vmem:[%s10 + $0x10] sm:$0xff]
    %v856 = vld [vmem:[%s10 + $0x18] sm:$0xff]
    %v857 = vld [vmem:[%s11] sm:$0x1]
    %v859 = vperm.slane %v857, 0
    %v862 = vsel %vm133, %v121, 0
    %v865 = vsel %vm133, %v122, 0
    %v868 = vsel %vm133, %v123, 0
    %v871 = vsel %vm133, %v124, 0
    %873 = vmatpush.msra.mxu0 0.0
    %874 = vmatpush.msra.mxu0 0.0
    %875 = vmatpush.msra.mxu0 0.0
    %876 = vmatpush.msra.mxu0 0.0
    %877 = vmatpush.msra.mxu0 0.0
    %878 = vmatpush.msra.mxu0 0.0
    %879 = vmatpush.msra.mxu0 0.0
    %880 = vmatpush.msra.mxu0 0.0
    %881 = vmatpush.msra.mxu0 0.0
    %882 = vmatpush.msra.mxu0 0.0
    %883 = vmatpush.msra.mxu0 0.0
    %884 = vmatpush.msra.mxu0 0.0
    %885 = vmatpush.msra.mxu0 %v856
    %886 = vmatpush.msra.mxu0 %v855
    %887 = vmatpush.msra.mxu0 %v854
    %888 = vmatpush.msra.mxu0 %v853
    %889 = vmatmul.f32.gmra.mxu0 %v862
    %v890 = vpop.f32.mrf.mxu0
    %v891 = vadd.f32 %v859, %v890
    %892 = vmatmul.f32.gmra.mxu0 %v865
    %v893 = vpop.f32.mrf.mxu0
    %v894 = vadd.f32 %v859, %v893
    %895 = vmatmul.f32.gmra.mxu0 %v868
    %v896 = vpop.f32.mrf.mxu0
    %v897 = vadd.f32 %v859, %v896
    %898 = vmatmul.f32.gmra.mxu0 %v871
    %v899 = vpop.f32.mrf.mxu0
    %v900 = vadd.f32 %v859, %v899
    %901 = vdwg.mxu0
    %v902 = vld [vmem:[#allocation5] sm:$0xff]
    %v903 = vld [vmem:[#allocation5 + $0x8] sm:$0xff]
    %v904 = vld [vmem:[#allocation5 + $0x10] sm:$0xff]
    %v905 = vld [vmem:[#allocation5 + $0x18] sm:$0xff]
    %v906 = vld [vmem:[%s13] sm:$0x1]
    %v908 = vsel %vm171, %v848, 0
    %v911 = vsel %vm171, %v891, 0
    %v914 = vsel %vm171, %v894, 0
    %916 = vmatpush.xpose.msra.mxu0 0.0
    %917 = vmatpush.xpose.msra.mxu0 0.0
    %918 = vmatpush.xpose.msra.mxu0 0.0
    %919 = vmatpush.xpose.msra.mxu0 0.0
    %920 = vmatpush.xpose.msra.mxu0 0.0
    %921 = vmatpush.xpose.msra.mxu0 0.0
    %922 = vmatpush.xpose.msra.mxu0 0.0
    %923 = vmatpush.xpose.msra.mxu0 0.0
    %924 = vmatpush.xpose.msra.mxu0 0.0
    %925 = vmatpush.xpose.msra.mxu0 0.0
    %926 = vmatpush.xpose.msra.mxu0 0.0
    %927 = vmatpush.xpose.msra.mxu0 0.0
    %928 = vmatpush.xpose.msra.mxu0 0.0
    %929 = vmatpush.xpose.msra.mxu0 0.0
    %930 = vmatpush.xpose.msra.mxu0 %v914
    %931 = vmatpush.xpose.msra.mxu0 %v911
    %932 = vmatmul.f32.gmra.mxu0 %v908
    %v933 = vpop.f32.mrf.mxu0
    %v934 = vadd.f32 0.0, %v933
    %935 = vdwg.mxu0
    %v937 = vsel %vm171, %v851, 0
    %v940 = vsel %vm171, %v897, 0
    %v943 = vsel %vm171, %v900, 0
    %945 = vmatpush.xpose.msra.mxu0 0.0
    %946 = vmatpush.xpose.msra.mxu0 0.0
    %947 = vmatpush.xpose.msra.mxu0 0.0
    %948 = vmatpush.xpose.msra.mxu0 0.0
    %949 = vmatpush.xpose.msra.mxu0 0.0
    %950 = vmatpush.xpose.msra.mxu0 0.0
    %951 = vmatpush.xpose.msra.mxu0 0.0
    %952 = vmatpush.xpose.msra.mxu0 0.0
    %953 = vmatpush.xpose.msra.mxu0 0.0
    %954 = vmatpush.xpose.msra.mxu0 0.0
    %955 = vmatpush.xpose.msra.mxu0 0.0
    %956 = vmatpush.xpose.msra.mxu0 0.0
    %957 = vmatpush.xpose.msra.mxu0 0.0
    %958 = vmatpush.xpose.msra.mxu0 0.0
    %959 = vmatpush.xpose.msra.mxu0 %v943
    %960 = vmatpush.xpose.msra.mxu0 %v940
    %961 = vmatmul.f32.gmra.mxu0 %v937
    %v962 = vpop.f32.mrf.mxu0
    %v963 = vadd.f32 0.0, %v962
    %964 = vdwg.mxu0
    %v965 = vsel %vm713, %v934, -inf
    %966 = vmax.xlane.f32.xlu0 %v965
    %v967 = vpop.xlane.xlu0 %966
    %v968 = vsel %vm713, %v963, -inf
    %969 = vmax.xlane.f32.xlu0 %v968
    %v970 = vpop.xlane.xlu0 %969
    %v971 = vsub.f32 %v934, %v967
    %v972 = vsub.f32 %v963, %v970
    %v973 = vmul.f32 %v971, 1.442695
    %v974 = vpow.pop %v973
    %v975 = vmul.f32 %v972, 1.442695
    %v976 = vpow.pop %v975
    %v977 = vsel %vm713, %v974, 0.0
    %978 = vadd.xlane.f32.xlu0 %v977
    %v979 = vpop.xlane.xlu0 %978
    %v980 = vsel %vm713, %v976, 0.0
    %981 = vadd.xlane.f32.xlu0 %v980
    %v982 = vpop.xlane.xlu0 %981
    %v983 = vrcp.pop %v979
    %v984 = vrcp.pop %v982
    %v985 = vmul.f32 %v974, %v983
    %v986 = vmul.f32 %v976, %v984
    %987 = vrot.lane.b32.xlu0 %v891, 96
    %v988 = vpop.permute.xlu0 %987
    %989 = vrot.lane.b32.xlu0 %v894, 96
    %v990 = vpop.permute.xlu0 %989
    %v994 = vsel %vm713, %v985, 0
    %996 = vmatpush.msra.mxu0 0.0
    %997 = vmatpush.msra.mxu0 0.0
    %998 = vmatpush.msra.mxu0 0.0
    %999 = vmatpush.msra.mxu0 0.0
    %1000 = vmatpush.msra.mxu0 0.0
    %1001 = vmatpush.msra.mxu0 0.0
    %1002 = vmatpush.msra.mxu0 0.0
    %1003 = vmatpush.msra.mxu0 0.0
    %1004 = vmatpush.msra.mxu0 0.0
    %1005 = vmatpush.msra.mxu0 0.0
    %1006 = vmatpush.msra.mxu0 0.0
    %1007 = vmatpush.msra.mxu0 0.0
    %1008 = vmatpush.msra.mxu0 0.0
    %1009 = vmatpush.msra.mxu0 0.0
    %1010 = vmatpush.msra.mxu0 %v990
    %1011 = vmatpush.msra.mxu0 %v988
    %1012 = vmatmul.f32.gmra.mxu0 %v994
    %v1013 = vpop.f32.mrf.mxu0
    %v1014 = vadd.f32 0.0, %v1013
    %1015 = vdwg.mxu0
    %1016 = vrot.lane.b32.xlu0 %v897, 96
    %v1017 = vpop.permute.xlu0 %1016
    %1018 = vrot.lane.b32.xlu0 %v900, 96
    %v1019 = vpop.permute.xlu0 %1018
    %v1023 = vsel %vm713, %v986, 0
    %1025 = vmatpush.msra.mxu0 0.0
    %1026 = vmatpush.msra.mxu0 0.0
    %1027 = vmatpush.msra.mxu0 0.0
    %1028 = vmatpush.msra.mxu0 0.0
    %1029 = vmatpush.msra.mxu0 0.0
    %1030 = vmatpush.msra.mxu0 0.0
    %1031 = vmatpush.msra.mxu0 0.0
    %1032 = vmatpush.msra.mxu0 0.0
    %1033 = vmatpush.msra.mxu0 0.0
    %1034 = vmatpush.msra.mxu0 0.0
    %1035 = vmatpush.msra.mxu0 0.0
    %1036 = vmatpush.msra.mxu0 0.0
    %1037 = vmatpush.msra.mxu0 0.0
    %1038 = vmatpush.msra.mxu0 0.0
    %1039 = vmatpush.msra.mxu0 %v1019
    %1040 = vmatpush.msra.mxu0 %v1017
    %1041 = vmatmul.f32.gmra.mxu0 %v1023
    %v1042 = vpop.f32.mrf.mxu0
    %v1043 = vadd.f32 0.0, %v1042
    %1044 = vdwg.mxu0
    %1045 = vrot.lane.b32.xlu0 %v848, 120
    %v1046 = vpop.permute.xlu0 %1045
    %1047 = vrot.lane.b32.xlu0 %v891, 120
    %v1048 = vpop.permute.xlu0 %1047
    %1049 = vrot.lane.b32.xlu0 %v894, 120
    %v1050 = vpop.permute.xlu0 %1049
    %v1051 = vsel %vm171, %v1046, 0
    %v1053 = vsel %vm171, %v1048, 0
    %v1055 = vsel %vm171, %v1050, 0
    %1057 = vmatpush.xpose.msra.mxu0 0.0
    %1058 = vmatpush.xpose.msra.mxu0 0.0
    %1059 = vmatpush.xpose.msra.mxu0 0.0
    %1060 = vmatpush.xpose.msra.mxu0 0.0
    %1061 = vmatpush.xpose.msra.mxu0 0.0
    %1062 = vmatpush.xpose.msra.mxu0 0.0
    %1063 = vmatpush.xpose.msra.mxu0 0.0
    %1064 = vmatpush.xpose.msra.mxu0 0.0
    %1065 = vmatpush.xpose.msra.mxu0 0.0
    %1066 = vmatpush.xpose.msra.mxu0 0.0
    %1067 = vmatpush.xpose.msra.mxu0 0.0
    %1068 = vmatpush.xpose.msra.mxu0 0.0
    %1069 = vmatpush.xpose.msra.mxu0 0.0
    %1070 = vmatpush.xpose.msra.mxu0 0.0
    %1071 = vmatpush.xpose.msra.mxu0 %v1055
    %1072 = vmatpush.xpose.msra.mxu0 %v1053
    %1073 = vmatmul.f32.gmra.mxu0 %v1051
    %v1074 = vpop.f32.mrf.mxu0
    %v1075 = vadd.f32 0.0, %v1074
    %1076 = vdwg.mxu0
    %1077 = vrot.lane.b32.xlu0 %v851, 120
    %v1078 = vpop.permute.xlu0 %1077
    %1079 = vrot.lane.b32.xlu0 %v897, 120
    %v1080 = vpop.permute.xlu0 %1079
    %1081 = vrot.lane.b32.xlu0 %v900, 120
    %v1082 = vpop.permute.xlu0 %1081
    %v1083 = vsel %vm171, %v1078, 0
    %v1085 = vsel %vm171, %v1080, 0
    %v1087 = vsel %vm171, %v1082, 0
    %1089 = vmatpush.xpose.msra.mxu0 0.0
    %1090 = vmatpush.xpose.msra.mxu0 0.0
    %1091 = vmatpush.xpose.msra.mxu0 0.0
    %1092 = vmatpush.xpose.msra.mxu0 0.0
    %1093 = vmatpush.xpose.msra.mxu0 0.0
    %1094 = vmatpush.xpose.msra.mxu0 0.0
    %1095 = vmatpush.xpose.msra.mxu0 0.0
    %1096 = vmatpush.xpose.msra.mxu0 0.0
    %1097 = vmatpush.xpose.msra.mxu0 0.0
    %1098 = vmatpush.xpose.msra.mxu0 0.0
    %1099 = vmatpush.xpose.msra.mxu0 0.0
    %1100 = vmatpush.xpose.msra.mxu0 0.0
    %1101 = vmatpush.xpose.msra.mxu0 0.0
    %1102 = vmatpush.xpose.msra.mxu0 0.0
    %1103 = vmatpush.xpose.msra.mxu0 %v1087
    %1104 = vmatpush.xpose.msra.mxu0 %v1085
    %1105 = vmatmul.f32.gmra.mxu0 %v1083
    %v1106 = vpop.f32.mrf.mxu0
    %v1107 = vadd.f32 0.0, %v1106
    %1108 = vdwg.mxu0
    %v1109 = vsel %vm713, %v1075, -inf
    %1110 = vmax.xlane.f32.xlu0 %v1109
    %v1111 = vpop.xlane.xlu0 %1110
    %v1112 = vsel %vm713, %v1107, -inf
    %1113 = vmax.xlane.f32.xlu0 %v1112
    %v1114 = vpop.xlane.xlu0 %1113
    %v1115 = vsub.f32 %v1075, %v1111
    %v1116 = vsub.f32 %v1107, %v1114
    %v1117 = vmul.f32 %v1115, 1.442695
    %v1118 = vpow.pop %v1117
    %v1119 = vmul.f32 %v1116, 1.442695
    %v1120 = vpow.pop %v1119
    %v1121 = vsel %vm713, %v1118, 0.0
    %1122 = vadd.xlane.f32.xlu0 %v1121
    %v1123 = vpop.xlane.xlu0 %1122
    %v1124 = vsel %vm713, %v1120, 0.0
    %1125 = vadd.xlane.f32.xlu0 %v1124
    %v1126 = vpop.xlane.xlu0 %1125
    %v1127 = vrcp.pop %v1123
    %v1128 = vrcp.pop %v1126
    %v1129 = vmul.f32 %v1118, %v1127
    %v1130 = vmul.f32 %v1120, %v1128
    %1131 = vrot.lane.b32.xlu0 %v891, 88
    %v1132 = vpop.permute.xlu0 %1131
    %1133 = vrot.lane.b32.xlu0 %v894, 88
    %v1134 = vpop.permute.xlu0 %1133
    %v1138 = vsel %vm713, %v1129, 0
    %1140 = vmatpush.msra.mxu0 0.0
    %1141 = vmatpush.msra.mxu0 0.0
    %1142 = vmatpush.msra.mxu0 0.0
    %1143 = vmatpush.msra.mxu0 0.0
    %1144 = vmatpush.msra.mxu0 0.0
    %1145 = vmatpush.msra.mxu0 0.0
    %1146 = vmatpush.msra.mxu0 0.0
    %1147 = vmatpush.msra.mxu0 0.0
    %1148 = vmatpush.msra.mxu0 0.0
    %1149 = vmatpush.msra.mxu0 0.0
    %1150 = vmatpush.msra.mxu0 0.0
    %1151 = vmatpush.msra.mxu0 0.0
    %1152 = vmatpush.msra.mxu0 0.0
    %1153 = vmatpush.msra.mxu0 0.0
    %1154 = vmatpush.msra.mxu0 %v1134
    %1155 = vmatpush.msra.mxu0 %v1132
    %1156 = vmatmul.f32.gmra.mxu0 %v1138
    %v1157 = vpop.f32.mrf.mxu0
    %v1158 = vadd.f32 0.0, %v1157
    %1159 = vdwg.mxu0
    %1160 = vrot.lane.b32.xlu0 %v897, 88
    %v1161 = vpop.permute.xlu0 %1160
    %1162 = vrot.lane.b32.xlu0 %v900, 88
    %v1163 = vpop.permute.xlu0 %1162
    %v1167 = vsel %vm713, %v1130, 0
    %1169 = vmatpush.msra.mxu0 0.0
    %1170 = vmatpush.msra.mxu0 0.0
    %1171 = vmatpush.msra.mxu0 0.0
    %1172 = vmatpush.msra.mxu0 0.0
    %1173 = vmatpush.msra.mxu0 0.0
    %1174 = vmatpush.msra.mxu0 0.0
    %1175 = vmatpush.msra.mxu0 0.0
    %1176 = vmatpush.msra.mxu0 0.0
    %1177 = vmatpush.msra.mxu0 0.0
    %1178 = vmatpush.msra.mxu0 0.0
    %1179 = vmatpush.msra.mxu0 0.0
    %1180 = vmatpush.msra.mxu0 0.0
    %1181 = vmatpush.msra.mxu0 0.0
    %1182 = vmatpush.msra.mxu0 0.0
    %1183 = vmatpush.msra.mxu0 %v1163
    %1184 = vmatpush.msra.mxu0 %v1161
    %1185 = vmatmul.f32.gmra.mxu0 %v1167
    %v1186 = vpop.f32.mrf.mxu0
    %v1187 = vadd.f32 0.0, %v1186
    %1188 = vdwg.mxu0
    %1189 = vrot.lane.b32.xlu0 %v848, 112
    %v1190 = vpop.permute.xlu0 %1189
    %1191 = vrot.lane.b32.xlu0 %v891, 112
    %v1192 = vpop.permute.xlu0 %1191
    %1193 = vrot.lane.b32.xlu0 %v894, 112
    %v1194 = vpop.permute.xlu0 %1193
    %v1195 = vsel %vm171, %v1190, 0
    %v1197 = vsel %vm171, %v1192, 0
    %v1199 = vsel %vm171, %v1194, 0
    %1201 = vmatpush.xpose.msra.mxu0 0.0
    %1202 = vmatpush.xpose.msra.mxu0 0.0
    %1203 = vmatpush.xpose.msra.mxu0 0.0
    %1204 = vmatpush.xpose.msra.mxu0 0.0
    %1205 = vmatpush.xpose.msra.mxu0 0.0
    %1206 = vmatpush.xpose.msra.mxu0 0.0
    %1207 = vmatpush.xpose.msra.mxu0 0.0
    %1208 = vmatpush.xpose.msra.mxu0 0.0
    %1209 = vmatpush.xpose.msra.mxu0 0.0
    %1210 = vmatpush.xpose.msra.mxu0 0.0
    %1211 = vmatpush.xpose.msra.mxu0 0.0
    %1212 = vmatpush.xpose.msra.mxu0 0.0
    %1213 = vmatpush.xpose.msra.mxu0 0.0
    %1214 = vmatpush.xpose.msra.mxu0 0.0
    %1215 = vmatpush.xpose.msra.mxu0 %v1199
    %1216 = vmatpush.xpose.msra.mxu0 %v1197
    %1217 = vmatmul.f32.gmra.mxu0 %v1195
    %v1218 = vpop.f32.mrf.mxu0
    %v1219 = vadd.f32 0.0, %v1218
    %1220 = vdwg.mxu0
    %1221 = vrot.lane.b32.xlu0 %v851, 112
    %v1222 = vpop.permute.xlu0 %1221
    %1223 = vrot.lane.b32.xlu0 %v897, 112
    %v1224 = vpop.permute.xlu0 %1223
    %1225 = vrot.lane.b32.xlu0 %v900, 112
    %v1226 = vpop.permute.xlu0 %1225
    %v1227 = vsel %vm171, %v1222, 0
    %v1229 = vsel %vm171, %v1224, 0
    %v1231 = vsel %vm171, %v1226, 0
    %1233 = vmatpush.xpose.msra.mxu0 0.0
    %1234 = vmatpush.xpose.msra.mxu0 0.0
    %1235 = vmatpush.xpose.msra.mxu0 0.0
    %1236 = vmatpush.xpose.msra.mxu0 0.0
    %1237 = vmatpush.xpose.msra.mxu0 0.0
    %1238 = vmatpush.xpose.msra.mxu0 0.0
    %1239 = vmatpush.xpose.msra.mxu0 0.0
    %1240 = vmatpush.xpose.msra.mxu0 0.0
    %1241 = vmatpush.xpose.msra.mxu0 0.0
    %1242 = vmatpush.xpose.msra.mxu0 0.0
    %1243 = vmatpush.xpose.msra.mxu0 0.0
    %1244 = vmatpush.xpose.msra.mxu0 0.0
    %1245 = vmatpush.xpose.msra.mxu0 0.0
    %1246 = vmatpush.xpose.msra.mxu0 0.0
    %1247 = vmatpush.xpose.msra.mxu0 %v1231
    %1248 = vmatpush.xpose.msra.mxu0 %v1229
    %1249 = vmatmul.f32.gmra.mxu0 %v1227
    %v1250 = vpop.f32.mrf.mxu0
    %v1251 = vadd.f32 0.0, %v1250
    %1252 = vdwg.mxu0
    %v1253 = vsel %vm713, %v1219, -inf
    %1254 = vmax.xlane.f32.xlu0 %v1253
    %v1255 = vpop.xlane.xlu0 %1254
    %v1256 = vsel %vm713, %v1251, -inf
    %1257 = vmax.xlane.f32.xlu0 %v1256
    %v1258 = vpop.xlane.xlu0 %1257
    %v1259 = vsub.f32 %v1219, %v1255
    %v1260 = vsub.f32 %v1251, %v1258
    %v1261 = vmul.f32 %v1259, 1.442695
    %v1262 = vpow.pop %v1261
    %v1263 = vmul.f32 %v1260, 1.442695
    %v1264 = vpow.pop %v1263
    %v1265 = vsel %vm713, %v1262, 0.0
    %1266 = vadd.xlane.f32.xlu0 %v1265
    %v1267 = vpop.xlane.xlu0 %1266
    %v1268 = vsel %vm713, %v1264, 0.0
    %1269 = vadd.xlane.f32.xlu0 %v1268
    %v1270 = vpop.xlane.xlu0 %1269
    %v1271 = vrcp.pop %v1267
    %v1272 = vrcp.pop %v1270
    %v1273 = vmul.f32 %v1262, %v1271
    %v1274 = vmul.f32 %v1264, %v1272
    %1275 = vrot.lane.b32.xlu0 %v891, 80
    %v1276 = vpop.permute.xlu0 %1275
    %1277 = vrot.lane.b32.xlu0 %v894, 80
    %v1278 = vpop.permute.xlu0 %1277
    %v1282 = vsel %vm713, %v1273, 0
    %1284 = vmatpush.msra.mxu0 0.0
    %1285 = vmatpush.msra.mxu0 0.0
    %1286 = vmatpush.msra.mxu0 0.0
    %1287 = vmatpush.msra.mxu0 0.0
    %1288 = vmatpush.msra.mxu0 0.0
    %1289 = vmatpush.msra.mxu0 0.0
    %1290 = vmatpush.msra.mxu0 0.0
    %1291 = vmatpush.msra.mxu0 0.0
    %1292 = vmatpush.msra.mxu0 0.0
    %1293 = vmatpush.msra.mxu0 0.0
    %1294 = vmatpush.msra.mxu0 0.0
    %1295 = vmatpush.msra.mxu0 0.0
    %1296 = vmatpush.msra.mxu0 0.0
    %1297 = vmatpush.msra.mxu0 0.0
    %1298 = vmatpush.msra.mxu0 %v1278
    %1299 = vmatpush.msra.mxu0 %v1276
    %1300 = vmatmul.f32.gmra.mxu0 %v1282
    %v1301 = vpop.f32.mrf.mxu0
    %v1302 = vadd.f32 0.0, %v1301
    %1303 = vdwg.mxu0
    %1304 = vrot.lane.b32.xlu0 %v897, 80
    %v1305 = vpop.permute.xlu0 %1304
    %1306 = vrot.lane.b32.xlu0 %v900, 80
    %v1307 = vpop.permute.xlu0 %1306
    %v1311 = vsel %vm713, %v1274, 0
    %1313 = vmatpush.msra.mxu0 0.0
    %1314 = vmatpush.msra.mxu0 0.0
    %1315 = vmatpush.msra.mxu0 0.0
    %1316 = vmatpush.msra.mxu0 0.0
    %1317 = vmatpush.msra.mxu0 0.0
    %1318 = vmatpush.msra.mxu0 0.0
    %1319 = vmatpush.msra.mxu0 0.0
    %1320 = vmatpush.msra.mxu0 0.0
    %1321 = vmatpush.msra.mxu0 0.0
    %1322 = vmatpush.msra.mxu0 0.0
    %1323 = vmatpush.msra.mxu0 0.0
    %1324 = vmatpush.msra.mxu0 0.0
    %1325 = vmatpush.msra.mxu0 0.0
    %1326 = vmatpush.msra.mxu0 0.0
    %1327 = vmatpush.msra.mxu0 %v1307
    %1328 = vmatpush.msra.mxu0 %v1305
    %1329 = vmatmul.f32.gmra.mxu0 %v1311
    %v1330 = vpop.f32.mrf.mxu0
    %v1331 = vadd.f32 0.0, %v1330
    %1332 = vdwg.mxu0
    %1333 = vrot.lane.b32.xlu0 %v848, 104
    %v1334 = vpop.permute.xlu0 %1333
    %1335 = vrot.lane.b32.xlu0 %v891, 104
    %v1336 = vpop.permute.xlu0 %1335
    %1337 = vrot.lane.b32.xlu0 %v894, 104
    %v1338 = vpop.permute.xlu0 %1337
    %v1339 = vsel %vm171, %v1334, 0
    %v1341 = vsel %vm171, %v1336, 0
    %v1343 = vsel %vm171, %v1338, 0
    %1345 = vmatpush.xpose.msra.mxu0 0.0
    %1346 = vmatpush.xpose.msra.mxu0 0.0
    %1347 = vmatpush.xpose.msra.mxu0 0.0
    %1348 = vmatpush.xpose.msra.mxu0 0.0
    %1349 = vmatpush.xpose.msra.mxu0 0.0
    %1350 = vmatpush.xpose.msra.mxu0 0.0
    %1351 = vmatpush.xpose.msra.mxu0 0.0
    %1352 = vmatpush.xpose.msra.mxu0 0.0
    %1353 = vmatpush.xpose.msra.mxu0 0.0
    %1354 = vmatpush.xpose.msra.mxu0 0.0
    %1355 = vmatpush.xpose.msra.mxu0 0.0
    %1356 = vmatpush.xpose.msra.mxu0 0.0
    %1357 = vmatpush.xpose.msra.mxu0 0.0
    %1358 = vmatpush.xpose.msra.mxu0 0.0
    %1359 = vmatpush.xpose.msra.mxu0 %v1343
    %1360 = vmatpush.xpose.msra.mxu0 %v1341
    %1361 = vmatmul.f32.gmra.mxu0 %v1339
    %v1362 = vpop.f32.mrf.mxu0
    %v1363 = vadd.f32 0.0, %v1362
    %1364 = vdwg.mxu0
    %1365 = vrot.lane.b32.xlu0 %v851, 104
    %v1366 = vpop.permute.xlu0 %1365
    %1367 = vrot.lane.b32.xlu0 %v897, 104
    %v1368 = vpop.permute.xlu0 %1367
    %1369 = vrot.lane.b32.xlu0 %v900, 104
    %v1370 = vpop.permute.xlu0 %1369
    %v1371 = vsel %vm171, %v1366, 0
    %v1373 = vsel %vm171, %v1368, 0
    %v1375 = vsel %vm171, %v1370, 0
    %1377 = vmatpush.xpose.msra.mxu0 0.0
    %1378 = vmatpush.xpose.msra.mxu0 0.0
    %1379 = vmatpush.xpose.msra.mxu0 0.0
    %1380 = vmatpush.xpose.msra.mxu0 0.0
    %1381 = vmatpush.xpose.msra.mxu0 0.0
    %1382 = vmatpush.xpose.msra.mxu0 0.0
    %1383 = vmatpush.xpose.msra.mxu0 0.0
    %1384 = vmatpush.xpose.msra.mxu0 0.0
    %1385 = vmatpush.xpose.msra.mxu0 0.0
    %1386 = vmatpush.xpose.msra.mxu0 0.0
    %1387 = vmatpush.xpose.msra.mxu0 0.0
    %1388 = vmatpush.xpose.msra.mxu0 0.0
    %1389 = vmatpush.xpose.msra.mxu0 0.0
    %1390 = vmatpush.xpose.msra.mxu0 0.0
    %1391 = vmatpush.xpose.msra.mxu0 %v1375
    %1392 = vmatpush.xpose.msra.mxu0 %v1373
    %1393 = vmatmul.f32.gmra.mxu0 %v1371
    %v1394 = vpop.f32.mrf.mxu0
    %v1395 = vadd.f32 0.0, %v1394
    %1396 = vdwg.mxu0
    %v1397 = vsel %vm713, %v1363, -inf
    %1398 = vmax.xlane.f32.xlu0 %v1397
    %v1399 = vpop.xlane.xlu0 %1398
    %v1400 = vsel %vm713, %v1395, -inf
    %1401 = vmax.xlane.f32.xlu0 %v1400
    %v1402 = vpop.xlane.xlu0 %1401
    %v1403 = vsub.f32 %v1363, %v1399
    %v1404 = vsub.f32 %v1395, %v1402
    %v1405 = vmul.f32 %v1403, 1.442695
    %v1406 = vpow.pop %v1405
    %v1407 = vmul.f32 %v1404, 1.442695
    %v1408 = vpow.pop %v1407
    %v1409 = vsel %vm713, %v1406, 0.0
    %1410 = vadd.xlane.f32.xlu0 %v1409
    %v1411 = vpop.xlane.xlu0 %1410
    %v1412 = vsel %vm713, %v1408, 0.0
    %1413 = vadd.xlane.f32.xlu0 %v1412
    %v1414 = vpop.xlane.xlu0 %1413
    %v1415 = vrcp.pop %v1411
    %v1416 = vrcp.pop %v1414
    %v1417 = vmul.f32 %v1406, %v1415
    %v1418 = vmul.f32 %v1408, %v1416
    %1419 = vrot.lane.b32.xlu0 %v891, 72
    %v1420 = vpop.permute.xlu0 %1419
    %1421 = vrot.lane.b32.xlu0 %v894, 72
    %v1422 = vpop.permute.xlu0 %1421
    %v1426 = vsel %vm713, %v1417, 0
    %1428 = vmatpush.msra.mxu0 0.0
    %1429 = vmatpush.msra.mxu0 0.0
    %1430 = vmatpush.msra.mxu0 0.0
    %1431 = vmatpush.msra.mxu0 0.0
    %1432 = vmatpush.msra.mxu0 0.0
    %1433 = vmatpush.msra.mxu0 0.0
    %1434 = vmatpush.msra.mxu0 0.0
    %1435 = vmatpush.msra.mxu0 0.0
    %1436 = vmatpush.msra.mxu0 0.0
    %1437 = vmatpush.msra.mxu0 0.0
    %1438 = vmatpush.msra.mxu0 0.0
    %1439 = vmatpush.msra.mxu0 0.0
    %1440 = vmatpush.msra.mxu0 0.0
    %1441 = vmatpush.msra.mxu0 0.0
    %1442 = vmatpush.msra.mxu0 %v1422
    %1443 = vmatpush.msra.mxu0 %v1420
    %1444 = vmatmul.f32.gmra.mxu0 %v1426
    %v1445 = vpop.f32.mrf.mxu0
    %v1446 = vadd.f32 0.0, %v1445
    %1447 = vdwg.mxu0
    %1448 = vrot.lane.b32.xlu0 %v897, 72
    %v1449 = vpop.permute.xlu0 %1448
    %1450 = vrot.lane.b32.xlu0 %v900, 72
    %v1451 = vpop.permute.xlu0 %1450
    %v1455 = vsel %vm713, %v1418, 0
    %1457 = vmatpush.msra.mxu0 0.0
    %1458 = vmatpush.msra.mxu0 0.0
    %1459 = vmatpush.msra.mxu0 0.0
    %1460 = vmatpush.msra.mxu0 0.0
    %1461 = vmatpush.msra.mxu0 0.0
    %1462 = vmatpush.msra.mxu0 0.0
    %1463 = vmatpush.msra.mxu0 0.0
    %1464 = vmatpush.msra.mxu0 0.0
    %1465 = vmatpush.msra.mxu0 0.0
    %1466 = vmatpush.msra.mxu0 0.0
    %1467 = vmatpush.msra.mxu0 0.0
    %1468 = vmatpush.msra.mxu0 0.0
    %1469 = vmatpush.msra.mxu0 0.0
    %1470 = vmatpush.msra.mxu0 0.0
    %1471 = vmatpush.msra.mxu0 %v1451
    %1472 = vmatpush.msra.mxu0 %v1449
    %1473 = vmatmul.f32.gmra.mxu0 %v1455
    %v1474 = vpop.f32.mrf.mxu0
    %v1475 = vadd.f32 0.0, %v1474
    %1476 = vdwg.mxu0
    %1479 = vrot.lane.b32.xlu0 %v1158, 8
    %v1480 = vpop.permute.xlu0 %1479
    %1481 = vrot.lane.b32.xlu0 %v1187, 8
    %v1482 = vpop.permute.xlu0 %1481
    %1487 = vrot.lane.b32.xlu0 %v1302, 16
    %v1488 = vpop.permute.xlu0 %1487
    %1489 = vrot.lane.b32.xlu0 %v1331, 16
    %v1490 = vpop.permute.xlu0 %1489
    %1495 = vrot.lane.b32.xlu0 %v1446, 24
    %v1496 = vpop.permute.xlu0 %1495
    %1497 = vrot.lane.b32.xlu0 %v1475, 24
    %v1498 = vpop.permute.xlu0 %1497
    %v1501 = vsel %vm171, %v1014, %v1480
    %v1502 = vsel %vm171, %v1043, %v1482
    %v1503 = vsel %vm713, %v1501, %v1488
    %v1504 = vsel %vm713, %v1502, %v1490
    %v1505 = vsel %vm716, %v1503, %v1496
    %v1506 = vsel %vm716, %v1504, %v1498
    %v1508 = vperm.slane %v906, 0
    %v1511 = vsel %vm133, %v1505, 0
    %v1514 = vsel %vm133, %v1506, 0
    %1516 = vmatpush.msra.mxu0 0.0
    %1517 = vmatpush.msra.mxu0 0.0
    %1518 = vmatpush.msra.mxu0 0.0
    %1519 = vmatpush.msra.mxu0 0.0
    %1520 = vmatpush.msra.mxu0 0.0
    %1521 = vmatpush.msra.mxu0 0.0
    %1522 = vmatpush.msra.mxu0 0.0
    %1523 = vmatpush.msra.mxu0 0.0
    %1524 = vmatpush.msra.mxu0 0.0
    %1525 = vmatpush.msra.mxu0 0.0
    %1526 = vmatpush.msra.mxu0 0.0
    %1527 = vmatpush.msra.mxu0 0.0
    %1528 = vmatpush.msra.mxu0 %v905
    %1529 = vmatpush.msra.mxu0 %v904
    %1530 = vmatpush.msra.mxu0 %v903
    %1531 = vmatpush.msra.mxu0 %v902
    %1532 = vmatmul.f32.gmra.mxu0 %v1511
    %v1533 = vpop.f32.mrf.mxu0
    %v1534 = vadd.f32 %v1508, %v1533
    %1535 = vmatmul.f32.gmra.mxu0 %v1514
    %v1536 = vpop.f32.mrf.mxu0
    %v1537 = vadd.f32 %v1508, %v1536
    %1538 = vdwg.mxu0
    %v1539 = vadd.f32 %v814, %v1534
    %v1540 = vadd.f32 %v815, %v1537
    %v1541 = vld [vmem:[%s14] sm:$0x1]
    %v1542 = vld [vmem:[%s15] sm:$0x1]
    %v1543 = vsel %vm133, %v1539, 0.0
    %1544 = vadd.xlane.f32.xlu0 %v1543
    %v1545 = vpop.xlane.xlu0 %1544
    %v1546 = vsel %vm133, %v1540, 0.0
    %1547 = vadd.xlane.f32.xlu0 %v1546
    %v1548 = vpop.xlane.xlu0 %1547
    %v1549 = vmul.f32 %v1545, %v767
    %v1550 = vmul.f32 %v1548, %v767
    %v1551 = vsub.f32 %v1539, %v1549
    %v1552 = vsub.f32 %v1540, %v1550
    %v1553 = vmul.f32 %v1551, %v1551
    %v1554 = vmul.f32 %v1552, %v1552
    %v1555 = vsel %vm133, %v1553, 0.0
    %1556 = vadd.xlane.f32.xlu0 %v1555
    %v1557 = vpop.xlane.xlu0 %1556
    %v1558 = vsel %vm133, %v1554, 0.0
    %1559 = vadd.xlane.f32.xlu0 %v1558
    %v1560 = vpop.xlane.xlu0 %1559
    %v1561 = vmul.f32 %v1557, %v767
    %v1562 = vmul.f32 %v1560, %v767
    %v1563 = vadd.f32 %v1561, 1e-05
    %v1564 = vadd.f32 %v1562, 1e-05
    %v1565 = vrsqrt.pop %v1563
    %v1566 = vmul.f32 %v1565, %v1563
    %v1567 = vmul.f32 %v1566, %v1565
    %v1568 = vmul.f32 0.5, %v1567
    %v1569 = vsub.f32 1.5, %v1568
    %v1570 = vmul.f32 %v1565, %v1569
    %vm1571 = vweird.f32 %v1563
    %vm1572 = vweird.f32 %v1565
    %vm1573 = vmor %vm1571, %vm1572
    %v1574 = vsel %vm1573, %v1565, %v1570
    %v1575 = vrsqrt.pop %v1564
    %v1576 = vmul.f32 %v1575, %v1564
    %v1577 = vmul.f32 %v1576, %v1575
    %v1578 = vmul.f32 0.5, %v1577
    %v1579 = vsub.f32 1.5, %v1578
    %v1580 = vmul.f32 %v1575, %v1579
    %vm1581 = vweird.f32 %v1564
    %vm1582 = vweird.f32 %v1575
    %vm1583 = vmor %vm1581, %vm1582
    %v1584 = vsel %vm1583, %v1575, %v1580
    %v1585 = vmul.f32 %v1551, %v1574
    %v1586 = vmul.f32 %v1552, %v1584
    %v1588 = vperm.slane %v1541, 0
    %v1590 = vmul.f32 %v1585, %v1588
    %v1591 = vmul.f32 %v1586, %v1588
    %v1593 = vperm.slane %v1542, 0
    %v1595 = vadd.f32 %v1590, %v1593
    %v1596 = vadd.f32 %v1591, %v1593
    %v1597 = vld [vmem:[#allocation7] sm:$0xff]
    %v1598 = vld [vmem:[#allocation7 + $0x8] sm:$0xff]
    %v1599 = vld [vmem:[#allocation7 + $0x10] sm:$0xff]
    %v1600 = vld [vmem:[#allocation7 + $0x18] sm:$0xff]
    %v1601 = vld [vmem:[%s17] sm:$0x1]
    %v1603 = vperm.slane %v1601, 0
    %v1606 = vsel %vm133, %v1595, 0
    %v1609 = vsel %vm133, %v1596, 0
    %1611 = vmatpush.msra.mxu0 0.0
    %1612 = vmatpush.msra.mxu0 0.0
    %1613 = vmatpush.msra.mxu0 0.0
    %1614 = vmatpush.msra.mxu0 0.0
    %1615 = vmatpush.msra.mxu0 0.0
    %1616 = vmatpush.msra.mxu0 0.0
    %1617 = vmatpush.msra.mxu0 0.0
    %1618 = vmatpush.msra.mxu0 0.0
    %1619 = vmatpush.msra.mxu0 0.0
    %1620 = vmatpush.msra.mxu0 0.0
    %1621 = vmatpush.msra.mxu0 0.0
    %1622 = vmatpush.msra.mxu0 0.0
    %1623 = vmatpush.msra.mxu0 %v1600
    %1624 = vmatpush.msra.mxu0 %v1599
    %1625 = vmatpush.msra.mxu0 %v1598
    %1626 = vmatpush.msra.mxu0 %v1597
    %1627 = vmatmul.f32.gmra.mxu0 %v1606
    %v1628 = vpop.f32.mrf.mxu0
    %v1629 = vadd.f32 %v1603, %v1628
    %1630 = vmatmul.f32.gmra.mxu0 %v1609
    %v1631 = vpop.f32.mrf.mxu0
    %v1632 = vadd.f32 %v1603, %v1631
    %1633 = vdwg.mxu0
    %v1634 = vmax.f32 %v1629, 0.0
    %v1635 = vmax.f32 %v1632, 0.0
    %v1636 = vld [vmem:[%s18] sm:$0xff]
    %v1637 = vld [vmem:[%s18 + $0x8] sm:$0xff]
    %v1638 = vld [vmem:[%s18 + $0x10] sm:$0xff]
    %v1639 = vld [vmem:[%s18 + $0x18] sm:$0xff]
    %v1640 = vld [vmem:[%s18 + $0x20] sm:$0xff]
    %v1641 = vld [vmem:[%s18 + $0x28] sm:$0xff]
    %v1642 = vld [vmem:[%s18 + $0x30] sm:$0xff]
    %v1643 = vld [vmem:[%s18 + $0x38] sm:$0xff]
    %v1644 = vld [vmem:[%s18 + $0x40] sm:$0xff]
    %v1645 = vld [vmem:[%s18 + $0x48] sm:$0xff]
    %v1646 = vld [vmem:[%s18 + $0x50] sm:$0xff]
    %v1647 = vld [vmem:[%s18 + $0x58] sm:$0xff]
    %v1648 = vld [vmem:[%s18 + $0x60] sm:$0xff]
    %v1649 = vld [vmem:[%s18 + $0x68] sm:$0xff]
    %v1650 = vld [vmem:[%s18 + $0x70] sm:$0xff]
    %v1651 = vld [vmem:[%s18 + $0x78] sm:$0xff]
    %v1652 = vld [vmem:[%s19] sm:$0x1]
    %v1654 = vperm.slane %v1652, 0
    %1656 = vmatpush.msra.mxu0 %v1651
    %1657 = vmatpush.msra.mxu0 %v1650
    %1658 = vmatpush.msra.mxu0 %v1649
    %1659 = vmatpush.msra.mxu0 %v1648
    %1660 = vmatpush.msra.mxu0 %v1647
    %1661 = vmatpush.msra.mxu0 %v1646
    %1662 = vmatpush.msra.mxu0 %v1645
    %1663 = vmatpush.msra.mxu0 %v1644
    %1664 = vmatpush.msra.mxu0 %v1643
    %1665 = vmatpush.msra.mxu0 %v1642
    %1666 = vmatpush.msra.mxu0 %v1641
    %1667 = vmatpush.msra.mxu0 %v1640
    %1668 = vmatpush.msra.mxu0 %v1639
    %1669 = vmatpush.msra.mxu0 %v1638
    %1670 = vmatpush.msra.mxu0 %v1637
    %1671 = vmatpush.msra.mxu0 %v1636
    %1672 = vmatmul.f32.gmra.mxu0 %v1634
    %v1673 = vpop.f32.mrf.mxu0
    %v1674 = vadd.f32 %v1654, %v1673
    %1675 = vmatmul.f32.gmra.mxu0 %v1635
    %v1676 = vpop.f32.mrf.mxu0
    %v1677 = vadd.f32 %v1654, %v1676
    %1678 = vdwg.mxu0
    %v1679 = vadd.f32 %v1595, %v1674
    %v1680 = vadd.f32 %v1596, %v1677
    %v1681 = vld [vmem:[%s20] sm:$0x1]
    %v1682 = vld [vmem:[%s21] sm:$0x1]
    %v1683 = vsel %vm133, %v1679, 0.0
    %1684 = vadd.xlane.f32.xlu0 %v1683
    %v1685 = vpop.xlane.xlu0 %1684
    %v1686 = vsel %vm133, %v1680, 0.0
    %1687 = vadd.xlane.f32.xlu0 %v1686
    %v1688 = vpop.xlane.xlu0 %1687
    %v1689 = vmul.f32 %v1685, %v767
    %v1690 = vmul.f32 %v1688, %v767
    %v1691 = vsub.f32 %v1679, %v1689
    %v1692 = vsub.f32 %v1680, %v1690
    %v1693 = vmul.f32 %v1691, %v1691
    %v1694 = vmul.f32 %v1692, %v1692
    %v1695 = vsel %vm133, %v1693, 0.0
    %1696 = vadd.xlane.f32.xlu0 %v1695
    %v1697 = vpop.xlane.xlu0 %1696
    %v1698 = vsel %vm133, %v1694, 0.0
    %1699 = vadd.xlane.f32.xlu0 %v1698
    %v1700 = vpop.xlane.xlu0 %1699
    %v1701 = vmul.f32 %v1697, %v767
    %v1702 = vmul.f32 %v1700, %v767
    %v1703 = vadd.f32 %v1701, 1e-05
    %v1704 = vadd.f32 %v1702, 1e-05
    %v1705 = vrsqrt.pop %v1703
    %v1706 = vmul.f32 %v1705, %v1703
    %v1707 = vmul.f32 %v1706, %v1705
    %v1708 = vmul.f32 0.5, %v1707
    %v1709 = vsub.f32 1.5, %v1708
    %v1710 = vmul.f32 %v1705, %v1709
    %vm1711 = vweird.f32 %v1703
    %vm1712 = vweird.f32 %v1705
    %vm1713 = vmor %vm1711, %vm1712
    %v1714 = vsel %vm1713, %v1705, %v1710
    %v1715 = vrsqrt.pop %v1704
    %v1716 = vmul.f32 %v1715, %v1704
    %v1717 = vmul.f32 %v1716, %v1715
    %v1718 = vmul.f32 0.5, %v1717
    %v1719 = vsub.f32 1.5, %v1718
    %v1720 = vmul.f32 %v1715, %v1719
    %vm1721 = vweird.f32 %v1704
    %vm1722 = vweird.f32 %v1715
    %vm1723 = vmor %vm1721, %vm1722
    %v1724 = vsel %vm1723, %v1715, %v1720
    %v1725 = vmul.f32 %v1691, %v1714
    %v1726 = vmul.f32 %v1692, %v1724
    %v1728 = vperm.slane %v1681, 0
    %v1730 = vmul.f32 %v1725, %v1728
    %v1731 = vmul.f32 %v1726, %v1728
    %v1733 = vperm.slane %v1682, 0
    %v1735 = vadd.f32 %v1730, %v1733
    %v1736 = vadd.f32 %v1731, %v1733
    %1737 = vst.msk [vmem:[#allocation8] sm:$0xff] %vm133, %v1735
    %1738 = vst.msk [vmem:[#allocation8 + $0x8] sm:$0xff] %vm133, %v1736
    // Predicated region
    $region102: #{tpu_custom_call.1} parent=1 // pred_check
      _
    $region103: #{tpu_custom_call.1} parent=1 // pred_check_branch
      %1740 = sbr.rel (0) target = $region105
    $region104: #{tpu_custom_call.1} parent=1 // pred_region
      %1742 = vsyncadd [#allocation4], 0
      %s1743 = sshll.u32 [#allocation8], 4
      %s1744 = int_to_ptr.vmem [resolvable:$true] %s1743
      %s1745 = sshll.u32 %s22, 4
      %s1746 = int_to_ptr.hbm [resolvable:$true] %s1745
      %1751 = dma.vmem_to_hbm [thread:$0]  %s1744, 256, %s1746, [#allocation4], 128, 128, 8
    $region105: #{tpu_custom_call.1} parent=1 // pred_fallthru
      _
    // Predicated region
    $region106: #{tpu_custom_call.1} parent=1 // pred_check
      _
    $region107: #{tpu_custom_call.1} parent=1 // pred_check_branch
      %1753 = sbr.rel (0) target = $region109
    $region108: #{tpu_custom_call.1} parent=1 // pred_region
      %1755 = dma.done [#allocation4], 256
    $region109: #{tpu_custom_call.1} parent=1 // pred_fallthru
      _
    %1756 = vsyncpa [#allocation3], 1
    %1757 = vsyncpa [#allocation6], 1
    %1758 = vsyncpa [#allocation4], 1

// kernel: tpu_custom_call.1
$region0: #{tpu_custom_call.1}
  #allocation0 [shape = 'u32[]', space=smem, size = 0x4, offset = 0x4, fixed_abs, tag = 'smem constant byte address 0x4 - core index']
  #allocation1 [shape = 'u32[72,128]{1,0:T(1,128)}', space=vmem, size = 0x9000, scoped, tag = 'internal scratch']
  %s0 = inlined_call_operand.hbm [shape: f32[2,8,32], index: 0, kind: input, shape index: {}]
  %s1 = inlined_call_operand.vmem [shape: f32[2,16,32], index: 1, kind: input, shape index: {}]
  %s2 = inlined_call_operand.vmem [shape: f32[32,96], index: 2, kind: input, shape index: {}]
  %s3 = inlined_call_operand.vmem [shape: f32[1,96], index: 3, kind: input, shape index: {}]
  %s4 = inlined_call_operand.vmem [shape: f32[32,32], index: 4, kind: input, shape index: {}]
  %s5 = inlined_call_operand.vmem [shape: f32[1,32], index: 5, kind: input, shape index: {}]
  %s6 = inlined_call_operand.vmem [shape: f32[1,32], index: 6, kind: input, shape index: {}]
  %s7 = inlined_call_operand.vmem [shape: f32[1,32], index: 7, kind: input, shape index: {}]
  %s8 = inlined_call_operand.vmem [shape: f32[32,32], index: 8, kind: input, shape index: {}]
  %s9 = inlined_call_operand.vmem [shape: f32[1,32], index: 9, kind: input, shape index: {}]
  %s10 = inlined_call_operand.vmem [shape: f32[32,64], index: 10, kind: input, shape index: {}]
  %s11 = inlined_call_operand.vmem [shape: f32[1,64], index: 11, kind: input, shape index: {}]
  %s12 = inlined_call_operand.hbm [shape: f32[32,32], index: 12, kind: input, shape index: {}]
  %s13 = inlined_call_operand.vmem [shape: f32[1,32], index: 13, kind: input, shape index: {}]
  %s14 = inlined_call_operand.vmem [shape: f32[1,32], index: 14, kind: input, shape index: {}]
  %s15 = inlined_call_operand.vmem [shape: f32[1,32], index: 15, kind: input, shape index: {}]
  %s16 = inlined_call_operand.hbm [shape: f32[32,128], index: 16, kind: input, shape index: {}]
  %s17 = inlined_call_operand.vmem [shape: f32[1,128], index: 17, kind: input, shape index: {}]
  %s18 = inlined_call_operand.vmem [shape: f32[128,32], index: 18, kind: input, shape index: {}]
  %s19 = inlined_call_operand.vmem [shape: f32[1,32], index: 19, kind: input, shape index: {}]
  %s20 = inlined_call_operand.vmem [shape: f32[1,32], index: 20, kind: input, shape index: {}]
  %s21 = inlined_call_operand.vmem [shape: f32[1,32], index: 21, kind: input, shape index: {}]
  %s22 = inlined_call_operand.hbm [shape: f32[2,8,32], index: 22, kind: output, shape index: {}]
  %s23 = sld [smem:[#allocation0]]
  $region110: #{tpu_custom_call.1} parent=0
    _
  %s25 = ssub.s32 1, %s23
  %s26 = scalar_select 0, %s25, %s23
  $region1: #{tpu_custom_call.1} parent=0
    #allocation2 [shape = 'u8[8192]{0}', space=vmem, size = 0x2000, scoped, tag = 'input window, operand 0, single buffered']
    #allocation3 [shape = 's32[1]{0}', space=sflag, size = 0x4, scoped, tag = 'scoped memory for tpu_custom_call.1']
    #allocation4 [shape = 's32[1]{0}', space=sflag, size = 0x4, scoped, tag = 'scoped memory for tpu_custom_call.1']
    #allocation5 [shape = 'u8[16384]{0}', space=vmem, size = 0x4000, scoped, tag = 'input window, operand 12, single buffered']
    #allocation6 [shape = 's32[1]{0}', space=sflag, size = 0x4, scoped, tag = 'scoped memory for tpu_custom_call.1']
    #allocation7 [shape = 'u8[16384]{0}', space=vmem, size = 0x4000, scoped, tag = 'input window, operand 16, single buffered']
    #allocation8 [shape = 'u8[8192]{0}', space=vmem, size = 0x2000, scoped, tag = 'output window, operand 0, single buffered']
    %27 = vsyncpa [#allocation3], 0
    %28 = vsyncpa [#allocation6], 0
    %29 = vsyncpa [#allocation4], 0
    // Predicated region
    $region2: #{tpu_custom_call.1} parent=1 // pred_check
      _
    $region3: #{tpu_custom_call.1} parent=1 // pred_check_branch
      %31 = sbr.rel (0) target = $region5
    $region4: #{tpu_custom_call.1} parent=1 // pred_region
      %33 = vsyncadd [#allocation3], 0
      %s34 = sshll.u32 %s0, 4
      %s35 = int_to_ptr.hbm [resolvable:$true] %s34
      %s36 = sshll.u32 [#allocation2], 4
      %s37 = int_to_ptr.vmem [resolvable:$true] %s36
      %42 = dma.hbm_to_vmem [thread:$0]  %s35, 256, %s37, [#allocation3], 128, 128, 8
    $region5: #{tpu_custom_call.1} parent=1 // pred_fallthru
      _
    // Predicated region
    $region6: #{tpu_custom_call.1} parent=1 // pred_check
      _
    $region7: #{tpu_custom_call.1} parent=1 // pred_check_branch
      %44 = sbr.rel (0) target = $region9
    $region8: #{tpu_custom_call.1} parent=1 // pred_region
      _
    $region9: #{tpu_custom_call.1} parent=1 // pred_fallthru
      _
    // Predicated region
    $region10: #{tpu_custom_call.1} parent=1 // pred_check
      _
    $region11: #{tpu_custom_call.1} parent=1 // pred_check_branch
      %46 = sbr.rel (0) target = $region13
    $region12: #{tpu_custom_call.1} parent=1 // pred_region
      _
    $region13: #{tpu_custom_call.1} parent=1 // pred_fallthru
      _
    // Predicated region
    $region14: #{tpu_custom_call.1} parent=1 // pred_check
      _
    $region15: #{tpu_custom_call.1} parent=1 // pred_check_branch
      %48 = sbr.rel (0) target = $region17
    $region16: #{tpu_custom_call.1} parent=1 // pred_region
      _
    $region17: #{tpu_custom_call.1} parent=1 // pred_fallthru
      _
    // Predicated region
    $region18: #{tpu_custom_call.1} parent=1 // pred_check
      _
    $region19: #{tpu_custom_call.1} parent=1 // pred_check_branch
      %50 = sbr.rel (0) target = $region21
    $region20: #{tpu_custom_call.1} parent=1 // pred_region
      _
    $region21: #{tpu_custom_call.1} parent=1 // pred_fallthru
      _
    // Predicated region
    $region22: #{tpu_custom_call.1} parent=1 // pred_check
      _
    $region23: #{tpu_custom_call.1} parent=1 // pred_check_branch
      %52 = sbr.rel (0) target = $region25
    $region24: #{tpu_custom_call.1} parent=1 // pred_region
      _
    $region25: #{tpu_custom_call.1} parent=1 // pred_fallthru
      _
    // Predicated region
    $region26: #{tpu_custom_call.1} parent=1 // pred_check
      _
    $region27: #{tpu_custom_call.1} parent=1 // pred_check_branch
      %54 = sbr.rel (0) target = $region29
    $region28: #{tpu_custom_call.1} parent=1 // pred_region
      _
    $region29: #{tpu_custom_call.1} parent=1 // pred_fallthru
      _
    // Predicated region
    $region30: #{tpu_custom_call.1} parent=1 // pred_check
      _
    $region31: #{tpu_custom_call.1} parent=1 // pred_check_branch
      %56 = sbr.rel (0) target = $region33
    $region32: #{tpu_custom_call.1} parent=1 // pred_region
      _
    $region33: #{tpu_custom_call.1} parent=1 // pred_fallthru
      _
    // Predicated region
    $region34: #{tpu_custom_call.1} parent=1 // pred_check
      _
    $region35: #{tpu_custom_call.1} parent=1 // pred_check_branch
      %58 = sbr.rel (0) target = $region37
    $region36: #{tpu_custom_call.1} parent=1 // pred_region
      _
    $region37: #{tpu_custom_call.1} parent=1 // pred_fallthru
      _
    // Predicated region
    $region38: #{tpu_custom_call.1} parent=1 // pred_check
      _
    $region39: #{tpu_custom_call.1} parent=1 // pred_check_branch
      %60 = sbr.rel (0) target = $region41
    $region40: #{tpu_custom_call.1} parent=1 // pred_region
      _
    $region41: #{tpu_custom_call.1} parent=1 // pred_fallthru
      _
    // Predicated region
    $region42: #{tpu_custom_call.1} parent=1 // pred_check
      _
    $region43: #{tpu_custom_call.1} parent=1 // pred_check_branch
      %62 = sbr.rel (0) target = $region45
    $region44: #{tpu_custom_call.1} parent=1 // pred_region
      _
    $region45: #{tpu_custom_call.1} parent=1 // pred_fallthru
      _
    // Predicated region
    $region46: #{tpu_custom_call.1} parent=1 // pred_check
      _
    $region47: #{tpu_custom_call.1} parent=1 // pred_check_branch
      %64 = sbr.rel (0) target = $region49
    $region48: #{tpu_custom_call.1} parent=1 // pred_region
      _
    $region49: #{tpu_custom_call.1} parent=1 // pred_fallthru
      _
    // Predicated region
    $region50: #{tpu_custom_call.1} parent=1 // pred_check
      _
    $region51: #{tpu_custom_call.1} parent=1 // pred_check_branch
      %66 = sbr.rel (0) target = $region53
    $region52: #{tpu_custom_call.1} parent=1 // pred_region
      %68 = vsyncadd [#allocation6], 0
      %s69 = sshll.u32 %s12, 4
      %s70 = int_to_ptr.hbm [resolvable:$true] %s69
      %s71 = sshll.u32 [#allocation5], 4
      %s72 = int_to_ptr.vmem [resolvable:$true] %s71
      %77 = dma.hbm_to_vmem [thread:$0]  %s70, 512, %s72, [#allocation6], 128, 128, 8
    $region53: #{tpu_custom_call.1} parent=1 // pred_fallthru
      _
    // Predicated region
    $region54: #{tpu_custom_call.1} parent=1 // pred_check
      _
    $region55: #{tpu_custom_call.1} parent=1 // pred_check_branch
      %79 = sbr.rel (0) target = $region57
    $region56: #{tpu_custom_call.1} parent=1 // pred_region
      _
    $region57: #{tpu_custom_call.1} parent=1 // pred_fallthru
      _
    // Predicated region
    $region58: #{tpu_custom_call.1} parent=1 // pred_check
      _
    $region59: #{tpu_custom_call.1} parent=1 // pred_check_branch
      %81 = sbr.rel (0) target = $region61
    $region60: #{tpu_custom_call.1} parent=1 // pred_region
      _
    $region61: #{tpu_custom_call.1} parent=1 // pred_fallthru
      _
    // Predicated region
    $region62: #{tpu_custom_call.1} parent=1 // pred_check
      _
    $region63: #{tpu_custom_call.1} parent=1 // pred_check_branch
      %83 = sbr.rel (0) target = $region65
    $region64: #{tpu_custom_call.1} parent=1 // pred_region
      _
    $region65: #{tpu_custom_call.1} parent=1 // pred_fallthru
      _
    // Predicated region
    $region66: #{tpu_custom_call.1} parent=1 // pred_check
      _
    $region67: #{tpu_custom_call.1} parent=1 // pred_check_branch
      %85 = sbr.rel (0) target = $region69
    $region68: #{tpu_custom_call.1} parent=1 // pred_region
      %87 = vsyncadd [#allocation6], 0
      %s88 = sshll.u32 %s16, 4
      %s89 = int_to_ptr.hbm [resolvable:$true] %s88
      %s90 = sshll.u32 [#allocation7], 4
      %s91 = int_to_ptr.vmem [resolvable:$true] %s90
      %96 = dma.hbm_to_vmem [thread:$0]  %s89, 512, %s91, [#allocation6], 128, 128, 8
    $region69: #{tpu_custom_call.1} parent=1 // pred_fallthru
      _
    // Predicated region
    $region70: #{tpu_custom_call.1} parent=1 // pred_check
      _
    $region71: #{tpu_custom_call.1} parent=1 // pred_check_branch
      %98 = sbr.rel (0) target = $region73
    $region72: #{tpu_custom_call.1} parent=1 // pred_region
      _
    $region73: #{tpu_custom_call.1} parent=1 // pred_fallthru
      _
    // Predicated region
    $region74: #{tpu_custom_call.1} parent=1 // pred_check
      _
    $region75: #{tpu_custom_call.1} parent=1 // pred_check_branch
      %100 = sbr.rel (0) target = $region77
    $region76: #{tpu_custom_call.1} parent=1 // pred_region
      _
    $region77: #{tpu_custom_call.1} parent=1 // pred_fallthru
      _
    // Predicated region
    $region78: #{tpu_custom_call.1} parent=1 // pred_check
      _
    $region79: #{tpu_custom_call.1} parent=1 // pred_check_branch
      %102 = sbr.rel (0) target = $region81
    $region80: #{tpu_custom_call.1} parent=1 // pred_region
      _
    $region81: #{tpu_custom_call.1} parent=1 // pred_fallthru
      _
    // Predicated region
    $region82: #{tpu_custom_call.1} parent=1 // pred_check
      _
    $region83: #{tpu_custom_call.1} parent=1 // pred_check_branch
      %104 = sbr.rel (0) target = $region85
    $region84: #{tpu_custom_call.1} parent=1 // pred_region
      _
    $region85: #{tpu_custom_call.1} parent=1 // pred_fallthru
      _
    // Predicated region
    $region86: #{tpu_custom_call.1} parent=1 // pred_check
      _
    $region87: #{tpu_custom_call.1} parent=1 // pred_check_branch
      %106 = sbr.rel (0) target = $region89
    $region88: #{tpu_custom_call.1} parent=1 // pred_region
      _
    $region89: #{tpu_custom_call.1} parent=1 // pred_fallthru
      _
    // Predicated region
    $region90: #{tpu_custom_call.1} parent=1 // pred_check
      _
    $region91: #{tpu_custom_call.1} parent=1 // pred_check_branch
      %108 = sbr.rel (0) target = $region93
    $region92: #{tpu_custom_call.1} parent=1 // pred_region
      %110 = dma.done [#allocation3], 256
    $region93: #{tpu_custom_call.1} parent=1 // pred_fallthru
      _
    // Predicated region
    $region94: #{tpu_custom_call.1} parent=1 // pred_check
      _
    $region95: #{tpu_custom_call.1} parent=1 // pred_check_branch
      %112 = sbr.rel (0) target = $region97
    $region96: #{tpu_custom_call.1} parent=1 // pred_region
      %114 = dma.done [#allocation6], 512
    $region97: #{tpu_custom_call.1} parent=1 // pred_fallthru
      _
    // Predicated region
    $region98: #{tpu_custom_call.1} parent=1 // pred_check
      _
    $region99: #{tpu_custom_call.1} parent=1 // pred_check_branch
      %116 = sbr.rel (0) target = $region101
    $region100: #{tpu_custom_call.1} parent=1 // pred_region
      %118 = dma.done [#allocation6], 512
    $region101: #{tpu_custom_call.1} parent=1 // pred_fallthru
      _
    %v119 = vld [vmem:[#allocation2] sm:$0xff]
    %v120 = vld [vmem:[#allocation2 + $0x8] sm:$0xff]
    %v121 = vld [vmem:[%s1] sm:$0xff]
    %v122 = vld [vmem:[%s1 + $0x8] sm:$0xff]
    %v123 = vld [vmem:[%s1 + $0x10] sm:$0xff]
    %v124 = vld [vmem:[%s1 + $0x18] sm:$0xff]
    %v125 = vld [vmem:[%s2] sm:$0xff]
    %v126 = vld [vmem:[%s2 + $0x8] sm:$0xff]
    %v127 = vld [vmem:[%s2 + $0x10] sm:$0xff]
    %v128 = vld [vmem:[%s2 + $0x18] sm:$0xff]
    %v129 = vld [vmem:[%s3] sm:$0x1]
    %v131 = vperm.slane %v129, 0
    %vm133 = vcmask 261120
    %v135 = vsel %vm133, %v119, 0
    %v138 = vsel %vm133, %v120, 0
    %140 = vmatpush.msra.mxu0 0.0
    %141 = vmatpush.msra.mxu0 0.0
    %142 = vmatpush.msra.mxu0 0.0
    %143 = vmatpush.msra.mxu0 0.0
    %144 = vmatpush.msra.mxu0 0.0
    %145 = vmatpush.msra.mxu0 0.0
    %146 = vmatpush.msra.mxu0 0.0
    %147 = vmatpush.msra.mxu0 0.0
    %148 = vmatpush.msra.mxu0 0.0
    %149 = vmatpush.msra.mxu0 0.0
    %150 = vmatpush.msra.mxu0 0.0
    %151 = vmatpush.msra.mxu0 0.0
    %152 = vmatpush.msra.mxu0 %v128
    %153 = vmatpush.msra.mxu0 %v127
    %154 = vmatpush.msra.mxu0 %v126
    %155 = vmatpush.msra.mxu0 %v125
    %156 = vmatmul.f32.gmra.mxu0 %v135
    %v157 = vpop.f32.mrf.mxu0
    %v158 = vadd.f32 %v131, %v157
    %159 = vmatmul.f32.gmra.mxu0 %v138
    %v160 = vpop.f32.mrf.mxu0
    %v161 = vadd.f32 %v131, %v160
    %162 = vdwg.mxu0
    %v163 = vld [vmem:[%s4] sm:$0xff]
    %v164 = vld [vmem:[%s4 + $0x8] sm:$0xff]
    %v165 = vld [vmem:[%s4 + $0x10] sm:$0xff]
    %v166 = vld [vmem:[%s4 + $0x18] sm:$0xff]
    %v167 = vld [vmem:[%s5] sm:$0x1]
    %169 = vrot.lane.b32.xlu0 %v158, 96
    %v170 = vpop.permute.xlu0 %169
    %vm171 = vcmask 64512
    %v172 = vsel %vm171, %v158, 0
    %v174 = vsel %vm171, %v170, 0
    %176 = vmatpush.xpose.msra.mxu0 0.0
    %177 = vmatpush.xpose.msra.mxu0 0.0
    %178 = vmatpush.xpose.msra.mxu0 0.0
    %179 = vmatpush.xpose.msra.mxu0 0.0
    %180 = vmatpush.xpose.msra.mxu0 0.0
    %181 = vmatpush.xpose.msra.mxu0 0.0
    %182 = vmatpush.xpose.msra.mxu0 0.0
    %183 = vmatpush.xpose.msra.mxu0 0.0
    %184 = vmatpush.xpose.msra.mxu0 0.0
    %185 = vmatpush.xpose.msra.mxu0 0.0
    %186 = vmatpush.xpose.msra.mxu0 0.0
    %187 = vmatpush.xpose.msra.mxu0 0.0
    %188 = vmatpush.xpose.msra.mxu0 0.0
    %189 = vmatpush.xpose.msra.mxu0 0.0
    %190 = vmatpush.xpose.msra.mxu0 0.0
    %191 = vmatpush.xpose.msra.mxu0 %v174
    %192 = vmatmul.f32.gmra.mxu0 %v172
    %v193 = vpop.f32.mrf.mxu0
    %v194 = vadd.f32 0.0, %v193
    %195 = vdwg.mxu0
    %197 = vrot.lane.b32.xlu0 %v161, 96
    %v198 = vpop.permute.xlu0 %197
    %v199 = vsel %vm171, %v161, 0
    %v201 = vsel %vm171, %v198, 0
    %203 = vmatpush.xpose.msra.mxu0 0.0
    %204 = vmatpush.xpose.msra.mxu0 0.0
    %205 = vmatpush.xpose.msra.mxu0 0.0
    %206 = vmatpush.xpose.msra.mxu0 0.0
    %207 = vmatpush.xpose.msra.mxu0 0.0
    %208 = vmatpush.xpose.msra.mxu0 0.0
    %209 = vmatpush.xpose.msra.mxu0 0.0
    %210 = vmatpush.xpose.msra.mxu0 0.0
    %211 = vmatpush.xpose.msra.mxu0 0.0
    %212 = vmatpush.xpose.msra.mxu0 0.0
    %213 = vmatpush.xpose.msra.mxu0 0.0
    %214 = vmatpush.xpose.msra.mxu0 0.0
    %215 = vmatpush.xpose.msra.mxu0 0.0
    %216 = vmatpush.xpose.msra.mxu0 0.0
    %217 = vmatpush.xpose.msra.mxu0 0.0
    %218 = vmatpush.xpose.msra.mxu0 %v201
    %219 = vmatmul.f32.gmra.mxu0 %v199
    %v220 = vpop.f32.mrf.mxu0
    %v221 = vadd.f32 0.0, %v220
    %222 = vdwg.mxu0
    %v223 = vsel %vm171, %v194, -inf
    %224 = vmax.xlane.f32.xlu0 %v223
    %v225 = vpop.xlane.xlu0 %224
    %v226 = vsel %vm171, %v221, -inf
    %227 = vmax.xlane.f32.xlu0 %v226
    %v228 = vpop.xlane.xlu0 %227
    %v229 = vsub.f32 %v194, %v225
    %v230 = vsub.f32 %v221, %v228
    %v231 = vmul.f32 %v229, 1.442695
    %v232 = vpow.pop %v231
    %v233 = vmul.f32 %v230, 1.442695
    %v234 = vpow.pop %v233
    %v235 = vsel %vm171, %v232, 0.0
    %236 = vadd.xlane.f32.xlu0 %v235
    %v237 = vpop.xlane.xlu0 %236
    %v238 = vsel %vm171, %v234, 0.0
    %239 = vadd.xlane.f32.xlu0 %v238
    %v240 = vpop.xlane.xlu0 %239
    %v241 = vrcp.pop %v237
    %v242 = vrcp.pop %v240
    %v243 = vmul.f32 %v232, %v241
    %v244 = vmul.f32 %v234, %v242
    %245 = vrot.lane.b32.xlu0 %v158, 64
    %v246 = vpop.permute.xlu0 %245
    %v249 = vsel %vm171, %v243, 0
    %251 = vmatpush.msra.mxu0 0.0
    %252 = vmatpush.msra.mxu0 0.0
    %253 = vmatpush.msra.mxu0 0.0
    %254 = vmatpush.msra.mxu0 0.0
    %255 = vmatpush.msra.mxu0 0.0
    %256 = vmatpush.msra.mxu0 0.0
    %257 = vmatpush.msra.mxu0 0.0
    %258 = vmatpush.msra.mxu0 0.0
    %259 = vmatpush.msra.mxu0 0.0
    %260 = vmatpush.msra.mxu0 0.0
    %261 = vmatpush.msra.mxu0 0.0
    %262 = vmatpush.msra.mxu0 0.0
    %263 = vmatpush.msra.mxu0 0.0
    %264 = vmatpush.msra.mxu0 0.0
    %265 = vmatpush.msra.mxu0 0.0
    %266 = vmatpush.msra.mxu0 %v246
    %267 = vmatmul.f32.gmra.mxu0 %v249
    %v268 = vpop.f32.mrf.mxu0
    %v269 = vadd.f32 0.0, %v268
    %270 = vdwg.mxu0
    %271 = vrot.lane.b32.xlu0 %v161, 64
    %v272 = vpop.permute.xlu0 %271
    %v275 = vsel %vm171, %v244, 0
    %277 = vmatpush.msra.mxu0 0.0
    %278 = vmatpush.msra.mxu0 0.0
    %279 = vmatpush.msra.mxu0 0.0
    %280 = vmatpush.msra.mxu0 0.0
    %281 = vmatpush.msra.mxu0 0.0
    %282 = vmatpush.msra.mxu0 0.0
    %283 = vmatpush.msra.mxu0 0.0
    %284 = vmatpush.msra.mxu0 0.0
    %285 = vmatpush.msra.mxu0 0.0
    %286 = vmatpush.msra.mxu0 0.0
    %287 = vmatpush.msra.mxu0 0.0
    %288 = vmatpush.msra.mxu0 0.0
    %289 = vmatpush.msra.mxu0 0.0
    %290 = vmatpush.msra.mxu0 0.0
    %291 = vmatpush.msra.mxu0 0.0
    %292 = vmatpush.msra.mxu0 %v272
    %293 = vmatmul.f32.gmra.mxu0 %v275
    %v294 = vpop.f32.mrf.mxu0
    %v295 = vadd.f32 0.0, %v294
    %296 = vdwg.mxu0
    %297 = vrot.lane.b32.xlu0 %v158, 120
    %v298 = vpop.permute.xlu0 %297
    %299 = vrot.lane.b32.xlu0 %v158, 88
    %v300 = vpop.permute.xlu0 %299
    %v301 = vsel %vm171, %v298, 0
    %v303 = vsel %vm171, %v300, 0
    %305 = vmatpush.xpose.msra.mxu0 0.0
    %306 = vmatpush.xpose.msra.mxu0 0.0
    %307 = vmatpush.xpose.msra.mxu0 0.0
    %308 = vmatpush.xpose.msra.mxu0 0.0
    %309 = vmatpush.xpose.msra.mxu0 0.0
    %310 = vmatpush.xpose.msra.mxu0 0.0
    %311 = vmatpush.xpose.msra.mxu0 0.0
    %312 = vmatpush.xpose.msra.mxu0 0.0
    %313 = vmatpush.xpose.msra.mxu0 0.0
    %314 = vmatpush.xpose.msra.mxu0 0.0
    %315 = vmatpush.xpose.msra.mxu0 0.0
    %316 = vmatpush.xpose.msra.mxu0 0.0
    %317 = vmatpush.xpose.msra.mxu0 0.0
    %318 = vmatpush.xpose.msra.mxu0 0.0
    %319 = vmatpush.xpose.msra.mxu0 0.0
    %320 = vmatpush.xpose.msra.mxu0 %v303
    %321 = vmatmul.f32.gmra.mxu0 %v301
    %v322 = vpop.f32.mrf.mxu0
    %v323 = vadd.f32 0.0, %v322
    %324 = vdwg.mxu0
    %325 = vrot.lane.b32.xlu0 %v161, 120
    %v326 = vpop.permute.xlu0 %325
    %327 = vrot.lane.b32.xlu0 %v161, 88
    %v328 = vpop.permute.xlu0 %327
    %v329 = vsel %vm171, %v326, 0
    %v331 = vsel %vm171, %v328, 0
    %333 = vmatpush.xpose.msra.mxu0 0.0
    %334 = vmatpush.xpose.msra.mxu0 0.0
    %335 = vmatpush.xpose.msra.mxu0 0.0
    %336 = vmatpush.xpose.msra.mxu0 0.0
    %337 = vmatpush.xpose.msra.mxu0 0.0
    %338 = vmatpush.xpose.msra.mxu0 0.0
    %339 = vmatpush.xpose.msra.mxu0 0.0
    %340 = vmatpush.xpose.msra.mxu0 0.0
    %341 = vmatpush.xpose.msra.mxu0 0.0
    %342 = vmatpush.xpose.msra.mxu0 0.0
    %343 = vmatpush.xpose.msra.mxu0 0.0
    %344 = vmatpush.xpose.msra.mxu0 0.0
    %345 = vmatpush.xpose.msra.mxu0 0.0
    %346 = vmatpush.xpose.msra.mxu0 0.0
    %347 = vmatpush.xpose.msra.mxu0 0.0
    %348 = vmatpush.xpose.msra.mxu0 %v331
    %349 = vmatmul.f32.gmra.mxu0 %v329
    %v350 = vpop.f32.mrf.mxu0
    %v351 = vadd.f32 0.0, %v350
    %352 = vdwg.mxu0
    %v353 = vsel %vm171, %v323, -inf
    %354 = vmax.xlane.f32.xlu0 %v353
    %v355 = vpop.xlane.xlu0 %354
    %v356 = vsel %vm171, %v351, -inf
    %357 = vmax.xlane.f32.xlu0 %v356
    %v358 = vpop.xlane.xlu0 %357
    %v359 = vsub.f32 %v323, %v355
    %v360 = vsub.f32 %v351, %v358
    %v361 = vmul.f32 %v359, 1.442695
    %v362 = vpow.pop %v361
    %v363 = vmul.f32 %v360, 1.442695
    %v364 = vpow.pop %v363
    %v365 = vsel %vm171, %v362, 0.0
    %366 = vadd.xlane.f32.xlu0 %v365
    %v367 = vpop.xlane.xlu0 %366
    %v368 = vsel %vm171, %v364, 0.0
    %369 = vadd.xlane.f32.xlu0 %v368
    %v370 = vpop.xlane.xlu0 %369
    %v371 = vrcp.pop %v367
    %v372 = vrcp.pop %v370
    %v373 = vmul.f32 %v362, %v371
    %v374 = vmul.f32 %v364, %v372
    %375 = vrot.lane.b32.xlu0 %v158, 56
    %v376 = vpop.permute.xlu0 %375
    %v379 = vsel %vm171, %v373, 0
    %381 = vmatpush.msra.mxu0 0.0
    %382 = vmatpush.msra.mxu0 0.0
    %383 = vmatpush.msra.mxu0 0.0
    %384 = vmatpush.msra.mxu0 0.0
    %385 = vmatpush.msra.mxu0 0.0
    %386 = vmatpush.msra.mxu0 0.0
    %387 = vmatpush.msra.mxu0 0.0
    %388 = vmatpush.msra.mxu0 0.0
    %389 = vmatpush.msra.mxu0 0.0
    %390 = vmatpush.msra.mxu0 0.0
    %391 = vmatpush.msra.mxu0 0.0
    %392 = vmatpush.msra.mxu0 0.0
    %393 = vmatpush.msra.mxu0 0.0
    %394 = vmatpush.msra.mxu0 0.0
    %395 = vmatpush.msra.mxu0 0.0
    %396 = vmatpush.msra.mxu0 %v376
    %397 = vmatmul.f32.gmra.mxu0 %v379
    %v398 = vpop.f32.mrf.mxu0
    %v399 = vadd.f32 0.0, %v398
    %400 = vdwg.mxu0
    %401 = vrot.lane.b32.xlu0 %v161, 56
    %v402 = vpop.permute.xlu0 %401
    %v405 = vsel %vm171, %v374, 0
    %407 = vmatpush.msra.mxu0 0.0
    %408 = vmatpush.msra.mxu0 0.0
    %409 = vmatpush.msra.mxu0 0.0
    %410 = vmatpush.msra.mxu0 0.0
    %411 = vmatpush.msra.mxu0 0.0
    %412 = vmatpush.msra.mxu0 0.0
    %413 = vmatpush.msra.mxu0 0.0
    %414 = vmatpush.msra.mxu0 0.0
    %415 = vmatpush.msra.mxu0 0.0
    %416 = vmatpush.msra.mxu0 0.0
    %417 = vmatpush.msra.mxu0 0.0
    %418 = vmatpush.msra.mxu0 0.0
    %419 = vmatpush.msra.mxu0 0.0
    %420 = vmatpush.msra.mxu0 0.0
    %421 = vmatpush.msra.mxu0 0.0
    %422 = vmatpush.msra.mxu0 %v402
    %423 = vmatmul.f32.gmra.mxu0 %v405
    %v424 = vpop.f32.mrf.mxu0
    %v425 = vadd.f32 0.0, %v424
    %426 = vdwg.mxu0
    %427 = vrot.lane.b32.xlu0 %v158, 112
    %v428 = vpop.permute.xlu0 %427
    %429 = vrot.lane.b32.xlu0 %v158, 80
    %v430 = vpop.permute.xlu0 %429
    %v431 = vsel %vm171, %v428, 0
    %v433 = vsel %vm171, %v430, 0
    %435 = vmatpush.xpose.msra.mxu0 0.0
    %436 = vmatpush.xpose.msra.mxu0 0.0
    %437 = vmatpush.xpose.msra.mxu0 0.0
    %438 = vmatpush.xpose.msra.mxu0 0.0
    %439 = vmatpush.xpose.msra.mxu0 0.0
    %440 = vmatpush.xpose.msra.mxu0 0.0
    %441 = vmatpush.xpose.msra.mxu0 0.0
    %442 = vmatpush.xpose.msra.mxu0 0.0
    %443 = vmatpush.xpose.msra.mxu0 0.0
    %444 = vmatpush.xpose.msra.mxu0 0.0
    %445 = vmatpush.xpose.msra.mxu0 0.0
    %446 = vmatpush.xpose.msra.mxu0 0.0
    %447 = vmatpush.xpose.msra.mxu0 0.0
    %448 = vmatpush.xpose.msra.mxu0 0.0
    %449 = vmatpush.xpose.msra.mxu0 0.0
    %450 = vmatpush.xpose.msra.mxu0 %v433
    %451 = vmatmul.f32.gmra.mxu0 %v431
    %v452 = vpop.f32.mrf.mxu0
    %v453 = vadd.f32 0.0, %v452
    %454 = vdwg.mxu0
    %455 = vrot.lane.b32.xlu0 %v161, 112
    %v456 = vpop.permute.xlu0 %455
    %457 = vrot.lane.b32.xlu0 %v161, 80
    %v458 = vpop.permute.xlu0 %457
    %v459 = vsel %vm171, %v456, 0
    %v461 = vsel %vm171, %v458, 0
    %463 = vmatpush.xpose.msra.mxu0 0.0
    %464 = vmatpush.xpose.msra.mxu0 0.0
    %465 = vmatpush.xpose.msra.mxu0 0.0
    %466 = vmatpush.xpose.msra.mxu0 0.0
    %467 = vmatpush.xpose.msra.mxu0 0.0
    %468 = vmatpush.xpose.msra.mxu0 0.0
    %469 = vmatpush.xpose.msra.mxu0 0.0
    %470 = vmatpush.xpose.msra.mxu0 0.0
    %471 = vmatpush.xpose.msra.mxu0 0.0
    %472 = vmatpush.xpose.msra.mxu0 0.0
    %473 = vmatpush.xpose.msra.mxu0 0.0
    %474 = vmatpush.xpose.msra.mxu0 0.0
    %475 = vmatpush.xpose.msra.mxu0 0.0
    %476 = vmatpush.xpose.msra.mxu0 0.0
    %477 = vmatpush.xpose.msra.mxu0 0.0
    %478 = vmatpush.xpose.msra.mxu0 %v461
    %479 = vmatmul.f32.gmra.mxu0 %v459
    %v480 = vpop.f32.mrf.mxu0
    %v481 = vadd.f32 0.0, %v480
    %482 = vdwg.mxu0
    %v483 = vsel %vm171, %v453, -inf
    %484 = vmax.xlane.f32.xlu0 %v483
    %v485 = vpop.xlane.xlu0 %484
    %v486 = vsel %vm171, %v481, -inf
    %487 = vmax.xlane.f32.xlu0 %v486
    %v488 = vpop.xlane.xlu0 %487
    %v489 = vsub.f32 %v453, %v485
    %v490 = vsub.f32 %v481, %v488
    %v491 = vmul.f32 %v489, 1.442695
    %v492 = vpow.pop %v491
    %v493 = vmul.f32 %v490, 1.442695
    %v494 = vpow.pop %v493
    %v495 = vsel %vm171, %v492, 0.0
    %496 = vadd.xlane.f32.xlu0 %v495
    %v497 = vpop.xlane.xlu0 %496
    %v498 = vsel %vm171, %v494, 0.0
    %499 = vadd.xlane.f32.xlu0 %v498
    %v500 = vpop.xlane.xlu0 %499
    %v501 = vrcp.pop %v497
    %v502 = vrcp.pop %v500
    %v503 = vmul.f32 %v492, %v501
    %v504 = vmul.f32 %v494, %v502
    %505 = vrot.lane.b32.xlu0 %v158, 48
    %v506 = vpop.permute.xlu0 %505
    %v509 = vsel %vm171, %v503, 0
    %511 = vmatpush.msra.mxu0 0.0
    %512 = vmatpush.msra.mxu0 0.0
    %513 = vmatpush.msra.mxu0 0.0
    %514 = vmatpush.msra.mxu0 0.0
    %515 = vmatpush.msra.mxu0 0.0
    %516 = vmatpush.msra.mxu0 0.0
    %517 = vmatpush.msra.mxu0 0.0
    %518 = vmatpush.msra.mxu0 0.0
    %519 = vmatpush.msra.mxu0 0.0
    %520 = vmatpush.msra.mxu0 0.0
    %521 = vmatpush.msra.mxu0 0.0
    %522 = vmatpush.msra.mxu0 0.0
    %523 = vmatpush.msra.mxu0 0.0
    %524 = vmatpush.msra.mxu0 0.0
    %525 = vmatpush.msra.mxu0 0.0
    %526 = vmatpush.msra.mxu0 %v506
    %527 = vmatmul.f32.gmra.mxu0 %v509
    %v528 = vpop.f32.mrf.mxu0
    %v529 = vadd.f32 0.0, %v528
    %530 = vdwg.mxu0
    %531 = vrot.lane.b32.xlu0 %v161, 48
    %v532 = vpop.permute.xlu0 %531
    %v535 = vsel %vm171, %v504, 0
    %537 = vmatpush.msra.mxu0 0.0
    %538 = vmatpush.msra.mxu0 0.0
    %539 = vmatpush.msra.mxu0 0.0
    %540 = vmatpush.msra.mxu0 0.0
    %541 = vmatpush.msra.mxu0 0.0
    %542 = vmatpush.msra.mxu0 0.0
    %543 = vmatpush.msra.mxu0 0.0
    %544 = vmatpush.msra.mxu0 0.0
    %545 = vmatpush.msra.mxu0 0.0
    %546 = vmatpush.msra.mxu0 0.0
    %547 = vmatpush.msra.mxu0 0.0
    %548 = vmatpush.msra.mxu0 0.0
    %549 = vmatpush.msra.mxu0 0.0
    %550 = vmatpush.msra.mxu0 0.0
    %551 = vmatpush.msra.mxu0 0.0
    %552 = vmatpush.msra.mxu0 %v532
    %553 = vmatmul.f32.gmra.mxu0 %v535
    %v554 = vpop.f32.mrf.mxu0
    %v555 = vadd.f32 0.0, %v554
    %556 = vdwg.mxu0
    %557 = vrot.lane.b32.xlu0 %v158, 104
    %v558 = vpop.permute.xlu0 %557
    %559 = vrot.lane.b32.xlu0 %v158, 72
    %v560 = vpop.permute.xlu0 %559
    %v561 = vsel %vm171, %v558, 0
    %v563 = vsel %vm171, %v560, 0
    %565 = vmatpush.xpose.msra.mxu0 0.0
    %566 = vmatpush.xpose.msra.mxu0 0.0
    %567 = vmatpush.xpose.msra.mxu0 0.0
    %568 = vmatpush.xpose.msra.mxu0 0.0
    %569 = vmatpush.xpose.msra.mxu0 0.0
    %570 = vmatpush.xpose.msra.mxu0 0.0
    %571 = vmatpush.xpose.msra.mxu0 0.0
    %572 = vmatpush.xpose.msra.mxu0 0.0
    %573 = vmatpush.xpose.msra.mxu0 0.0
    %574 = vmatpush.xpose.msra.mxu0 0.0
    %575 = vmatpush.xpose.msra.mxu0 0.0
    %576 = vmatpush.xpose.msra.mxu0 0.0
    %577 = vmatpush.xpose.msra.mxu0 0.0
    %578 = vmatpush.xpose.msra.mxu0 0.0
    %579 = vmatpush.xpose.msra.mxu0 0.0
    %580 = vmatpush.xpose.msra.mxu0 %v563
    %581 = vmatmul.f32.gmra.mxu0 %v561
    %v582 = vpop.f32.mrf.mxu0
    %v583 = vadd.f32 0.0, %v582
    %584 = vdwg.mxu0
    %585 = vrot.lane.b32.xlu0 %v161, 104
    %v586 = vpop.permute.xlu0 %585
    %587 = vrot.lane.b32.xlu0 %v161, 72
    %v588 = vpop.permute.xlu0 %587
    %v589 = vsel %vm171, %v586, 0
    %v591 = vsel %vm171, %v588, 0
    %593 = vmatpush.xpose.msra.mxu0 0.0
    %594 = vmatpush.xpose.msra.mxu0 0.0
    %595 = vmatpush.xpose.msra.mxu0 0.0
    %596 = vmatpush.xpose.msra.mxu0 0.0
    %597 = vmatpush.xpose.msra.mxu0 0.0
    %598 = vmatpush.xpose.msra.mxu0 0.0
    %599 = vmatpush.xpose.msra.mxu0 0.0
    %600 = vmatpush.xpose.msra.mxu0 0.0
    %601 = vmatpush.xpose.msra.mxu0 0.0
    %602 = vmatpush.xpose.msra.mxu0 0.0
    %603 = vmatpush.xpose.msra.mxu0 0.0
    %604 = vmatpush.xpose.msra.mxu0 0.0
    %605 = vmatpush.xpose.msra.mxu0 0.0
    %606 = vmatpush.xpose.msra.mxu0 0.0
    %607 = vmatpush.xpose.msra.mxu0 0.0
    %608 = vmatpush.xpose.msra.mxu0 %v591
    %609 = vmatmul.f32.gmra.mxu0 %v589
    %v610 = vpop.f32.mrf.mxu0
    %v611 = vadd.f32 0.0, %v610
    %612 = vdwg.mxu0
    %v613 = vsel %vm171, %v583, -inf
    %614 = vmax.xlane.f32.xlu0 %v613
    %v615 = vpop.xlane.xlu0 %614
    %v616 = vsel %vm171, %v611, -inf
    %617 = vmax.xlane.f32.xlu0 %v616
    %v618 = vpop.xlane.xlu0 %617
    %v619 = vsub.f32 %v583, %v615
    %v620 = vsub.f32 %v611, %v618
    %v621 = vmul.f32 %v619, 1.442695
    %v622 = vpow.pop %v621
    %v623 = vmul.f32 %v620, 1.442695
    %v624 = vpow.pop %v623
    %v625 = vsel %vm171, %v622, 0.0
    %626 = vadd.xlane.f32.xlu0 %v625
    %v627 = vpop.xlane.xlu0 %626
    %v628 = vsel %vm171, %v624, 0.0
    %629 = vadd.xlane.f32.xlu0 %v628
    %v630 = vpop.xlane.xlu0 %629
    %v631 = vrcp.pop %v627
    %v632 = vrcp.pop %v630
    %v633 = vmul.f32 %v622, %v631
    %v634 = vmul.f32 %v624, %v632
    %635 = vrot.lane.b32.xlu0 %v158, 40
    %v636 = vpop.permute.xlu0 %635
    %v639 = vsel %vm171, %v633, 0
    %641 = vmatpush.msra.mxu0 0.0
    %642 = vmatpush.msra.mxu0 0.0
    %643 = vmatpush.msra.mxu0 0.0
    %644 = vmatpush.msra.mxu0 0.0
    %645 = vmatpush.msra.mxu0 0.0
    %646 = vmatpush.msra.mxu0 0.0
    %647 = vmatpush.msra.mxu0 0.0
    %648 = vmatpush.msra.mxu0 0.0
    %649 = vmatpush.msra.mxu0 0.0
    %650 = vmatpush.msra.mxu0 0.0
    %651 = vmatpush.msra.mxu0 0.0
    %652 = vmatpush.msra.mxu0 0.0
    %653 = vmatpush.msra.mxu0 0.0
    %654 = vmatpush.msra.mxu0 0.0
    %655 = vmatpush.msra.mxu0 0.0
    %656 = vmatpush.msra.mxu0 %v636
    %657 = vmatmul.f32.gmra.mxu0 %v639
    %v658 = vpop.f32.mrf.mxu0
    %v659 = vadd.f32 0.0, %v658
    %660 = vdwg.mxu0
    %661 = vrot.lane.b32.xlu0 %v161, 40
    %v662 = vpop.permute.xlu0 %661
    %v665 = vsel %vm171, %v634, 0
    %667 = vmatpush.msra.mxu0 0.0
    %668 = vmatpush.msra.mxu0 0.0
    %669 = vmatpush.msra.mxu0 0.0
    %670 = vmatpush.msra.mxu0 0.0
    %671 = vmatpush.msra.mxu0 0.0
    %672 = vmatpush.msra.mxu0 0.0
    %673 = vmatpush.msra.mxu0 0.0
    %674 = vmatpush.msra.mxu0 0.0
    %675 = vmatpush.msra.mxu0 0.0
    %676 = vmatpush.msra.mxu0 0.0
    %677 = vmatpush.msra.mxu0 0.0
    %678 = vmatpush.msra.mxu0 0.0
    %679 = vmatpush.msra.mxu0 0.0
    %680 = vmatpush.msra.mxu0 0.0
    %681 = vmatpush.msra.mxu0 0.0
    %682 = vmatpush.msra.mxu0 %v662
    %683 = vmatmul.f32.gmra.mxu0 %v665
    %v684 = vpop.f32.mrf.mxu0
    %v685 = vadd.f32 0.0, %v684
    %686 = vdwg.mxu0
    %v688 = vsel %vm171, %v399, 0
    %v691 = vsel %vm171, %v425, 0
    %693 = vmatpush.msra.mxu0 0.0
    %694 = vmatpush.msra.mxu0 0.0
    %695 = vmatpush.msra.mxu0 0.0
    %696 = vmatpush.msra.mxu0 0.0
    %697 = vmatpush.msra.mxu0 0.0
    %698 = vmatpush.msra.mxu0 0.0
    %699 = vmatpush.msra.mxu0 0.0
    %700 = vmatpush.msra.mxu0 0.0
    %701 = vmatpush.msra.mxu0 0.0
    %702 = vmatpush.msra.mxu0 0.0
    %703 = vmatpush.msra.mxu0 0.0
    %704 = vmatpush.msra.mxu0 0.0
    %705 = vmatpush.msra.mxu0 0.0
    %706 = vmatpush.msra.mxu0 0.0
    %707 = vmatpush.msra.mxu0 0.0
    %708 = vmatpush.msra.mxu0 %v164
    %709 = vmatmul.f32.gmra.mxu0 %v688
    %v710 = vpop.f32.mrf.mxu0
    %v711 = vadd.f32 0.0, %v710
    %712 = vmatmul.f32.gmra.mxu0 %v691
    %v713 = vpop.f32.mrf.mxu0
    %v714 = vadd.f32 0.0, %v713
    %715 = vdwg.mxu0
    %v717 = vsel %vm171, %v269, 0
    %v720 = vsel %vm171, %v295, 0
    %722 = vmatpush.msra.mxu0 0.0
    %723 = vmatpush.msra.mxu0 0.0
    %724 = vmatpush.msra.mxu0 0.0
    %725 = vmatpush.msra.mxu0 0.0
    %726 = vmatpush.msra.mxu0 0.0
    %727 = vmatpush.msra.mxu0 0.0
    %728 = vmatpush.msra.mxu0 0.0
    %729 = vmatpush.msra.mxu0 0.0
    %730 = vmatpush.msra.mxu0 0.0
    %731 = vmatpush.msra.mxu0 0.0
    %732 = vmatpush.msra.mxu0 0.0
    %733 = vmatpush.msra.mxu0 0.0
    %734 = vmatpush.msra.mxu0 0.0
    %735 = vmatpush.msra.mxu0 0.0
    %736 = vmatpush.msra.mxu0 0.0
    %737 = vmatpush.msra.mxu0 %v163
    %738 = vmatmul.f32.gmra.mxu0 %v717
    %v739 = vpop.f32.mrf.mxu0
    %v740 = vadd.f32 %v711, %v739
    %741 = vmatmul.f32.gmra.mxu0 %v720
    %v742 = vpop.f32.mrf.mxu0
    %v743 = vadd.f32 %v714, %v742
    %744 = vdwg.mxu0
    %v746 = vsel %vm171, %v529, 0
    %v749 = vsel %vm171, %v555, 0
    %751 = vmatpush.msra.mxu0 0.0
    %752 = vmatpush.msra.mxu0 0.0
    %753 = vmatpush.msra.mxu0 0.0
    %754 = vmatpush.msra.mxu0 0.0
    %755 = vmatpush.msra.mxu0 0.0
    %756 = vmatpush.msra.mxu0 0.0
    %757 = vmatpush.msra.mxu0 0.0
    %758 = vmatpush.msra.mxu0 0.0
    %759 = vmatpush.msra.mxu0 0.0
    %760 = vmatpush.msra.mxu0 0.0
    %761 = vmatpush.msra.mxu0 0.0
    %762 = vmatpush.msra.mxu0 0.0
    %763 = vmatpush.msra.mxu0 0.0
    %764 = vmatpush.msra.mxu0 0.0
    %765 = vmatpush.msra.mxu0 0.0
    %766 = vmatpush.msra.mxu0 %v165
    %767 = vmatmul.f32.gmra.mxu0 %v746
    %v768 = vpop.f32.mrf.mxu0
    %v769 = vadd.f32 0.0, %v768
    %770 = vmatmul.f32.gmra.mxu0 %v749
    %v771 = vpop.f32.mrf.mxu0
    %v772 = vadd.f32 0.0, %v771
    %773 = vdwg.mxu0
    %v774 = vadd.f32 %v740, %v769
    %v775 = vadd.f32 %v743, %v772
    %v777 = vsel %vm171, %v659, 0
    %v780 = vsel %vm171, %v685, 0
    %782 = vmatpush.msra.mxu0 0.0
    %783 = vmatpush.msra.mxu0 0.0
    %784 = vmatpush.msra.mxu0 0.0
    %785 = vmatpush.msra.mxu0 0.0
    %786 = vmatpush.msra.mxu0 0.0
    %787 = vmatpush.msra.mxu0 0.0
    %788 = vmatpush.msra.mxu0 0.0
    %789 = vmatpush.msra.mxu0 0.0
    %790 = vmatpush.msra.mxu0 0.0
    %791 = vmatpush.msra.mxu0 0.0
    %792 = vmatpush.msra.mxu0 0.0
    %793 = vmatpush.msra.mxu0 0.0
    %794 = vmatpush.msra.mxu0 0.0
    %795 = vmatpush.msra.mxu0 0.0
    %796 = vmatpush.msra.mxu0 0.0
    %797 = vmatpush.msra.mxu0 %v166
    %798 = vmatmul.f32.gmra.mxu0 %v777
    %v799 = vpop.f32.mrf.mxu0
    %v800 = vadd.f32 0.0, %v799
    %801 = vmatmul.f32.gmra.mxu0 %v780
    %v802 = vpop.f32.mrf.mxu0
    %v803 = vadd.f32 0.0, %v802
    %804 = vdwg.mxu0
    %v805 = vadd.f32 %v774, %v800
    %v806 = vadd.f32 %v775, %v803
    %v808 = vperm.slane %v167, 0
    %v810 = vadd.f32 %v805, %v808
    %v811 = vadd.f32 %v806, %v808
    %v812 = vadd.f32 %v119, %v810
    %v813 = vadd.f32 %v120, %v811
    %v814 = vld [vmem:[%s6] sm:$0x1]
    %v815 = vld [vmem:[%s7] sm:$0x1]
    %v816 = vsel %vm133, %v812, 0.0
    %817 = vadd.xlane.f32.xlu0 %v816
    %v818 = vpop.xlane.xlu0 %817
    %v819 = vsel %vm133, %v813, 0.0
    %820 = vadd.xlane.f32.xlu0 %v819
    %v821 = vpop.xlane.xlu0 %820
    %v822 = vrcp.pop 32.0
    %v823 = vmul.f32 32.0, %v822
    %v824 = vsub.f32 1.0, %v823
    %v825 = vmul.f32 %v822, %v824
    %v826 = vadd.f32 %v822, %v825
    %vm827 = vweird.f32 %v822
    %v828 = vsel %vm827, %v822, %v826
    %v829 = vmul.f32 %v818, %v828
    %v830 = vmul.f32 %v821, %v828
    %v831 = vsub.f32 %v812, %v829
    %v832 = vsub.f32 %v813, %v830
    %v833 = vmul.f32 %v831, %v831
    %v834 = vmul.f32 %v832, %v832
    %v835 = vsel %vm133, %v833, 0.0
    %836 = vadd.xlane.f32.xlu0 %v835
    %v837 = vpop.xlane.xlu0 %836
    %v838 = vsel %vm133, %v834, 0.0
    %839 = vadd.xlane.f32.xlu0 %v838
    %v840 = vpop.xlane.xlu0 %839
    %v841 = vmul.f32 %v837, %v828
    %v842 = vmul.f32 %v840, %v828
    %v843 = vadd.f32 %v841, 1e-05
    %v844 = vadd.f32 %v842, 1e-05
    %v845 = vrsqrt.pop %v843
    %v846 = vmul.f32 %v845, %v843
    %v847 = vmul.f32 %v846, %v845
    %v848 = vmul.f32 0.5, %v847
    %v849 = vsub.f32 1.5, %v848
    %v850 = vmul.f32 %v845, %v849
    %vm851 = vweird.f32 %v843
    %vm852 = vweird.f32 %v845
    %vm853 = vmor %vm851, %vm852
    %v854 = vsel %vm853, %v845, %v850
    %v855 = vrsqrt.pop %v844
    %v856 = vmul.f32 %v855, %v844
    %v857 = vmul.f32 %v856, %v855
    %v858 = vmul.f32 0.5, %v857
    %v859 = vsub.f32 1.5, %v858
    %v860 = vmul.f32 %v855, %v859
    %vm861 = vweird.f32 %v844
    %vm862 = vweird.f32 %v855
    %vm863 = vmor %vm861, %vm862
    %v864 = vsel %vm863, %v855, %v860
    %v865 = vmul.f32 %v831, %v854
    %v866 = vmul.f32 %v832, %v864
    %v868 = vperm.slane %v814, 0
    %v870 = vmul.f32 %v865, %v868
    %v871 = vmul.f32 %v866, %v868
    %v873 = vperm.slane %v815, 0
    %v875 = vadd.f32 %v870, %v873
    %v876 = vadd.f32 %v871, %v873
    %v877 = vld [vmem:[%s8] sm:$0xff]
    %v878 = vld [vmem:[%s8 + $0x8] sm:$0xff]
    %v879 = vld [vmem:[%s8 + $0x10] sm:$0xff]
    %v880 = vld [vmem:[%s8 + $0x18] sm:$0xff]
    %v881 = vld [vmem:[%s9] sm:$0x1]
    %v883 = vperm.slane %v881, 0
    %v886 = vsel %vm133, %v875, 0
    %v889 = vsel %vm133, %v876, 0
    %891 = vmatpush.msra.mxu0 0.0
    %892 = vmatpush.msra.mxu0 0.0
    %893 = vmatpush.msra.mxu0 0.0
    %894 = vmatpush.msra.mxu0 0.0
    %895 = vmatpush.msra.mxu0 0.0
    %896 = vmatpush.msra.mxu0 0.0
    %897 = vmatpush.msra.mxu0 0.0
    %898 = vmatpush.msra.mxu0 0.0
    %899 = vmatpush.msra.mxu0 0.0
    %900 = vmatpush.msra.mxu0 0.0
    %901 = vmatpush.msra.mxu0 0.0
    %902 = vmatpush.msra.mxu0 0.0
    %903 = vmatpush.msra.mxu0 %v880
    %904 = vmatpush.msra.mxu0 %v879
    %905 = vmatpush.msra.mxu0 %v878
    %906 = vmatpush.msra.mxu0 %v877
    %907 = vmatmul.f32.gmra.mxu0 %v886
    %v908 = vpop.f32.mrf.mxu0
    %v909 = vadd.f32 %v883, %v908
    %910 = vmatmul.f32.gmra.mxu0 %v889
    %v911 = vpop.f32.mrf.mxu0
    %v912 = vadd.f32 %v883, %v911
    %913 = vdwg.mxu0
    %v914 = vld [vmem:[%s10] sm:$0xff]
    %v915 = vld [vmem:[%s10 + $0x8] sm:$0xff]
    %v916 = vld [vmem:[%s10 + $0x10] sm:$0xff]
    %v917 = vld [vmem:[%s10 + $0x18] sm:$0xff]
    %v918 = vld [vmem:[%s11] sm:$0x1]
    %v920 = vperm.slane %v918, 0
    %v923 = vsel %vm133, %v121, 0
    %v926 = vsel %vm133, %v122, 0
    %v929 = vsel %vm133, %v123, 0
    %v932 = vsel %vm133, %v124, 0
    %934 = vmatpush.msra.mxu0 0.0
    %935 = vmatpush.msra.mxu0 0.0
    %936 = vmatpush.msra.mxu0 0.0
    %937 = vmatpush.msra.mxu0 0.0
    %938 = vmatpush.msra.mxu0 0.0
    %939 = vmatpush.msra.mxu0 0.0
    %940 = vmatpush.msra.mxu0 0.0
    %941 = vmatpush.msra.mxu0 0.0
    %942 = vmatpush.msra.mxu0 0.0
    %943 = vmatpush.msra.mxu0 0.0
    %944 = vmatpush.msra.mxu0 0.0
    %945 = vmatpush.msra.mxu0 0.0
    %946 = vmatpush.msra.mxu0 %v917
    %947 = vmatpush.msra.mxu0 %v916
    %948 = vmatpush.msra.mxu0 %v915
    %949 = vmatpush.msra.mxu0 %v914
    %950 = vmatmul.f32.gmra.mxu0 %v923
    %v951 = vpop.f32.mrf.mxu0
    %v952 = vadd.f32 %v920, %v951
    %953 = vmatmul.f32.gmra.mxu0 %v926
    %v954 = vpop.f32.mrf.mxu0
    %v955 = vadd.f32 %v920, %v954
    %956 = vmatmul.f32.gmra.mxu0 %v929
    %v957 = vpop.f32.mrf.mxu0
    %v958 = vadd.f32 %v920, %v957
    %959 = vmatmul.f32.gmra.mxu0 %v932
    %v960 = vpop.f32.mrf.mxu0
    %v961 = vadd.f32 %v920, %v960
    %962 = vdwg.mxu0
    %v963 = vld [vmem:[#allocation5] sm:$0xff]
    %v964 = vld [vmem:[#allocation5 + $0x8] sm:$0xff]
    %v965 = vld [vmem:[#allocation5 + $0x10] sm:$0xff]
    %v966 = vld [vmem:[#allocation5 + $0x18] sm:$0xff]
    %v967 = vld [vmem:[%s13] sm:$0x1]
    %v969 = vsel %vm171, %v909, 0
    %v972 = vsel %vm171, %v952, 0
    %v975 = vsel %vm171, %v955, 0
    %977 = vmatpush.xpose.msra.mxu0 0.0
    %978 = vmatpush.xpose.msra.mxu0 0.0
    %979 = vmatpush.xpose.msra.mxu0 0.0
    %980 = vmatpush.xpose.msra.mxu0 0.0
    %981 = vmatpush.xpose.msra.mxu0 0.0
    %982 = vmatpush.xpose.msra.mxu0 0.0
    %983 = vmatpush.xpose.msra.mxu0 0.0
    %984 = vmatpush.xpose.msra.mxu0 0.0
    %985 = vmatpush.xpose.msra.mxu0 0.0
    %986 = vmatpush.xpose.msra.mxu0 0.0
    %987 = vmatpush.xpose.msra.mxu0 0.0
    %988 = vmatpush.xpose.msra.mxu0 0.0
    %989 = vmatpush.xpose.msra.mxu0 0.0
    %990 = vmatpush.xpose.msra.mxu0 0.0
    %991 = vmatpush.xpose.msra.mxu0 %v975
    %992 = vmatpush.xpose.msra.mxu0 %v972
    %993 = vmatmul.f32.gmra.mxu0 %v969
    %v994 = vpop.f32.mrf.mxu0
    %v995 = vadd.f32 0.0, %v994
    %996 = vdwg.mxu0
    %v998 = vsel %vm171, %v912, 0
    %v1001 = vsel %vm171, %v958, 0
    %v1004 = vsel %vm171, %v961, 0
    %1006 = vmatpush.xpose.msra.mxu0 0.0
    %1007 = vmatpush.xpose.msra.mxu0 0.0
    %1008 = vmatpush.xpose.msra.mxu0 0.0
    %1009 = vmatpush.xpose.msra.mxu0 0.0
    %1010 = vmatpush.xpose.msra.mxu0 0.0
    %1011 = vmatpush.xpose.msra.mxu0 0.0
    %1012 = vmatpush.xpose.msra.mxu0 0.0
    %1013 = vmatpush.xpose.msra.mxu0 0.0
    %1014 = vmatpush.xpose.msra.mxu0 0.0
    %1015 = vmatpush.xpose.msra.mxu0 0.0
    %1016 = vmatpush.xpose.msra.mxu0 0.0
    %1017 = vmatpush.xpose.msra.mxu0 0.0
    %1018 = vmatpush.xpose.msra.mxu0 0.0
    %1019 = vmatpush.xpose.msra.mxu0 0.0
    %1020 = vmatpush.xpose.msra.mxu0 %v1004
    %1021 = vmatpush.xpose.msra.mxu0 %v1001
    %1022 = vmatmul.f32.gmra.mxu0 %v998
    %v1023 = vpop.f32.mrf.mxu0
    %v1024 = vadd.f32 0.0, %v1023
    %1025 = vdwg.mxu0
    %vm1026 = vcmask 130048
    %v1027 = vsel %vm1026, %v995, -inf
    %1028 = vmax.xlane.f32.xlu0 %v1027
    %v1029 = vpop.xlane.xlu0 %1028
    %v1030 = vsel %vm1026, %v1024, -inf
    %1031 = vmax.xlane.f32.xlu0 %v1030
    %v1032 = vpop.xlane.xlu0 %1031
    %v1033 = vsub.f32 %v995, %v1029
    %v1034 = vsub.f32 %v1024, %v1032
    %v1035 = vmul.f32 %v1033, 1.442695
    %v1036 = vpow.pop %v1035
    %v1037 = vmul.f32 %v1034, 1.442695
    %v1038 = vpow.pop %v1037
    %v1039 = vsel %vm1026, %v1036, 0.0
    %1040 = vadd.xlane.f32.xlu0 %v1039
    %v1041 = vpop.xlane.xlu0 %1040
    %v1042 = vsel %vm1026, %v1038, 0.0
    %1043 = vadd.xlane.f32.xlu0 %v1042
    %v1044 = vpop.xlane.xlu0 %1043
    %v1045 = vrcp.pop %v1041
    %v1046 = vrcp.pop %v1044
    %v1047 = vmul.f32 %v1036, %v1045
    %v1048 = vmul.f32 %v1038, %v1046
    %1049 = vrot.lane.b32.xlu0 %v952, 96
    %v1050 = vpop.permute.xlu0 %1049
    %1051 = vrot.lane.b32.xlu0 %v955, 96
    %v1052 = vpop.permute.xlu0 %1051
    %v1056 = vsel %vm1026, %v1047, 0
    %1058 = vmatpush.msra.mxu0 0.0
    %1059 = vmatpush.msra.mxu0 0.0
    %1060 = vmatpush.msra.mxu0 0.0
    %1061 = vmatpush.msra.mxu0 0.0
    %1062 = vmatpush.msra.mxu0 0.0
    %1063 = vmatpush.msra.mxu0 0.0
    %1064 = vmatpush.msra.mxu0 0.0
    %1065 = vmatpush.msra.mxu0 0.0
    %1066 = vmatpush.msra.mxu0 0.0
    %1067 = vmatpush.msra.mxu0 0.0
    %1068 = vmatpush.msra.mxu0 0.0
    %1069 = vmatpush.msra.mxu0 0.0
    %1070 = vmatpush.msra.mxu0 0.0
    %1071 = vmatpush.msra.mxu0 0.0
    %1072 = vmatpush.msra.mxu0 %v1052
    %1073 = vmatpush.msra.mxu0 %v1050
    %1074 = vmatmul.f32.gmra.mxu0 %v1056
    %v1075 = vpop.f32.mrf.mxu0
    %v1076 = vadd.f32 0.0, %v1075
    %1077 = vdwg.mxu0
    %1078 = vrot.lane.b32.xlu0 %v958, 96
    %v1079 = vpop.permute.xlu0 %1078
    %1080 = vrot.lane.b32.xlu0 %v961, 96
    %v1081 = vpop.permute.xlu0 %1080
    %v1085 = vsel %vm1026, %v1048, 0
    %1087 = vmatpush.msra.mxu0 0.0
    %1088 = vmatpush.msra.mxu0 0.0
    %1089 = vmatpush.msra.mxu0 0.0
    %1090 = vmatpush.msra.mxu0 0.0
    %1091 = vmatpush.msra.mxu0 0.0
    %1092 = vmatpush.msra.mxu0 0.0
    %1093 = vmatpush.msra.mxu0 0.0
    %1094 = vmatpush.msra.mxu0 0.0
    %1095 = vmatpush.msra.mxu0 0.0
    %1096 = vmatpush.msra.mxu0 0.0
    %1097 = vmatpush.msra.mxu0 0.0
    %1098 = vmatpush.msra.mxu0 0.0
    %1099 = vmatpush.msra.mxu0 0.0
    %1100 = vmatpush.msra.mxu0 0.0
    %1101 = vmatpush.msra.mxu0 %v1081
    %1102 = vmatpush.msra.mxu0 %v1079
    %1103 = vmatmul.f32.gmra.mxu0 %v1085
    %v1104 = vpop.f32.mrf.mxu0
    %v1105 = vadd.f32 0.0, %v1104
    %1106 = vdwg.mxu0
    %1107 = vrot.lane.b32.xlu0 %v909, 120
    %v1108 = vpop.permute.xlu0 %1107
    %1109 = vrot.lane.b32.xlu0 %v952, 120
    %v1110 = vpop.permute.xlu0 %1109
    %1111 = vrot.lane.b32.xlu0 %v955, 120
    %v1112 = vpop.permute.xlu0 %1111
    %v1113 = vsel %vm171, %v1108, 0
    %v1115 = vsel %vm171, %v1110, 0
    %v1117 = vsel %vm171, %v1112, 0
    %1119 = vmatpush.xpose.msra.mxu0 0.0
    %1120 = vmatpush.xpose.msra.mxu0 0.0
    %1121 = vmatpush.xpose.msra.mxu0 0.0
    %1122 = vmatpush.xpose.msra.mxu0 0.0
    %1123 = vmatpush.xpose.msra.mxu0 0.0
    %1124 = vmatpush.xpose.msra.mxu0 0.0
    %1125 = vmatpush.xpose.msra.mxu0 0.0
    %1126 = vmatpush.xpose.msra.mxu0 0.0
    %1127 = vmatpush.xpose.msra.mxu0 0.0
    %1128 = vmatpush.xpose.msra.mxu0 0.0
    %1129 = vmatpush.xpose.msra.mxu0 0.0
    %1130 = vmatpush.xpose.msra.mxu0 0.0
    %1131 = vmatpush.xpose.msra.mxu0 0.0
    %1132 = vmatpush.xpose.msra.mxu0 0.0
    %1133 = vmatpush.xpose.msra.mxu0 %v1117
    %1134 = vmatpush.xpose.msra.mxu0 %v1115
    %1135 = vmatmul.f32.gmra.mxu0 %v1113
    %v1136 = vpop.f32.mrf.mxu0
    %v1137 = vadd.f32 0.0, %v1136
    %1138 = vdwg.mxu0
    %1139 = vrot.lane.b32.xlu0 %v912, 120
    %v1140 = vpop.permute.xlu0 %1139
    %1141 = vrot.lane.b32.xlu0 %v958, 120
    %v1142 = vpop.permute.xlu0 %1141
    %1143 = vrot.lane.b32.xlu0 %v961, 120
    %v1144 = vpop.permute.xlu0 %1143
    %v1145 = vsel %vm171, %v1140, 0
    %v1147 = vsel %vm171, %v1142, 0
    %v1149 = vsel %vm171, %v1144, 0
    %1151 = vmatpush.xpose.msra.mxu0 0.0
    %1152 = vmatpush.xpose.msra.mxu0 0.0
    %1153 = vmatpush.xpose.msra.mxu0 0.0
    %1154 = vmatpush.xpose.msra.mxu0 0.0
    %1155 = vmatpush.xpose.msra.mxu0 0.0
    %1156 = vmatpush.xpose.msra.mxu0 0.0
    %1157 = vmatpush.xpose.msra.mxu0 0.0
    %1158 = vmatpush.xpose.msra.mxu0 0.0
    %1159 = vmatpush.xpose.msra.mxu0 0.0
    %1160 = vmatpush.xpose.msra.mxu0 0.0
    %1161 = vmatpush.xpose.msra.mxu0 0.0
    %1162 = vmatpush.xpose.msra.mxu0 0.0
    %1163 = vmatpush.xpose.msra.mxu0 0.0
    %1164 = vmatpush.xpose.msra.mxu0 0.0
    %1165 = vmatpush.xpose.msra.mxu0 %v1149
    %1166 = vmatpush.xpose.msra.mxu0 %v1147
    %1167 = vmatmul.f32.gmra.mxu0 %v1145
    %v1168 = vpop.f32.mrf.mxu0
    %v1169 = vadd.f32 0.0, %v1168
    %1170 = vdwg.mxu0
    %v1171 = vsel %vm1026, %v1137, -inf
    %1172 = vmax.xlane.f32.xlu0 %v1171
    %v1173 = vpop.xlane.xlu0 %1172
    %v1174 = vsel %vm1026, %v1169, -inf
    %1175 = vmax.xlane.f32.xlu0 %v1174
    %v1176 = vpop.xlane.xlu0 %1175
    %v1177 = vsub.f32 %v1137, %v1173
    %v1178 = vsub.f32 %v1169, %v1176
    %v1179 = vmul.f32 %v1177, 1.442695
    %v1180 = vpow.pop %v1179
    %v1181 = vmul.f32 %v1178, 1.442695
    %v1182 = vpow.pop %v1181
    %v1183 = vsel %vm1026, %v1180, 0.0
    %1184 = vadd.xlane.f32.xlu0 %v1183
    %v1185 = vpop.xlane.xlu0 %1184
    %v1186 = vsel %vm1026, %v1182, 0.0
    %1187 = vadd.xlane.f32.xlu0 %v1186
    %v1188 = vpop.xlane.xlu0 %1187
    %v1189 = vrcp.pop %v1185
    %v1190 = vrcp.pop %v1188
    %v1191 = vmul.f32 %v1180, %v1189
    %v1192 = vmul.f32 %v1182, %v1190
    %1193 = vrot.lane.b32.xlu0 %v952, 88
    %v1194 = vpop.permute.xlu0 %1193
    %1195 = vrot.lane.b32.xlu0 %v955, 88
    %v1196 = vpop.permute.xlu0 %1195
    %v1200 = vsel %vm1026, %v1191, 0
    %1202 = vmatpush.msra.mxu0 0.0
    %1203 = vmatpush.msra.mxu0 0.0
    %1204 = vmatpush.msra.mxu0 0.0
    %1205 = vmatpush.msra.mxu0 0.0
    %1206 = vmatpush.msra.mxu0 0.0
    %1207 = vmatpush.msra.mxu0 0.0
    %1208 = vmatpush.msra.mxu0 0.0
    %1209 = vmatpush.msra.mxu0 0.0
    %1210 = vmatpush.msra.mxu0 0.0
    %1211 = vmatpush.msra.mxu0 0.0
    %1212 = vmatpush.msra.mxu0 0.0
    %1213 = vmatpush.msra.mxu0 0.0
    %1214 = vmatpush.msra.mxu0 0.0
    %1215 = vmatpush.msra.mxu0 0.0
    %1216 = vmatpush.msra.mxu0 %v1196
    %1217 = vmatpush.msra.mxu0 %v1194
    %1218 = vmatmul.f32.gmra.mxu0 %v1200
    %v1219 = vpop.f32.mrf.mxu0
    %v1220 = vadd.f32 0.0, %v1219
    %1221 = vdwg.mxu0
    %1222 = vrot.lane.b32.xlu0 %v958, 88
    %v1223 = vpop.permute.xlu0 %1222
    %1224 = vrot.lane.b32.xlu0 %v961, 88
    %v1225 = vpop.permute.xlu0 %1224
    %v1229 = vsel %vm1026, %v1192, 0
    %1231 = vmatpush.msra.mxu0 0.0
    %1232 = vmatpush.msra.mxu0 0.0
    %1233 = vmatpush.msra.mxu0 0.0
    %1234 = vmatpush.msra.mxu0 0.0
    %1235 = vmatpush.msra.mxu0 0.0
    %1236 = vmatpush.msra.mxu0 0.0
    %1237 = vmatpush.msra.mxu0 0.0
    %1238 = vmatpush.msra.mxu0 0.0
    %1239 = vmatpush.msra.mxu0 0.0
    %1240 = vmatpush.msra.mxu0 0.0
    %1241 = vmatpush.msra.mxu0 0.0
    %1242 = vmatpush.msra.mxu0 0.0
    %1243 = vmatpush.msra.mxu0 0.0
    %1244 = vmatpush.msra.mxu0 0.0
    %1245 = vmatpush.msra.mxu0 %v1225
    %1246 = vmatpush.msra.mxu0 %v1223
    %1247 = vmatmul.f32.gmra.mxu0 %v1229
    %v1248 = vpop.f32.mrf.mxu0
    %v1249 = vadd.f32 0.0, %v1248
    %1250 = vdwg.mxu0
    %1251 = vrot.lane.b32.xlu0 %v909, 112
    %v1252 = vpop.permute.xlu0 %1251
    %1253 = vrot.lane.b32.xlu0 %v952, 112
    %v1254 = vpop.permute.xlu0 %1253
    %1255 = vrot.lane.b32.xlu0 %v955, 112
    %v1256 = vpop.permute.xlu0 %1255
    %v1257 = vsel %vm171, %v1252, 0
    %v1259 = vsel %vm171, %v1254, 0
    %v1261 = vsel %vm171, %v1256, 0
    %1263 = vmatpush.xpose.msra.mxu0 0.0
    %1264 = vmatpush.xpose.msra.mxu0 0.0
    %1265 = vmatpush.xpose.msra.mxu0 0.0
    %1266 = vmatpush.xpose.msra.mxu0 0.0
    %1267 = vmatpush.xpose.msra.mxu0 0.0
    %1268 = vmatpush.xpose.msra.mxu0 0.0
    %1269 = vmatpush.xpose.msra.mxu0 0.0
    %1270 = vmatpush.xpose.msra.mxu0 0.0
    %1271 = vmatpush.xpose.msra.mxu0 0.0
    %1272 = vmatpush.xpose.msra.mxu0 0.0
    %1273 = vmatpush.xpose.msra.mxu0 0.0
    %1274 = vmatpush.xpose.msra.mxu0 0.0
    %1275 = vmatpush.xpose.msra.mxu0 0.0
    %1276 = vmatpush.xpose.msra.mxu0 0.0
    %1277 = vmatpush.xpose.msra.mxu0 %v1261
    %1278 = vmatpush.xpose.msra.mxu0 %v1259
    %1279 = vmatmul.f32.gmra.mxu0 %v1257
    %v1280 = vpop.f32.mrf.mxu0
    %v1281 = vadd.f32 0.0, %v1280
    %1282 = vdwg.mxu0
    %1283 = vrot.lane.b32.xlu0 %v912, 112
    %v1284 = vpop.permute.xlu0 %1283
    %1285 = vrot.lane.b32.xlu0 %v958, 112
    %v1286 = vpop.permute.xlu0 %1285
    %1287 = vrot.lane.b32.xlu0 %v961, 112
    %v1288 = vpop.permute.xlu0 %1287
    %v1289 = vsel %vm171, %v1284, 0
    %v1291 = vsel %vm171, %v1286, 0
    %v1293 = vsel %vm171, %v1288, 0
    %1295 = vmatpush.xpose.msra.mxu0 0.0
    %1296 = vmatpush.xpose.msra.mxu0 0.0
    %1297 = vmatpush.xpose.msra.mxu0 0.0
    %1298 = vmatpush.xpose.msra.mxu0 0.0
    %1299 = vmatpush.xpose.msra.mxu0 0.0
    %1300 = vmatpush.xpose.msra.mxu0 0.0
    %1301 = vmatpush.xpose.msra.mxu0 0.0
    %1302 = vmatpush.xpose.msra.mxu0 0.0
    %1303 = vmatpush.xpose.msra.mxu0 0.0
    %1304 = vmatpush.xpose.msra.mxu0 0.0
    %1305 = vmatpush.xpose.msra.mxu0 0.0
    %1306 = vmatpush.xpose.msra.mxu0 0.0
    %1307 = vmatpush.xpose.msra.mxu0 0.0
    %1308 = vmatpush.xpose.msra.mxu0 0.0
    %1309 = vmatpush.xpose.msra.mxu0 %v1293
    %1310 = vmatpush.xpose.msra.mxu0 %v1291
    %1311 = vmatmul.f32.gmra.mxu0 %v1289
    %v1312 = vpop.f32.mrf.mxu0
    %v1313 = vadd.f32 0.0, %v1312
    %1314 = vdwg.mxu0
    %v1315 = vsel %vm1026, %v1281, -inf
    %1316 = vmax.xlane.f32.xlu0 %v1315
    %v1317 = vpop.xlane.xlu0 %1316
    %v1318 = vsel %vm1026, %v1313, -inf
    %1319 = vmax.xlane.f32.xlu0 %v1318
    %v1320 = vpop.xlane.xlu0 %1319
    %v1321 = vsub.f32 %v1281, %v1317
    %v1322 = vsub.f32 %v1313, %v1320
    %v1323 = vmul.f32 %v1321, 1.442695
    %v1324 = vpow.pop %v1323
    %v1325 = vmul.f32 %v1322, 1.442695
    %v1326 = vpow.pop %v1325
    %v1327 = vsel %vm1026, %v1324, 0.0
    %1328 = vadd.xlane.f32.xlu0 %v1327
    %v1329 = vpop.xlane.xlu0 %1328
    %v1330 = vsel %vm1026, %v1326, 0.0
    %1331 = vadd.xlane.f32.xlu0 %v1330
    %v1332 = vpop.xlane.xlu0 %1331
    %v1333 = vrcp.pop %v1329
    %v1334 = vrcp.pop %v1332
    %v1335 = vmul.f32 %v1324, %v1333
    %v1336 = vmul.f32 %v1326, %v1334
    %1337 = vrot.lane.b32.xlu0 %v952, 80
    %v1338 = vpop.permute.xlu0 %1337
    %1339 = vrot.lane.b32.xlu0 %v955, 80
    %v1340 = vpop.permute.xlu0 %1339
    %v1344 = vsel %vm1026, %v1335, 0
    %1346 = vmatpush.msra.mxu0 0.0
    %1347 = vmatpush.msra.mxu0 0.0
    %1348 = vmatpush.msra.mxu0 0.0
    %1349 = vmatpush.msra.mxu0 0.0
    %1350 = vmatpush.msra.mxu0 0.0
    %1351 = vmatpush.msra.mxu0 0.0
    %1352 = vmatpush.msra.mxu0 0.0
    %1353 = vmatpush.msra.mxu0 0.0
    %1354 = vmatpush.msra.mxu0 0.0
    %1355 = vmatpush.msra.mxu0 0.0
    %1356 = vmatpush.msra.mxu0 0.0
    %1357 = vmatpush.msra.mxu0 0.0
    %1358 = vmatpush.msra.mxu0 0.0
    %1359 = vmatpush.msra.mxu0 0.0
    %1360 = vmatpush.msra.mxu0 %v1340
    %1361 = vmatpush.msra.mxu0 %v1338
    %1362 = vmatmul.f32.gmra.mxu0 %v1344
    %v1363 = vpop.f32.mrf.mxu0
    %v1364 = vadd.f32 0.0, %v1363
    %1365 = vdwg.mxu0
    %1366 = vrot.lane.b32.xlu0 %v958, 80
    %v1367 = vpop.permute.xlu0 %1366
    %1368 = vrot.lane.b32.xlu0 %v961, 80
    %v1369 = vpop.permute.xlu0 %1368
    %v1373 = vsel %vm1026, %v1336, 0
    %1375 = vmatpush.msra.mxu0 0.0
    %1376 = vmatpush.msra.mxu0 0.0
    %1377 = vmatpush.msra.mxu0 0.0
    %1378 = vmatpush.msra.mxu0 0.0
    %1379 = vmatpush.msra.mxu0 0.0
    %1380 = vmatpush.msra.mxu0 0.0
    %1381 = vmatpush.msra.mxu0 0.0
    %1382 = vmatpush.msra.mxu0 0.0
    %1383 = vmatpush.msra.mxu0 0.0
    %1384 = vmatpush.msra.mxu0 0.0
    %1385 = vmatpush.msra.mxu0 0.0
    %1386 = vmatpush.msra.mxu0 0.0
    %1387 = vmatpush.msra.mxu0 0.0
    %1388 = vmatpush.msra.mxu0 0.0
    %1389 = vmatpush.msra.mxu0 %v1369
    %1390 = vmatpush.msra.mxu0 %v1367
    %1391 = vmatmul.f32.gmra.mxu0 %v1373
    %v1392 = vpop.f32.mrf.mxu0
    %v1393 = vadd.f32 0.0, %v1392
    %1394 = vdwg.mxu0
    %1395 = vrot.lane.b32.xlu0 %v909, 104
    %v1396 = vpop.permute.xlu0 %1395
    %1397 = vrot.lane.b32.xlu0 %v952, 104
    %v1398 = vpop.permute.xlu0 %1397
    %1399 = vrot.lane.b32.xlu0 %v955, 104
    %v1400 = vpop.permute.xlu0 %1399
    %v1401 = vsel %vm171, %v1396, 0
    %v1403 = vsel %vm171, %v1398, 0
    %v1405 = vsel %vm171, %v1400, 0
    %1407 = vmatpush.xpose.msra.mxu0 0.0
    %1408 = vmatpush.xpose.msra.mxu0 0.0
    %1409 = vmatpush.xpose.msra.mxu0 0.0
    %1410 = vmatpush.xpose.msra.mxu0 0.0
    %1411 = vmatpush.xpose.msra.mxu0 0.0
    %1412 = vmatpush.xpose.msra.mxu0 0.0
    %1413 = vmatpush.xpose.msra.mxu0 0.0
    %1414 = vmatpush.xpose.msra.mxu0 0.0
    %1415 = vmatpush.xpose.msra.mxu0 0.0
    %1416 = vmatpush.xpose.msra.mxu0 0.0
    %1417 = vmatpush.xpose.msra.mxu0 0.0
    %1418 = vmatpush.xpose.msra.mxu0 0.0
    %1419 = vmatpush.xpose.msra.mxu0 0.0
    %1420 = vmatpush.xpose.msra.mxu0 0.0
    %1421 = vmatpush.xpose.msra.mxu0 %v1405
    %1422 = vmatpush.xpose.msra.mxu0 %v1403
    %1423 = vmatmul.f32.gmra.mxu0 %v1401
    %v1424 = vpop.f32.mrf.mxu0
    %v1425 = vadd.f32 0.0, %v1424
    %1426 = vdwg.mxu0
    %1427 = vrot.lane.b32.xlu0 %v912, 104
    %v1428 = vpop.permute.xlu0 %1427
    %1429 = vrot.lane.b32.xlu0 %v958, 104
    %v1430 = vpop.permute.xlu0 %1429
    %1431 = vrot.lane.b32.xlu0 %v961, 104
    %v1432 = vpop.permute.xlu0 %1431
    %v1433 = vsel %vm171, %v1428, 0
    %v1435 = vsel %vm171, %v1430, 0
    %v1437 = vsel %vm171, %v1432, 0
    %1439 = vmatpush.xpose.msra.mxu0 0.0
    %1440 = vmatpush.xpose.msra.mxu0 0.0
    %1441 = vmatpush.xpose.msra.mxu0 0.0
    %1442 = vmatpush.xpose.msra.mxu0 0.0
    %1443 = vmatpush.xpose.msra.mxu0 0.0
    %1444 = vmatpush.xpose.msra.mxu0 0.0
    %1445 = vmatpush.xpose.msra.mxu0 0.0
    %1446 = vmatpush.xpose.msra.mxu0 0.0
    %1447 = vmatpush.xpose.msra.mxu0 0.0
    %1448 = vmatpush.xpose.msra.mxu0 0.0
    %1449 = vmatpush.xpose.msra.mxu0 0.0
    %1450 = vmatpush.xpose.msra.mxu0 0.0
    %1451 = vmatpush.xpose.msra.mxu0 0.0
    %1452 = vmatpush.xpose.msra.mxu0 0.0
    %1453 = vmatpush.xpose.msra.mxu0 %v1437
    %1454 = vmatpush.xpose.msra.mxu0 %v1435
    %1455 = vmatmul.f32.gmra.mxu0 %v1433
    %v1456 = vpop.f32.mrf.mxu0
    %v1457 = vadd.f32 0.0, %v1456
    %1458 = vdwg.mxu0
    %v1459 = vsel %vm1026, %v1425, -inf
    %1460 = vmax.xlane.f32.xlu0 %v1459
    %v1461 = vpop.xlane.xlu0 %1460
    %v1462 = vsel %vm1026, %v1457, -inf
    %1463 = vmax.xlane.f32.xlu0 %v1462
    %v1464 = vpop.xlane.xlu0 %1463
    %v1465 = vsub.f32 %v1425, %v1461
    %v1466 = vsub.f32 %v1457, %v1464
    %v1467 = vmul.f32 %v1465, 1.442695
    %v1468 = vpow.pop %v1467
    %v1469 = vmul.f32 %v1466, 1.442695
    %v1470 = vpow.pop %v1469
    %v1471 = vsel %vm1026, %v1468, 0.0
    %1472 = vadd.xlane.f32.xlu0 %v1471
    %v1473 = vpop.xlane.xlu0 %1472
    %v1474 = vsel %vm1026, %v1470, 0.0
    %1475 = vadd.xlane.f32.xlu0 %v1474
    %v1476 = vpop.xlane.xlu0 %1475
    %v1477 = vrcp.pop %v1473
    %v1478 = vrcp.pop %v1476
    %v1479 = vmul.f32 %v1468, %v1477
    %v1480 = vmul.f32 %v1470, %v1478
    %1481 = vrot.lane.b32.xlu0 %v952, 72
    %v1482 = vpop.permute.xlu0 %1481
    %1483 = vrot.lane.b32.xlu0 %v955, 72
    %v1484 = vpop.permute.xlu0 %1483
    %v1488 = vsel %vm1026, %v1479, 0
    %1490 = vmatpush.msra.mxu0 0.0
    %1491 = vmatpush.msra.mxu0 0.0
    %1492 = vmatpush.msra.mxu0 0.0
    %1493 = vmatpush.msra.mxu0 0.0
    %1494 = vmatpush.msra.mxu0 0.0
    %1495 = vmatpush.msra.mxu0 0.0
    %1496 = vmatpush.msra.mxu0 0.0
    %1497 = vmatpush.msra.mxu0 0.0
    %1498 = vmatpush.msra.mxu0 0.0
    %1499 = vmatpush.msra.mxu0 0.0
    %1500 = vmatpush.msra.mxu0 0.0
    %1501 = vmatpush.msra.mxu0 0.0
    %1502 = vmatpush.msra.mxu0 0.0
    %1503 = vmatpush.msra.mxu0 0.0
    %1504 = vmatpush.msra.mxu0 %v1484
    %1505 = vmatpush.msra.mxu0 %v1482
    %1506 = vmatmul.f32.gmra.mxu0 %v1488
    %v1507 = vpop.f32.mrf.mxu0
    %v1508 = vadd.f32 0.0, %v1507
    %1509 = vdwg.mxu0
    %1510 = vrot.lane.b32.xlu0 %v958, 72
    %v1511 = vpop.permute.xlu0 %1510
    %1512 = vrot.lane.b32.xlu0 %v961, 72
    %v1513 = vpop.permute.xlu0 %1512
    %v1517 = vsel %vm1026, %v1480, 0
    %1519 = vmatpush.msra.mxu0 0.0
    %1520 = vmatpush.msra.mxu0 0.0
    %1521 = vmatpush.msra.mxu0 0.0
    %1522 = vmatpush.msra.mxu0 0.0
    %1523 = vmatpush.msra.mxu0 0.0
    %1524 = vmatpush.msra.mxu0 0.0
    %1525 = vmatpush.msra.mxu0 0.0
    %1526 = vmatpush.msra.mxu0 0.0
    %1527 = vmatpush.msra.mxu0 0.0
    %1528 = vmatpush.msra.mxu0 0.0
    %1529 = vmatpush.msra.mxu0 0.0
    %1530 = vmatpush.msra.mxu0 0.0
    %1531 = vmatpush.msra.mxu0 0.0
    %1532 = vmatpush.msra.mxu0 0.0
    %1533 = vmatpush.msra.mxu0 %v1513
    %1534 = vmatpush.msra.mxu0 %v1511
    %1535 = vmatmul.f32.gmra.mxu0 %v1517
    %v1536 = vpop.f32.mrf.mxu0
    %v1537 = vadd.f32 0.0, %v1536
    %1538 = vdwg.mxu0
    %v1540 = vsel %vm171, %v1220, 0
    %v1543 = vsel %vm171, %v1249, 0
    %1545 = vmatpush.msra.mxu0 0.0
    %1546 = vmatpush.msra.mxu0 0.0
    %1547 = vmatpush.msra.mxu0 0.0
    %1548 = vmatpush.msra.mxu0 0.0
    %1549 = vmatpush.msra.mxu0 0.0
    %1550 = vmatpush.msra.mxu0 0.0
    %1551 = vmatpush.msra.mxu0 0.0
    %1552 = vmatpush.msra.mxu0 0.0
    %1553 = vmatpush.msra.mxu0 0.0
    %1554 = vmatpush.msra.mxu0 0.0
    %1555 = vmatpush.msra.mxu0 0.0
    %1556 = vmatpush.msra.mxu0 0.0
    %1557 = vmatpush.msra.mxu0 0.0
    %1558 = vmatpush.msra.mxu0 0.0
    %1559 = vmatpush.msra.mxu0 0.0
    %1560 = vmatpush.msra.mxu0 %v964
    %1561 = vmatmul.f32.gmra.mxu0 %v1540
    %v1562 = vpop.f32.mrf.mxu0
    %v1563 = vadd.f32 0.0, %v1562
    %1564 = vmatmul.f32.gmra.mxu0 %v1543
    %v1565 = vpop.f32.mrf.mxu0
    %v1566 = vadd.f32 0.0, %v1565
    %1567 = vdwg.mxu0
    %v1569 = vsel %vm171, %v1076, 0
    %v1572 = vsel %vm171, %v1105, 0
    %1574 = vmatpush.msra.mxu0 0.0
    %1575 = vmatpush.msra.mxu0 0.0
    %1576 = vmatpush.msra.mxu0 0.0
    %1577 = vmatpush.msra.mxu0 0.0
    %1578 = vmatpush.msra.mxu0 0.0
    %1579 = vmatpush.msra.mxu0 0.0
    %1580 = vmatpush.msra.mxu0 0.0
    %1581 = vmatpush.msra.mxu0 0.0
    %1582 = vmatpush.msra.mxu0 0.0
    %1583 = vmatpush.msra.mxu0 0.0
    %1584 = vmatpush.msra.mxu0 0.0
    %1585 = vmatpush.msra.mxu0 0.0
    %1586 = vmatpush.msra.mxu0 0.0
    %1587 = vmatpush.msra.mxu0 0.0
    %1588 = vmatpush.msra.mxu0 0.0
    %1589 = vmatpush.msra.mxu0 %v963
    %1590 = vmatmul.f32.gmra.mxu0 %v1569
    %v1591 = vpop.f32.mrf.mxu0
    %v1592 = vadd.f32 %v1563, %v1591
    %1593 = vmatmul.f32.gmra.mxu0 %v1572
    %v1594 = vpop.f32.mrf.mxu0
    %v1595 = vadd.f32 %v1566, %v1594
    %1596 = vdwg.mxu0
    %v1598 = vsel %vm171, %v1364, 0
    %v1601 = vsel %vm171, %v1393, 0
    %1603 = vmatpush.msra.mxu0 0.0
    %1604 = vmatpush.msra.mxu0 0.0
    %1605 = vmatpush.msra.mxu0 0.0
    %1606 = vmatpush.msra.mxu0 0.0
    %1607 = vmatpush.msra.mxu0 0.0
    %1608 = vmatpush.msra.mxu0 0.0
    %1609 = vmatpush.msra.mxu0 0.0
    %1610 = vmatpush.msra.mxu0 0.0
    %1611 = vmatpush.msra.mxu0 0.0
    %1612 = vmatpush.msra.mxu0 0.0
    %1613 = vmatpush.msra.mxu0 0.0
    %1614 = vmatpush.msra.mxu0 0.0
    %1615 = vmatpush.msra.mxu0 0.0
    %1616 = vmatpush.msra.mxu0 0.0
    %1617 = vmatpush.msra.mxu0 0.0
    %1618 = vmatpush.msra.mxu0 %v965
    %1619 = vmatmul.f32.gmra.mxu0 %v1598
    %v1620 = vpop.f32.mrf.mxu0
    %v1621 = vadd.f32 0.0, %v1620
    %1622 = vmatmul.f32.gmra.mxu0 %v1601
    %v1623 = vpop.f32.mrf.mxu0
    %v1624 = vadd.f32 0.0, %v1623
    %1625 = vdwg.mxu0
    %v1626 = vadd.f32 %v1592, %v1621
    %v1627 = vadd.f32 %v1595, %v1624
    %v1629 = vsel %vm171, %v1508, 0
    %v1632 = vsel %vm171, %v1537, 0
    %1634 = vmatpush.msra.mxu0 0.0
    %1635 = vmatpush.msra.mxu0 0.0
    %1636 = vmatpush.msra.mxu0 0.0
    %1637 = vmatpush.msra.mxu0 0.0
    %1638 = vmatpush.msra.mxu0 0.0
    %1639 = vmatpush.msra.mxu0 0.0
    %1640 = vmatpush.msra.mxu0 0.0
    %1641 = vmatpush.msra.mxu0 0.0
    %1642 = vmatpush.msra.mxu0 0.0
    %1643 = vmatpush.msra.mxu0 0.0
    %1644 = vmatpush.msra.mxu0 0.0
    %1645 = vmatpush.msra.mxu0 0.0
    %1646 = vmatpush.msra.mxu0 0.0
    %1647 = vmatpush.msra.mxu0 0.0
    %1648 = vmatpush.msra.mxu0 0.0
    %1649 = vmatpush.msra.mxu0 %v966
    %1650 = vmatmul.f32.gmra.mxu0 %v1629
    %v1651 = vpop.f32.mrf.mxu0
    %v1652 = vadd.f32 0.0, %v1651
    %1653 = vmatmul.f32.gmra.mxu0 %v1632
    %v1654 = vpop.f32.mrf.mxu0
    %v1655 = vadd.f32 0.0, %v1654
    %1656 = vdwg.mxu0
    %v1657 = vadd.f32 %v1626, %v1652
    %v1658 = vadd.f32 %v1627, %v1655
    %v1660 = vperm.slane %v967, 0
    %v1662 = vadd.f32 %v1657, %v1660
    %v1663 = vadd.f32 %v1658, %v1660
    %v1664 = vadd.f32 %v875, %v1662
    %v1665 = vadd.f32 %v876, %v1663
    %v1666 = vld [vmem:[%s14] sm:$0x1]
    %v1667 = vld [vmem:[%s15] sm:$0x1]
    %v1668 = vsel %vm133, %v1664, 0.0
    %1669 = vadd.xlane.f32.xlu0 %v1668
    %v1670 = vpop.xlane.xlu0 %1669
    %v1671 = vsel %vm133, %v1665, 0.0
    %1672 = vadd.xlane.f32.xlu0 %v1671
    %v1673 = vpop.xlane.xlu0 %1672
    %v1674 = vmul.f32 %v1670, %v828
    %v1675 = vmul.f32 %v1673, %v828
    %v1676 = vsub.f32 %v1664, %v1674
    %v1677 = vsub.f32 %v1665, %v1675
    %v1678 = vmul.f32 %v1676, %v1676
    %v1679 = vmul.f32 %v1677, %v1677
    %v1680 = vsel %vm133, %v1678, 0.0
    %1681 = vadd.xlane.f32.xlu0 %v1680
    %v1682 = vpop.xlane.xlu0 %1681
    %v1683 = vsel %vm133, %v1679, 0.0
    %1684 = vadd.xlane.f32.xlu0 %v1683
    %v1685 = vpop.xlane.xlu0 %1684
    %v1686 = vmul.f32 %v1682, %v828
    %v1687 = vmul.f32 %v1685, %v828
    %v1688 = vadd.f32 %v1686, 1e-05
    %v1689 = vadd.f32 %v1687, 1e-05
    %v1690 = vrsqrt.pop %v1688
    %v1691 = vmul.f32 %v1690, %v1688
    %v1692 = vmul.f32 %v1691, %v1690
    %v1693 = vmul.f32 0.5, %v1692
    %v1694 = vsub.f32 1.5, %v1693
    %v1695 = vmul.f32 %v1690, %v1694
    %vm1696 = vweird.f32 %v1688
    %vm1697 = vweird.f32 %v1690
    %vm1698 = vmor %vm1696, %vm1697
    %v1699 = vsel %vm1698, %v1690, %v1695
    %v1700 = vrsqrt.pop %v1689
    %v1701 = vmul.f32 %v1700, %v1689
    %v1702 = vmul.f32 %v1701, %v1700
    %v1703 = vmul.f32 0.5, %v1702
    %v1704 = vsub.f32 1.5, %v1703
    %v1705 = vmul.f32 %v1700, %v1704
    %vm1706 = vweird.f32 %v1689
    %vm1707 = vweird.f32 %v1700
    %vm1708 = vmor %vm1706, %vm1707
    %v1709 = vsel %vm1708, %v1700, %v1705
    %v1710 = vmul.f32 %v1676, %v1699
    %v1711 = vmul.f32 %v1677, %v1709
    %v1713 = vperm.slane %v1666, 0
    %v1715 = vmul.f32 %v1710, %v1713
    %v1716 = vmul.f32 %v1711, %v1713
    %v1718 = vperm.slane %v1667, 0
    %v1720 = vadd.f32 %v1715, %v1718
    %v1721 = vadd.f32 %v1716, %v1718
    %v1722 = vld [vmem:[#allocation7] sm:$0xff]
    %v1723 = vld [vmem:[#allocation7 + $0x8] sm:$0xff]
    %v1724 = vld [vmem:[#allocation7 + $0x10] sm:$0xff]
    %v1725 = vld [vmem:[#allocation7 + $0x18] sm:$0xff]
    %v1726 = vld [vmem:[%s17] sm:$0x1]
    %v1728 = vperm.slane %v1726, 0
    %v1731 = vsel %vm133, %v1720, 0
    %v1734 = vsel %vm133, %v1721, 0
    %1736 = vmatpush.msra.mxu0 0.0
    %1737 = vmatpush.msra.mxu0 0.0
    %1738 = vmatpush.msra.mxu0 0.0
    %1739 = vmatpush.msra.mxu0 0.0
    %1740 = vmatpush.msra.mxu0 0.0
    %1741 = vmatpush.msra.mxu0 0.0
    %1742 = vmatpush.msra.mxu0 0.0
    %1743 = vmatpush.msra.mxu0 0.0
    %1744 = vmatpush.msra.mxu0 0.0
    %1745 = vmatpush.msra.mxu0 0.0
    %1746 = vmatpush.msra.mxu0 0.0
    %1747 = vmatpush.msra.mxu0 0.0
    %1748 = vmatpush.msra.mxu0 %v1725
    %1749 = vmatpush.msra.mxu0 %v1724
    %1750 = vmatpush.msra.mxu0 %v1723
    %1751 = vmatpush.msra.mxu0 %v1722
    %1752 = vmatmul.f32.gmra.mxu0 %v1731
    %v1753 = vpop.f32.mrf.mxu0
    %v1754 = vadd.f32 %v1728, %v1753
    %1755 = vmatmul.f32.gmra.mxu0 %v1734
    %v1756 = vpop.f32.mrf.mxu0
    %v1757 = vadd.f32 %v1728, %v1756
    %1758 = vdwg.mxu0
    %v1759 = vmax.f32 %v1754, 0.0
    %v1760 = vmax.f32 %v1757, 0.0
    %v1761 = vld [vmem:[%s18] sm:$0xff]
    %v1762 = vld [vmem:[%s18 + $0x8] sm:$0xff]
    %v1763 = vld [vmem:[%s18 + $0x10] sm:$0xff]
    %v1764 = vld [vmem:[%s18 + $0x18] sm:$0xff]
    %v1765 = vld [vmem:[%s18 + $0x20] sm:$0xff]
    %v1766 = vld [vmem:[%s18 + $0x28] sm:$0xff]
    %v1767 = vld [vmem:[%s18 + $0x30] sm:$0xff]
    %v1768 = vld [vmem:[%s18 + $0x38] sm:$0xff]
    %v1769 = vld [vmem:[%s18 + $0x40] sm:$0xff]
    %v1770 = vld [vmem:[%s18 + $0x48] sm:$0xff]
    %v1771 = vld [vmem:[%s18 + $0x50] sm:$0xff]
    %v1772 = vld [vmem:[%s18 + $0x58] sm:$0xff]
    %v1773 = vld [vmem:[%s18 + $0x60] sm:$0xff]
    %v1774 = vld [vmem:[%s18 + $0x68] sm:$0xff]
    %v1775 = vld [vmem:[%s18 + $0x70] sm:$0xff]
    %v1776 = vld [vmem:[%s18 + $0x78] sm:$0xff]
    %v1777 = vld [vmem:[%s19] sm:$0x1]
    %v1779 = vperm.slane %v1777, 0
    %1781 = vmatpush.msra.mxu0 %v1776
    %1782 = vmatpush.msra.mxu0 %v1775
    %1783 = vmatpush.msra.mxu0 %v1774
    %1784 = vmatpush.msra.mxu0 %v1773
    %1785 = vmatpush.msra.mxu0 %v1772
    %1786 = vmatpush.msra.mxu0 %v1771
    %1787 = vmatpush.msra.mxu0 %v1770
    %1788 = vmatpush.msra.mxu0 %v1769
    %1789 = vmatpush.msra.mxu0 %v1768
    %1790 = vmatpush.msra.mxu0 %v1767
    %1791 = vmatpush.msra.mxu0 %v1766
    %1792 = vmatpush.msra.mxu0 %v1765
    %1793 = vmatpush.msra.mxu0 %v1764
    %1794 = vmatpush.msra.mxu0 %v1763
    %1795 = vmatpush.msra.mxu0 %v1762
    %1796 = vmatpush.msra.mxu0 %v1761
    %1797 = vmatmul.f32.gmra.mxu0 %v1759
    %v1798 = vpop.f32.mrf.mxu0
    %v1799 = vadd.f32 %v1779, %v1798
    %1800 = vmatmul.f32.gmra.mxu0 %v1760
    %v1801 = vpop.f32.mrf.mxu0
    %v1802 = vadd.f32 %v1779, %v1801
    %1803 = vdwg.mxu0
    %v1804 = vadd.f32 %v1720, %v1799
    %v1805 = vadd.f32 %v1721, %v1802
    %v1806 = vld [vmem:[%s20] sm:$0x1]
    %v1807 = vld [vmem:[%s21] sm:$0x1]
    %v1808 = vsel %vm133, %v1804, 0.0
    %1809 = vadd.xlane.f32.xlu0 %v1808
    %v1810 = vpop.xlane.xlu0 %1809
    %v1811 = vsel %vm133, %v1805, 0.0
    %1812 = vadd.xlane.f32.xlu0 %v1811
    %v1813 = vpop.xlane.xlu0 %1812
    %v1814 = vmul.f32 %v1810, %v828
    %v1815 = vmul.f32 %v1813, %v828
    %v1816 = vsub.f32 %v1804, %v1814
    %v1817 = vsub.f32 %v1805, %v1815
    %v1818 = vmul.f32 %v1816, %v1816
    %v1819 = vmul.f32 %v1817, %v1817
    %v1820 = vsel %vm133, %v1818, 0.0
    %1821 = vadd.xlane.f32.xlu0 %v1820
    %v1822 = vpop.xlane.xlu0 %1821
    %v1823 = vsel %vm133, %v1819, 0.0
    %1824 = vadd.xlane.f32.xlu0 %v1823
    %v1825 = vpop.xlane.xlu0 %1824
    %v1826 = vmul.f32 %v1822, %v828
    %v1827 = vmul.f32 %v1825, %v828
    %v1828 = vadd.f32 %v1826, 1e-05
    %v1829 = vadd.f32 %v1827, 1e-05
    %v1830 = vrsqrt.pop %v1828
    %v1831 = vmul.f32 %v1830, %v1828
    %v1832 = vmul.f32 %v1831, %v1830
    %v1833 = vmul.f32 0.5, %v1832
    %v1834 = vsub.f32 1.5, %v1833
    %v1835 = vmul.f32 %v1830, %v1834
    %vm1836 = vweird.f32 %v1828
    %vm1837 = vweird.f32 %v1830
    %vm1838 = vmor %vm1836, %vm1837
    %v1839 = vsel %vm1838, %v1830, %v1835
    %v1840 = vrsqrt.pop %v1829
    %v1841 = vmul.f32 %v1840, %v1829
    %v1842 = vmul.f32 %v1841, %v1840
    %v1843 = vmul.f32 0.5, %v1842
    %v1844 = vsub.f32 1.5, %v1843
    %v1845 = vmul.f32 %v1840, %v1844
    %vm1846 = vweird.f32 %v1829
    %vm1847 = vweird.f32 %v1840
    %vm1848 = vmor %vm1846, %vm1847
    %v1849 = vsel %vm1848, %v1840, %v1845
    %v1850 = vmul.f32 %v1816, %v1839
    %v1851 = vmul.f32 %v1817, %v1849
    %v1853 = vperm.slane %v1806, 0
    %v1855 = vmul.f32 %v1850, %v1853
    %v1856 = vmul.f32 %v1851, %v1853
    %v1858 = vperm.slane %v1807, 0
    %v1860 = vadd.f32 %v1855, %v1858
    %v1861 = vadd.f32 %v1856, %v1858
    %1862 = vst.msk [vmem:[#allocation8] sm:$0xff] %vm133, %v1860
    %1863 = vst.msk [vmem:[#allocation8 + $0x8] sm:$0xff] %vm133, %v1861
    // Predicated region
    $region102: #{tpu_custom_call.1} parent=1 // pred_check
      _
    $region103: #{tpu_custom_call.1} parent=1 // pred_check_branch
      %1865 = sbr.rel (0) target = $region105
    $region104: #{tpu_custom_call.1} parent=1 // pred_region
      %1867 = vsyncadd [#allocation4], 0
      %s1868 = sshll.u32 [#allocation8], 4
      %s1869 = int_to_ptr.vmem [resolvable:$true] %s1868
      %s1870 = sshll.u32 %s22, 4
      %s1871 = int_to_ptr.hbm [resolvable:$true] %s1870
      %1876 = dma.vmem_to_hbm [thread:$0]  %s1869, 256, %s1871, [#allocation4], 128, 128, 8
    $region105: #{tpu_custom_call.1} parent=1 // pred_fallthru
      _
    // Predicated region
    $region106: #{tpu_custom_call.1} parent=1 // pred_check
      _
    $region107: #{tpu_custom_call.1} parent=1 // pred_check_branch
      %1878 = sbr.rel (0) target = $region109
    $region108: #{tpu_custom_call.1} parent=1 // pred_region
      %1880 = dma.done [#allocation4], 256
    $region109: #{tpu_custom_call.1} parent=1 // pred_fallthru
      _
    %1881 = vsyncpa [#allocation3], 1
    %1882 = vsyncpa [#allocation6], 1
    %1883 = vsyncpa [#allocation4], 1

</llo_original>
